<compile_context>
chip_gen: v5e
topology: v5e:2x2
jax: 0.10.0
libtpu: 0.0.40
codegen_flags: <defaults>
</compile_context>

<pallas_src>
import numpy as np
import jax
import jax.numpy as jnp
from jax.experimental import pallas as pl
from jax.experimental.pallas import tpu as pltpu

F32 = jnp.float32
BF16 = jnp.bfloat16


# ----------------------------------------------------------------------------
# The fused kernel (one batch element per grid step).
# ----------------------------------------------------------------------------
def _n3ded64_kernel(
    x_ref,                                    # (1, 8, 16, 48)
    bw1, sc1, sh1, sel1,
    bw2, sc2, sh2, sel2,
    bw3, sc3, sh3,
    bw4, sc4, sh4,
    wt1eo, wt1m, wt1p, sct1, sht1,
    wt2eo, wt2m, wt2p, sct2, sht2,
    w5r, srow, b5,
    o_ref,                                    # (1, 2, 4, 1)
    cv1, cv2, cv3, cv4, ct1, ct2,             # VMEM scratch canvases
):
    f32 = jnp.float32

    def bf(v):
        return v.astype(BF16)

    def relu(v):
        return jnp.maximum(v, 0.0)

    def elu(v):
        return jnp.where(v > 0, v, jnp.exp(jnp.minimum(v, 0.0)) - 1.0)

    # Scratch is uninitialised and per-core (parallel grid) -> zero every step.
    cv1[...] = jnp.zeros(cv1.shape, f32)
    cv2[...] = jnp.zeros(cv2.shape, f32)
    cv3[...] = jnp.zeros(cv3.shape, f32)
    cv4[...] = jnp.zeros(cv4.shape, f32)
    ct1[...] = jnp.zeros(ct1.shape, f32)
    ct2[...] = jnp.zeros(ct2.shape, f32)

    # ---- Conv1 (1x5x5, 3->16) + BN + ReLU : 5 banded matmuls, K=48, N=256 ----
    cv1[:, pl.ds(8, 16), :] = x_ref[0]                     # H-padded canvas
    acc = jnp.zeros((128, 256), f32)
    for dh in range(5):
        xs = cv1[:, pl.ds(6 + dh, 16), :].reshape(128, 48)
        acc += jnp.dot(bf(xs), bw1[dh], preferred_element_type=f32)
    y1 = relu(acc * sc1[:, :] + sh1[:, :])                 # rows (t*16+h), cols (w%2, w//2, c)

    # ---- MaxPool(2,2,2): W via column-parity halves, (T,H) via 0/1 selection matmuls
    yw = bf(jnp.maximum(y1[:, 0:128], y1[:, 128:256]))     # (128,128)
    p1 = jnp.dot(sel1[0], yw, preferred_element_type=f32)
    for k in range(1, 4):
        p1 = jnp.maximum(p1, jnp.dot(sel1[k], yw, preferred_element_type=f32))
    # p1: (32,128) rows (t1*8+h1), cols (w1*16+c)

    # ---- Conv2 (1x5x5, 16->32) + BN + ReLU : 5 banded matmuls, K=128, N=256 ----
    for t1 in range(4):
        cv2[t1, pl.ds(8, 8), :] = p1[8 * t1:8 * t1 + 8, :]
    acc = jnp.zeros((32, 256), f32)
    for dh in range(5):
        xs = cv2[:, pl.ds(6 + dh, 8), :].reshape(32, 128)
        acc += jnp.dot(bf(xs), bw2[dh], preferred_element_type=f32)
    y2 = relu(acc * sc2[:, :] + sh2[:, :])                 # cols (w%4, w//4, c)

    # ---- MaxPool(2,4,4) ----
    yw2 = jnp.maximum(jnp.maximum(y2[:, 0:64], y2[:, 64:128]),
                      jnp.maximum(y2[:, 128:192], y2[:, 192:256]))
    yw2 = bf(yw2)                                          # (32,64)
    for t2 in range(2):
        p2 = jnp.dot(sel2[t2, 0], yw2, preferred_element_type=f32)
        for k in range(1, 8):
            p2 = jnp.maximum(p2, jnp.dot(sel2[t2, k], yw2,
                                         preferred_element_type=f32))
        # p2: (2,64) rows h2, cols (w2*32+c) -> write into conv3 padded canvas
        cv3[pl.ds(24 + 16 * t2, 2), :] = p2

    # ---- Conv3 (3x3x3, 32->64) + BN + ReLU : 9 banded matmuls, K=64, N=128 ----
    acc = jnp.zeros((18, 128), f32)
    for dt in range(3):
        for dh in range(3):
            xs = cv3[pl.ds(16 * dt + 7 + dh, 18), :]
            acc += jnp.dot(bf(xs), bw3[dt * 3 + dh], preferred_element_type=f32)
    y3 = relu(acc * sc3[:, :] + sh3[:, :])                 # valid rows {0,1,16,17}

    # ---- Conv4 (3x3x3, 64->64) + BN + ReLU : 9 banded matmuls, K=128, N=128 ----
    cv4[pl.ds(24, 2), :] = y3[0:2, :]
    cv4[pl.ds(40, 2), :] = y3[16:18, :]
    acc = jnp.zeros((18, 128), f32)
    for dt in range(3):
        for dh in range(3):
            xs = cv4[pl.ds(16 * dt + 7 + dh, 18), :]
            acc += jnp.dot(bf(xs), bw4[dt * 3 + dh], preferred_element_type=f32)
    y4 = relu(acc * sc4[:, :] + sh4[:, :])                 # valid rows {0,1,16,17}

    # ---- TrConv1 (4,1,1)/stride 2 + BN + ELU : 3 whole-sequence matmuls ----
    ct1[pl.ds(8, 2), :] = y4[0:2, :]                       # frame 0
    ct1[pl.ds(16, 2), :] = y4[16:18, :]                    # frame 1
    x0 = bf(ct1[pl.ds(8, 16), :])                          # x[j]
    xm = bf(ct1[pl.ds(0, 16), :])                          # x[j-1]
    xp = bf(ct1[pl.ds(16, 16), :])                         # x[j+1]
    p0 = jnp.dot(x0, wt1eo[...], preferred_element_type=f32)       # (16,256)
    ev = p0[:, 0:128] + jnp.dot(xm, wt1m[...], preferred_element_type=f32)
    od = p0[:, 128:256] + jnp.dot(xp, wt1p[...], preferred_element_type=f32)
    ev = elu(ev * sct1[:, :] + sht1[:, :])                 # frames 2j
    od = elu(od * sct1[:, :] + sht1[:, :])                 # frames 2j+1

    # ---- TrConv2 ----
    ct2[pl.ds(8, 2), :] = ev[0:2, :]                       # frame 0
    ct2[pl.ds(16, 2), :] = od[0:2, :]                      # frame 1
    ct2[pl.ds(24, 2), :] = ev[8:10, :]                     # frame 2
    ct2[pl.ds(32, 2), :] = od[8:10, :]                     # frame 3
    x0 = bf(ct2[pl.ds(8, 32), :])
    xm = bf(ct2[pl.ds(0, 32), :])
    xp = bf(ct2[pl.ds(16, 32), :])
    p0 = jnp.dot(x0, wt2eo[...], preferred_element_type=f32)       # (32,256)
    ev = p0[:, 0:128] + jnp.dot(xm, wt2m[...], preferred_element_type=f32)
    od = p0[:, 128:256] + jnp.dot(xp, wt2p[...], preferred_element_type=f32)
    ev = elu(ev * sct2[:, :] + sht2[:, :])                 # (32,128) frames 2j'
    od = elu(od * sct2[:, :] + sht2[:, :])                 # frames 2j'+1

    # ---- poolspa (spatial mean) + ConvBlock5 (1x1x1, 64->1) ----
    ve = jnp.dot(ev, w5r[...], preferred_element_type=f32)         # (32,1)
    vo = jnp.dot(od, w5r[...], preferred_element_type=f32)
    oe = jnp.dot(srow[...], ve, preferred_element_type=f32) + b5[:, :]   # (4,1)
    oo = jnp.dot(srow[...], vo, preferred_element_type=f32) + b5[:, :]
    o_ref[0, 0, :, :] = oe                                  # even frames
    o_ref[0, 1, :, :] = oo                                  # odd frames


# ----------------------------------------------------------------------------
# Glue: weight preparation (banded matmul form, pooling selections, BN fold).
# ----------------------------------------------------------------------------
def _banded_weight(k, w_size, pw):
    """k: (KH, KW, Cin, Cout) -> (KH, w_size*Cin, w_size*Cout) 'same' conv in W."""
    KH, KW, Cin, Cout = k.shape
    wi = jnp.arange(w_size)[:, None]
    wo = jnp.arange(w_size)[None, :]
    dw = wi - wo + pw
    valid = (dw >= 0) & (dw < KW)
    g = jnp.take(k, jnp.clip(dw, 0, KW - 1), axis=1)       # (KH, wi, wo, Cin, Cout)
    g = jnp.where(valid[None, :, :, None, None], g, 0.0)
    g = jnp.transpose(g, (0, 1, 3, 2, 4))                  # (KH, wi, Cin, wo, Cout)
    return g.reshape(KH, w_size * Cin, w_size * Cout)


def _pool_col_perm(w_size, cout, pool_w):
    """Column order (w % pool_w, w // pool_w, c) so W-pooling = max of slabs."""
    wb = w_size // pool_w
    order = np.zeros(w_size * cout, dtype=np.int32)
    for p in range(pool_w):
        for q in range(wb):
            w = q * pool_w + p
            dst = (p * wb + q) * cout
            order[dst:dst + cout] = np.arange(w * cout, (w + 1) * cout)
    return jnp.asarray(order)


def _pool1_sel():
    S = np.zeros((4, 32, 128), np.float32)
    for dt in range(2):
        for dh in range(2):
            k = dt * 2 + dh
            for t1 in range(4):
                for h1 in range(8):
                    S[k, t1 * 8 + h1, (2 * t1 + dt) * 16 + (2 * h1 + dh)] = 1.0
    return jnp.asarray(S, BF16)


def _pool2_sel():
    S = np.zeros((2, 8, 2, 32), np.float32)
    for t2 in range(2):
        for dt in range(2):
            for dh in range(4):
                k = dt * 4 + dh
                for h2 in range(2):
                    S[t2, k, h2, (2 * t2 + dt) * 8 + (4 * h2 + dh)] = 1.0
    return jnp.asarray(S, BF16)


def _srow():
    S = np.zeros((4, 32), np.float32)
    for j in range(4):
        S[j, 8 * j] = 1.0
        S[j, 8 * j + 1] = 1.0
    return jnp.asarray(S)


def _blockdiag2(m):
    c = m.shape[0]
    z = jnp.zeros((2 * c, 2 * c), m.dtype)
    z = z.at[:c, :c].set(m)
    z = z.at[c:, c:].set(m)
    return z


def _bn_cols(bias, c, reps, eps=1e-5):
    # TODO(synk): eval-mode BN with synthetic stats (gamma=1, beta=0, mean=0, var=1).
    scale = 1.0 / jnp.sqrt(jnp.ones((c,), F32) + eps)
    shift = bias.astype(F32) * scale
    return (jnp.tile(scale, reps).reshape(1, c * reps),
            jnp.tile(shift, reps).reshape(1, c * reps))


def init_params(key):
    ks = jax.random.split(key, 14)

    def w_init(k, shape):
        fan_in = float(np.prod(shape[1:]))
        return (jax.random.normal(k, shape, F32) / np.sqrt(fan_in)).astype(F32)

    def b_init(k, n):
        return (0.01 * jax.random.normal(k, (n,), F32)).astype(F32)

    p = {}
    p["w1"] = w_init(ks[0], (16, 3, 1, 5, 5));   p["b1"] = b_init(ks[1], 16)
    p["w2"] = w_init(ks[2], (32, 16, 1, 5, 5));  p["b2"] = b_init(ks[3], 32)
    p["w3"] = w_init(ks[4], (64, 32, 3, 3, 3));  p["b3"] = b_init(ks[5], 64)
    p["w4"] = w_init(ks[6], (64, 64, 3, 3, 3));  p["b4"] = b_init(ks[7], 64)
    p["wt1"] = w_init(ks[8], (64, 64, 4, 1, 1)); p["bt1"] = b_init(ks[9], 64)
    p["wt2"] = w_init(ks[10], (64, 64, 4, 1, 1)); p["bt2"] = b_init(ks[11], 64)
    p["w5"] = w_init(ks[12], (1, 64, 1, 1, 1));  p["b5"] = b_init(ks[13], 1)
    return p


# ----------------------------------------------------------------------------
# Full forward pass (frames == input T == 8, H = W = 16).
# ----------------------------------------------------------------------------
def n3ded64_forward(x_ncdhw, params):
    N, _, T, H, W = x_ncdhw.shape
    assert (T, H, W) == (8, 16, 16), "kernel is specialised to T=8, H=W=16"

    # Input: keep first 3 channels, channels-last, flatten (W, C) into lanes.
    x = x_ncdhw[:, :3].astype(F32)
    x = jnp.transpose(x, (0, 2, 3, 4, 1)).reshape(N, T, H, W * 3)   # (N,8,16,48)

    # Conv weights -> banded matmul form (bf16), columns grouped for the pools.
    w1 = jnp.transpose(params["w1"][:, :, 0], (2, 3, 1, 0))          # (5,5,3,16)
    w2 = jnp.transpose(params["w2"][:, :, 0], (2, 3, 1, 0))          # (5,5,16,32)
    w3 = jnp.transpose(params["w3"], (2, 3, 4, 1, 0)).reshape(9, 3, 32, 64)
    w4 = jnp.transpose(params["w4"], (2, 3, 4, 1, 0)).reshape(9, 3, 64, 64)
    bw1 = _banded_weight(w1, 16, 2)[:, :, _pool_col_perm(16, 16, 2)].astype(BF16)
    bw2 = _banded_weight(w2, 8, 2)[:, :, _pool_col_perm(8, 32, 4)].astype(BF16)
    bw3 = _banded_weight(w3, 2, 1).astype(BF16)
    bw4 = _banded_weight(w4, 2, 1).astype(BF16)

    sc1, sh1 = _bn_cols(params["b1"], 16, 16)
    sc2, sh2 = _bn_cols(params["b2"], 32, 8)
    sc3, sh3 = _bn_cols(params["b3"], 64, 2)
    sc4, sh4 = _bn_cols(params["b4"], 64, 2)
    sct1, sht1 = _bn_cols(params["bt1"], 64, 2)
    sct2, sht2 = _bn_cols(params["bt2"], 64, 2)

    # Transposed-conv weights: block-diag over the 2 spatial-w lane blocks,
    # even|odd taps concatenated into a lane-dense (128,256) weight.
    def tr_weights(wt):
        wk = [wt[:, :, i, 0, 0] for i in range(4)]                  # (Cin,Cout)
        eo = jnp.concatenate([_blockdiag2(wk[1]), _blockdiag2(wk[2])], axis=1)
        return (eo.astype(BF16),
                _blockdiag2(wk[3]).astype(BF16),
                _blockdiag2(wk[0]).astype(BF16))

    wt1eo, wt1m, wt1p = tr_weights(params["wt1"])
    wt2eo, wt2m, wt2p = tr_weights(params["wt2"])

    sel1 = _pool1_sel()
    sel2 = _pool2_sel()
    w5r = (jnp.tile(params["w5"][0, :, 0, 0, 0], 2) * 0.25).reshape(128, 1)
    srow = _srow()
    b5 = params["b5"].reshape(1, 1).astype(F32)

    b2 = lambda n: (0, 0)
    b3 = lambda n: (0, 0, 0)
    b4 = lambda n: (0, 0, 0, 0)

    in_specs = [
        pl.BlockSpec((1, 8, 16, 48), lambda n: (n, 0, 0, 0)),
        pl.BlockSpec(bw1.shape, b3), pl.BlockSpec((1, 256), b2), pl.BlockSpec((1, 256), b2),
        pl.BlockSpec(sel1.shape, b3),
        pl.BlockSpec(bw2.shape, b3), pl.BlockSpec((1, 256), b2), pl.BlockSpec((1, 256), b2),
        pl.BlockSpec(sel2.shape, b4),
        pl.BlockSpec(bw3.shape, b3), pl.BlockSpec((1, 128), b2), pl.BlockSpec((1, 128), b2),
        pl.BlockSpec(bw4.shape, b3), pl.BlockSpec((1, 128), b2), pl.BlockSpec((1, 128), b2),
        pl.BlockSpec((128, 256), b2), pl.BlockSpec((128, 128), b2), pl.BlockSpec((128, 128), b2),
        pl.BlockSpec((1, 128), b2), pl.BlockSpec((1, 128), b2),
        pl.BlockSpec((128, 256), b2), pl.BlockSpec((128, 128), b2), pl.BlockSpec((128, 128), b2),
        pl.BlockSpec((1, 128), b2), pl.BlockSpec((1, 128), b2),
        pl.BlockSpec((128, 1), b2), pl.BlockSpec((4, 32), b2), pl.BlockSpec((1, 1), b2),
    ]

    scratch = [
        pltpu.VMEM((8, 26, 48), F32),     # conv1 H-padded canvas
        pltpu.VMEM((4, 18, 128), F32),    # conv2 H-padded canvas
        pltpu.VMEM((64, 64), F32),        # conv3 (T,H)-padded canvas (16-row blocks)
        pltpu.VMEM((64, 128), F32),       # conv4 (T,H)-padded canvas
        pltpu.VMEM((32, 128), F32),       # trconv1 time-padded canvas
        pltpu.VMEM((48, 128), F32),       # trconv2 time-padded canvas
    ]

    out = pl.pallas_call(
        _n3ded64_kernel,
        out_shape=jax.ShapeDtypeStruct((N, 2, 4, 1), F32),
        grid=(N,),
        in_specs=in_specs,
        out_specs=pl.BlockSpec((1, 2, 4, 1), lambda n: (n, 0, 0, 0)),
        scratch_shapes=scratch,
        compiler_params=pltpu.CompilerParams(
            dimension_semantics=("parallel",),
            vmem_limit_bytes=16 * 1024 * 1024,
        ),
    )(x,
      bw1, sc1, sh1, sel1,
      bw2, sc2, sh2, sel2,
      bw3, sc3, sh3,
      bw4, sc4, sh4,
      wt1eo, wt1m, wt1p, sct1, sht1,
      wt2eo, wt2m, wt2p, sct2, sht2,
      w5r, srow, b5)

    # (N, parity, j) -> frame f = 2*j + parity
    out = out.reshape(N, 2, 4)
    rppg = jnp.transpose(out, (0, 2, 1)).reshape(N, 8)
    return rppg


if __name__ == "__main__":
    key = jax.random.PRNGKey(0)
    k_in, k_par = jax.random.split(key)

    # Small shapes: N=2, input channels=4 (forward keeps first 3),
    # T=frames=8, H=W=16.
    N, C_in, T, H, W = 2, 4, 8, 16, 16
    x = jax.random.normal(k_in, (N, C_in, T, H, W), F32)
    params = init_params(k_par)

    fwd = jax.jit(n3ded64_forward)
    rppg = jax.block_until_ready(fwd(x, params))

    assert rppg.shape == (N, T), rppg.shape
    assert bool(jnp.all(jnp.isfinite(rppg)))
    print("KERNEL_OK")
</pallas_src>

<mosaic_0001>
module attributes {stable_mosaic.version = 11 : i64} {
  func.func @_n3ded64_kernel(%arg0: i32, %arg1: memref<1x8x16x48xf32, #tpu.memory_space<vmem>>, %arg2: memref<5x48x256xbf16, #tpu.memory_space<vmem>>, %arg3: memref<1x256xf32, #tpu.memory_space<vmem>>, %arg4: memref<1x256xf32, #tpu.memory_space<vmem>>, %arg5: memref<4x32x128xbf16, #tpu.memory_space<vmem>>, %arg6: memref<5x128x256xbf16, #tpu.memory_space<vmem>>, %arg7: memref<1x256xf32, #tpu.memory_space<vmem>>, %arg8: memref<1x256xf32, #tpu.memory_space<vmem>>, %arg9: memref<2x8x2x32xbf16, #tpu.memory_space<vmem>>, %arg10: memref<9x64x128xbf16, #tpu.memory_space<vmem>>, %arg11: memref<1x128xf32, #tpu.memory_space<vmem>>, %arg12: memref<1x128xf32, #tpu.memory_space<vmem>>, %arg13: memref<9x128x128xbf16, #tpu.memory_space<vmem>>, %arg14: memref<1x128xf32, #tpu.memory_space<vmem>>, %arg15: memref<1x128xf32, #tpu.memory_space<vmem>>, %arg16: memref<128x256xbf16, #tpu.memory_space<vmem>>, %arg17: memref<128x128xbf16, #tpu.memory_space<vmem>>, %arg18: memref<128x128xbf16, #tpu.memory_space<vmem>>, %arg19: memref<1x128xf32, #tpu.memory_space<vmem>>, %arg20: memref<1x128xf32, #tpu.memory_space<vmem>>, %arg21: memref<128x256xbf16, #tpu.memory_space<vmem>>, %arg22: memref<128x128xbf16, #tpu.memory_space<vmem>>, %arg23: memref<128x128xbf16, #tpu.memory_space<vmem>>, %arg24: memref<1x128xf32, #tpu.memory_space<vmem>>, %arg25: memref<1x128xf32, #tpu.memory_space<vmem>>, %arg26: memref<128x1xf32, #tpu.memory_space<vmem>>, %arg27: memref<4x32xf32, #tpu.memory_space<vmem>>, %arg28: memref<1x1xf32, #tpu.memory_space<vmem>>, %arg29: memref<1x2x4x1xf32, #tpu.memory_space<vmem>>, %arg30: memref<8x26x48xf32, #tpu.memory_space<vmem>>, %arg31: memref<4x18x128xf32, #tpu.memory_space<vmem>>, %arg32: memref<64x64xf32, #tpu.memory_space<vmem>>, %arg33: memref<64x128xf32, #tpu.memory_space<vmem>>, %arg34: memref<32x128xf32, #tpu.memory_space<vmem>>, %arg35: memref<48x128xf32, #tpu.memory_space<vmem>>) attributes {dimension_semantics = [#tpu.dimension_semantics<parallel>], iteration_bounds = array<i64: 2>, scalar_prefetch = 0 : i64, scratch_operands = 6 : i64, tpu.core_type = #tpu.core_type<tc>, window_params = [{transform_indices = @transform_0, window_bounds = array<i64: 1, 8, 16, 48>}, {pipeline_mode = #tpu.pipeline_mode<synchronous>, transform_indices = @transform_1, window_bounds = array<i64: 5, 48, 256>}, {pipeline_mode = #tpu.pipeline_mode<synchronous>, transform_indices = @transform_2, window_bounds = array<i64: 1, 256>}, {pipeline_mode = #tpu.pipeline_mode<synchronous>, transform_indices = @transform_3, window_bounds = array<i64: 1, 256>}, {pipeline_mode = #tpu.pipeline_mode<synchronous>, transform_indices = @transform_4, window_bounds = array<i64: 4, 32, 128>}, {pipeline_mode = #tpu.pipeline_mode<synchronous>, transform_indices = @transform_5, window_bounds = array<i64: 5, 128, 256>}, {pipeline_mode = #tpu.pipeline_mode<synchronous>, transform_indices = @transform_6, window_bounds = array<i64: 1, 256>}, {pipeline_mode = #tpu.pipeline_mode<synchronous>, transform_indices = @transform_7, window_bounds = array<i64: 1, 256>}, {pipeline_mode = #tpu.pipeline_mode<synchronous>, transform_indices = @transform_8, window_bounds = array<i64: 2, 8, 2, 32>}, {pipeline_mode = #tpu.pipeline_mode<synchronous>, transform_indices = @transform_9, window_bounds = array<i64: 9, 64, 128>}, {pipeline_mode = #tpu.pipeline_mode<synchronous>, transform_indices = @transform_10, window_bounds = array<i64: 1, 128>}, {pipeline_mode = #tpu.pipeline_mode<synchronous>, transform_indices = @transform_11, window_bounds = array<i64: 1, 128>}, {pipeline_mode = #tpu.pipeline_mode<synchronous>, transform_indices = @transform_12, window_bounds = array<i64: 9, 128, 128>}, {pipeline_mode = #tpu.pipeline_mode<synchronous>, transform_indices = @transform_13, window_bounds = array<i64: 1, 128>}, {pipeline_mode = #tpu.pipeline_mode<synchronous>, transform_indices = @transform_14, window_bounds = array<i64: 1, 128>}, {pipeline_mode = #tpu.pipeline_mode<synchronous>, transform_indices = @transform_15, window_bounds = array<i64: 128, 256>}, {pipeline_mode = #tpu.pipeline_mode<synchronous>, transform_indices = @transform_16, window_bounds = array<i64: 128, 128>}, {pipeline_mode = #tpu.pipeline_mode<synchronous>, transform_indices = @transform_17, window_bounds = array<i64: 128, 128>}, {pipeline_mode = #tpu.pipeline_mode<synchronous>, transform_indices = @transform_18, window_bounds = array<i64: 1, 128>}, {pipeline_mode = #tpu.pipeline_mode<synchronous>, transform_indices = @transform_19, window_bounds = array<i64: 1, 128>}, {pipeline_mode = #tpu.pipeline_mode<synchronous>, transform_indices = @transform_20, window_bounds = array<i64: 128, 256>}, {pipeline_mode = #tpu.pipeline_mode<synchronous>, transform_indices = @transform_21, window_bounds = array<i64: 128, 128>}, {pipeline_mode = #tpu.pipeline_mode<synchronous>, transform_indices = @transform_22, window_bounds = array<i64: 128, 128>}, {pipeline_mode = #tpu.pipeline_mode<synchronous>, transform_indices = @transform_23, window_bounds = array<i64: 1, 128>}, {pipeline_mode = #tpu.pipeline_mode<synchronous>, transform_indices = @transform_24, window_bounds = array<i64: 1, 128>}, {pipeline_mode = #tpu.pipeline_mode<synchronous>, transform_indices = @transform_25, window_bounds = array<i64: 128, 1>}, {pipeline_mode = #tpu.pipeline_mode<synchronous>, transform_indices = @transform_26, window_bounds = array<i64: 4, 32>}, {pipeline_mode = #tpu.pipeline_mode<synchronous>, transform_indices = @transform_27, window_bounds = array<i64: 1, 1>}, {transform_indices = @transform_28, window_bounds = array<i64: 1, 2, 4, 1>}]} {
    %cst = arith.constant 0.000000e+00 : f32
    %0 = vector.broadcast %cst : f32 to vector<8x26x48xf32>
    %c0 = arith.constant 0 : index
    %c0_0 = arith.constant 0 : index
    %c0_1 = arith.constant 0 : index
    %1 = vector.load %arg30[%c0, %c0_0, %c0_1] : memref<8x26x48xf32, #tpu.memory_space<vmem>>, vector<8x26x48xf32>
    tpu.vector_store %arg30[%c0, %c0_0, %c0_1], %0 {strides = array<i32>} : memref<8x26x48xf32, #tpu.memory_space<vmem>>, vector<8x26x48xf32>,
    %cst_2 = arith.constant 0.000000e+00 : f32
    %2 = vector.broadcast %cst_2 : f32 to vector<4x18x128xf32>
    %c0_3 = arith.constant 0 : index
    %c0_4 = arith.constant 0 : index
    %c0_5 = arith.constant 0 : index
    %3 = vector.load %arg31[%c0_3, %c0_4, %c0_5] : memref<4x18x128xf32, #tpu.memory_space<vmem>>, vector<4x18x128xf32>
    tpu.vector_store %arg31[%c0_3, %c0_4, %c0_5], %2 {strides = array<i32>} : memref<4x18x128xf32, #tpu.memory_space<vmem>>, vector<4x18x128xf32>,
    %cst_6 = arith.constant 0.000000e+00 : f32
    %4 = vector.broadcast %cst_6 : f32 to vector<64x64xf32>
    %c0_7 = arith.constant 0 : index
    %c0_8 = arith.constant 0 : index
    %5 = vector.load %arg32[%c0_7, %c0_8] : memref<64x64xf32, #tpu.memory_space<vmem>>, vector<64x64xf32>
    tpu.vector_store %arg32[%c0_7, %c0_8], %4 {strides = array<i32>} : memref<64x64xf32, #tpu.memory_space<vmem>>, vector<64x64xf32>,
    %cst_9 = arith.constant 0.000000e+00 : f32
    %6 = vector.broadcast %cst_9 : f32 to vector<64x128xf32>
    %c0_10 = arith.constant 0 : index
    %c0_11 = arith.constant 0 : index
    %7 = vector.load %arg33[%c0_10, %c0_11] : memref<64x128xf32, #tpu.memory_space<vmem>>, vector<64x128xf32>
    tpu.vector_store %arg33[%c0_10, %c0_11], %6 {strides = array<i32>} : memref<64x128xf32, #tpu.memory_space<vmem>>, vector<64x128xf32>,
    %cst_12 = arith.constant 0.000000e+00 : f32
    %8 = vector.broadcast %cst_12 : f32 to vector<32x128xf32>
    %c0_13 = arith.constant 0 : index
    %c0_14 = arith.constant 0 : index
    %9 = vector.load %arg34[%c0_13, %c0_14] : memref<32x128xf32, #tpu.memory_space<vmem>>, vector<32x128xf32>
    tpu.vector_store %arg34[%c0_13, %c0_14], %8 {strides = array<i32>} : memref<32x128xf32, #tpu.memory_space<vmem>>, vector<32x128xf32>,
    %cst_15 = arith.constant 0.000000e+00 : f32
    %10 = vector.broadcast %cst_15 : f32 to vector<48x128xf32>
    %c0_16 = arith.constant 0 : index
    %c0_17 = arith.constant 0 : index
    %11 = vector.load %arg35[%c0_16, %c0_17] : memref<48x128xf32, #tpu.memory_space<vmem>>, vector<48x128xf32>
    tpu.vector_store %arg35[%c0_16, %c0_17], %10 {strides = array<i32>} : memref<48x128xf32, #tpu.memory_space<vmem>>, vector<48x128xf32>,
    %c0_18 = arith.constant 0 : index
    %c0_19 = arith.constant 0 : index
    %c0_20 = arith.constant 0 : index
    %c0_21 = arith.constant 0 : index
    %12 = vector.load %arg1[%c0_18, %c0_19, %c0_20, %c0_21] : memref<1x8x16x48xf32, #tpu.memory_space<vmem>>, vector<1x8x16x48xf32>
    %13 = vector.shape_cast %12 : vector<1x8x16x48xf32> to vector<8x16x48xf32>
    %c0_22 = arith.constant 0 : index
    %c8 = arith.constant 8 : index
    %c0_23 = arith.constant 0 : index
    %14 = vector.load %arg30[%c0_22, %c8, %c0_23] : memref<8x26x48xf32, #tpu.memory_space<vmem>>, vector<8x16x48xf32>
    tpu.vector_store %arg30[%c0_22, %c8, %c0_23], %13 {strides = array<i32>} : memref<8x26x48xf32, #tpu.memory_space<vmem>>, vector<8x16x48xf32>,
    %cst_24 = arith.constant 0.000000e+00 : f32
    %15 = vector.broadcast %cst_24 : f32 to vector<128x256xf32>
    %c0_25 = arith.constant 0 : index
    %c6 = arith.constant 6 : index
    %c0_26 = arith.constant 0 : index
    %16 = vector.load %arg30[%c0_25, %c6, %c0_26] : memref<8x26x48xf32, #tpu.memory_space<vmem>>, vector<8x16x48xf32>
    %17 = vector.shape_cast %16 : vector<8x16x48xf32> to vector<128x48xf32>
    %18 = arith.truncf %17 : vector<128x48xf32> to vector<128x48xbf16>
    %c0_27 = arith.constant 0 : index
    %c0_28 = arith.constant 0 : index
    %c0_29 = arith.constant 0 : index
    %19 = vector.load %arg2[%c0_27, %c0_28, %c0_29] : memref<5x48x256xbf16, #tpu.memory_space<vmem>>, vector<1x48x256xbf16>
    %20 = vector.shape_cast %19 : vector<1x48x256xbf16> to vector<48x256xbf16>
    %cst_30 = arith.constant dense<0.000000e+00> : vector<128x256xf32>
    %21 = tpu.matmul %18, %20, %cst_30 {dimension_numbers = #tpu.dot_dimension_numbers<[1], [0], [0], [1], [0, 0, 1, 1], [], []>} : vector<128x48xbf16>, vector<48x256xbf16>, vector<128x256xf32> -> vector<128x256xf32>
    %22 = arith.addf %15, %21 : vector<128x256xf32>
    %c0_31 = arith.constant 0 : index
    %c7 = arith.constant 7 : index
    %c0_32 = arith.constant 0 : index
    %23 = vector.load %arg30[%c0_31, %c7, %c0_32] : memref<8x26x48xf32, #tpu.memory_space<vmem>>, vector<8x16x48xf32>
    %24 = vector.shape_cast %23 : vector<8x16x48xf32> to vector<128x48xf32>
    %25 = arith.truncf %24 : vector<128x48xf32> to vector<128x48xbf16>
    %c1 = arith.constant 1 : index
    %c0_33 = arith.constant 0 : index
    %c0_34 = arith.constant 0 : index
    %26 = vector.load %arg2[%c1, %c0_33, %c0_34] : memref<5x48x256xbf16, #tpu.memory_space<vmem>>, vector<1x48x256xbf16>
    %27 = vector.shape_cast %26 : vector<1x48x256xbf16> to vector<48x256xbf16>
    %cst_35 = arith.constant dense<0.000000e+00> : vector<128x256xf32>
    %28 = tpu.matmul %25, %27, %cst_35 {dimension_numbers = #tpu.dot_dimension_numbers<[1], [0], [0], [1], [0, 0, 1, 1], [], []>} : vector<128x48xbf16>, vector<48x256xbf16>, vector<128x256xf32> -> vector<128x256xf32>
    %29 = arith.addf %22, %28 : vector<128x256xf32>
    %c0_36 = arith.constant 0 : index
    %c8_37 = arith.constant 8 : index
    %c0_38 = arith.constant 0 : index
    %30 = vector.load %arg30[%c0_36, %c8_37, %c0_38] : memref<8x26x48xf32, #tpu.memory_space<vmem>>, vector<8x16x48xf32>
    %31 = vector.shape_cast %30 : vector<8x16x48xf32> to vector<128x48xf32>
    %32 = arith.truncf %31 : vector<128x48xf32> to vector<128x48xbf16>
    %c2 = arith.constant 2 : index
    %c0_39 = arith.constant 0 : index
    %c0_40 = arith.constant 0 : index
    %33 = vector.load %arg2[%c2, %c0_39, %c0_40] : memref<5x48x256xbf16, #tpu.memory_space<vmem>>, vector<1x48x256xbf16>
    %34 = vector.shape_cast %33 : vector<1x48x256xbf16> to vector<48x256xbf16>
    %cst_41 = arith.constant dense<0.000000e+00> : vector<128x256xf32>
    %35 = tpu.matmul %32, %34, %cst_41 {dimension_numbers = #tpu.dot_dimension_numbers<[1], [0], [0], [1], [0, 0, 1, 1], [], []>} : vector<128x48xbf16>, vector<48x256xbf16>, vector<128x256xf32> -> vector<128x256xf32>
    %36 = arith.addf %29, %35 : vector<128x256xf32>
    %c0_42 = arith.constant 0 : index
    %c9 = arith.constant 9 : index
    %c0_43 = arith.constant 0 : index
    %37 = vector.load %arg30[%c0_42, %c9, %c0_43] : memref<8x26x48xf32, #tpu.memory_space<vmem>>, vector<8x16x48xf32>
    %38 = vector.shape_cast %37 : vector<8x16x48xf32> to vector<128x48xf32>
    %39 = arith.truncf %38 : vector<128x48xf32> to vector<128x48xbf16>
    %c3 = arith.constant 3 : index
    %c0_44 = arith.constant 0 : index
    %c0_45 = arith.constant 0 : index
    %40 = vector.load %arg2[%c3, %c0_44, %c0_45] : memref<5x48x256xbf16, #tpu.memory_space<vmem>>, vector<1x48x256xbf16>
    %41 = vector.shape_cast %40 : vector<1x48x256xbf16> to vector<48x256xbf16>
    %cst_46 = arith.constant dense<0.000000e+00> : vector<128x256xf32>
    %42 = tpu.matmul %39, %41, %cst_46 {dimension_numbers = #tpu.dot_dimension_numbers<[1], [0], [0], [1], [0, 0, 1, 1], [], []>} : vector<128x48xbf16>, vector<48x256xbf16>, vector<128x256xf32> -> vector<128x256xf32>
    %43 = arith.addf %36, %42 : vector<128x256xf32>
    %c0_47 = arith.constant 0 : index
    %c10 = arith.constant 10 : index
    %c0_48 = arith.constant 0 : index
    %44 = vector.load %arg30[%c0_47, %c10, %c0_48] : memref<8x26x48xf32, #tpu.memory_space<vmem>>, vector<8x16x48xf32>
    %45 = vector.shape_cast %44 : vector<8x16x48xf32> to vector<128x48xf32>
    %46 = arith.truncf %45 : vector<128x48xf32> to vector<128x48xbf16>
    %c4 = arith.constant 4 : index
    %c0_49 = arith.constant 0 : index
    %c0_50 = arith.constant 0 : index
    %47 = vector.load %arg2[%c4, %c0_49, %c0_50] : memref<5x48x256xbf16, #tpu.memory_space<vmem>>, vector<1x48x256xbf16>
    %48 = vector.shape_cast %47 : vector<1x48x256xbf16> to vector<48x256xbf16>
    %cst_51 = arith.constant dense<0.000000e+00> : vector<128x256xf32>
    %49 = tpu.matmul %46, %48, %cst_51 {dimension_numbers = #tpu.dot_dimension_numbers<[1], [0], [0], [1], [0, 0, 1, 1], [], []>} : vector<128x48xbf16>, vector<48x256xbf16>, vector<128x256xf32> -> vector<128x256xf32>
    %50 = arith.addf %43, %49 : vector<128x256xf32>
    %c0_52 = arith.constant 0 : index
    %c0_53 = arith.constant 0 : index
    %51 = vector.load %arg3[%c0_52, %c0_53] : memref<1x256xf32, #tpu.memory_space<vmem>>, vector<1x256xf32>
    %52 = vector.broadcast %51 : vector<1x256xf32> to vector<128x256xf32>
    %53 = arith.mulf %50, %52 : vector<128x256xf32>
    %c0_54 = arith.constant 0 : index
    %c0_55 = arith.constant 0 : index
    %54 = vector.load %arg4[%c0_54, %c0_55] : memref<1x256xf32, #tpu.memory_space<vmem>>, vector<1x256xf32>
    %55 = vector.broadcast %54 : vector<1x256xf32> to vector<128x256xf32>
    %56 = arith.addf %53, %55 : vector<128x256xf32>
    %cst_56 = arith.constant 0.000000e+00 : f32
    %57 = vector.broadcast %cst_56 : f32 to vector<128x256xf32>
    %58 = arith.maximumf %56, %57 : vector<128x256xf32>
    %59 = vector.extract_strided_slice %58 {offsets = [0, 0], sizes = [128, 128], strides = [1, 1]} : vector<128x256xf32> to vector<128x128xf32>
    %60 = vector.extract_strided_slice %58 {offsets = [0, 128], sizes = [128, 128], strides = [1, 1]} : vector<128x256xf32> to vector<128x128xf32>
    %61 = arith.maximumf %59, %60 : vector<128x128xf32>
    %62 = arith.truncf %61 : vector<128x128xf32> to vector<128x128xbf16>
    %c0_57 = arith.constant 0 : index
    %c0_58 = arith.constant 0 : index
    %c0_59 = arith.constant 0 : index
    %63 = vector.load %arg5[%c0_57, %c0_58, %c0_59] : memref<4x32x128xbf16, #tpu.memory_space<vmem>>, vector<1x32x128xbf16>
    %64 = vector.shape_cast %63 : vector<1x32x128xbf16> to vector<32x128xbf16>
    %cst_60 = arith.constant dense<0.000000e+00> : vector<32x128xf32>
    %65 = tpu.matmul %64, %62, %cst_60 {dimension_numbers = #tpu.dot_dimension_numbers<[1], [0], [0], [1], [0, 0, 1, 1], [], []>} : vector<32x128xbf16>, vector<128x128xbf16>, vector<32x128xf32> -> vector<32x128xf32>
    %c1_61 = arith.constant 1 : index
    %c0_62 = arith.constant 0 : index
    %c0_63 = arith.constant 0 : index
    %66 = vector.load %arg5[%c1_61, %c0_62, %c0_63] : memref<4x32x128xbf16, #tpu.memory_space<vmem>>, vector<1x32x128xbf16>
    %67 = vector.shape_cast %66 : vector<1x32x128xbf16> to vector<32x128xbf16>
    %cst_64 = arith.constant dense<0.000000e+00> : vector<32x128xf32>
    %68 = tpu.matmul %67, %62, %cst_64 {dimension_numbers = #tpu.dot_dimension_numbers<[1], [0], [0], [1], [0, 0, 1, 1], [], []>} : vector<32x128xbf16>, vector<128x128xbf16>, vector<32x128xf32> -> vector<32x128xf32>
    %69 = arith.maximumf %65, %68 : vector<32x128xf32>
    %c2_65 = arith.constant 2 : index
    %c0_66 = arith.constant 0 : index
    %c0_67 = arith.constant 0 : index
    %70 = vector.load %arg5[%c2_65, %c0_66, %c0_67] : memref<4x32x128xbf16, #tpu.memory_space<vmem>>, vector<1x32x128xbf16>
    %71 = vector.shape_cast %70 : vector<1x32x128xbf16> to vector<32x128xbf16>
    %cst_68 = arith.constant dense<0.000000e+00> : vector<32x128xf32>
    %72 = tpu.matmul %71, %62, %cst_68 {dimension_numbers = #tpu.dot_dimension_numbers<[1], [0], [0], [1], [0, 0, 1, 1], [], []>} : vector<32x128xbf16>, vector<128x128xbf16>, vector<32x128xf32> -> vector<32x128xf32>
    %73 = arith.maximumf %69, %72 : vector<32x128xf32>
    %c3_69 = arith.constant 3 : index
    %c0_70 = arith.constant 0 : index
    %c0_71 = arith.constant 0 : index
    %74 = vector.load %arg5[%c3_69, %c0_70, %c0_71] : memref<4x32x128xbf16, #tpu.memory_space<vmem>>, vector<1x32x128xbf16>
    %75 = vector.shape_cast %74 : vector<1x32x128xbf16> to vector<32x128xbf16>
    %cst_72 = arith.constant dense<0.000000e+00> : vector<32x128xf32>
    %76 = tpu.matmul %75, %62, %cst_72 {dimension_numbers = #tpu.dot_dimension_numbers<[1], [0], [0], [1], [0, 0, 1, 1], [], []>} : vector<32x128xbf16>, vector<128x128xbf16>, vector<32x128xf32> -> vector<32x128xf32>
    %77 = arith.maximumf %73, %76 : vector<32x128xf32>
    %78 = vector.extract_strided_slice %77 {offsets = [0, 0], sizes = [8, 128], strides = [1, 1]} : vector<32x128xf32> to vector<8x128xf32>
    %c0_73 = arith.constant 0 : index
    %c8_74 = arith.constant 8 : index
    %c0_75 = arith.constant 0 : index
    %79 = vector.load %arg31[%c0_73, %c8_74, %c0_75] : memref<4x18x128xf32, #tpu.memory_space<vmem>>, vector<1x8x128xf32>
    %80 = vector.shape_cast %79 : vector<1x8x128xf32> to vector<8x128xf32>
    %81 = vector.shape_cast %78 : vector<8x128xf32> to vector<1x8x128xf32>
    tpu.vector_store %arg31[%c0_73, %c8_74, %c0_75], %81 {strides = array<i32>} : memref<4x18x128xf32, #tpu.memory_space<vmem>>, vector<1x8x128xf32>,
    %82 = vector.extract_strided_slice %77 {offsets = [8, 0], sizes = [8, 128], strides = [1, 1]} : vector<32x128xf32> to vector<8x128xf32>
    %c1_76 = arith.constant 1 : index
    %c8_77 = arith.constant 8 : index
    %c0_78 = arith.constant 0 : index
    %83 = vector.load %arg31[%c1_76, %c8_77, %c0_78] : memref<4x18x128xf32, #tpu.memory_space<vmem>>, vector<1x8x128xf32>
    %84 = vector.shape_cast %83 : vector<1x8x128xf32> to vector<8x128xf32>
    %85 = vector.shape_cast %82 : vector<8x128xf32> to vector<1x8x128xf32>
    tpu.vector_store %arg31[%c1_76, %c8_77, %c0_78], %85 {strides = array<i32>} : memref<4x18x128xf32, #tpu.memory_space<vmem>>, vector<1x8x128xf32>,
    %86 = vector.extract_strided_slice %77 {offsets = [16, 0], sizes = [8, 128], strides = [1, 1]} : vector<32x128xf32> to vector<8x128xf32>
    %c2_79 = arith.constant 2 : index
    %c8_80 = arith.constant 8 : index
    %c0_81 = arith.constant 0 : index
    %87 = vector.load %arg31[%c2_79, %c8_80, %c0_81] : memref<4x18x128xf32, #tpu.memory_space<vmem>>, vector<1x8x128xf32>
    %88 = vector.shape_cast %87 : vector<1x8x128xf32> to vector<8x128xf32>
    %89 = vector.shape_cast %86 : vector<8x128xf32> to vector<1x8x128xf32>
    tpu.vector_store %arg31[%c2_79, %c8_80, %c0_81], %89 {strides = array<i32>} : memref<4x18x128xf32, #tpu.memory_space<vmem>>, vector<1x8x128xf32>,
    %90 = vector.extract_strided_slice %77 {offsets = [24, 0], sizes = [8, 128], strides = [1, 1]} : vector<32x128xf32> to vector<8x128xf32>
    %c3_82 = arith.constant 3 : index
    %c8_83 = arith.constant 8 : index
    %c0_84 = arith.constant 0 : index
    %91 = vector.load %arg31[%c3_82, %c8_83, %c0_84] : memref<4x18x128xf32, #tpu.memory_space<vmem>>, vector<1x8x128xf32>
    %92 = vector.shape_cast %91 : vector<1x8x128xf32> to vector<8x128xf32>
    %93 = vector.shape_cast %90 : vector<8x128xf32> to vector<1x8x128xf32>
    tpu.vector_store %arg31[%c3_82, %c8_83, %c0_84], %93 {strides = array<i32>} : memref<4x18x128xf32, #tpu.memory_space<vmem>>, vector<1x8x128xf32>,
    %cst_85 = arith.constant 0.000000e+00 : f32
    %94 = vector.broadcast %cst_85 : f32 to vector<32x256xf32>
    %c0_86 = arith.constant 0 : index
    %c6_87 = arith.constant 6 : index
    %c0_88 = arith.constant 0 : index
    %95 = vector.load %arg31[%c0_86, %c6_87, %c0_88] : memref<4x18x128xf32, #tpu.memory_space<vmem>>, vector<4x8x128xf32>
    %96 = vector.shape_cast %95 : vector<4x8x128xf32> to vector<32x128xf32>
    %97 = arith.truncf %96 : vector<32x128xf32> to vector<32x128xbf16>
    %c0_89 = arith.constant 0 : index
    %c0_90 = arith.constant 0 : index
    %c0_91 = arith.constant 0 : index
    %98 = vector.load %arg6[%c0_89, %c0_90, %c0_91] : memref<5x128x256xbf16, #tpu.memory_space<vmem>>, vector<1x128x256xbf16>
    %99 = vector.shape_cast %98 : vector<1x128x256xbf16> to vector<128x256xbf16>
    %cst_92 = arith.constant dense<0.000000e+00> : vector<32x256xf32>
    %100 = tpu.matmul %97, %99, %cst_92 {dimension_numbers = #tpu.dot_dimension_numbers<[1], [0], [0], [1], [0, 0, 1, 1], [], []>} : vector<32x128xbf16>, vector<128x256xbf16>, vector<32x256xf32> -> vector<32x256xf32>
    %101 = arith.addf %94, %100 : vector<32x256xf32>
    %c0_93 = arith.constant 0 : index
    %c7_94 = arith.constant 7 : index
    %c0_95 = arith.constant 0 : index
    %102 = vector.load %arg31[%c0_93, %c7_94, %c0_95] : memref<4x18x128xf32, #tpu.memory_space<vmem>>, vector<4x8x128xf32>
    %103 = vector.shape_cast %102 : vector<4x8x128xf32> to vector<32x128xf32>
    %104 = arith.truncf %103 : vector<32x128xf32> to vector<32x128xbf16>
    %c1_96 = arith.constant 1 : index
    %c0_97 = arith.constant 0 : index
    %c0_98 = arith.constant 0 : index
    %105 = vector.load %arg6[%c1_96, %c0_97, %c0_98] : memref<5x128x256xbf16, #tpu.memory_space<vmem>>, vector<1x128x256xbf16>
    %106 = vector.shape_cast %105 : vector<1x128x256xbf16> to vector<128x256xbf16>
    %cst_99 = arith.constant dense<0.000000e+00> : vector<32x256xf32>
    %107 = tpu.matmul %104, %106, %cst_99 {dimension_numbers = #tpu.dot_dimension_numbers<[1], [0], [0], [1], [0, 0, 1, 1], [], []>} : vector<32x128xbf16>, vector<128x256xbf16>, vector<32x256xf32> -> vector<32x256xf32>
    %108 = arith.addf %101, %107 : vector<32x256xf32>
    %c0_100 = arith.constant 0 : index
    %c8_101 = arith.constant 8 : index
    %c0_102 = arith.constant 0 : index
    %109 = vector.load %arg31[%c0_100, %c8_101, %c0_102] : memref<4x18x128xf32, #tpu.memory_space<vmem>>, vector<4x8x128xf32>
    %110 = vector.shape_cast %109 : vector<4x8x128xf32> to vector<32x128xf32>
    %111 = arith.truncf %110 : vector<32x128xf32> to vector<32x128xbf16>
    %c2_103 = arith.constant 2 : index
    %c0_104 = arith.constant 0 : index
    %c0_105 = arith.constant 0 : index
    %112 = vector.load %arg6[%c2_103, %c0_104, %c0_105] : memref<5x128x256xbf16, #tpu.memory_space<vmem>>, vector<1x128x256xbf16>
    %113 = vector.shape_cast %112 : vector<1x128x256xbf16> to vector<128x256xbf16>
    %cst_106 = arith.constant dense<0.000000e+00> : vector<32x256xf32>
    %114 = tpu.matmul %111, %113, %cst_106 {dimension_numbers = #tpu.dot_dimension_numbers<[1], [0], [0], [1], [0, 0, 1, 1], [], []>} : vector<32x128xbf16>, vector<128x256xbf16>, vector<32x256xf32> -> vector<32x256xf32>
    %115 = arith.addf %108, %114 : vector<32x256xf32>
    %c0_107 = arith.constant 0 : index
    %c9_108 = arith.constant 9 : index
    %c0_109 = arith.constant 0 : index
    %116 = vector.load %arg31[%c0_107, %c9_108, %c0_109] : memref<4x18x128xf32, #tpu.memory_space<vmem>>, vector<4x8x128xf32>
    %117 = vector.shape_cast %116 : vector<4x8x128xf32> to vector<32x128xf32>
    %118 = arith.truncf %117 : vector<32x128xf32> to vector<32x128xbf16>
    %c3_110 = arith.constant 3 : index
    %c0_111 = arith.constant 0 : index
    %c0_112 = arith.constant 0 : index
    %119 = vector.load %arg6[%c3_110, %c0_111, %c0_112] : memref<5x128x256xbf16, #tpu.memory_space<vmem>>, vector<1x128x256xbf16>
    %120 = vector.shape_cast %119 : vector<1x128x256xbf16> to vector<128x256xbf16>
    %cst_113 = arith.constant dense<0.000000e+00> : vector<32x256xf32>
    %121 = tpu.matmul %118, %120, %cst_113 {dimension_numbers = #tpu.dot_dimension_numbers<[1], [0], [0], [1], [0, 0, 1, 1], [], []>} : vector<32x128xbf16>, vector<128x256xbf16>, vector<32x256xf32> -> vector<32x256xf32>
    %122 = arith.addf %115, %121 : vector<32x256xf32>
    %c0_114 = arith.constant 0 : index
    %c10_115 = arith.constant 10 : index
    %c0_116 = arith.constant 0 : index
    %123 = vector.load %arg31[%c0_114, %c10_115, %c0_116] : memref<4x18x128xf32, #tpu.memory_space<vmem>>, vector<4x8x128xf32>
    %124 = vector.shape_cast %123 : vector<4x8x128xf32> to vector<32x128xf32>
    %125 = arith.truncf %124 : vector<32x128xf32> to vector<32x128xbf16>
    %c4_117 = arith.constant 4 : index
    %c0_118 = arith.constant 0 : index
    %c0_119 = arith.constant 0 : index
    %126 = vector.load %arg6[%c4_117, %c0_118, %c0_119] : memref<5x128x256xbf16, #tpu.memory_space<vmem>>, vector<1x128x256xbf16>
    %127 = vector.shape_cast %126 : vector<1x128x256xbf16> to vector<128x256xbf16>
    %cst_120 = arith.constant dense<0.000000e+00> : vector<32x256xf32>
    %128 = tpu.matmul %125, %127, %cst_120 {dimension_numbers = #tpu.dot_dimension_numbers<[1], [0], [0], [1], [0, 0, 1, 1], [], []>} : vector<32x128xbf16>, vector<128x256xbf16>, vector<32x256xf32> -> vector<32x256xf32>
    %129 = arith.addf %122, %128 : vector<32x256xf32>
    %c0_121 = arith.constant 0 : index
    %c0_122 = arith.constant 0 : index
    %130 = vector.load %arg7[%c0_121, %c0_122] : memref<1x256xf32, #tpu.memory_space<vmem>>, vector<1x256xf32>
    %131 = vector.broadcast %130 : vector<1x256xf32> to vector<32x256xf32>
    %132 = arith.mulf %129, %131 : vector<32x256xf32>
    %c0_123 = arith.constant 0 : index
    %c0_124 = arith.constant 0 : index
    %133 = vector.load %arg8[%c0_123, %c0_124] : memref<1x256xf32, #tpu.memory_space<vmem>>, vector<1x256xf32>
    %134 = vector.broadcast %133 : vector<1x256xf32> to vector<32x256xf32>
    %135 = arith.addf %132, %134 : vector<32x256xf32>
    %cst_125 = arith.constant 0.000000e+00 : f32
    %136 = vector.broadcast %cst_125 : f32 to vector<32x256xf32>
    %137 = arith.maximumf %135, %136 : vector<32x256xf32>
    %138 = vector.extract_strided_slice %137 {offsets = [0, 0], sizes = [32, 64], strides = [1, 1]} : vector<32x256xf32> to vector<32x64xf32>
    %139 = vector.extract_strided_slice %137 {offsets = [0, 64], sizes = [32, 64], strides = [1, 1]} : vector<32x256xf32> to vector<32x64xf32>
    %140 = arith.maximumf %138, %139 : vector<32x64xf32>
    %141 = vector.extract_strided_slice %137 {offsets = [0, 128], sizes = [32, 64], strides = [1, 1]} : vector<32x256xf32> to vector<32x64xf32>
    %142 = vector.extract_strided_slice %137 {offsets = [0, 192], sizes = [32, 64], strides = [1, 1]} : vector<32x256xf32> to vector<32x64xf32>
    %143 = arith.maximumf %141, %142 : vector<32x64xf32>
    %144 = arith.maximumf %140, %143 : vector<32x64xf32>
    %145 = arith.truncf %144 : vector<32x64xf32> to vector<32x64xbf16>
    %c0_126 = arith.constant 0 : index
    %c0_127 = arith.constant 0 : index
    %c0_128 = arith.constant 0 : index
    %c0_129 = arith.constant 0 : index
    %146 = vector.load %arg9[%c0_126, %c0_127, %c0_128, %c0_129] : memref<2x8x2x32xbf16, #tpu.memory_space<vmem>>, vector<1x1x2x32xbf16>
    %147 = vector.shape_cast %146 : vector<1x1x2x32xbf16> to vector<2x32xbf16>
    %cst_130 = arith.constant dense<0.000000e+00> : vector<2x64xf32>
    %148 = tpu.matmul %147, %145, %cst_130 {dimension_numbers = #tpu.dot_dimension_numbers<[1], [0], [0], [1], [0, 0, 1, 1], [], []>} : vector<2x32xbf16>, vector<32x64xbf16>, vector<2x64xf32> -> vector<2x64xf32>
    %c0_131 = arith.constant 0 : index
    %c1_132 = arith.constant 1 : index
    %c0_133 = arith.constant 0 : index
    %c0_134 = arith.constant 0 : index
    %149 = vector.load %arg9[%c0_131, %c1_132, %c0_133, %c0_134] : memref<2x8x2x32xbf16, #tpu.memory_space<vmem>>, vector<1x1x2x32xbf16>
    %150 = vector.shape_cast %149 : vector<1x1x2x32xbf16> to vector<2x32xbf16>
    %cst_135 = arith.constant dense<0.000000e+00> : vector<2x64xf32>
    %151 = tpu.matmul %150, %145, %cst_135 {dimension_numbers = #tpu.dot_dimension_numbers<[1], [0], [0], [1], [0, 0, 1, 1], [], []>} : vector<2x32xbf16>, vector<32x64xbf16>, vector<2x64xf32> -> vector<2x64xf32>
    %152 = arith.maximumf %148, %151 : vector<2x64xf32>
    %c0_136 = arith.constant 0 : index
    %c2_137 = arith.constant 2 : index
    %c0_138 = arith.constant 0 : index
    %c0_139 = arith.constant 0 : index
    %153 = vector.load %arg9[%c0_136, %c2_137, %c0_138, %c0_139] : memref<2x8x2x32xbf16, #tpu.memory_space<vmem>>, vector<1x1x2x32xbf16>
    %154 = vector.shape_cast %153 : vector<1x1x2x32xbf16> to vector<2x32xbf16>
    %cst_140 = arith.constant dense<0.000000e+00> : vector<2x64xf32>
    %155 = tpu.matmul %154, %145, %cst_140 {dimension_numbers = #tpu.dot_dimension_numbers<[1], [0], [0], [1], [0, 0, 1, 1], [], []>} : vector<2x32xbf16>, vector<32x64xbf16>, vector<2x64xf32> -> vector<2x64xf32>
    %156 = arith.maximumf %152, %155 : vector<2x64xf32>
    %c0_141 = arith.constant 0 : index
    %c3_142 = arith.constant 3 : index
    %c0_143 = arith.constant 0 : index
    %c0_144 = arith.constant 0 : index
    %157 = vector.load %arg9[%c0_141, %c3_142, %c0_143, %c0_144] : memref<2x8x2x32xbf16, #tpu.memory_space<vmem>>, vector<1x1x2x32xbf16>
    %158 = vector.shape_cast %157 : vector<1x1x2x32xbf16> to vector<2x32xbf16>
    %cst_145 = arith.constant dense<0.000000e+00> : vector<2x64xf32>
    %159 = tpu.matmul %158, %145, %cst_145 {dimension_numbers = #tpu.dot_dimension_numbers<[1], [0], [0], [1], [0, 0, 1, 1], [], []>} : vector<2x32xbf16>, vector<32x64xbf16>, vector<2x64xf32> -> vector<2x64xf32>
    %160 = arith.maximumf %156, %159 : vector<2x64xf32>
    %c0_146 = arith.constant 0 : index
    %c4_147 = arith.constant 4 : index
    %c0_148 = arith.constant 0 : index
    %c0_149 = arith.constant 0 : index
    %161 = vector.load %arg9[%c0_146, %c4_147, %c0_148, %c0_149] : memref<2x8x2x32xbf16, #tpu.memory_space<vmem>>, vector<1x1x2x32xbf16>
    %162 = vector.shape_cast %161 : vector<1x1x2x32xbf16> to vector<2x32xbf16>
    %cst_150 = arith.constant dense<0.000000e+00> : vector<2x64xf32>
    %163 = tpu.matmul %162, %145, %cst_150 {dimension_numbers = #tpu.dot_dimension_numbers<[1], [0], [0], [1], [0, 0, 1, 1], [], []>} : vector<2x32xbf16>, vector<32x64xbf16>, vector<2x64xf32> -> vector<2x64xf32>
    %164 = arith.maximumf %160, %163 : vector<2x64xf32>
    %c0_151 = arith.constant 0 : index
    %c5 = arith.constant 5 : index
    %c0_152 = arith.constant 0 : index
    %c0_153 = arith.constant 0 : index
    %165 = vector.load %arg9[%c0_151, %c5, %c0_152, %c0_153] : memref<2x8x2x32xbf16, #tpu.memory_space<vmem>>, vector<1x1x2x32xbf16>
    %166 = vector.shape_cast %165 : vector<1x1x2x32xbf16> to vector<2x32xbf16>
    %cst_154 = arith.constant dense<0.000000e+00> : vector<2x64xf32>
    %167 = tpu.matmul %166, %145, %cst_154 {dimension_numbers = #tpu.dot_dimension_numbers<[1], [0], [0], [1], [0, 0, 1, 1], [], []>} : vector<2x32xbf16>, vector<32x64xbf16>, vector<2x64xf32> -> vector<2x64xf32>
    %168 = arith.maximumf %164, %167 : vector<2x64xf32>
    %c0_155 = arith.constant 0 : index
    %c6_156 = arith.constant 6 : index
    %c0_157 = arith.constant 0 : index
    %c0_158 = arith.constant 0 : index
    %169 = vector.load %arg9[%c0_155, %c6_156, %c0_157, %c0_158] : memref<2x8x2x32xbf16, #tpu.memory_space<vmem>>, vector<1x1x2x32xbf16>
    %170 = vector.shape_cast %169 : vector<1x1x2x32xbf16> to vector<2x32xbf16>
    %cst_159 = arith.constant dense<0.000000e+00> : vector<2x64xf32>
    %171 = tpu.matmul %170, %145, %cst_159 {dimension_numbers = #tpu.dot_dimension_numbers<[1], [0], [0], [1], [0, 0, 1, 1], [], []>} : vector<2x32xbf16>, vector<32x64xbf16>, vector<2x64xf32> -> vector<2x64xf32>
    %172 = arith.maximumf %168, %171 : vector<2x64xf32>
    %c0_160 = arith.constant 0 : index
    %c7_161 = arith.constant 7 : index
    %c0_162 = arith.constant 0 : index
    %c0_163 = arith.constant 0 : index
    %173 = vector.load %arg9[%c0_160, %c7_161, %c0_162, %c0_163] : memref<2x8x2x32xbf16, #tpu.memory_space<vmem>>, vector<1x1x2x32xbf16>
    %174 = vector.shape_cast %173 : vector<1x1x2x32xbf16> to vector<2x32xbf16>
    %cst_164 = arith.constant dense<0.000000e+00> : vector<2x64xf32>
    %175 = tpu.matmul %174, %145, %cst_164 {dimension_numbers = #tpu.dot_dimension_numbers<[1], [0], [0], [1], [0, 0, 1, 1], [], []>} : vector<2x32xbf16>, vector<32x64xbf16>, vector<2x64xf32> -> vector<2x64xf32>
    %176 = arith.maximumf %172, %175 : vector<2x64xf32>
    %c24 = arith.constant 24 : index
    %c0_165 = arith.constant 0 : index
    %177 = vector.load %arg32[%c24, %c0_165] : memref<64x64xf32, #tpu.memory_space<vmem>>, vector<2x64xf32>
    tpu.vector_store %arg32[%c24, %c0_165], %176 {strides = array<i32>} : memref<64x64xf32, #tpu.memory_space<vmem>>, vector<2x64xf32>,
    %c1_166 = arith.constant 1 : index
    %c0_167 = arith.constant 0 : index
    %c0_168 = arith.constant 0 : index
    %c0_169 = arith.constant 0 : index
    %178 = vector.load %arg9[%c1_166, %c0_167, %c0_168, %c0_169] : memref<2x8x2x32xbf16, #tpu.memory_space<vmem>>, vector<1x1x2x32xbf16>
    %179 = vector.shape_cast %178 : vector<1x1x2x32xbf16> to vector<2x32xbf16>
    %cst_170 = arith.constant dense<0.000000e+00> : vector<2x64xf32>
    %180 = tpu.matmul %179, %145, %cst_170 {dimension_numbers = #tpu.dot_dimension_numbers<[1], [0], [0], [1], [0, 0, 1, 1], [], []>} : vector<2x32xbf16>, vector<32x64xbf16>, vector<2x64xf32> -> vector<2x64xf32>
    %c1_171 = arith.constant 1 : index
    %c1_172 = arith.constant 1 : index
    %c0_173 = arith.constant 0 : index
    %c0_174 = arith.constant 0 : index
    %181 = vector.load %arg9[%c1_171, %c1_172, %c0_173, %c0_174] : memref<2x8x2x32xbf16, #tpu.memory_space<vmem>>, vector<1x1x2x32xbf16>
    %182 = vector.shape_cast %181 : vector<1x1x2x32xbf16> to vector<2x32xbf16>
    %cst_175 = arith.constant dense<0.000000e+00> : vector<2x64xf32>
    %183 = tpu.matmul %182, %145, %cst_175 {dimension_numbers = #tpu.dot_dimension_numbers<[1], [0], [0], [1], [0, 0, 1, 1], [], []>} : vector<2x32xbf16>, vector<32x64xbf16>, vector<2x64xf32> -> vector<2x64xf32>
    %184 = arith.maximumf %180, %183 : vector<2x64xf32>
    %c1_176 = arith.constant 1 : index
    %c2_177 = arith.constant 2 : index
    %c0_178 = arith.constant 0 : index
    %c0_179 = arith.constant 0 : index
    %185 = vector.load %arg9[%c1_176, %c2_177, %c0_178, %c0_179] : memref<2x8x2x32xbf16, #tpu.memory_space<vmem>>, vector<1x1x2x32xbf16>
    %186 = vector.shape_cast %185 : vector<1x1x2x32xbf16> to vector<2x32xbf16>
    %cst_180 = arith.constant dense<0.000000e+00> : vector<2x64xf32>
    %187 = tpu.matmul %186, %145, %cst_180 {dimension_numbers = #tpu.dot_dimension_numbers<[1], [0], [0], [1], [0, 0, 1, 1], [], []>} : vector<2x32xbf16>, vector<32x64xbf16>, vector<2x64xf32> -> vector<2x64xf32>
    %188 = arith.maximumf %184, %187 : vector<2x64xf32>
    %c1_181 = arith.constant 1 : index
    %c3_182 = arith.constant 3 : index
    %c0_183 = arith.constant 0 : index
    %c0_184 = arith.constant 0 : index
    %189 = vector.load %arg9[%c1_181, %c3_182, %c0_183, %c0_184] : memref<2x8x2x32xbf16, #tpu.memory_space<vmem>>, vector<1x1x2x32xbf16>
    %190 = vector.shape_cast %189 : vector<1x1x2x32xbf16> to vector<2x32xbf16>
    %cst_185 = arith.constant dense<0.000000e+00> : vector<2x64xf32>
    %191 = tpu.matmul %190, %145, %cst_185 {dimension_numbers = #tpu.dot_dimension_numbers<[1], [0], [0], [1], [0, 0, 1, 1], [], []>} : vector<2x32xbf16>, vector<32x64xbf16>, vector<2x64xf32> -> vector<2x64xf32>
    %192 = arith.maximumf %188, %191 : vector<2x64xf32>
    %c1_186 = arith.constant 1 : index
    %c4_187 = arith.constant 4 : index
    %c0_188 = arith.constant 0 : index
    %c0_189 = arith.constant 0 : index
    %193 = vector.load %arg9[%c1_186, %c4_187, %c0_188, %c0_189] : memref<2x8x2x32xbf16, #tpu.memory_space<vmem>>, vector<1x1x2x32xbf16>
    %194 = vector.shape_cast %193 : vector<1x1x2x32xbf16> to vector<2x32xbf16>
    %cst_190 = arith.constant dense<0.000000e+00> : vector<2x64xf32>
    %195 = tpu.matmul %194, %145, %cst_190 {dimension_numbers = #tpu.dot_dimension_numbers<[1], [0], [0], [1], [0, 0, 1, 1], [], []>} : vector<2x32xbf16>, vector<32x64xbf16>, vector<2x64xf32> -> vector<2x64xf32>
    %196 = arith.maximumf %192, %195 : vector<2x64xf32>
    %c1_191 = arith.constant 1 : index
    %c5_192 = arith.constant 5 : index
    %c0_193 = arith.constant 0 : index
    %c0_194 = arith.constant 0 : index
    %197 = vector.load %arg9[%c1_191, %c5_192, %c0_193, %c0_194] : memref<2x8x2x32xbf16, #tpu.memory_space<vmem>>, vector<1x1x2x32xbf16>
    %198 = vector.shape_cast %197 : vector<1x1x2x32xbf16> to vector<2x32xbf16>
    %cst_195 = arith.constant dense<0.000000e+00> : vector<2x64xf32>
    %199 = tpu.matmul %198, %145, %cst_195 {dimension_numbers = #tpu.dot_dimension_numbers<[1], [0], [0], [1], [0, 0, 1, 1], [], []>} : vector<2x32xbf16>, vector<32x64xbf16>, vector<2x64xf32> -> vector<2x64xf32>
    %200 = arith.maximumf %196, %199 : vector<2x64xf32>
    %c1_196 = arith.constant 1 : index
    %c6_197 = arith.constant 6 : index
    %c0_198 = arith.constant 0 : index
    %c0_199 = arith.constant 0 : index
    %201 = vector.load %arg9[%c1_196, %c6_197, %c0_198, %c0_199] : memref<2x8x2x32xbf16, #tpu.memory_space<vmem>>, vector<1x1x2x32xbf16>
    %202 = vector.shape_cast %201 : vector<1x1x2x32xbf16> to vector<2x32xbf16>
    %cst_200 = arith.constant dense<0.000000e+00> : vector<2x64xf32>
    %203 = tpu.matmul %202, %145, %cst_200 {dimension_numbers = #tpu.dot_dimension_numbers<[1], [0], [0], [1], [0, 0, 1, 1], [], []>} : vector<2x32xbf16>, vector<32x64xbf16>, vector<2x64xf32> -> vector<2x64xf32>
    %204 = arith.maximumf %200, %203 : vector<2x64xf32>
    %c1_201 = arith.constant 1 : index
    %c7_202 = arith.constant 7 : index
    %c0_203 = arith.constant 0 : index
    %c0_204 = arith.constant 0 : index
    %205 = vector.load %arg9[%c1_201, %c7_202, %c0_203, %c0_204] : memref<2x8x2x32xbf16, #tpu.memory_space<vmem>>, vector<1x1x2x32xbf16>
    %206 = vector.shape_cast %205 : vector<1x1x2x32xbf16> to vector<2x32xbf16>
    %cst_205 = arith.constant dense<0.000000e+00> : vector<2x64xf32>
    %207 = tpu.matmul %206, %145, %cst_205 {dimension_numbers = #tpu.dot_dimension_numbers<[1], [0], [0], [1], [0, 0, 1, 1], [], []>} : vector<2x32xbf16>, vector<32x64xbf16>, vector<2x64xf32> -> vector<2x64xf32>
    %208 = arith.maximumf %204, %207 : vector<2x64xf32>
    %c40 = arith.constant 40 : index
    %c0_206 = arith.constant 0 : index
    %209 = vector.load %arg32[%c40, %c0_206] : memref<64x64xf32, #tpu.memory_space<vmem>>, vector<2x64xf32>
    tpu.vector_store %arg32[%c40, %c0_206], %208 {strides = array<i32>} : memref<64x64xf32, #tpu.memory_space<vmem>>, vector<2x64xf32>,
    %cst_207 = arith.constant 0.000000e+00 : f32
    %210 = vector.broadcast %cst_207 : f32 to vector<18x128xf32>
    %c7_208 = arith.constant 7 : index
    %c0_209 = arith.constant 0 : index
    %211 = vector.load %arg32[%c7_208, %c0_209] : memref<64x64xf32, #tpu.memory_space<vmem>>, vector<18x64xf32>
    %212 = arith.truncf %211 : vector<18x64xf32> to vector<18x64xbf16>
    %c0_210 = arith.constant 0 : index
    %c0_211 = arith.constant 0 : index
    %c0_212 = arith.constant 0 : index
    %213 = vector.load %arg10[%c0_210, %c0_211, %c0_212] : memref<9x64x128xbf16, #tpu.memory_space<vmem>>, vector<1x64x128xbf16>
    %214 = vector.shape_cast %213 : vector<1x64x128xbf16> to vector<64x128xbf16>
    %cst_213 = arith.constant dense<0.000000e+00> : vector<18x128xf32>
    %215 = tpu.matmul %212, %214, %cst_213 {dimension_numbers = #tpu.dot_dimension_numbers<[1], [0], [0], [1], [0, 0, 1, 1], [], []>} : vector<18x64xbf16>, vector<64x128xbf16>, vector<18x128xf32> -> vector<18x128xf32>
    %216 = arith.addf %210, %215 : vector<18x128xf32>
    %c8_214 = arith.constant 8 : index
    %c0_215 = arith.constant 0 : index
    %217 = vector.load %arg32[%c8_214, %c0_215] : memref<64x64xf32, #tpu.memory_space<vmem>>, vector<18x64xf32>
    %218 = arith.truncf %217 : vector<18x64xf32> to vector<18x64xbf16>
    %c1_216 = arith.constant 1 : index
    %c0_217 = arith.constant 0 : index
    %c0_218 = arith.constant 0 : index
    %219 = vector.load %arg10[%c1_216, %c0_217, %c0_218] : memref<9x64x128xbf16, #tpu.memory_space<vmem>>, vector<1x64x128xbf16>
    %220 = vector.shape_cast %219 : vector<1x64x128xbf16> to vector<64x128xbf16>
    %cst_219 = arith.constant dense<0.000000e+00> : vector<18x128xf32>
    %221 = tpu.matmul %218, %220, %cst_219 {dimension_numbers = #tpu.dot_dimension_numbers<[1], [0], [0], [1], [0, 0, 1, 1], [], []>} : vector<18x64xbf16>, vector<64x128xbf16>, vector<18x128xf32> -> vector<18x128xf32>
    %222 = arith.addf %216, %221 : vector<18x128xf32>
    %c9_220 = arith.constant 9 : index
    %c0_221 = arith.constant 0 : index
    %223 = vector.load %arg32[%c9_220, %c0_221] : memref<64x64xf32, #tpu.memory_space<vmem>>, vector<18x64xf32>
    %224 = arith.truncf %223 : vector<18x64xf32> to vector<18x64xbf16>
    %c2_222 = arith.constant 2 : index
    %c0_223 = arith.constant 0 : index
    %c0_224 = arith.constant 0 : index
    %225 = vector.load %arg10[%c2_222, %c0_223, %c0_224] : memref<9x64x128xbf16, #tpu.memory_space<vmem>>, vector<1x64x128xbf16>
    %226 = vector.shape_cast %225 : vector<1x64x128xbf16> to vector<64x128xbf16>
    %cst_225 = arith.constant dense<0.000000e+00> : vector<18x128xf32>
    %227 = tpu.matmul %224, %226, %cst_225 {dimension_numbers = #tpu.dot_dimension_numbers<[1], [0], [0], [1], [0, 0, 1, 1], [], []>} : vector<18x64xbf16>, vector<64x128xbf16>, vector<18x128xf32> -> vector<18x128xf32>
    %228 = arith.addf %222, %227 : vector<18x128xf32>
    %c23 = arith.constant 23 : index
    %c0_226 = arith.constant 0 : index
    %229 = vector.load %arg32[%c23, %c0_226] : memref<64x64xf32, #tpu.memory_space<vmem>>, vector<18x64xf32>
    %230 = arith.truncf %229 : vector<18x64xf32> to vector<18x64xbf16>
    %c3_227 = arith.constant 3 : index
    %c0_228 = arith.constant 0 : index
    %c0_229 = arith.constant 0 : index
    %231 = vector.load %arg10[%c3_227, %c0_228, %c0_229] : memref<9x64x128xbf16, #tpu.memory_space<vmem>>, vector<1x64x128xbf16>
    %232 = vector.shape_cast %231 : vector<1x64x128xbf16> to vector<64x128xbf16>
    %cst_230 = arith.constant dense<0.000000e+00> : vector<18x128xf32>
    %233 = tpu.matmul %230, %232, %cst_230 {dimension_numbers = #tpu.dot_dimension_numbers<[1], [0], [0], [1], [0, 0, 1, 1], [], []>} : vector<18x64xbf16>, vector<64x128xbf16>, vector<18x128xf32> -> vector<18x128xf32>
    %234 = arith.addf %228, %233 : vector<18x128xf32>
    %c24_231 = arith.constant 24 : index
    %c0_232 = arith.constant 0 : index
    %235 = vector.load %arg32[%c24_231, %c0_232] : memref<64x64xf32, #tpu.memory_space<vmem>>, vector<18x64xf32>
    %236 = arith.truncf %235 : vector<18x64xf32> to vector<18x64xbf16>
    %c4_233 = arith.constant 4 : index
    %c0_234 = arith.constant 0 : index
    %c0_235 = arith.constant 0 : index
    %237 = vector.load %arg10[%c4_233, %c0_234, %c0_235] : memref<9x64x128xbf16, #tpu.memory_space<vmem>>, vector<1x64x128xbf16>
    %238 = vector.shape_cast %237 : vector<1x64x128xbf16> to vector<64x128xbf16>
    %cst_236 = arith.constant dense<0.000000e+00> : vector<18x128xf32>
    %239 = tpu.matmul %236, %238, %cst_236 {dimension_numbers = #tpu.dot_dimension_numbers<[1], [0], [0], [1], [0, 0, 1, 1], [], []>} : vector<18x64xbf16>, vector<64x128xbf16>, vector<18x128xf32> -> vector<18x128xf32>
    %240 = arith.addf %234, %239 : vector<18x128xf32>
    %c25 = arith.constant 25 : index
    %c0_237 = arith.constant 0 : index
    %241 = vector.load %arg32[%c25, %c0_237] : memref<64x64xf32, #tpu.memory_space<vmem>>, vector<18x64xf32>
    %242 = arith.truncf %241 : vector<18x64xf32> to vector<18x64xbf16>
    %c5_238 = arith.constant 5 : index
    %c0_239 = arith.constant 0 : index
    %c0_240 = arith.constant 0 : index
    %243 = vector.load %arg10[%c5_238, %c0_239, %c0_240] : memref<9x64x128xbf16, #tpu.memory_space<vmem>>, vector<1x64x128xbf16>
    %244 = vector.shape_cast %243 : vector<1x64x128xbf16> to vector<64x128xbf16>
    %cst_241 = arith.constant dense<0.000000e+00> : vector<18x128xf32>
    %245 = tpu.matmul %242, %244, %cst_241 {dimension_numbers = #tpu.dot_dimension_numbers<[1], [0], [0], [1], [0, 0, 1, 1], [], []>} : vector<18x64xbf16>, vector<64x128xbf16>, vector<18x128xf32> -> vector<18x128xf32>
    %246 = arith.addf %240, %245 : vector<18x128xf32>
    %c39 = arith.constant 39 : index
    %c0_242 = arith.constant 0 : index
    %247 = vector.load %arg32[%c39, %c0_242] : memref<64x64xf32, #tpu.memory_space<vmem>>, vector<18x64xf32>
    %248 = arith.truncf %247 : vector<18x64xf32> to vector<18x64xbf16>
    %c6_243 = arith.constant 6 : index
    %c0_244 = arith.constant 0 : index
    %c0_245 = arith.constant 0 : index
    %249 = vector.load %arg10[%c6_243, %c0_244, %c0_245] : memref<9x64x128xbf16, #tpu.memory_space<vmem>>, vector<1x64x128xbf16>
    %250 = vector.shape_cast %249 : vector<1x64x128xbf16> to vector<64x128xbf16>
    %cst_246 = arith.constant dense<0.000000e+00> : vector<18x128xf32>
    %251 = tpu.matmul %248, %250, %cst_246 {dimension_numbers = #tpu.dot_dimension_numbers<[1], [0], [0], [1], [0, 0, 1, 1], [], []>} : vector<18x64xbf16>, vector<64x128xbf16>, vector<18x128xf32> -> vector<18x128xf32>
    %252 = arith.addf %246, %251 : vector<18x128xf32>
    %c40_247 = arith.constant 40 : index
    %c0_248 = arith.constant 0 : index
    %253 = vector.load %arg32[%c40_247, %c0_248] : memref<64x64xf32, #tpu.memory_space<vmem>>, vector<18x64xf32>
    %254 = arith.truncf %253 : vector<18x64xf32> to vector<18x64xbf16>
    %c7_249 = arith.constant 7 : index
    %c0_250 = arith.constant 0 : index
    %c0_251 = arith.constant 0 : index
    %255 = vector.load %arg10[%c7_249, %c0_250, %c0_251] : memref<9x64x128xbf16, #tpu.memory_space<vmem>>, vector<1x64x128xbf16>
    %256 = vector.shape_cast %255 : vector<1x64x128xbf16> to vector<64x128xbf16>
    %cst_252 = arith.constant dense<0.000000e+00> : vector<18x128xf32>
    %257 = tpu.matmul %254, %256, %cst_252 {dimension_numbers = #tpu.dot_dimension_numbers<[1], [0], [0], [1], [0, 0, 1, 1], [], []>} : vector<18x64xbf16>, vector<64x128xbf16>, vector<18x128xf32> -> vector<18x128xf32>
    %258 = arith.addf %252, %257 : vector<18x128xf32>
    %c41 = arith.constant 41 : index
    %c0_253 = arith.constant 0 : index
    %259 = vector.load %arg32[%c41, %c0_253] : memref<64x64xf32, #tpu.memory_space<vmem>>, vector<18x64xf32>
    %260 = arith.truncf %259 : vector<18x64xf32> to vector<18x64xbf16>
    %c8_254 = arith.constant 8 : index
    %c0_255 = arith.constant 0 : index
    %c0_256 = arith.constant 0 : index
    %261 = vector.load %arg10[%c8_254, %c0_255, %c0_256] : memref<9x64x128xbf16, #tpu.memory_space<vmem>>, vector<1x64x128xbf16>
    %262 = vector.shape_cast %261 : vector<1x64x128xbf16> to vector<64x128xbf16>
    %cst_257 = arith.constant dense<0.000000e+00> : vector<18x128xf32>
    %263 = tpu.matmul %260, %262, %cst_257 {dimension_numbers = #tpu.dot_dimension_numbers<[1], [0], [0], [1], [0, 0, 1, 1], [], []>} : vector<18x64xbf16>, vector<64x128xbf16>, vector<18x128xf32> -> vector<18x128xf32>
    %264 = arith.addf %258, %263 : vector<18x128xf32>
    %c0_258 = arith.constant 0 : index
    %c0_259 = arith.constant 0 : index
    %265 = vector.load %arg11[%c0_258, %c0_259] : memref<1x128xf32, #tpu.memory_space<vmem>>, vector<1x128xf32>
    %266 = vector.broadcast %265 : vector<1x128xf32> to vector<18x128xf32>
    %267 = arith.mulf %264, %266 : vector<18x128xf32>
    %c0_260 = arith.constant 0 : index
    %c0_261 = arith.constant 0 : index
    %268 = vector.load %arg12[%c0_260, %c0_261] : memref<1x128xf32, #tpu.memory_space<vmem>>, vector<1x128xf32>
    %269 = vector.broadcast %268 : vector<1x128xf32> to vector<18x128xf32>
    %270 = arith.addf %267, %269 : vector<18x128xf32>
    %cst_262 = arith.constant 0.000000e+00 : f32
    %271 = vector.broadcast %cst_262 : f32 to vector<18x128xf32>
    %272 = arith.maximumf %270, %271 : vector<18x128xf32>
    %273 = vector.extract_strided_slice %272 {offsets = [0, 0], sizes = [2, 128], strides = [1, 1]} : vector<18x128xf32> to vector<2x128xf32>
    %c24_263 = arith.constant 24 : index
    %c0_264 = arith.constant 0 : index
    %274 = vector.load %arg33[%c24_263, %c0_264] : memref<64x128xf32, #tpu.memory_space<vmem>>, vector<2x128xf32>
    tpu.vector_store %arg33[%c24_263, %c0_264], %273 {strides = array<i32>} : memref<64x128xf32, #tpu.memory_space<vmem>>, vector<2x128xf32>,
    %275 = vector.extract_strided_slice %272 {offsets = [16, 0], sizes = [2, 128], strides = [1, 1]} : vector<18x128xf32> to vector<2x128xf32>
    %c40_265 = arith.constant 40 : index
    %c0_266 = arith.constant 0 : index
    %276 = vector.load %arg33[%c40_265, %c0_266] : memref<64x128xf32, #tpu.memory_space<vmem>>, vector<2x128xf32>
    tpu.vector_store %arg33[%c40_265, %c0_266], %275 {strides = array<i32>} : memref<64x128xf32, #tpu.memory_space<vmem>>, vector<2x128xf32>,
    %cst_267 = arith.constant 0.000000e+00 : f32
    %277 = vector.broadcast %cst_267 : f32 to vector<18x128xf32>
    %c7_268 = arith.constant 7 : index
    %c0_269 = arith.constant 0 : index
    %278 = vector.load %arg33[%c7_268, %c0_269] : memref<64x128xf32, #tpu.memory_space<vmem>>, vector<18x128xf32>
    %279 = arith.truncf %278 : vector<18x128xf32> to vector<18x128xbf16>
    %c0_270 = arith.constant 0 : index
    %c0_271 = arith.constant 0 : index
    %c0_272 = arith.constant 0 : index
    %280 = vector.load %arg13[%c0_270, %c0_271, %c0_272] : memref<9x128x128xbf16, #tpu.memory_space<vmem>>, vector<1x128x128xbf16>
    %281 = vector.shape_cast %280 : vector<1x128x128xbf16> to vector<128x128xbf16>
    %cst_273 = arith.constant dense<0.000000e+00> : vector<18x128xf32>
    %282 = tpu.matmul %279, %281, %cst_273 {dimension_numbers = #tpu.dot_dimension_numbers<[1], [0], [0], [1], [0, 0, 1, 1], [], []>} : vector<18x128xbf16>, vector<128x128xbf16>, vector<18x128xf32> -> vector<18x128xf32>
    %283 = arith.addf %277, %282 : vector<18x128xf32>
    %c8_274 = arith.constant 8 : index
    %c0_275 = arith.constant 0 : index
    %284 = vector.load %arg33[%c8_274, %c0_275] : memref<64x128xf32, #tpu.memory_space<vmem>>, vector<18x128xf32>
    %285 = arith.truncf %284 : vector<18x128xf32> to vector<18x128xbf16>
    %c1_276 = arith.constant 1 : index
    %c0_277 = arith.constant 0 : index
    %c0_278 = arith.constant 0 : index
    %286 = vector.load %arg13[%c1_276, %c0_277, %c0_278] : memref<9x128x128xbf16, #tpu.memory_space<vmem>>, vector<1x128x128xbf16>
    %287 = vector.shape_cast %286 : vector<1x128x128xbf16> to vector<128x128xbf16>
    %cst_279 = arith.constant dense<0.000000e+00> : vector<18x128xf32>
    %288 = tpu.matmul %285, %287, %cst_279 {dimension_numbers = #tpu.dot_dimension_numbers<[1], [0], [0], [1], [0, 0, 1, 1], [], []>} : vector<18x128xbf16>, vector<128x128xbf16>, vector<18x128xf32> -> vector<18x128xf32>
    %289 = arith.addf %283, %288 : vector<18x128xf32>
    %c9_280 = arith.constant 9 : index
    %c0_281 = arith.constant 0 : index
    %290 = vector.load %arg33[%c9_280, %c0_281] : memref<64x128xf32, #tpu.memory_space<vmem>>, vector<18x128xf32>
    %291 = arith.truncf %290 : vector<18x128xf32> to vector<18x128xbf16>
    %c2_282 = arith.constant 2 : index
    %c0_283 = arith.constant 0 : index
    %c0_284 = arith.constant 0 : index
    %292 = vector.load %arg13[%c2_282, %c0_283, %c0_284] : memref<9x128x128xbf16, #tpu.memory_space<vmem>>, vector<1x128x128xbf16>
    %293 = vector.shape_cast %292 : vector<1x128x128xbf16> to vector<128x128xbf16>
    %cst_285 = arith.constant dense<0.000000e+00> : vector<18x128xf32>
    %294 = tpu.matmul %291, %293, %cst_285 {dimension_numbers = #tpu.dot_dimension_numbers<[1], [0], [0], [1], [0, 0, 1, 1], [], []>} : vector<18x128xbf16>, vector<128x128xbf16>, vector<18x128xf32> -> vector<18x128xf32>
    %295 = arith.addf %289, %294 : vector<18x128xf32>
    %c23_286 = arith.constant 23 : index
    %c0_287 = arith.constant 0 : index
    %296 = vector.load %arg33[%c23_286, %c0_287] : memref<64x128xf32, #tpu.memory_space<vmem>>, vector<18x128xf32>
    %297 = arith.truncf %296 : vector<18x128xf32> to vector<18x128xbf16>
    %c3_288 = arith.constant 3 : index
    %c0_289 = arith.constant 0 : index
    %c0_290 = arith.constant 0 : index
    %298 = vector.load %arg13[%c3_288, %c0_289, %c0_290] : memref<9x128x128xbf16, #tpu.memory_space<vmem>>, vector<1x128x128xbf16>
    %299 = vector.shape_cast %298 : vector<1x128x128xbf16> to vector<128x128xbf16>
    %cst_291 = arith.constant dense<0.000000e+00> : vector<18x128xf32>
    %300 = tpu.matmul %297, %299, %cst_291 {dimension_numbers = #tpu.dot_dimension_numbers<[1], [0], [0], [1], [0, 0, 1, 1], [], []>} : vector<18x128xbf16>, vector<128x128xbf16>, vector<18x128xf32> -> vector<18x128xf32>
    %301 = arith.addf %295, %300 : vector<18x128xf32>
    %c24_292 = arith.constant 24 : index
    %c0_293 = arith.constant 0 : index
    %302 = vector.load %arg33[%c24_292, %c0_293] : memref<64x128xf32, #tpu.memory_space<vmem>>, vector<18x128xf32>
    %303 = arith.truncf %302 : vector<18x128xf32> to vector<18x128xbf16>
    %c4_294 = arith.constant 4 : index
    %c0_295 = arith.constant 0 : index
    %c0_296 = arith.constant 0 : index
    %304 = vector.load %arg13[%c4_294, %c0_295, %c0_296] : memref<9x128x128xbf16, #tpu.memory_space<vmem>>, vector<1x128x128xbf16>
    %305 = vector.shape_cast %304 : vector<1x128x128xbf16> to vector<128x128xbf16>
    %cst_297 = arith.constant dense<0.000000e+00> : vector<18x128xf32>
    %306 = tpu.matmul %303, %305, %cst_297 {dimension_numbers = #tpu.dot_dimension_numbers<[1], [0], [0], [1], [0, 0, 1, 1], [], []>} : vector<18x128xbf16>, vector<128x128xbf16>, vector<18x128xf32> -> vector<18x128xf32>
    %307 = arith.addf %301, %306 : vector<18x128xf32>
    %c25_298 = arith.constant 25 : index
    %c0_299 = arith.constant 0 : index
    %308 = vector.load %arg33[%c25_298, %c0_299] : memref<64x128xf32, #tpu.memory_space<vmem>>, vector<18x128xf32>
    %309 = arith.truncf %308 : vector<18x128xf32> to vector<18x128xbf16>
    %c5_300 = arith.constant 5 : index
    %c0_301 = arith.constant 0 : index
    %c0_302 = arith.constant 0 : index
    %310 = vector.load %arg13[%c5_300, %c0_301, %c0_302] : memref<9x128x128xbf16, #tpu.memory_space<vmem>>, vector<1x128x128xbf16>
    %311 = vector.shape_cast %310 : vector<1x128x128xbf16> to vector<128x128xbf16>
    %cst_303 = arith.constant dense<0.000000e+00> : vector<18x128xf32>
    %312 = tpu.matmul %309, %311, %cst_303 {dimension_numbers = #tpu.dot_dimension_numbers<[1], [0], [0], [1], [0, 0, 1, 1], [], []>} : vector<18x128xbf16>, vector<128x128xbf16>, vector<18x128xf32> -> vector<18x128xf32>
    %313 = arith.addf %307, %312 : vector<18x128xf32>
    %c39_304 = arith.constant 39 : index
    %c0_305 = arith.constant 0 : index
    %314 = vector.load %arg33[%c39_304, %c0_305] : memref<64x128xf32, #tpu.memory_space<vmem>>, vector<18x128xf32>
    %315 = arith.truncf %314 : vector<18x128xf32> to vector<18x128xbf16>
    %c6_306 = arith.constant 6 : index
    %c0_307 = arith.constant 0 : index
    %c0_308 = arith.constant 0 : index
    %316 = vector.load %arg13[%c6_306, %c0_307, %c0_308] : memref<9x128x128xbf16, #tpu.memory_space<vmem>>, vector<1x128x128xbf16>
    %317 = vector.shape_cast %316 : vector<1x128x128xbf16> to vector<128x128xbf16>
    %cst_309 = arith.constant dense<0.000000e+00> : vector<18x128xf32>
    %318 = tpu.matmul %315, %317, %cst_309 {dimension_numbers = #tpu.dot_dimension_numbers<[1], [0], [0], [1], [0, 0, 1, 1], [], []>} : vector<18x128xbf16>, vector<128x128xbf16>, vector<18x128xf32> -> vector<18x128xf32>
    %319 = arith.addf %313, %318 : vector<18x128xf32>
    %c40_310 = arith.constant 40 : index
    %c0_311 = arith.constant 0 : index
    %320 = vector.load %arg33[%c40_310, %c0_311] : memref<64x128xf32, #tpu.memory_space<vmem>>, vector<18x128xf32>
    %321 = arith.truncf %320 : vector<18x128xf32> to vector<18x128xbf16>
    %c7_312 = arith.constant 7 : index
    %c0_313 = arith.constant 0 : index
    %c0_314 = arith.constant 0 : index
    %322 = vector.load %arg13[%c7_312, %c0_313, %c0_314] : memref<9x128x128xbf16, #tpu.memory_space<vmem>>, vector<1x128x128xbf16>
    %323 = vector.shape_cast %322 : vector<1x128x128xbf16> to vector<128x128xbf16>
    %cst_315 = arith.constant dense<0.000000e+00> : vector<18x128xf32>
    %324 = tpu.matmul %321, %323, %cst_315 {dimension_numbers = #tpu.dot_dimension_numbers<[1], [0], [0], [1], [0, 0, 1, 1], [], []>} : vector<18x128xbf16>, vector<128x128xbf16>, vector<18x128xf32> -> vector<18x128xf32>
    %325 = arith.addf %319, %324 : vector<18x128xf32>
    %c41_316 = arith.constant 41 : index
    %c0_317 = arith.constant 0 : index
    %326 = vector.load %arg33[%c41_316, %c0_317] : memref<64x128xf32, #tpu.memory_space<vmem>>, vector<18x128xf32>
    %327 = arith.truncf %326 : vector<18x128xf32> to vector<18x128xbf16>
    %c8_318 = arith.constant 8 : index
    %c0_319 = arith.constant 0 : index
    %c0_320 = arith.constant 0 : index
    %328 = vector.load %arg13[%c8_318, %c0_319, %c0_320] : memref<9x128x128xbf16, #tpu.memory_space<vmem>>, vector<1x128x128xbf16>
    %329 = vector.shape_cast %328 : vector<1x128x128xbf16> to vector<128x128xbf16>
    %cst_321 = arith.constant dense<0.000000e+00> : vector<18x128xf32>
    %330 = tpu.matmul %327, %329, %cst_321 {dimension_numbers = #tpu.dot_dimension_numbers<[1], [0], [0], [1], [0, 0, 1, 1], [], []>} : vector<18x128xbf16>, vector<128x128xbf16>, vector<18x128xf32> -> vector<18x128xf32>
    %331 = arith.addf %325, %330 : vector<18x128xf32>
    %c0_322 = arith.constant 0 : index
    %c0_323 = arith.constant 0 : index
    %332 = vector.load %arg14[%c0_322, %c0_323] : memref<1x128xf32, #tpu.memory_space<vmem>>, vector<1x128xf32>
    %333 = vector.broadcast %332 : vector<1x128xf32> to vector<18x128xf32>
    %334 = arith.mulf %331, %333 : vector<18x128xf32>
    %c0_324 = arith.constant 0 : index
    %c0_325 = arith.constant 0 : index
    %335 = vector.load %arg15[%c0_324, %c0_325] : memref<1x128xf32, #tpu.memory_space<vmem>>, vector<1x128xf32>
    %336 = vector.broadcast %335 : vector<1x128xf32> to vector<18x128xf32>
    %337 = arith.addf %334, %336 : vector<18x128xf32>
    %cst_326 = arith.constant 0.000000e+00 : f32
    %338 = vector.broadcast %cst_326 : f32 to vector<18x128xf32>
    %339 = arith.maximumf %337, %338 : vector<18x128xf32>
    %340 = vector.extract_strided_slice %339 {offsets = [0, 0], sizes = [2, 128], strides = [1, 1]} : vector<18x128xf32> to vector<2x128xf32>
    %c8_327 = arith.constant 8 : index
    %c0_328 = arith.constant 0 : index
    %341 = vector.load %arg34[%c8_327, %c0_328] : memref<32x128xf32, #tpu.memory_space<vmem>>, vector<2x128xf32>
    tpu.vector_store %arg34[%c8_327, %c0_328], %340 {strides = array<i32>} : memref<32x128xf32, #tpu.memory_space<vmem>>, vector<2x128xf32>,
    %342 = vector.extract_strided_slice %339 {offsets = [16, 0], sizes = [2, 128], strides = [1, 1]} : vector<18x128xf32> to vector<2x128xf32>
    %c16 = arith.constant 16 : index
    %c0_329 = arith.constant 0 : index
    %343 = vector.load %arg34[%c16, %c0_329] : memref<32x128xf32, #tpu.memory_space<vmem>>, vector<2x128xf32>
    tpu.vector_store %arg34[%c16, %c0_329], %342 {strides = array<i32>} : memref<32x128xf32, #tpu.memory_space<vmem>>, vector<2x128xf32>,
    %c8_330 = arith.constant 8 : index
    %c0_331 = arith.constant 0 : index
    %344 = vector.load %arg34[%c8_330, %c0_331] : memref<32x128xf32, #tpu.memory_space<vmem>>, vector<16x128xf32>
    %345 = arith.truncf %344 : vector<16x128xf32> to vector<16x128xbf16>
    %c0_332 = arith.constant 0 : index
    %c0_333 = arith.constant 0 : index
    %346 = vector.load %arg34[%c0_332, %c0_333] : memref<32x128xf32, #tpu.memory_space<vmem>>, vector<16x128xf32>
    %347 = arith.truncf %346 : vector<16x128xf32> to vector<16x128xbf16>
    %c16_334 = arith.constant 16 : index
    %c0_335 = arith.constant 0 : index
    %348 = vector.load %arg34[%c16_334, %c0_335] : memref<32x128xf32, #tpu.memory_space<vmem>>, vector<16x128xf32>
    %349 = arith.truncf %348 : vector<16x128xf32> to vector<16x128xbf16>
    %c0_336 = arith.constant 0 : index
    %c0_337 = arith.constant 0 : index
    %350 = vector.load %arg16[%c0_336, %c0_337] : memref<128x256xbf16, #tpu.memory_space<vmem>>, vector<128x256xbf16>
    %cst_338 = arith.constant dense<0.000000e+00> : vector<16x256xf32>
    %351 = tpu.matmul %345, %350, %cst_338 {dimension_numbers = #tpu.dot_dimension_numbers<[1], [0], [0], [1], [0, 0, 1, 1], [], []>} : vector<16x128xbf16>, vector<128x256xbf16>, vector<16x256xf32> -> vector<16x256xf32>
    %352 = vector.extract_strided_slice %351 {offsets = [0, 0], sizes = [16, 128], strides = [1, 1]} : vector<16x256xf32> to vector<16x128xf32>
    %c0_339 = arith.constant 0 : index
    %c0_340 = arith.constant 0 : index
    %353 = vector.load %arg17[%c0_339, %c0_340] : memref<128x128xbf16, #tpu.memory_space<vmem>>, vector<128x128xbf16>
    %cst_341 = arith.constant dense<0.000000e+00> : vector<16x128xf32>
    %354 = tpu.matmul %347, %353, %cst_341 {dimension_numbers = #tpu.dot_dimension_numbers<[1], [0], [0], [1], [0, 0, 1, 1], [], []>} : vector<16x128xbf16>, vector<128x128xbf16>, vector<16x128xf32> -> vector<16x128xf32>
    %355 = arith.addf %352, %354 : vector<16x128xf32>
    %356 = vector.extract_strided_slice %351 {offsets = [0, 128], sizes = [16, 128], strides = [1, 1]} : vector<16x256xf32> to vector<16x128xf32>
    %c0_342 = arith.constant 0 : index
    %c0_343 = arith.constant 0 : index
    %357 = vector.load %arg18[%c0_342, %c0_343] : memref<128x128xbf16, #tpu.memory_space<vmem>>, vector<128x128xbf16>
    %cst_344 = arith.constant dense<0.000000e+00> : vector<16x128xf32>
    %358 = tpu.matmul %349, %357, %cst_344 {dimension_numbers = #tpu.dot_dimension_numbers<[1], [0], [0], [1], [0, 0, 1, 1], [], []>} : vector<16x128xbf16>, vector<128x128xbf16>, vector<16x128xf32> -> vector<16x128xf32>
    %359 = arith.addf %356, %358 : vector<16x128xf32>
    %c0_345 = arith.constant 0 : index
    %c0_346 = arith.constant 0 : index
    %360 = vector.load %arg19[%c0_345, %c0_346] : memref<1x128xf32, #tpu.memory_space<vmem>>, vector<1x128xf32>
    %361 = vector.broadcast %360 : vector<1x128xf32> to vector<16x128xf32>
    %362 = arith.mulf %355, %361 : vector<16x128xf32>
    %c0_347 = arith.constant 0 : index
    %c0_348 = arith.constant 0 : index
    %363 = vector.load %arg20[%c0_347, %c0_348] : memref<1x128xf32, #tpu.memory_space<vmem>>, vector<1x128xf32>
    %364 = vector.broadcast %363 : vector<1x128xf32> to vector<16x128xf32>
    %365 = arith.addf %362, %364 : vector<16x128xf32>
    %cst_349 = arith.constant 0.000000e+00 : f32
    %366 = vector.broadcast %cst_349 : f32 to vector<16x128xf32>
    %367 = arith.cmpf ogt, %365, %366 : vector<16x128xf32>
    %cst_350 = arith.constant 0.000000e+00 : f32
    %368 = vector.broadcast %cst_350 : f32 to vector<16x128xf32>
    %369 = arith.minimumf %365, %368 : vector<16x128xf32>
    %370 = math.exp %369 : vector<16x128xf32>
    %cst_351 = arith.constant 1.000000e+00 : f32
    %371 = vector.broadcast %cst_351 : f32 to vector<16x128xf32>
    %372 = arith.subf %370, %371 : vector<16x128xf32>
    %373 = arith.select %367, %365, %372 : vector<16x128xi1>, vector<16x128xf32>
    %c0_352 = arith.constant 0 : index
    %c0_353 = arith.constant 0 : index
    %374 = vector.load %arg19[%c0_352, %c0_353] : memref<1x128xf32, #tpu.memory_space<vmem>>, vector<1x128xf32>
    %375 = vector.broadcast %374 : vector<1x128xf32> to vector<16x128xf32>
    %376 = arith.mulf %359, %375 : vector<16x128xf32>
    %c0_354 = arith.constant 0 : index
    %c0_355 = arith.constant 0 : index
    %377 = vector.load %arg20[%c0_354, %c0_355] : memref<1x128xf32, #tpu.memory_space<vmem>>, vector<1x128xf32>
    %378 = vector.broadcast %377 : vector<1x128xf32> to vector<16x128xf32>
    %379 = arith.addf %376, %378 : vector<16x128xf32>
    %cst_356 = arith.constant 0.000000e+00 : f32
    %380 = vector.broadcast %cst_356 : f32 to vector<16x128xf32>
    %381 = arith.cmpf ogt, %379, %380 : vector<16x128xf32>
    %cst_357 = arith.constant 0.000000e+00 : f32
    %382 = vector.broadcast %cst_357 : f32 to vector<16x128xf32>
    %383 = arith.minimumf %379, %382 : vector<16x128xf32>
    %384 = math.exp %383 : vector<16x128xf32>
    %cst_358 = arith.constant 1.000000e+00 : f32
    %385 = vector.broadcast %cst_358 : f32 to vector<16x128xf32>
    %386 = arith.subf %384, %385 : vector<16x128xf32>
    %387 = arith.select %381, %379, %386 : vector<16x128xi1>, vector<16x128xf32>
    %388 = vector.extract_strided_slice %373 {offsets = [0, 0], sizes = [2, 128], strides = [1, 1]} : vector<16x128xf32> to vector<2x128xf32>
    %c8_359 = arith.constant 8 : index
    %c0_360 = arith.constant 0 : index
    %389 = vector.load %arg35[%c8_359, %c0_360] : memref<48x128xf32, #tpu.memory_space<vmem>>, vector<2x128xf32>
    tpu.vector_store %arg35[%c8_359, %c0_360], %388 {strides = array<i32>} : memref<48x128xf32, #tpu.memory_space<vmem>>, vector<2x128xf32>,
    %390 = vector.extract_strided_slice %387 {offsets = [0, 0], sizes = [2, 128], strides = [1, 1]} : vector<16x128xf32> to vector<2x128xf32>
    %c16_361 = arith.constant 16 : index
    %c0_362 = arith.constant 0 : index
    %391 = vector.load %arg35[%c16_361, %c0_362] : memref<48x128xf32, #tpu.memory_space<vmem>>, vector<2x128xf32>
    tpu.vector_store %arg35[%c16_361, %c0_362], %390 {strides = array<i32>} : memref<48x128xf32, #tpu.memory_space<vmem>>, vector<2x128xf32>,
    %392 = vector.extract_strided_slice %373 {offsets = [8, 0], sizes = [2, 128], strides = [1, 1]} : vector<16x128xf32> to vector<2x128xf32>
    %c24_363 = arith.constant 24 : index
    %c0_364 = arith.constant 0 : index
    %393 = vector.load %arg35[%c24_363, %c0_364] : memref<48x128xf32, #tpu.memory_space<vmem>>, vector<2x128xf32>
    tpu.vector_store %arg35[%c24_363, %c0_364], %392 {strides = array<i32>} : memref<48x128xf32, #tpu.memory_space<vmem>>, vector<2x128xf32>,
    %394 = vector.extract_strided_slice %387 {offsets = [8, 0], sizes = [2, 128], strides = [1, 1]} : vector<16x128xf32> to vector<2x128xf32>
    %c32 = arith.constant 32 : index
    %c0_365 = arith.constant 0 : index
    %395 = vector.load %arg35[%c32, %c0_365] : memref<48x128xf32, #tpu.memory_space<vmem>>, vector<2x128xf32>
    tpu.vector_store %arg35[%c32, %c0_365], %394 {strides = array<i32>} : memref<48x128xf32, #tpu.memory_space<vmem>>, vector<2x128xf32>,
    %c8_366 = arith.constant 8 : index
    %c0_367 = arith.constant 0 : index
    %396 = vector.load %arg35[%c8_366, %c0_367] : memref<48x128xf32, #tpu.memory_space<vmem>>, vector<32x128xf32>
    %397 = arith.truncf %396 : vector<32x128xf32> to vector<32x128xbf16>
    %c0_368 = arith.constant 0 : index
    %c0_369 = arith.constant 0 : index
    %398 = vector.load %arg35[%c0_368, %c0_369] : memref<48x128xf32, #tpu.memory_space<vmem>>, vector<32x128xf32>
    %399 = arith.truncf %398 : vector<32x128xf32> to vector<32x128xbf16>
    %c16_370 = arith.constant 16 : index
    %c0_371 = arith.constant 0 : index
    %400 = vector.load %arg35[%c16_370, %c0_371] : memref<48x128xf32, #tpu.memory_space<vmem>>, vector<32x128xf32>
    %401 = arith.truncf %400 : vector<32x128xf32> to vector<32x128xbf16>
    %c0_372 = arith.constant 0 : index
    %c0_373 = arith.constant 0 : index
    %402 = vector.load %arg21[%c0_372, %c0_373] : memref<128x256xbf16, #tpu.memory_space<vmem>>, vector<128x256xbf16>
    %cst_374 = arith.constant dense<0.000000e+00> : vector<32x256xf32>
    %403 = tpu.matmul %397, %402, %cst_374 {dimension_numbers = #tpu.dot_dimension_numbers<[1], [0], [0], [1], [0, 0, 1, 1], [], []>} : vector<32x128xbf16>, vector<128x256xbf16>, vector<32x256xf32> -> vector<32x256xf32>
    %404 = vector.extract_strided_slice %403 {offsets = [0, 0], sizes = [32, 128], strides = [1, 1]} : vector<32x256xf32> to vector<32x128xf32>
    %c0_375 = arith.constant 0 : index
    %c0_376 = arith.constant 0 : index
    %405 = vector.load %arg22[%c0_375, %c0_376] : memref<128x128xbf16, #tpu.memory_space<vmem>>, vector<128x128xbf16>
    %cst_377 = arith.constant dense<0.000000e+00> : vector<32x128xf32>
    %406 = tpu.matmul %399, %405, %cst_377 {dimension_numbers = #tpu.dot_dimension_numbers<[1], [0], [0], [1], [0, 0, 1, 1], [], []>} : vector<32x128xbf16>, vector<128x128xbf16>, vector<32x128xf32> -> vector<32x128xf32>
    %407 = arith.addf %404, %406 : vector<32x128xf32>
    %408 = vector.extract_strided_slice %403 {offsets = [0, 128], sizes = [32, 128], strides = [1, 1]} : vector<32x256xf32> to vector<32x128xf32>
    %c0_378 = arith.constant 0 : index
    %c0_379 = arith.constant 0 : index
    %409 = vector.load %arg23[%c0_378, %c0_379] : memref<128x128xbf16, #tpu.memory_space<vmem>>, vector<128x128xbf16>
    %cst_380 = arith.constant dense<0.000000e+00> : vector<32x128xf32>
    %410 = tpu.matmul %401, %409, %cst_380 {dimension_numbers = #tpu.dot_dimension_numbers<[1], [0], [0], [1], [0, 0, 1, 1], [], []>} : vector<32x128xbf16>, vector<128x128xbf16>, vector<32x128xf32> -> vector<32x128xf32>
    %411 = arith.addf %408, %410 : vector<32x128xf32>
    %c0_381 = arith.constant 0 : index
    %c0_382 = arith.constant 0 : index
    %412 = vector.load %arg24[%c0_381, %c0_382] : memref<1x128xf32, #tpu.memory_space<vmem>>, vector<1x128xf32>
    %413 = vector.broadcast %412 : vector<1x128xf32> to vector<32x128xf32>
    %414 = arith.mulf %407, %413 : vector<32x128xf32>
    %c0_383 = arith.constant 0 : index
    %c0_384 = arith.constant 0 : index
    %415 = vector.load %arg25[%c0_383, %c0_384] : memref<1x128xf32, #tpu.memory_space<vmem>>, vector<1x128xf32>
    %416 = vector.broadcast %415 : vector<1x128xf32> to vector<32x128xf32>
    %417 = arith.addf %414, %416 : vector<32x128xf32>
    %cst_385 = arith.constant 0.000000e+00 : f32
    %418 = vector.broadcast %cst_385 : f32 to vector<32x128xf32>
    %419 = arith.cmpf ogt, %417, %418 : vector<32x128xf32>
    %cst_386 = arith.constant 0.000000e+00 : f32
    %420 = vector.broadcast %cst_386 : f32 to vector<32x128xf32>
    %421 = arith.minimumf %417, %420 : vector<32x128xf32>
    %422 = math.exp %421 : vector<32x128xf32>
    %cst_387 = arith.constant 1.000000e+00 : f32
    %423 = vector.broadcast %cst_387 : f32 to vector<32x128xf32>
    %424 = arith.subf %422, %423 : vector<32x128xf32>
    %425 = arith.select %419, %417, %424 : vector<32x128xi1>, vector<32x128xf32>
    %c0_388 = arith.constant 0 : index
    %c0_389 = arith.constant 0 : index
    %426 = vector.load %arg24[%c0_388, %c0_389] : memref<1x128xf32, #tpu.memory_space<vmem>>, vector<1x128xf32>
    %427 = vector.broadcast %426 : vector<1x128xf32> to vector<32x128xf32>
    %428 = arith.mulf %411, %427 : vector<32x128xf32>
    %c0_390 = arith.constant 0 : index
    %c0_391 = arith.constant 0 : index
    %429 = vector.load %arg25[%c0_390, %c0_391] : memref<1x128xf32, #tpu.memory_space<vmem>>, vector<1x128xf32>
    %430 = vector.broadcast %429 : vector<1x128xf32> to vector<32x128xf32>
    %431 = arith.addf %428, %430 : vector<32x128xf32>
    %cst_392 = arith.constant 0.000000e+00 : f32
    %432 = vector.broadcast %cst_392 : f32 to vector<32x128xf32>
    %433 = arith.cmpf ogt, %431, %432 : vector<32x128xf32>
    %cst_393 = arith.constant 0.000000e+00 : f32
    %434 = vector.broadcast %cst_393 : f32 to vector<32x128xf32>
    %435 = arith.minimumf %431, %434 : vector<32x128xf32>
    %436 = math.exp %435 : vector<32x128xf32>
    %cst_394 = arith.constant 1.000000e+00 : f32
    %437 = vector.broadcast %cst_394 : f32 to vector<32x128xf32>
    %438 = arith.subf %436, %437 : vector<32x128xf32>
    %439 = arith.select %433, %431, %438 : vector<32x128xi1>, vector<32x128xf32>
    %c0_395 = arith.constant 0 : index
    %c0_396 = arith.constant 0 : index
    %440 = vector.load %arg26[%c0_395, %c0_396] : memref<128x1xf32, #tpu.memory_space<vmem>>, vector<128x1xf32>
    %cst_397 = arith.constant dense<0.000000e+00> : vector<32x1xf32>
    %441 = tpu.matmul %425, %440, %cst_397 {dimension_numbers = #tpu.dot_dimension_numbers<[1], [0], [0], [1], [0, 0, 1, 1], [], []>} : vector<32x128xf32>, vector<128x1xf32>, vector<32x1xf32> -> vector<32x1xf32>
    %c0_398 = arith.constant 0 : index
    %c0_399 = arith.constant 0 : index
    %442 = vector.load %arg26[%c0_398, %c0_399] : memref<128x1xf32, #tpu.memory_space<vmem>>, vector<128x1xf32>
    %cst_400 = arith.constant dense<0.000000e+00> : vector<32x1xf32>
    %443 = tpu.matmul %439, %442, %cst_400 {dimension_numbers = #tpu.dot_dimension_numbers<[1], [0], [0], [1], [0, 0, 1, 1], [], []>} : vector<32x128xf32>, vector<128x1xf32>, vector<32x1xf32> -> vector<32x1xf32>
    %c0_401 = arith.constant 0 : index
    %c0_402 = arith.constant 0 : index
    %444 = vector.load %arg27[%c0_401, %c0_402] : memref<4x32xf32, #tpu.memory_space<vmem>>, vector<4x32xf32>
    %cst_403 = arith.constant dense<0.000000e+00> : vector<4x1xf32>
    %445 = tpu.matmul %444, %441, %cst_403 {dimension_numbers = #tpu.dot_dimension_numbers<[1], [0], [0], [1], [0, 0, 1, 1], [], []>} : vector<4x32xf32>, vector<32x1xf32>, vector<4x1xf32> -> vector<4x1xf32>
    %c0_404 = arith.constant 0 : index
    %c0_405 = arith.constant 0 : index
    %446 = vector.load %arg28[%c0_404, %c0_405] : memref<1x1xf32, #tpu.memory_space<vmem>>, vector<1x1xf32>
    %447 = vector.broadcast %446 : vector<1x1xf32> to vector<4x1xf32>
    %448 = arith.addf %445, %447 : vector<4x1xf32>
    %c0_406 = arith.constant 0 : index
    %c0_407 = arith.constant 0 : index
    %449 = vector.load %arg27[%c0_406, %c0_407] : memref<4x32xf32, #tpu.memory_space<vmem>>, vector<4x32xf32>
    %cst_408 = arith.constant dense<0.000000e+00> : vector<4x1xf32>
    %450 = tpu.matmul %449, %443, %cst_408 {dimension_numbers = #tpu.dot_dimension_numbers<[1], [0], [0], [1], [0, 0, 1, 1], [], []>} : vector<4x32xf32>, vector<32x1xf32>, vector<4x1xf32> -> vector<4x1xf32>
    %c0_409 = arith.constant 0 : index
    %c0_410 = arith.constant 0 : index
    %451 = vector.load %arg28[%c0_409, %c0_410] : memref<1x1xf32, #tpu.memory_space<vmem>>, vector<1x1xf32>
    %452 = vector.broadcast %451 : vector<1x1xf32> to vector<4x1xf32>
    %453 = arith.addf %450, %452 : vector<4x1xf32>
    %c0_411 = arith.constant 0 : index
    %c0_412 = arith.constant 0 : index
    %c0_413 = arith.constant 0 : index
    %c0_414 = arith.constant 0 : index
    %454 = vector.load %arg29[%c0_411, %c0_412, %c0_413, %c0_414] : memref<1x2x4x1xf32, #tpu.memory_space<vmem>>, vector<1x1x4x1xf32>
    %455 = vector.shape_cast %454 : vector<1x1x4x1xf32> to vector<4x1xf32>
    %456 = vector.shape_cast %448 : vector<4x1xf32> to vector<1x1x4x1xf32>
    tpu.vector_store %arg29[%c0_411, %c0_412, %c0_413, %c0_414], %456 {strides = array<i32>} : memref<1x2x4x1xf32, #tpu.memory_space<vmem>>, vector<1x1x4x1xf32>,
    %c0_415 = arith.constant 0 : index
    %c1_416 = arith.constant 1 : index
    %c0_417 = arith.constant 0 : index
    %c0_418 = arith.constant 0 : index
    %457 = vector.load %arg29[%c0_415, %c1_416, %c0_417, %c0_418] : memref<1x2x4x1xf32, #tpu.memory_space<vmem>>, vector<1x1x4x1xf32>
    %458 = vector.shape_cast %457 : vector<1x1x4x1xf32> to vector<4x1xf32>
    %459 = vector.shape_cast %453 : vector<4x1xf32> to vector<1x1x4x1xf32>
    tpu.vector_store %arg29[%c0_415, %c1_416, %c0_417, %c0_418], %459 {strides = array<i32>} : memref<1x2x4x1xf32, #tpu.memory_space<vmem>>, vector<1x1x4x1xf32>,
    return
  }
  func.func @transform_0(%arg0: i32) -> (i32, i32, i32, i32) {
    %c0_i32 = arith.constant 0 : i32
    %c0_i32_0 = arith.constant 0 : i32
    %c0_i32_1 = arith.constant 0 : i32
    %c0_i32_2 = arith.constant 0 : i32
    return %arg0, %c0_i32, %c0_i32_0, %c0_i32_1 : i32, i32, i32, i32
  }
  func.func @transform_1(%arg0: i32) -> (i32, i32, i32) {
    %c0_i32 = arith.constant 0 : i32
    %c0_i32_0 = arith.constant 0 : i32
    %c0_i32_1 = arith.constant 0 : i32
    %c0_i32_2 = arith.constant 0 : i32
    return %c0_i32, %c0_i32_0, %c0_i32_1 : i32, i32, i32
  }
  func.func @transform_2(%arg0: i32) -> (i32, i32) {
    %c0_i32 = arith.constant 0 : i32
    %c0_i32_0 = arith.constant 0 : i32
    %c0_i32_1 = arith.constant 0 : i32
    return %c0_i32, %c0_i32_0 : i32, i32
  }
  func.func @transform_3(%arg0: i32) -> (i32, i32) {
    %c0_i32 = arith.constant 0 : i32
    %c0_i32_0 = arith.constant 0 : i32
    %c0_i32_1 = arith.constant 0 : i32
    return %c0_i32, %c0_i32_0 : i32, i32
  }
  func.func @transform_4(%arg0: i32) -> (i32, i32, i32) {
    %c0_i32 = arith.constant 0 : i32
    %c0_i32_0 = arith.constant 0 : i32
    %c0_i32_1 = arith.constant 0 : i32
    %c0_i32_2 = arith.constant 0 : i32
    return %c0_i32, %c0_i32_0, %c0_i32_1 : i32, i32, i32
  }
  func.func @transform_5(%arg0: i32) -> (i32, i32, i32) {
    %c0_i32 = arith.constant 0 : i32
    %c0_i32_0 = arith.constant 0 : i32
    %c0_i32_1 = arith.constant 0 : i32
    %c0_i32_2 = arith.constant 0 : i32
    return %c0_i32, %c0_i32_0, %c0_i32_1 : i32, i32, i32
  }
  func.func @transform_6(%arg0: i32) -> (i32, i32) {
    %c0_i32 = arith.constant 0 : i32
    %c0_i32_0 = arith.constant 0 : i32
    %c0_i32_1 = arith.constant 0 : i32
    return %c0_i32, %c0_i32_0 : i32, i32
  }
  func.func @transform_7(%arg0: i32) -> (i32, i32) {
    %c0_i32 = arith.constant 0 : i32
    %c0_i32_0 = arith.constant 0 : i32
    %c0_i32_1 = arith.constant 0 : i32
    return %c0_i32, %c0_i32_0 : i32, i32
  }
  func.func @transform_8(%arg0: i32) -> (i32, i32, i32, i32) {
    %c0_i32 = arith.constant 0 : i32
    %c0_i32_0 = arith.constant 0 : i32
    %c0_i32_1 = arith.constant 0 : i32
    %c0_i32_2 = arith.constant 0 : i32
    %c0_i32_3 = arith.constant 0 : i32
    return %c0_i32, %c0_i32_0, %c0_i32_1, %c0_i32_2 : i32, i32, i32, i32
  }
  func.func @transform_9(%arg0: i32) -> (i32, i32, i32) {
    %c0_i32 = arith.constant 0 : i32
    %c0_i32_0 = arith.constant 0 : i32
    %c0_i32_1 = arith.constant 0 : i32
    %c0_i32_2 = arith.constant 0 : i32
    return %c0_i32, %c0_i32_0, %c0_i32_1 : i32, i32, i32
  }
  func.func @transform_10(%arg0: i32) -> (i32, i32) {
    %c0_i32 = arith.constant 0 : i32
    %c0_i32_0 = arith.constant 0 : i32
    %c0_i32_1 = arith.constant 0 : i32
    return %c0_i32, %c0_i32_0 : i32, i32
  }
  func.func @transform_11(%arg0: i32) -> (i32, i32) {
    %c0_i32 = arith.constant 0 : i32
    %c0_i32_0 = arith.constant 0 : i32
    %c0_i32_1 = arith.constant 0 : i32
    return %c0_i32, %c0_i32_0 : i32, i32
  }
  func.func @transform_12(%arg0: i32) -> (i32, i32, i32) {
    %c0_i32 = arith.constant 0 : i32
    %c0_i32_0 = arith.constant 0 : i32
    %c0_i32_1 = arith.constant 0 : i32
    %c0_i32_2 = arith.constant 0 : i32
    return %c0_i32, %c0_i32_0, %c0_i32_1 : i32, i32, i32
  }
  func.func @transform_13(%arg0: i32) -> (i32, i32) {
    %c0_i32 = arith.constant 0 : i32
    %c0_i32_0 = arith.constant 0 : i32
    %c0_i32_1 = arith.constant 0 : i32
    return %c0_i32, %c0_i32_0 : i32, i32
  }
  func.func @transform_14(%arg0: i32) -> (i32, i32) {
    %c0_i32 = arith.constant 0 : i32
    %c0_i32_0 = arith.constant 0 : i32
    %c0_i32_1 = arith.constant 0 : i32
    return %c0_i32, %c0_i32_0 : i32, i32
  }
  func.func @transform_15(%arg0: i32) -> (i32, i32) {
    %c0_i32 = arith.constant 0 : i32
    %c0_i32_0 = arith.constant 0 : i32
    %c0_i32_1 = arith.constant 0 : i32
    return %c0_i32, %c0_i32_0 : i32, i32
  }
  func.func @transform_16(%arg0: i32) -> (i32, i32) {
    %c0_i32 = arith.constant 0 : i32
    %c0_i32_0 = arith.constant 0 : i32
    %c0_i32_1 = arith.constant 0 : i32
    return %c0_i32, %c0_i32_0 : i32, i32
  }
  func.func @transform_17(%arg0: i32) -> (i32, i32) {
    %c0_i32 = arith.constant 0 : i32
    %c0_i32_0 = arith.constant 0 : i32
    %c0_i32_1 = arith.constant 0 : i32
    return %c0_i32, %c0_i32_0 : i32, i32
  }
  func.func @transform_18(%arg0: i32) -> (i32, i32) {
    %c0_i32 = arith.constant 0 : i32
    %c0_i32_0 = arith.constant 0 : i32
    %c0_i32_1 = arith.constant 0 : i32
    return %c0_i32, %c0_i32_0 : i32, i32
  }
  func.func @transform_19(%arg0: i32) -> (i32, i32) {
    %c0_i32 = arith.constant 0 : i32
    %c0_i32_0 = arith.constant 0 : i32
    %c0_i32_1 = arith.constant 0 : i32
    return %c0_i32, %c0_i32_0 : i32, i32
  }
  func.func @transform_20(%arg0: i32) -> (i32, i32) {
    %c0_i32 = arith.constant 0 : i32
    %c0_i32_0 = arith.constant 0 : i32
    %c0_i32_1 = arith.constant 0 : i32
    return %c0_i32, %c0_i32_0 : i32, i32
  }
  func.func @transform_21(%arg0: i32) -> (i32, i32) {
    %c0_i32 = arith.constant 0 : i32
    %c0_i32_0 = arith.constant 0 : i32
    %c0_i32_1 = arith.constant 0 : i32
    return %c0_i32, %c0_i32_0 : i32, i32
  }
  func.func @transform_22(%arg0: i32) -> (i32, i32) {
    %c0_i32 = arith.constant 0 : i32
    %c0_i32_0 = arith.constant 0 : i32
    %c0_i32_1 = arith.constant 0 : i32
    return %c0_i32, %c0_i32_0 : i32, i32
  }
  func.func @transform_23(%arg0: i32) -> (i32, i32) {
    %c0_i32 = arith.constant 0 : i32
    %c0_i32_0 = arith.constant 0 : i32
    %c0_i32_1 = arith.constant 0 : i32
    return %c0_i32, %c0_i32_0 : i32, i32
  }
  func.func @transform_24(%arg0: i32) -> (i32, i32) {
    %c0_i32 = arith.constant 0 : i32
    %c0_i32_0 = arith.constant 0 : i32
    %c0_i32_1 = arith.constant 0 : i32
    return %c0_i32, %c0_i32_0 : i32, i32
  }
  func.func @transform_25(%arg0: i32) -> (i32, i32) {
    %c0_i32 = arith.constant 0 : i32
    %c0_i32_0 = arith.constant 0 : i32
    %c0_i32_1 = arith.constant 0 : i32
    return %c0_i32, %c0_i32_0 : i32, i32
  }
  func.func @transform_26(%arg0: i32) -> (i32, i32) {
    %c0_i32 = arith.constant 0 : i32
    %c0_i32_0 = arith.constant 0 : i32
    %c0_i32_1 = arith.constant 0 : i32
    return %c0_i32, %c0_i32_0 : i32, i32
  }
  func.func @transform_27(%arg0: i32) -> (i32, i32) {
    %c0_i32 = arith.constant 0 : i32
    %c0_i32_0 = arith.constant 0 : i32
    %c0_i32_1 = arith.constant 0 : i32
    return %c0_i32, %c0_i32_0 : i32, i32
  }
  func.func @transform_28(%arg0: i32) -> (i32, i32, i32, i32) {
    %c0_i32 = arith.constant 0 : i32
    %c0_i32_0 = arith.constant 0 : i32
    %c0_i32_1 = arith.constant 0 : i32
    %c0_i32_2 = arith.constant 0 : i32
    return %arg0, %c0_i32, %c0_i32_0, %c0_i32_1 : i32, i32, i32, i32
  }
}

</mosaic_0001>

<llo_original>
// kernel: tile.37
$region0: #{tile.37}
  #allocation0 [shape = 's32[1]{0}', space=sflag, size = 0x4, scoped, tag = 'scoped memory for tile.37']
  %s0 = inlined_call_operand.vmem [shape: f32[16], index: 0, kind: input, shape index: {}]
  %s1 = inlined_call_operand.vmem [shape: f32[16,16], index: 1, kind: output, shape index: {}]
  // Predicated region
  $region2: #{tile.37} parent=0 // pred_check
    _
  $region3: #{tile.37} parent=0 // pred_check_branch
    %3 = sbr.rel (0) target = $region5
  $region4: #{tile.37} parent=0 // pred_region
    _
  $region5: #{tile.37} parent=0 // pred_fallthru
    _
  %v4 = vld [vmem:[%s0] ss:$0 sm:$0xff]
  %5 = vst [vmem:[%s1] sm:$0xff] %v4
  %s6 = scalar_lea.vmem %s1, 8
  %7 = vst [vmem:[%s6] sm:$0xff] %v4

// kernel: tile.38
$region0: #{tile.38}
  %s0 = inlined_call_operand.vmem [shape: f32[16,16], index: 0, kind: input, shape index: {}]
  %s1 = inlined_call_operand.vmem [shape: f32[1,256], index: 1, kind: output, shape index: {}]
  $region1: #{tile.38} parent=0
    #allocation0 [shape = 'u8[8192]{0}', space=vmem, size = 0x2000, scoped, tag = 'scoped mem for output reshape']
    %s2 = smov 3
    %v3 = vld [vmem:[%s0] ss:$8 sm:%s2]
    %vm4 = vcmask 130048
    %5 = vst.msk [vmem:[#allocation0] ss:$8 sm:$0x3] %vm4, %v3
    %s6 = scalar_lea.vmem %s0, 7
    %s7 = smov 3
    %v8 = vld [vmem:[%s6] ss:$8 sm:%s7]
    %9 = vrot.lane.b32.xlu0 %v8, 112
    %v10 = vpop.permute.xlu0 %9
    %vm11 = vcmask 1048448
    %12 = vst.msk [vmem:[#allocation0] ss:$8 sm:$0x3] %vm11, %v10
    %s13 = scalar_lea.vmem %s0, 6
    %s14 = smov 3
    %v15 = vld [vmem:[%s13] ss:$8 sm:%s14]
    %16 = vrot.lane.b32.xlu0 %v15, 96
    %v17 = vpop.permute.xlu0 %16
    %vm18 = vcmask 917248
    %19 = vst.msk [vmem:[#allocation0] ss:$8 sm:$0x3] %vm18, %v17
    %s20 = scalar_lea.vmem %s0, 5
    %s21 = smov 3
    %v22 = vld [vmem:[%s20] ss:$8 sm:%s21]
    %23 = vrot.lane.b32.xlu0 %v22, 80
    %v24 = vpop.permute.xlu0 %23
    %vm25 = vcmask 786048
    %26 = vst.msk [vmem:[#allocation0] ss:$8 sm:$0x3] %vm25, %v24
    %s27 = scalar_lea.vmem %s0, 4
    %s28 = smov 3
    %v29 = vld [vmem:[%s27] ss:$8 sm:%s28]
    %30 = vrot.lane.b32.xlu0 %v29, 64
    %v31 = vpop.permute.xlu0 %30
    %vm32 = vcmask 654848
    %33 = vst.msk [vmem:[#allocation0] ss:$8 sm:$0x3] %vm32, %v31
    %s34 = scalar_lea.vmem %s0, 3
    %s35 = smov 3
    %v36 = vld [vmem:[%s34] ss:$8 sm:%s35]
    %37 = vrot.lane.b32.xlu0 %v36, 48
    %v38 = vpop.permute.xlu0 %37
    %vm39 = vcmask 523648
    %40 = vst.msk [vmem:[#allocation0] ss:$8 sm:$0x3] %vm39, %v38
    %s41 = scalar_lea.vmem %s0, 2
    %s42 = smov 3
    %v43 = vld [vmem:[%s41] ss:$8 sm:%s42]
    %44 = vrot.lane.b32.xlu0 %v43, 32
    %v45 = vpop.permute.xlu0 %44
    %vm46 = vcmask 392448
    %47 = vst.msk [vmem:[#allocation0] ss:$8 sm:$0x3] %vm46, %v45
    %s48 = scalar_lea.vmem %s0, 1
    %s49 = smov 3
    %v50 = vld [vmem:[%s48] ss:$8 sm:%s49]
    %51 = vrot.lane.b32.xlu0 %v50, 16
    %v52 = vpop.permute.xlu0 %51
    %vm53 = vcmask 261248
    %54 = vst.msk [vmem:[#allocation0] ss:$8 sm:$0x3] %vm53, %v52
    %s56 = ssub.s32 2, 1
    %v57 = vld [vmem:[#allocation0] sm:%s56]
    %s59 = ssub.s32 2, 1
    %60 = vst [vmem:[%s1] sm:%s59] %v57
    %s61 = scalar_lea.vmem [#allocation0], 8
    %v62 = vld [vmem:[%s61] sm:%s56]
    %s64 = ssub.s32 2, 1
    %s65 = scalar_lea.vmem %s1, 1
    %66 = vst [vmem:[%s65] sm:%s64] %v62

// kernel: tile.42
$region0: #{tile.42}
  #allocation0 [shape = 's32[1]{0}', space=sflag, size = 0x4, scoped, tag = 'scoped memory for tile.42']
  %s0 = inlined_call_operand.vmem [shape: f32[32], index: 0, kind: input, shape index: {}]
  %s1 = inlined_call_operand.vmem [shape: f32[8,32], index: 1, kind: output, shape index: {}]
  // Predicated region
  $region2: #{tile.42} parent=0 // pred_check
    _
  $region3: #{tile.42} parent=0 // pred_check_branch
    %3 = sbr.rel (0) target = $region5
  $region4: #{tile.42} parent=0 // pred_region
    _
  $region5: #{tile.42} parent=0 // pred_fallthru
    _
  %v4 = vld [vmem:[%s0] ss:$0 sm:$0xff]
  %5 = vst [vmem:[%s1] sm:$0xff] %v4

// kernel: tile.43
$region0: #{tile.43}
  %s0 = inlined_call_operand.vmem [shape: f32[8,32], index: 0, kind: input, shape index: {}]
  %s1 = inlined_call_operand.vmem [shape: f32[1,256], index: 1, kind: output, shape index: {}]
  $region1: #{tile.43} parent=0
    #allocation0 [shape = 'u8[8192]{0}', space=vmem, size = 0x2000, scoped, tag = 'scoped mem for output reshape']
    %s2 = smov 3
    %v3 = vld [vmem:[%s0] ss:$4 sm:%s2]
    %vm4 = vcmask 261120
    %5 = vst.msk [vmem:[#allocation0] ss:$8 sm:$0x3] %vm4, %v3
    %s6 = scalar_lea.vmem %s0, 3
    %s7 = smov 3
    %v8 = vld [vmem:[%s6] ss:$4 sm:%s7]
    %9 = vrot.lane.b32.xlu0 %v8, 96
    %v10 = vpop.permute.xlu0 %9
    %vm11 = vcmask 1048320
    %12 = vst.msk [vmem:[#allocation0] ss:$8 sm:$0x3] %vm11, %v10
    %s13 = scalar_lea.vmem %s0, 2
    %s14 = smov 3
    %v15 = vld [vmem:[%s13] ss:$4 sm:%s14]
    %16 = vrot.lane.b32.xlu0 %v15, 64
    %v17 = vpop.permute.xlu0 %16
    %vm18 = vcmask 785920
    %19 = vst.msk [vmem:[#allocation0] ss:$8 sm:$0x3] %vm18, %v17
    %s20 = scalar_lea.vmem %s0, 1
    %s21 = smov 3
    %v22 = vld [vmem:[%s20] ss:$4 sm:%s21]
    %23 = vrot.lane.b32.xlu0 %v22, 32
    %v24 = vpop.permute.xlu0 %23
    %vm25 = vcmask 523520
    %26 = vst.msk [vmem:[#allocation0] ss:$8 sm:$0x3] %vm25, %v24
    %s28 = ssub.s32 2, 1
    %v29 = vld [vmem:[#allocation0] sm:%s28]
    %s31 = ssub.s32 2, 1
    %32 = vst [vmem:[%s1] sm:%s31] %v29
    %s33 = scalar_lea.vmem [#allocation0], 8
    %v34 = vld [vmem:[%s33] sm:%s28]
    %s36 = ssub.s32 2, 1
    %s37 = scalar_lea.vmem %s1, 1
    %38 = vst [vmem:[%s37] sm:%s36] %v34

// kernel: tile.47
$region0: #{tile.47}
  #allocation0 [shape = 's32[1]{0}', space=sflag, size = 0x4, scoped, tag = 'scoped memory for tile.47']
  %s0 = inlined_call_operand.vmem [shape: f32[64], index: 0, kind: input, shape index: {}]
  %s1 = inlined_call_operand.vmem [shape: f32[2,64], index: 1, kind: output, shape index: {}]
  // Predicated region
  $region2: #{tile.47} parent=0 // pred_check
    _
  $region3: #{tile.47} parent=0 // pred_check_branch
    %3 = sbr.rel (0) target = $region5
  $region4: #{tile.47} parent=0 // pred_region
    _
  $region5: #{tile.47} parent=0 // pred_fallthru
    _
  %v4 = vld [vmem:[%s0] ss:$0 sm:$0xff]
  %5 = vst [vmem:[%s1] sm:$0x3] %v4

// kernel: tile.48
$region0: #{tile.48}
  %s0 = inlined_call_operand.vmem [shape: f32[2,64], index: 0, kind: input, shape index: {}]
  %s1 = inlined_call_operand.vmem [shape: f32[1,128], index: 1, kind: output, shape index: {}]
  $region1: #{tile.48} parent=0
    #allocation0 [shape = 'u8[4096]{0}', space=vmem, size = 0x1000, scoped, tag = 'scoped mem for output reshape']
    #allocation1 [shape = 'u8[4096]{0}', space=vmem, size = 0x1000, scoped, tag = 'scoped mem for input reshape']
    %s3 = ssub.s32 4, 1
    %v4 = vld [vmem:[%s0] sm:%s3]
    %5 = vst [vmem:[#allocation1] sm:%s3] %v4
    %v6 = vld [vmem:[#allocation1] sm:$0x1]
    %vm7 = vcmask 523264
    %8 = vst.msk [vmem:[#allocation0] sm:$0x1] %vm7, %v6
    %s9 = scalar_lea.vmem [#allocation1], 1
    %v10 = vld [vmem:[%s9] sm:$0x1]
    %11 = vrot.lane.b32.xlu0 %v10, 64
    %v12 = vpop.permute.xlu0 %11
    %vm13 = vcmask 1048064
    %14 = vst.msk [vmem:[#allocation0] sm:$0x1] %vm13, %v12
    %s16 = ssub.s32 2, 1
    %v17 = vld [vmem:[#allocation0] sm:%s16]
    %s19 = ssub.s32 2, 1
    %20 = vst [vmem:[%s1] sm:%s19] %v17

// kernel: n3ded64_forward.1
$region0: #{n3ded64_forward.1}
  #allocation0 [shape = 'u32[]', space=smem, size = 0x4, offset = 0x4, fixed_abs, tag = 'smem constant byte address 0x4 - core index']
  #allocation1 [shape = 'u32[72,128]{1,0:T(1,128)}', space=vmem, size = 0x9000, scoped, tag = 'internal scratch']
  #allocation2 [shape = 'f32[8,26,48]{2,1,0:T(8,128)}', space=vmem, size = 0x20000, scoped, tag = 'scratch operand']
  #allocation3 [shape = 'f32[4,18,128]{2,1,0:T(8,128)}', space=vmem, size = 0xc000, scoped, tag = 'scratch operand']
  #allocation4 [shape = 'f32[64,64]{1,0:T(8,128)}', space=vmem, size = 0x8000, scoped, tag = 'scratch operand']
  #allocation5 [shape = 'f32[64,128]{1,0:T(8,128)}', space=vmem, size = 0x8000, scoped, tag = 'scratch operand']
  #allocation6 [shape = 'f32[32,128]{1,0:T(8,128)}', space=vmem, size = 0x4000, scoped, tag = 'scratch operand']
  #allocation7 [shape = 'f32[48,128]{1,0:T(8,128)}', space=vmem, size = 0x6000, scoped, tag = 'scratch operand']
  #allocation8 [shape = 'f32[1,1]{1,0:T(1,128)S(1)}', space=vmem, size = 0x200, scoped, tag = 'scoped memory for n3ded64_forward.1']
  %s0 = inlined_call_operand.vmem [shape: f32[2,8,16,48], index: 0, kind: input, shape index: {}]
  %s1 = inlined_call_operand.vmem [shape: bf16[5,48,256], index: 1, kind: input, shape index: {}]
  %s2 = inlined_call_operand.vmem [shape: f32[1,256], index: 2, kind: input, shape index: {}, may-alias: {2,6}]
  %s3 = inlined_call_operand.vmem [shape: f32[1,256], index: 3, kind: input, shape index: {}]
  %s4 = inlined_call_operand.vmem [shape: bf16[4,32,128], index: 4, kind: input, shape index: {}]
  %s5 = inlined_call_operand.vmem [shape: bf16[5,128,256], index: 5, kind: input, shape index: {}]
  %s6 = inlined_call_operand.vmem [shape: f32[1,256], index: 6, kind: input, shape index: {}, may-alias: {2,6}]
  %s7 = inlined_call_operand.vmem [shape: f32[1,256], index: 7, kind: input, shape index: {}]
  %s8 = inlined_call_operand.vmem [shape: bf16[2,8,2,32], index: 8, kind: input, shape index: {}]
  %s9 = inlined_call_operand.vmem [shape: bf16[9,64,128], index: 9, kind: input, shape index: {}]
  %s10 = inlined_call_operand.vmem [shape: f32[1,128], index: 10, kind: input, shape index: {}, may-alias: {10,13,18,23}]
  %s11 = inlined_call_operand.vmem [shape: f32[1,128], index: 11, kind: input, shape index: {}]
  %s12 = inlined_call_operand.vmem [shape: bf16[9,128,128], index: 12, kind: input, shape index: {}]
  %s13 = inlined_call_operand.vmem [shape: f32[1,128], index: 13, kind: input, shape index: {}, may-alias: {10,13,18,23}]
  %s14 = inlined_call_operand.vmem [shape: f32[1,128], index: 14, kind: input, shape index: {}]
  %s15 = inlined_call_operand.vmem [shape: bf16[128,256], index: 15, kind: input, shape index: {}]
  %s16 = inlined_call_operand.vmem [shape: bf16[128,128], index: 16, kind: input, shape index: {}]
  %s17 = inlined_call_operand.vmem [shape: bf16[128,128], index: 17, kind: input, shape index: {}]
  %s18 = inlined_call_operand.vmem [shape: f32[1,128], index: 18, kind: input, shape index: {}, may-alias: {10,13,18,23}]
  %s19 = inlined_call_operand.vmem [shape: f32[1,128], index: 19, kind: input, shape index: {}]
  %s20 = inlined_call_operand.vmem [shape: bf16[128,256], index: 20, kind: input, shape index: {}]
  %s21 = inlined_call_operand.vmem [shape: bf16[128,128], index: 21, kind: input, shape index: {}]
  %s22 = inlined_call_operand.vmem [shape: bf16[128,128], index: 22, kind: input, shape index: {}]
  %s23 = inlined_call_operand.vmem [shape: f32[1,128], index: 23, kind: input, shape index: {}, may-alias: {10,13,18,23}]
  %s24 = inlined_call_operand.vmem [shape: f32[1,128], index: 24, kind: input, shape index: {}]
  %s25 = inlined_call_operand.vmem [shape: f32[128,1], index: 25, kind: input, shape index: {}]
  %s26 = inlined_call_operand.vmem [shape: f32[4,32], index: 26, kind: input, shape index: {}]
  %s27 = inlined_call_operand.<no memory space> [shape: f32[1,1], index: 27, kind: input, shape index: {}]
  %s28 = inlined_call_operand.vmem [shape: f32[2,2,4,1], index: 28, kind: output, shape index: {}]
  %s29 = sld [smem:[#allocation0]]
  $region145: #{n3ded64_forward.1} parent=0
    _
  %s31 = ssub.s32 1, %s29
  %s32 = scalar_select 0, %s31, %s29
  %v33 = vstv %s27
  %34 = vst [vmem:[#allocation8] sm:$0x1] %v33
  loop: start=0, step=1, limit=4
  $region2: #{n3ded64_forward.1} parent=0 // loop_pre_header
    _
  $region3: #{n3ded64_forward.1} parent=0 // loop_header
    %s36 = sphi 0, %s40
    %p37 = scmp.ge.s32.totalorder %s36, 4
    %s46 = sphi 0, %s48
    %s49 = sphi 0, %s46
    %s50 = sphi 0, %s49
    %s66 = sphi 0, %s50
    %s70 = sphi 0, %s70
    %s72 = sphi 0, %s70
    %s73 = sphi 0, %s72
    %s87 = sphi 0, %s73
    %s91 = sphi 0, %s91
    %s93 = sphi 0, %s91
    %s94 = sphi 0, %s93
    %s108 = sphi 0, %s94
    %s112 = sphi 0, %s112
    %s114 = sphi 0, %s112
    %s115 = sphi 0, %s114
    %s129 = sphi 0, %s115
    %s133 = sphi 0, %s133
    %s135 = sphi 0, %s133
    %s136 = sphi 0, %s135
    %s150 = sphi 0, %s136
    %s154 = sphi 0, %s154
    %s156 = sphi 0, %s154
    %s157 = sphi 0, %s156
    %s171 = sphi 0, %s157
    %s175 = sphi 0, %s175
    %s177 = sphi 0, %s175
    %s178 = sphi 0, %s177
    %s192 = sphi 0, %s178
    %s196 = sphi 0, %s196
    %s198 = sphi 0, %s196
    %s199 = sphi 0, %s198
    %s213 = sphi 0, %s199
    %s217 = sphi 0, %s217
    %s219 = sphi 0, %s217
    %s220 = sphi 0, %s219
    %s234 = sphi 0, %s220
    %s238 = sphi 0, %s238
    %s240 = sphi 0, %s238
    %s241 = sphi 0, %s240
    %s255 = sphi 0, %s241
    %s259 = sphi 0, %s259
    %s261 = sphi 0, %s259
    %s262 = sphi 0, %s261
    %s276 = sphi 0, %s262
    %s280 = sphi 0, %s280
    %s282 = sphi 0, %s280
    %s283 = sphi 0, %s282
    %s297 = sphi 0, %s283
    %s301 = sphi 0, %s301
    %s303 = sphi 0, %s301
    %s304 = sphi 0, %s303
    %s318 = sphi 0, %s304
    %s322 = sphi 0, %s322
    %s324 = sphi 0, %s322
    %s325 = sphi 0, %s324
    %s339 = sphi 0, %s325
    %s343 = sphi 0, %s343
    %s345 = sphi 0, %s343
    %s346 = sphi 0, %s345
    %s360 = sphi 0, %s346
    %s364 = sphi 0, %s364
    %s366 = sphi 0, %s364
    %s367 = sphi 0, %s366
    %s381 = sphi 0, %s367
    %s385 = sphi 0, %s385
    %s387 = sphi 0, %s385
    %s388 = sphi 0, %s387
    %s402 = sphi 0, %s388
    %s406 = sphi 0, %s406
    %s408 = sphi 0, %s406
    %s409 = sphi 0, %s408
    %s423 = sphi 0, %s409
    %s427 = sphi 0, %s427
    %s429 = sphi 0, %s427
    %s430 = sphi 0, %s429
    %s444 = sphi 0, %s430
    %s448 = sphi 0, %s448
    %s450 = sphi 0, %s448
    %s451 = sphi 0, %s450
    %s465 = sphi 0, %s451
    %s469 = sphi 0, %s469
    %s471 = sphi 0, %s469
    %s472 = sphi 0, %s471
    %s486 = sphi 0, %s472
    %s490 = sphi 0, %s490
    %s492 = sphi 0, %s490
    %s493 = sphi 0, %s492
    %s507 = sphi 0, %s493
    %s511 = sphi 0, %s511
    %s513 = sphi 0, %s511
    %s514 = sphi 0, %s513
    %s528 = sphi 0, %s514
    %s532 = sphi 0, %s532
    %s534 = sphi 0, %s532
    %s535 = sphi 0, %s534
    %s549 = sphi 0, %s535
    %s553 = sphi 0, %s553
    %s555 = sphi 0, %s553
    %s556 = sphi 0, %s555
    %s570 = sphi 0, %s556
    %s574 = sphi 0, %s574
    %s576 = sphi 0, %s574
    %s577 = sphi 0, %s576
    %s591 = sphi 0, %s577
    %s595 = sphi 0, %s595
    %s597 = sphi 0, %s595
    %s598 = sphi 0, %s597
    %s612 = sphi 0, %s598
    %s616 = sphi 0, %s616
    %s618 = sphi 0, %s616
    %s619 = sphi 0, %s618
    %s633 = sphi 0, %s619
    %s639 = sphi 0, %s641
    %s642 = sphi 0, %s639
    %s643 = sphi 0, %s642
    %s659 = sphi 0, %s643
  $region4: #{n3ded64_forward.1} parent=0 // loop_header_branch
    %39 = sbr.rel (%p37) target = $region8
  $region5: #{n3ded64_forward.1} parent=0 // loop_body
    %s41 = ssub.s32 %s36, 1
    %s42 = ssub.s32 %s36, 2
    %s43 = sadd.s32 %s36, 1
    %s44 = ssub.s32 %s36, %s43
    %p45 = scmp.eq.s32.totalorder %s44, 0
    %s47 = sadd.s32 %s46, 1
    %s48 = scalar_select %p45, %s46, %s47
    %p51 = pneg %p45
    %p52 = scmp.eq.s32.totalorder %s36, 1
    %p53 = por %p51, %p52
    %p54 = scmp.ne.s32.totalorder %s46, %s49
    %p55 = scmp.eq.s32.totalorder %s36, 0
    %p56 = por %p54, %p55
    %p57 = scmp.ne.s32.totalorder %s46, %s49
    %p58 = scmp.eq.s32.totalorder %s41, 1
    %p59 = por %p57, %p58
    %p60 = scmp.ne.s32.totalorder %s49, %s50
    %p61 = scmp.eq.s32.totalorder %s41, 0
    %p62 = por %p60, %p61
    %p63 = scmp.ne.s32.totalorder %s49, %s50
    %p64 = scmp.eq.s32.totalorder %s42, 1
    %p65 = por %p63, %p64
    %p67 = scmp.ne.s32.totalorder %s50, %s66
    %p68 = scmp.eq.s32.totalorder %s42, 0
    %p69 = por %p67, %p68
    %s71 = sadd.s32 %s70, 1
    %p74 = scmp.eq.s32.totalorder %s36, 1
    %p75 = scmp.ne.s32.totalorder %s70, %s72
    %p76 = scmp.eq.s32.totalorder %s36, 0
    %p77 = por %p75, %p76
    %p78 = scmp.ne.s32.totalorder %s70, %s72
    %p79 = scmp.eq.s32.totalorder %s41, 1
    %p80 = por %p78, %p79
    %p81 = scmp.ne.s32.totalorder %s72, %s73
    %p82 = scmp.eq.s32.totalorder %s41, 0
    %p83 = por %p81, %p82
    %p84 = scmp.ne.s32.totalorder %s72, %s73
    %p85 = scmp.eq.s32.totalorder %s42, 1
    %p86 = por %p84, %p85
    %p88 = scmp.ne.s32.totalorder %s73, %s87
    %p89 = scmp.eq.s32.totalorder %s42, 0
    %p90 = por %p88, %p89
    %s92 = sadd.s32 %s91, 1
    %p95 = scmp.eq.s32.totalorder %s36, 1
    %p96 = scmp.ne.s32.totalorder %s91, %s93
    %p97 = scmp.eq.s32.totalorder %s36, 0
    %p98 = por %p96, %p97
    %p99 = scmp.ne.s32.totalorder %s91, %s93
    %p100 = scmp.eq.s32.totalorder %s41, 1
    %p101 = por %p99, %p100
    %p102 = scmp.ne.s32.totalorder %s93, %s94
    %p103 = scmp.eq.s32.totalorder %s41, 0
    %p104 = por %p102, %p103
    %p105 = scmp.ne.s32.totalorder %s93, %s94
    %p106 = scmp.eq.s32.totalorder %s42, 1
    %p107 = por %p105, %p106
    %p109 = scmp.ne.s32.totalorder %s94, %s108
    %p110 = scmp.eq.s32.totalorder %s42, 0
    %p111 = por %p109, %p110
    %s113 = sadd.s32 %s112, 1
    %p116 = scmp.eq.s32.totalorder %s36, 1
    %p117 = scmp.ne.s32.totalorder %s112, %s114
    %p118 = scmp.eq.s32.totalorder %s36, 0
    %p119 = por %p117, %p118
    %p120 = scmp.ne.s32.totalorder %s112, %s114
    %p121 = scmp.eq.s32.totalorder %s41, 1
    %p122 = por %p120, %p121
    %p123 = scmp.ne.s32.totalorder %s114, %s115
    %p124 = scmp.eq.s32.totalorder %s41, 0
    %p125 = por %p123, %p124
    %p126 = scmp.ne.s32.totalorder %s114, %s115
    %p127 = scmp.eq.s32.totalorder %s42, 1
    %p128 = por %p126, %p127
    %p130 = scmp.ne.s32.totalorder %s115, %s129
    %p131 = scmp.eq.s32.totalorder %s42, 0
    %p132 = por %p130, %p131
    %s134 = sadd.s32 %s133, 1
    %p137 = scmp.eq.s32.totalorder %s36, 1
    %p138 = scmp.ne.s32.totalorder %s133, %s135
    %p139 = scmp.eq.s32.totalorder %s36, 0
    %p140 = por %p138, %p139
    %p141 = scmp.ne.s32.totalorder %s133, %s135
    %p142 = scmp.eq.s32.totalorder %s41, 1
    %p143 = por %p141, %p142
    %p144 = scmp.ne.s32.totalorder %s135, %s136
    %p145 = scmp.eq.s32.totalorder %s41, 0
    %p146 = por %p144, %p145
    %p147 = scmp.ne.s32.totalorder %s135, %s136
    %p148 = scmp.eq.s32.totalorder %s42, 1
    %p149 = por %p147, %p148
    %p151 = scmp.ne.s32.totalorder %s136, %s150
    %p152 = scmp.eq.s32.totalorder %s42, 0
    %p153 = por %p151, %p152
    %s155 = sadd.s32 %s154, 1
    %p158 = scmp.eq.s32.totalorder %s36, 1
    %p159 = scmp.ne.s32.totalorder %s154, %s156
    %p160 = scmp.eq.s32.totalorder %s36, 0
    %p161 = por %p159, %p160
    %p162 = scmp.ne.s32.totalorder %s154, %s156
    %p163 = scmp.eq.s32.totalorder %s41, 1
    %p164 = por %p162, %p163
    %p165 = scmp.ne.s32.totalorder %s156, %s157
    %p166 = scmp.eq.s32.totalorder %s41, 0
    %p167 = por %p165, %p166
    %p168 = scmp.ne.s32.totalorder %s156, %s157
    %p169 = scmp.eq.s32.totalorder %s42, 1
    %p170 = por %p168, %p169
    %p172 = scmp.ne.s32.totalorder %s157, %s171
    %p173 = scmp.eq.s32.totalorder %s42, 0
    %p174 = por %p172, %p173
    %s176 = sadd.s32 %s175, 1
    %p179 = scmp.eq.s32.totalorder %s36, 1
    %p180 = scmp.ne.s32.totalorder %s175, %s177
    %p181 = scmp.eq.s32.totalorder %s36, 0
    %p182 = por %p180, %p181
    %p183 = scmp.ne.s32.totalorder %s175, %s177
    %p184 = scmp.eq.s32.totalorder %s41, 1
    %p185 = por %p183, %p184
    %p186 = scmp.ne.s32.totalorder %s177, %s178
    %p187 = scmp.eq.s32.totalorder %s41, 0
    %p188 = por %p186, %p187
    %p189 = scmp.ne.s32.totalorder %s177, %s178
    %p190 = scmp.eq.s32.totalorder %s42, 1
    %p191 = por %p189, %p190
    %p193 = scmp.ne.s32.totalorder %s178, %s192
    %p194 = scmp.eq.s32.totalorder %s42, 0
    %p195 = por %p193, %p194
    %s197 = sadd.s32 %s196, 1
    %p200 = scmp.eq.s32.totalorder %s36, 1
    %p201 = scmp.ne.s32.totalorder %s196, %s198
    %p202 = scmp.eq.s32.totalorder %s36, 0
    %p203 = por %p201, %p202
    %p204 = scmp.ne.s32.totalorder %s196, %s198
    %p205 = scmp.eq.s32.totalorder %s41, 1
    %p206 = por %p204, %p205
    %p207 = scmp.ne.s32.totalorder %s198, %s199
    %p208 = scmp.eq.s32.totalorder %s41, 0
    %p209 = por %p207, %p208
    %p210 = scmp.ne.s32.totalorder %s198, %s199
    %p211 = scmp.eq.s32.totalorder %s42, 1
    %p212 = por %p210, %p211
    %p214 = scmp.ne.s32.totalorder %s199, %s213
    %p215 = scmp.eq.s32.totalorder %s42, 0
    %p216 = por %p214, %p215
    %s218 = sadd.s32 %s217, 1
    %p221 = scmp.eq.s32.totalorder %s36, 1
    %p222 = scmp.ne.s32.totalorder %s217, %s219
    %p223 = scmp.eq.s32.totalorder %s36, 0
    %p224 = por %p222, %p223
    %p225 = scmp.ne.s32.totalorder %s217, %s219
    %p226 = scmp.eq.s32.totalorder %s41, 1
    %p227 = por %p225, %p226
    %p228 = scmp.ne.s32.totalorder %s219, %s220
    %p229 = scmp.eq.s32.totalorder %s41, 0
    %p230 = por %p228, %p229
    %p231 = scmp.ne.s32.totalorder %s219, %s220
    %p232 = scmp.eq.s32.totalorder %s42, 1
    %p233 = por %p231, %p232
    %p235 = scmp.ne.s32.totalorder %s220, %s234
    %p236 = scmp.eq.s32.totalorder %s42, 0
    %p237 = por %p235, %p236
    %s239 = sadd.s32 %s238, 1
    %p242 = scmp.eq.s32.totalorder %s36, 1
    %p243 = scmp.ne.s32.totalorder %s238, %s240
    %p244 = scmp.eq.s32.totalorder %s36, 0
    %p245 = por %p243, %p244
    %p246 = scmp.ne.s32.totalorder %s238, %s240
    %p247 = scmp.eq.s32.totalorder %s41, 1
    %p248 = por %p246, %p247
    %p249 = scmp.ne.s32.totalorder %s240, %s241
    %p250 = scmp.eq.s32.totalorder %s41, 0
    %p251 = por %p249, %p250
    %p252 = scmp.ne.s32.totalorder %s240, %s241
    %p253 = scmp.eq.s32.totalorder %s42, 1
    %p254 = por %p252, %p253
    %p256 = scmp.ne.s32.totalorder %s241, %s255
    %p257 = scmp.eq.s32.totalorder %s42, 0
    %p258 = por %p256, %p257
    %s260 = sadd.s32 %s259, 1
    %p263 = scmp.eq.s32.totalorder %s36, 1
    %p264 = scmp.ne.s32.totalorder %s259, %s261
    %p265 = scmp.eq.s32.totalorder %s36, 0
    %p266 = por %p264, %p265
    %p267 = scmp.ne.s32.totalorder %s259, %s261
    %p268 = scmp.eq.s32.totalorder %s41, 1
    %p269 = por %p267, %p268
    %p270 = scmp.ne.s32.totalorder %s261, %s262
    %p271 = scmp.eq.s32.totalorder %s41, 0
    %p272 = por %p270, %p271
    %p273 = scmp.ne.s32.totalorder %s261, %s262
    %p274 = scmp.eq.s32.totalorder %s42, 1
    %p275 = por %p273, %p274
    %p277 = scmp.ne.s32.totalorder %s262, %s276
    %p278 = scmp.eq.s32.totalorder %s42, 0
    %p279 = por %p277, %p278
    %s281 = sadd.s32 %s280, 1
    %p284 = scmp.eq.s32.totalorder %s36, 1
    %p285 = scmp.ne.s32.totalorder %s280, %s282
    %p286 = scmp.eq.s32.totalorder %s36, 0
    %p287 = por %p285, %p286
    %p288 = scmp.ne.s32.totalorder %s280, %s282
    %p289 = scmp.eq.s32.totalorder %s41, 1
    %p290 = por %p288, %p289
    %p291 = scmp.ne.s32.totalorder %s282, %s283
    %p292 = scmp.eq.s32.totalorder %s41, 0
    %p293 = por %p291, %p292
    %p294 = scmp.ne.s32.totalorder %s282, %s283
    %p295 = scmp.eq.s32.totalorder %s42, 1
    %p296 = por %p294, %p295
    %p298 = scmp.ne.s32.totalorder %s283, %s297
    %p299 = scmp.eq.s32.totalorder %s42, 0
    %p300 = por %p298, %p299
    %s302 = sadd.s32 %s301, 1
    %p305 = scmp.eq.s32.totalorder %s36, 1
    %p306 = scmp.ne.s32.totalorder %s301, %s303
    %p307 = scmp.eq.s32.totalorder %s36, 0
    %p308 = por %p306, %p307
    %p309 = scmp.ne.s32.totalorder %s301, %s303
    %p310 = scmp.eq.s32.totalorder %s41, 1
    %p311 = por %p309, %p310
    %p312 = scmp.ne.s32.totalorder %s303, %s304
    %p313 = scmp.eq.s32.totalorder %s41, 0
    %p314 = por %p312, %p313
    %p315 = scmp.ne.s32.totalorder %s303, %s304
    %p316 = scmp.eq.s32.totalorder %s42, 1
    %p317 = por %p315, %p316
    %p319 = scmp.ne.s32.totalorder %s304, %s318
    %p320 = scmp.eq.s32.totalorder %s42, 0
    %p321 = por %p319, %p320
    %s323 = sadd.s32 %s322, 1
    %p326 = scmp.eq.s32.totalorder %s36, 1
    %p327 = scmp.ne.s32.totalorder %s322, %s324
    %p328 = scmp.eq.s32.totalorder %s36, 0
    %p329 = por %p327, %p328
    %p330 = scmp.ne.s32.totalorder %s322, %s324
    %p331 = scmp.eq.s32.totalorder %s41, 1
    %p332 = por %p330, %p331
    %p333 = scmp.ne.s32.totalorder %s324, %s325
    %p334 = scmp.eq.s32.totalorder %s41, 0
    %p335 = por %p333, %p334
    %p336 = scmp.ne.s32.totalorder %s324, %s325
    %p337 = scmp.eq.s32.totalorder %s42, 1
    %p338 = por %p336, %p337
    %p340 = scmp.ne.s32.totalorder %s325, %s339
    %p341 = scmp.eq.s32.totalorder %s42, 0
    %p342 = por %p340, %p341
    %s344 = sadd.s32 %s343, 1
    %p347 = scmp.eq.s32.totalorder %s36, 1
    %p348 = scmp.ne.s32.totalorder %s343, %s345
    %p349 = scmp.eq.s32.totalorder %s36, 0
    %p350 = por %p348, %p349
    %p351 = scmp.ne.s32.totalorder %s343, %s345
    %p352 = scmp.eq.s32.totalorder %s41, 1
    %p353 = por %p351, %p352
    %p354 = scmp.ne.s32.totalorder %s345, %s346
    %p355 = scmp.eq.s32.totalorder %s41, 0
    %p356 = por %p354, %p355
    %p357 = scmp.ne.s32.totalorder %s345, %s346
    %p358 = scmp.eq.s32.totalorder %s42, 1
    %p359 = por %p357, %p358
    %p361 = scmp.ne.s32.totalorder %s346, %s360
    %p362 = scmp.eq.s32.totalorder %s42, 0
    %p363 = por %p361, %p362
    %s365 = sadd.s32 %s364, 1
    %p368 = scmp.eq.s32.totalorder %s36, 1
    %p369 = scmp.ne.s32.totalorder %s364, %s366
    %p370 = scmp.eq.s32.totalorder %s36, 0
    %p371 = por %p369, %p370
    %p372 = scmp.ne.s32.totalorder %s364, %s366
    %p373 = scmp.eq.s32.totalorder %s41, 1
    %p374 = por %p372, %p373
    %p375 = scmp.ne.s32.totalorder %s366, %s367
    %p376 = scmp.eq.s32.totalorder %s41, 0
    %p377 = por %p375, %p376
    %p378 = scmp.ne.s32.totalorder %s366, %s367
    %p379 = scmp.eq.s32.totalorder %s42, 1
    %p380 = por %p378, %p379
    %p382 = scmp.ne.s32.totalorder %s367, %s381
    %p383 = scmp.eq.s32.totalorder %s42, 0
    %p384 = por %p382, %p383
    %s386 = sadd.s32 %s385, 1
    %p389 = scmp.eq.s32.totalorder %s36, 1
    %p390 = scmp.ne.s32.totalorder %s385, %s387
    %p391 = scmp.eq.s32.totalorder %s36, 0
    %p392 = por %p390, %p391
    %p393 = scmp.ne.s32.totalorder %s385, %s387
    %p394 = scmp.eq.s32.totalorder %s41, 1
    %p395 = por %p393, %p394
    %p396 = scmp.ne.s32.totalorder %s387, %s388
    %p397 = scmp.eq.s32.totalorder %s41, 0
    %p398 = por %p396, %p397
    %p399 = scmp.ne.s32.totalorder %s387, %s388
    %p400 = scmp.eq.s32.totalorder %s42, 1
    %p401 = por %p399, %p400
    %p403 = scmp.ne.s32.totalorder %s388, %s402
    %p404 = scmp.eq.s32.totalorder %s42, 0
    %p405 = por %p403, %p404
    %s407 = sadd.s32 %s406, 1
    %p410 = scmp.eq.s32.totalorder %s36, 1
    %p411 = scmp.ne.s32.totalorder %s406, %s408
    %p412 = scmp.eq.s32.totalorder %s36, 0
    %p413 = por %p411, %p412
    %p414 = scmp.ne.s32.totalorder %s406, %s408
    %p415 = scmp.eq.s32.totalorder %s41, 1
    %p416 = por %p414, %p415
    %p417 = scmp.ne.s32.totalorder %s408, %s409
    %p418 = scmp.eq.s32.totalorder %s41, 0
    %p419 = por %p417, %p418
    %p420 = scmp.ne.s32.totalorder %s408, %s409
    %p421 = scmp.eq.s32.totalorder %s42, 1
    %p422 = por %p420, %p421
    %p424 = scmp.ne.s32.totalorder %s409, %s423
    %p425 = scmp.eq.s32.totalorder %s42, 0
    %p426 = por %p424, %p425
    %s428 = sadd.s32 %s427, 1
    %p431 = scmp.eq.s32.totalorder %s36, 1
    %p432 = scmp.ne.s32.totalorder %s427, %s429
    %p433 = scmp.eq.s32.totalorder %s36, 0
    %p434 = por %p432, %p433
    %p435 = scmp.ne.s32.totalorder %s427, %s429
    %p436 = scmp.eq.s32.totalorder %s41, 1
    %p437 = por %p435, %p436
    %p438 = scmp.ne.s32.totalorder %s429, %s430
    %p439 = scmp.eq.s32.totalorder %s41, 0
    %p440 = por %p438, %p439
    %p441 = scmp.ne.s32.totalorder %s429, %s430
    %p442 = scmp.eq.s32.totalorder %s42, 1
    %p443 = por %p441, %p442
    %p445 = scmp.ne.s32.totalorder %s430, %s444
    %p446 = scmp.eq.s32.totalorder %s42, 0
    %p447 = por %p445, %p446
    %s449 = sadd.s32 %s448, 1
    %p452 = scmp.eq.s32.totalorder %s36, 1
    %p453 = scmp.ne.s32.totalorder %s448, %s450
    %p454 = scmp.eq.s32.totalorder %s36, 0
    %p455 = por %p453, %p454
    %p456 = scmp.ne.s32.totalorder %s448, %s450
    %p457 = scmp.eq.s32.totalorder %s41, 1
    %p458 = por %p456, %p457
    %p459 = scmp.ne.s32.totalorder %s450, %s451
    %p460 = scmp.eq.s32.totalorder %s41, 0
    %p461 = por %p459, %p460
    %p462 = scmp.ne.s32.totalorder %s450, %s451
    %p463 = scmp.eq.s32.totalorder %s42, 1
    %p464 = por %p462, %p463
    %p466 = scmp.ne.s32.totalorder %s451, %s465
    %p467 = scmp.eq.s32.totalorder %s42, 0
    %p468 = por %p466, %p467
    %s470 = sadd.s32 %s469, 1
    %p473 = scmp.eq.s32.totalorder %s36, 1
    %p474 = scmp.ne.s32.totalorder %s469, %s471
    %p475 = scmp.eq.s32.totalorder %s36, 0
    %p476 = por %p474, %p475
    %p477 = scmp.ne.s32.totalorder %s469, %s471
    %p478 = scmp.eq.s32.totalorder %s41, 1
    %p479 = por %p477, %p478
    %p480 = scmp.ne.s32.totalorder %s471, %s472
    %p481 = scmp.eq.s32.totalorder %s41, 0
    %p482 = por %p480, %p481
    %p483 = scmp.ne.s32.totalorder %s471, %s472
    %p484 = scmp.eq.s32.totalorder %s42, 1
    %p485 = por %p483, %p484
    %p487 = scmp.ne.s32.totalorder %s472, %s486
    %p488 = scmp.eq.s32.totalorder %s42, 0
    %p489 = por %p487, %p488
    %s491 = sadd.s32 %s490, 1
    %p494 = scmp.eq.s32.totalorder %s36, 1
    %p495 = scmp.ne.s32.totalorder %s490, %s492
    %p496 = scmp.eq.s32.totalorder %s36, 0
    %p497 = por %p495, %p496
    %p498 = scmp.ne.s32.totalorder %s490, %s492
    %p499 = scmp.eq.s32.totalorder %s41, 1
    %p500 = por %p498, %p499
    %p501 = scmp.ne.s32.totalorder %s492, %s493
    %p502 = scmp.eq.s32.totalorder %s41, 0
    %p503 = por %p501, %p502
    %p504 = scmp.ne.s32.totalorder %s492, %s493
    %p505 = scmp.eq.s32.totalorder %s42, 1
    %p506 = por %p504, %p505
    %p508 = scmp.ne.s32.totalorder %s493, %s507
    %p509 = scmp.eq.s32.totalorder %s42, 0
    %p510 = por %p508, %p509
    %s512 = sadd.s32 %s511, 1
    %p515 = scmp.eq.s32.totalorder %s36, 1
    %p516 = scmp.ne.s32.totalorder %s511, %s513
    %p517 = scmp.eq.s32.totalorder %s36, 0
    %p518 = por %p516, %p517
    %p519 = scmp.ne.s32.totalorder %s511, %s513
    %p520 = scmp.eq.s32.totalorder %s41, 1
    %p521 = por %p519, %p520
    %p522 = scmp.ne.s32.totalorder %s513, %s514
    %p523 = scmp.eq.s32.totalorder %s41, 0
    %p524 = por %p522, %p523
    %p525 = scmp.ne.s32.totalorder %s513, %s514
    %p526 = scmp.eq.s32.totalorder %s42, 1
    %p527 = por %p525, %p526
    %p529 = scmp.ne.s32.totalorder %s514, %s528
    %p530 = scmp.eq.s32.totalorder %s42, 0
    %p531 = por %p529, %p530
    %s533 = sadd.s32 %s532, 1
    %p536 = scmp.eq.s32.totalorder %s36, 1
    %p537 = scmp.ne.s32.totalorder %s532, %s534
    %p538 = scmp.eq.s32.totalorder %s36, 0
    %p539 = por %p537, %p538
    %p540 = scmp.ne.s32.totalorder %s532, %s534
    %p541 = scmp.eq.s32.totalorder %s41, 1
    %p542 = por %p540, %p541
    %p543 = scmp.ne.s32.totalorder %s534, %s535
    %p544 = scmp.eq.s32.totalorder %s41, 0
    %p545 = por %p543, %p544
    %p546 = scmp.ne.s32.totalorder %s534, %s535
    %p547 = scmp.eq.s32.totalorder %s42, 1
    %p548 = por %p546, %p547
    %p550 = scmp.ne.s32.totalorder %s535, %s549
    %p551 = scmp.eq.s32.totalorder %s42, 0
    %p552 = por %p550, %p551
    %s554 = sadd.s32 %s553, 1
    %p557 = scmp.eq.s32.totalorder %s36, 1
    %p558 = scmp.ne.s32.totalorder %s553, %s555
    %p559 = scmp.eq.s32.totalorder %s36, 0
    %p560 = por %p558, %p559
    %p561 = scmp.ne.s32.totalorder %s553, %s555
    %p562 = scmp.eq.s32.totalorder %s41, 1
    %p563 = por %p561, %p562
    %p564 = scmp.ne.s32.totalorder %s555, %s556
    %p565 = scmp.eq.s32.totalorder %s41, 0
    %p566 = por %p564, %p565
    %p567 = scmp.ne.s32.totalorder %s555, %s556
    %p568 = scmp.eq.s32.totalorder %s42, 1
    %p569 = por %p567, %p568
    %p571 = scmp.ne.s32.totalorder %s556, %s570
    %p572 = scmp.eq.s32.totalorder %s42, 0
    %p573 = por %p571, %p572
    %s575 = sadd.s32 %s574, 1
    %p578 = scmp.eq.s32.totalorder %s36, 1
    %p579 = scmp.ne.s32.totalorder %s574, %s576
    %p580 = scmp.eq.s32.totalorder %s36, 0
    %p581 = por %p579, %p580
    %p582 = scmp.ne.s32.totalorder %s574, %s576
    %p583 = scmp.eq.s32.totalorder %s41, 1
    %p584 = por %p582, %p583
    %p585 = scmp.ne.s32.totalorder %s576, %s577
    %p586 = scmp.eq.s32.totalorder %s41, 0
    %p587 = por %p585, %p586
    %p588 = scmp.ne.s32.totalorder %s576, %s577
    %p589 = scmp.eq.s32.totalorder %s42, 1
    %p590 = por %p588, %p589
    %p592 = scmp.ne.s32.totalorder %s577, %s591
    %p593 = scmp.eq.s32.totalorder %s42, 0
    %p594 = por %p592, %p593
    %s596 = sadd.s32 %s595, 1
    %p599 = scmp.eq.s32.totalorder %s36, 1
    %p600 = scmp.ne.s32.totalorder %s595, %s597
    %p601 = scmp.eq.s32.totalorder %s36, 0
    %p602 = por %p600, %p601
    %p603 = scmp.ne.s32.totalorder %s595, %s597
    %p604 = scmp.eq.s32.totalorder %s41, 1
    %p605 = por %p603, %p604
    %p606 = scmp.ne.s32.totalorder %s597, %s598
    %p607 = scmp.eq.s32.totalorder %s41, 0
    %p608 = por %p606, %p607
    %p609 = scmp.ne.s32.totalorder %s597, %s598
    %p610 = scmp.eq.s32.totalorder %s42, 1
    %p611 = por %p609, %p610
    %p613 = scmp.ne.s32.totalorder %s598, %s612
    %p614 = scmp.eq.s32.totalorder %s42, 0
    %p615 = por %p613, %p614
    %s617 = sadd.s32 %s616, 1
    %p620 = scmp.eq.s32.totalorder %s36, 1
    %p621 = scmp.ne.s32.totalorder %s616, %s618
    %p622 = scmp.eq.s32.totalorder %s36, 0
    %p623 = por %p621, %p622
    %p624 = scmp.ne.s32.totalorder %s616, %s618
    %p625 = scmp.eq.s32.totalorder %s41, 1
    %p626 = por %p624, %p625
    %p627 = scmp.ne.s32.totalorder %s618, %s619
    %p628 = scmp.eq.s32.totalorder %s41, 0
    %p629 = por %p627, %p628
    %p630 = scmp.ne.s32.totalorder %s618, %s619
    %p631 = scmp.eq.s32.totalorder %s42, 1
    %p632 = por %p630, %p631
    %p634 = scmp.ne.s32.totalorder %s619, %s633
    %p635 = scmp.eq.s32.totalorder %s42, 0
    %p636 = por %p634, %p635
    %s637 = ssub.s32 %s36, %s43
    %p638 = scmp.eq.s32.totalorder %s637, 0
    %s640 = sadd.s32 %s639, 1
    %s641 = scalar_select %p638, %s639, %s640
    %p644 = pneg %p638
    %p645 = scmp.eq.s32.totalorder %s36, 1
    %p646 = por %p644, %p645
    %p647 = scmp.ne.s32.totalorder %s639, %s642
    %p648 = scmp.eq.s32.totalorder %s36, 0
    %p649 = por %p647, %p648
    %p650 = scmp.ne.s32.totalorder %s639, %s642
    %p651 = scmp.eq.s32.totalorder %s41, 1
    %p652 = por %p650, %p651
    %p653 = scmp.ne.s32.totalorder %s642, %s643
    %p654 = scmp.eq.s32.totalorder %s41, 0
    %p655 = por %p653, %p654
    %p656 = scmp.ne.s32.totalorder %s642, %s643
    %p657 = scmp.eq.s32.totalorder %s42, 1
    %p658 = por %p656, %p657
    %p660 = scmp.ne.s32.totalorder %s643, %s659
    %p661 = scmp.eq.s32.totalorder %s42, 0
    %p662 = por %p660, %p661
    %p663 = scmp.le.s32.totalorder 1, %s36
    %p664 = scmp.lt.s32.totalorder %s36, 3
    %p665 = pnand %p663, %p664
    %p666 = pneg %p665
    // Predicated region
    $region9: #{n3ded64_forward.1} parent=5 // pred_check
      _
    $region10: #{n3ded64_forward.1} parent=5 // pred_check_branch
      %668 = sbr.rel (%p665) target = $region12
    $region11: #{n3ded64_forward.1} parent=5 // pred_region
      %s669 = ssub.s32 %s36, 1
      // Predicated region
      $region13: #{n3ded64_forward.1} parent=11 // pred_check
        %p670 = pneg %p83
      $region14: #{n3ded64_forward.1} parent=11 // pred_check_branch
        %672 = sbr.rel (%p670) target = $region16
      $region15: #{n3ded64_forward.1} parent=11 // pred_region
        _
      $region16: #{n3ded64_forward.1} parent=11 // pred_fallthru
        _
      // Predicated region
      $region17: #{n3ded64_forward.1} parent=11 // pred_check
        %p673 = pneg %p104
      $region18: #{n3ded64_forward.1} parent=11 // pred_check_branch
        %675 = sbr.rel (%p673) target = $region20
      $region19: #{n3ded64_forward.1} parent=11 // pred_region
        _
      $region20: #{n3ded64_forward.1} parent=11 // pred_fallthru
        _
      // Predicated region
      $region21: #{n3ded64_forward.1} parent=11 // pred_check
        %p676 = pneg %p125
      $region22: #{n3ded64_forward.1} parent=11 // pred_check_branch
        %678 = sbr.rel (%p676) target = $region24
      $region23: #{n3ded64_forward.1} parent=11 // pred_region
        _
      $region24: #{n3ded64_forward.1} parent=11 // pred_fallthru
        _
      // Predicated region
      $region25: #{n3ded64_forward.1} parent=11 // pred_check
        %p679 = pneg %p146
      $region26: #{n3ded64_forward.1} parent=11 // pred_check_branch
        %681 = sbr.rel (%p679) target = $region28
      $region27: #{n3ded64_forward.1} parent=11 // pred_region
        _
      $region28: #{n3ded64_forward.1} parent=11 // pred_fallthru
        _
      // Predicated region
      $region29: #{n3ded64_forward.1} parent=11 // pred_check
        %p682 = pneg %p167
      $region30: #{n3ded64_forward.1} parent=11 // pred_check_branch
        %684 = sbr.rel (%p682) target = $region32
      $region31: #{n3ded64_forward.1} parent=11 // pred_region
        _
      $region32: #{n3ded64_forward.1} parent=11 // pred_fallthru
        _
      // Predicated region
      $region33: #{n3ded64_forward.1} parent=11 // pred_check
        %p685 = pneg %p188
      $region34: #{n3ded64_forward.1} parent=11 // pred_check_branch
        %687 = sbr.rel (%p685) target = $region36
      $region35: #{n3ded64_forward.1} parent=11 // pred_region
        _
      $region36: #{n3ded64_forward.1} parent=11 // pred_fallthru
        _
      // Predicated region
      $region37: #{n3ded64_forward.1} parent=11 // pred_check
        %p688 = pneg %p209
      $region38: #{n3ded64_forward.1} parent=11 // pred_check_branch
        %690 = sbr.rel (%p688) target = $region40
      $region39: #{n3ded64_forward.1} parent=11 // pred_region
        _
      $region40: #{n3ded64_forward.1} parent=11 // pred_fallthru
        _
      // Predicated region
      $region41: #{n3ded64_forward.1} parent=11 // pred_check
        %p691 = pneg %p230
      $region42: #{n3ded64_forward.1} parent=11 // pred_check_branch
        %693 = sbr.rel (%p691) target = $region44
      $region43: #{n3ded64_forward.1} parent=11 // pred_region
        _
      $region44: #{n3ded64_forward.1} parent=11 // pred_fallthru
        _
      // Predicated region
      $region45: #{n3ded64_forward.1} parent=11 // pred_check
        %p694 = pneg %p251
      $region46: #{n3ded64_forward.1} parent=11 // pred_check_branch
        %696 = sbr.rel (%p694) target = $region48
      $region47: #{n3ded64_forward.1} parent=11 // pred_region
        _
      $region48: #{n3ded64_forward.1} parent=11 // pred_fallthru
        _
      // Predicated region
      $region49: #{n3ded64_forward.1} parent=11 // pred_check
        %p697 = pneg %p272
      $region50: #{n3ded64_forward.1} parent=11 // pred_check_branch
        %699 = sbr.rel (%p697) target = $region52
      $region51: #{n3ded64_forward.1} parent=11 // pred_region
        _
      $region52: #{n3ded64_forward.1} parent=11 // pred_fallthru
        _
      // Predicated region
      $region53: #{n3ded64_forward.1} parent=11 // pred_check
        %p700 = pneg %p293
      $region54: #{n3ded64_forward.1} parent=11 // pred_check_branch
        %702 = sbr.rel (%p700) target = $region56
      $region55: #{n3ded64_forward.1} parent=11 // pred_region
        _
      $region56: #{n3ded64_forward.1} parent=11 // pred_fallthru
        _
      // Predicated region
      $region57: #{n3ded64_forward.1} parent=11 // pred_check
        %p703 = pneg %p314
      $region58: #{n3ded64_forward.1} parent=11 // pred_check_branch
        %705 = sbr.rel (%p703) target = $region60
      $region59: #{n3ded64_forward.1} parent=11 // pred_region
        _
      $region60: #{n3ded64_forward.1} parent=11 // pred_fallthru
        _
      // Predicated region
      $region61: #{n3ded64_forward.1} parent=11 // pred_check
        %p706 = pneg %p335
      $region62: #{n3ded64_forward.1} parent=11 // pred_check_branch
        %708 = sbr.rel (%p706) target = $region64
      $region63: #{n3ded64_forward.1} parent=11 // pred_region
        _
      $region64: #{n3ded64_forward.1} parent=11 // pred_fallthru
        _
      // Predicated region
      $region65: #{n3ded64_forward.1} parent=11 // pred_check
        %p709 = pneg %p356
      $region66: #{n3ded64_forward.1} parent=11 // pred_check_branch
        %711 = sbr.rel (%p709) target = $region68
      $region67: #{n3ded64_forward.1} parent=11 // pred_region
        _
      $region68: #{n3ded64_forward.1} parent=11 // pred_fallthru
        _
      // Predicated region
      $region69: #{n3ded64_forward.1} parent=11 // pred_check
        %p712 = pneg %p377
      $region70: #{n3ded64_forward.1} parent=11 // pred_check_branch
        %714 = sbr.rel (%p712) target = $region72
      $region71: #{n3ded64_forward.1} parent=11 // pred_region
        _
      $region72: #{n3ded64_forward.1} parent=11 // pred_fallthru
        _
      // Predicated region
      $region73: #{n3ded64_forward.1} parent=11 // pred_check
        %p715 = pneg %p398
      $region74: #{n3ded64_forward.1} parent=11 // pred_check_branch
        %717 = sbr.rel (%p715) target = $region76
      $region75: #{n3ded64_forward.1} parent=11 // pred_region
        _
      $region76: #{n3ded64_forward.1} parent=11 // pred_fallthru
        _
      // Predicated region
      $region77: #{n3ded64_forward.1} parent=11 // pred_check
        %p718 = pneg %p419
      $region78: #{n3ded64_forward.1} parent=11 // pred_check_branch
        %720 = sbr.rel (%p718) target = $region80
      $region79: #{n3ded64_forward.1} parent=11 // pred_region
        _
      $region80: #{n3ded64_forward.1} parent=11 // pred_fallthru
        _
      // Predicated region
      $region81: #{n3ded64_forward.1} parent=11 // pred_check
        %p721 = pneg %p440
      $region82: #{n3ded64_forward.1} parent=11 // pred_check_branch
        %723 = sbr.rel (%p721) target = $region84
      $region83: #{n3ded64_forward.1} parent=11 // pred_region
        _
      $region84: #{n3ded64_forward.1} parent=11 // pred_fallthru
        _
      // Predicated region
      $region85: #{n3ded64_forward.1} parent=11 // pred_check
        %p724 = pneg %p461
      $region86: #{n3ded64_forward.1} parent=11 // pred_check_branch
        %726 = sbr.rel (%p724) target = $region88
      $region87: #{n3ded64_forward.1} parent=11 // pred_region
        _
      $region88: #{n3ded64_forward.1} parent=11 // pred_fallthru
        _
      // Predicated region
      $region89: #{n3ded64_forward.1} parent=11 // pred_check
        %p727 = pneg %p482
      $region90: #{n3ded64_forward.1} parent=11 // pred_check_branch
        %729 = sbr.rel (%p727) target = $region92
      $region91: #{n3ded64_forward.1} parent=11 // pred_region
        _
      $region92: #{n3ded64_forward.1} parent=11 // pred_fallthru
        _
      // Predicated region
      $region93: #{n3ded64_forward.1} parent=11 // pred_check
        %p730 = pneg %p503
      $region94: #{n3ded64_forward.1} parent=11 // pred_check_branch
        %732 = sbr.rel (%p730) target = $region96
      $region95: #{n3ded64_forward.1} parent=11 // pred_region
        _
      $region96: #{n3ded64_forward.1} parent=11 // pred_fallthru
        _
      // Predicated region
      $region97: #{n3ded64_forward.1} parent=11 // pred_check
        %p733 = pneg %p524
      $region98: #{n3ded64_forward.1} parent=11 // pred_check_branch
        %735 = sbr.rel (%p733) target = $region100
      $region99: #{n3ded64_forward.1} parent=11 // pred_region
        _
      $region100: #{n3ded64_forward.1} parent=11 // pred_fallthru
        _
      // Predicated region
      $region101: #{n3ded64_forward.1} parent=11 // pred_check
        %p736 = pneg %p545
      $region102: #{n3ded64_forward.1} parent=11 // pred_check_branch
        %738 = sbr.rel (%p736) target = $region104
      $region103: #{n3ded64_forward.1} parent=11 // pred_region
        _
      $region104: #{n3ded64_forward.1} parent=11 // pred_fallthru
        _
      // Predicated region
      $region105: #{n3ded64_forward.1} parent=11 // pred_check
        %p739 = pneg %p566
      $region106: #{n3ded64_forward.1} parent=11 // pred_check_branch
        %741 = sbr.rel (%p739) target = $region108
      $region107: #{n3ded64_forward.1} parent=11 // pred_region
        _
      $region108: #{n3ded64_forward.1} parent=11 // pred_fallthru
        _
      // Predicated region
      $region109: #{n3ded64_forward.1} parent=11 // pred_check
        %p742 = pneg %p587
      $region110: #{n3ded64_forward.1} parent=11 // pred_check_branch
        %744 = sbr.rel (%p742) target = $region112
      $region111: #{n3ded64_forward.1} parent=11 // pred_region
        _
      $region112: #{n3ded64_forward.1} parent=11 // pred_fallthru
        _
      // Predicated region
      $region113: #{n3ded64_forward.1} parent=11 // pred_check
        %p745 = pneg %p608
      $region114: #{n3ded64_forward.1} parent=11 // pred_check_branch
        %747 = sbr.rel (%p745) target = $region116
      $region115: #{n3ded64_forward.1} parent=11 // pred_region
        _
      $region116: #{n3ded64_forward.1} parent=11 // pred_fallthru
        _
      // Predicated region
      $region117: #{n3ded64_forward.1} parent=11 // pred_check
        %p748 = pneg %p629
      $region118: #{n3ded64_forward.1} parent=11 // pred_check_branch
        %750 = sbr.rel (%p748) target = $region120
      $region119: #{n3ded64_forward.1} parent=11 // pred_region
        _
      $region120: #{n3ded64_forward.1} parent=11 // pred_fallthru
        _
    $region12: #{n3ded64_forward.1} parent=5 // pred_fallthru
      _
    %p751 = scmp.lt.s32.totalorder %s36, 2
    // Predicated region
    $region121: #{n3ded64_forward.1} parent=5 // pred_check
      %p752 = pneg %p751
    $region122: #{n3ded64_forward.1} parent=5 // pred_check_branch
      %754 = sbr.rel (%p752) target = $region124
    $region123: #{n3ded64_forward.1} parent=5 // pred_region
      // Predicated region
      $region125: #{n3ded64_forward.1} parent=123 // pred_check
        %p755 = pneg %p56
      $region126: #{n3ded64_forward.1} parent=123 // pred_check_branch
        %757 = sbr.rel (%p755) target = $region128
      $region127: #{n3ded64_forward.1} parent=123 // pred_region
        %p758 = scmp.lt.s32.totalorder %s36, 1
        %s759 = scalar_select %p758, %s36, 1
        %s760 = smul.addr %s759, 16
        %s761 = smul.addr %s760, 8
        %s762 = scalar_lea.vmem %s0, %s761
      $region128: #{n3ded64_forward.1} parent=123 // pred_fallthru
        _
    $region124: #{n3ded64_forward.1} parent=5 // pred_fallthru
      _
    %p763 = scmp.le.s32.totalorder 1, %s36
    %p764 = scmp.lt.s32.totalorder %s36, 3
    %p765 = pnand %p763, %p764
    %p766 = pneg %p765
    // Predicated region
    $region129: #{n3ded64_forward.1} parent=5 // pred_check
      _
    $region130: #{n3ded64_forward.1} parent=5 // pred_check_branch
      %768 = sbr.rel (%p765) target = $region132
    $region131: #{n3ded64_forward.1} parent=5 // pred_region
      %s769 = ssub.s32 %s36, 1
      %p770 = scmp.lt.s32.totalorder %s41, 1
      %s771 = scalar_select %p770, %s41, 1
      %s772 = smul.addr %s771, 16
      %s773 = smul.addr %s772, 8
      %s774 = scalar_lea.vmem %s0, %s773
      %p775 = pneg %p62
      %p776 = pneg %p59
      %p777 = pneg %p83
      %p778 = pneg %p80
      %p779 = pneg %p104
      %p780 = pneg %p101
      %p781 = pneg %p125
      %p782 = pneg %p122
      %p783 = pneg %p146
      %p784 = pneg %p143
      %p785 = pneg %p167
      %p786 = pneg %p164
      %p787 = pneg %p188
      %p788 = pneg %p185
      %p789 = pneg %p209
      %p790 = pneg %p206
      %p791 = pneg %p230
      %p792 = pneg %p227
      %p793 = pneg %p251
      %p794 = pneg %p248
      %p795 = pneg %p272
      %p796 = pneg %p269
      %p797 = pneg %p293
      %p798 = pneg %p290
      %p799 = pneg %p314
      %p800 = pneg %p311
      %p801 = pneg %p335
      %p802 = pneg %p332
      %p803 = pneg %p356
      %p804 = pneg %p353
      %p805 = pneg %p377
      %p806 = pneg %p374
      %p807 = pneg %p398
      %p808 = pneg %p395
      %p809 = pneg %p419
      %p810 = pneg %p416
      %p811 = pneg %p440
      %p812 = pneg %p437
      %p813 = pneg %p461
      %p814 = pneg %p458
      %p815 = pneg %p482
      %p816 = pneg %p479
      %p817 = pneg %p503
      %p818 = pneg %p500
      %p819 = pneg %p524
      %p820 = pneg %p521
      %p821 = pneg %p545
      %p822 = pneg %p542
      %p823 = pneg %p566
      %p824 = pneg %p563
      %p825 = pneg %p587
      %p826 = pneg %p584
      %p827 = pneg %p608
      %p828 = pneg %p605
      %p829 = pneg %p629
      %p830 = pneg %p626
      %p831 = pneg %p655
      %p832 = pneg %p652
      %p833 = scmp.lt.s32.totalorder %s41, 1
      %s834 = scalar_select %p833, %s41, 1
      %s835 = smul.addr %s834, 2
      %s836 = smul.addr %s835, 4
      %s837 = scalar_lea.vmem %s28, %s836
      %p838 = scmp.lt.s32.totalorder %s41, 1
      %s839 = scalar_select %p838, %s41, 1
      %s840 = smul.addr %s839, 16
      %s841 = smul.addr %s840, 8
      %s842 = scalar_lea.vmem %s0, %s841
      %p843 = scmp.lt.s32.totalorder %s41, 1
      %s844 = scalar_select %p843, %s41, 1
      %s845 = smul.addr %s844, 2
      %s846 = smul.addr %s845, 4
      %s847 = scalar_lea.vmem %s28, %s846
      %vm849 = vcmask 392192
      %850 = vst.msk [vmem:[#allocation2] sm:$0xff] %vm849, 0.0
      %851 = vst.msk [vmem:[#allocation2 + $0x8] sm:$0xff] %vm849, 0.0
      %852 = vst.msk [vmem:[#allocation2 + $0x10] sm:$0xff] %vm849, 0.0
      %vm853 = vcmask 386048
      %854 = vst.msk [vmem:[#allocation2 + $0x18] sm:$0x3] %vm853, 0.0
      %855 = vst.msk [vmem:[#allocation2 + $0x20] sm:$0xff] %vm849, 0.0
      %856 = vst.msk [vmem:[#allocation2 + $0x28] sm:$0xff] %vm849, 0.0
      %857 = vst.msk [vmem:[#allocation2 + $0x30] sm:$0xff] %vm849, 0.0
      %858 = vst.msk [vmem:[#allocation2 + $0x38] sm:$0x3] %vm853, 0.0
      %859 = vst.msk [vmem:[#allocation2 + $0x40] sm:$0xff] %vm849, 0.0
      %860 = vst.msk [vmem:[#allocation2 + $0x48] sm:$0xff] %vm849, 0.0
      %861 = vst.msk [vmem:[#allocation2 + $0x50] sm:$0xff] %vm849, 0.0
      %862 = vst.msk [vmem:[#allocation2 + $0x58] sm:$0x3] %vm853, 0.0
      %863 = vst.msk [vmem:[#allocation2 + $0x60] sm:$0xff] %vm849, 0.0
      %864 = vst.msk [vmem:[#allocation2 + $0x68] sm:$0xff] %vm849, 0.0
      %865 = vst.msk [vmem:[#allocation2 + $0x70] sm:$0xff] %vm849, 0.0
      %866 = vst.msk [vmem:[#allocation2 + $0x78] sm:$0x3] %vm853, 0.0
      %867 = vst.msk [vmem:[#allocation2 + $0x80] sm:$0xff] %vm849, 0.0
      %868 = vst.msk [vmem:[#allocation2 + $0x88] sm:$0xff] %vm849, 0.0
      %869 = vst.msk [vmem:[#allocation2 + $0x90] sm:$0xff] %vm849, 0.0
      %870 = vst.msk [vmem:[#allocation2 + $0x98] sm:$0x3] %vm853, 0.0
      %871 = vst.msk [vmem:[#allocation2 + $0xa0] sm:$0xff] %vm849, 0.0
      %872 = vst.msk [vmem:[#allocation2 + $0xa8] sm:$0xff] %vm849, 0.0
      %873 = vst.msk [vmem:[#allocation2 + $0xb0] sm:$0xff] %vm849, 0.0
      %874 = vst.msk [vmem:[#allocation2 + $0xb8] sm:$0x3] %vm853, 0.0
      %875 = vst.msk [vmem:[#allocation2 + $0xc0] sm:$0xff] %vm849, 0.0
      %876 = vst.msk [vmem:[#allocation2 + $0xc8] sm:$0xff] %vm849, 0.0
      %877 = vst.msk [vmem:[#allocation2 + $0xd0] sm:$0xff] %vm849, 0.0
      %878 = vst.msk [vmem:[#allocation2 + $0xd8] sm:$0x3] %vm853, 0.0
      %879 = vst.msk [vmem:[#allocation2 + $0xe0] sm:$0xff] %vm849, 0.0
      %880 = vst.msk [vmem:[#allocation2 + $0xe8] sm:$0xff] %vm849, 0.0
      %881 = vst.msk [vmem:[#allocation2 + $0xf0] sm:$0xff] %vm849, 0.0
      %882 = vst.msk [vmem:[#allocation2 + $0xf8] sm:$0x3] %vm853, 0.0
      %883 = vst [vmem:[#allocation3] sm:$0xff] 0.0
      %884 = vst [vmem:[#allocation3 + $0x8] sm:$0xff] 0.0
      %885 = vst [vmem:[#allocation3 + $0x10] sm:$0x3] 0.0
      %886 = vst [vmem:[#allocation3 + $0x18] sm:$0xff] 0.0
      %887 = vst [vmem:[#allocation3 + $0x20] sm:$0xff] 0.0
      %888 = vst [vmem:[#allocation3 + $0x28] sm:$0x3] 0.0
      %889 = vst [vmem:[#allocation3 + $0x30] sm:$0xff] 0.0
      %890 = vst [vmem:[#allocation3 + $0x38] sm:$0xff] 0.0
      %891 = vst [vmem:[#allocation3 + $0x40] sm:$0x3] 0.0
      %892 = vst [vmem:[#allocation3 + $0x48] sm:$0xff] 0.0
      %893 = vst [vmem:[#allocation3 + $0x50] sm:$0xff] 0.0
      %894 = vst [vmem:[#allocation3 + $0x58] sm:$0x3] 0.0
      %vm895 = vcmask 523264
      %896 = vst.msk [vmem:[#allocation4] sm:$0xff] %vm895, 0.0
      %897 = vst.msk [vmem:[#allocation4 + $0x8] sm:$0xff] %vm895, 0.0
      %898 = vst.msk [vmem:[#allocation4 + $0x10] sm:$0xff] %vm895, 0.0
      %899 = vst.msk [vmem:[#allocation4 + $0x18] sm:$0xff] %vm895, 0.0
      %900 = vst.msk [vmem:[#allocation4 + $0x20] sm:$0xff] %vm895, 0.0
      %901 = vst.msk [vmem:[#allocation4 + $0x28] sm:$0xff] %vm895, 0.0
      %902 = vst.msk [vmem:[#allocation4 + $0x30] sm:$0xff] %vm895, 0.0
      %903 = vst.msk [vmem:[#allocation4 + $0x38] sm:$0xff] %vm895, 0.0
      %904 = vst [vmem:[#allocation5] sm:$0xff] 0.0
      %905 = vst [vmem:[#allocation5 + $0x8] sm:$0xff] 0.0
      %906 = vst [vmem:[#allocation5 + $0x10] sm:$0xff] 0.0
      %907 = vst [vmem:[#allocation5 + $0x18] sm:$0xff] 0.0
      %908 = vst [vmem:[#allocation5 + $0x20] sm:$0xff] 0.0
      %909 = vst [vmem:[#allocation5 + $0x28] sm:$0xff] 0.0
      %910 = vst [vmem:[#allocation5 + $0x30] sm:$0xff] 0.0
      %911 = vst [vmem:[#allocation5 + $0x38] sm:$0xff] 0.0
      %912 = vst [vmem:[#allocation6] sm:$0xff] 0.0
      %913 = vst [vmem:[#allocation6 + $0x8] sm:$0xff] 0.0
      %914 = vst [vmem:[#allocation6 + $0x10] sm:$0xff] 0.0
      %915 = vst [vmem:[#allocation6 + $0x18] sm:$0xff] 0.0
      %916 = vst [vmem:[#allocation7] sm:$0xff] 0.0
      %917 = vst [vmem:[#allocation7 + $0x8] sm:$0xff] 0.0
      %918 = vst [vmem:[#allocation7 + $0x10] sm:$0xff] 0.0
      %919 = vst [vmem:[#allocation7 + $0x18] sm:$0xff] 0.0
      %920 = vst [vmem:[#allocation7 + $0x20] sm:$0xff] 0.0
      %921 = vst [vmem:[#allocation7 + $0x28] sm:$0xff] 0.0
      %v922 = vld [vmem:[%s842] sm:$0xff]
      %v923 = vld [vmem:[%s842 + $0x8] sm:$0xff]
      %v924 = vld [vmem:[%s842 + $0x10] sm:$0xff]
      %v925 = vld [vmem:[%s842 + $0x18] sm:$0xff]
      %v926 = vld [vmem:[%s842 + $0x20] sm:$0xff]
      %v927 = vld [vmem:[%s842 + $0x28] sm:$0xff]
      %v928 = vld [vmem:[%s842 + $0x30] sm:$0xff]
      %v929 = vld [vmem:[%s842 + $0x38] sm:$0xff]
      %v930 = vld [vmem:[%s842 + $0x40] sm:$0xff]
      %v931 = vld [vmem:[%s842 + $0x48] sm:$0xff]
      %v932 = vld [vmem:[%s842 + $0x50] sm:$0xff]
      %v933 = vld [vmem:[%s842 + $0x58] sm:$0xff]
      %v934 = vld [vmem:[%s842 + $0x60] sm:$0xff]
      %v935 = vld [vmem:[%s842 + $0x68] sm:$0xff]
      %v936 = vld [vmem:[%s842 + $0x70] sm:$0xff]
      %v937 = vld [vmem:[%s842 + $0x78] sm:$0xff]
      %938 = vst.msk [vmem:[#allocation2 + $0x8] sm:$0xff] %vm849, %v922
      %939 = vst.msk [vmem:[#allocation2 + $0x10] sm:$0xff] %vm849, %v923
      %940 = vst.msk [vmem:[#allocation2 + $0x28] sm:$0xff] %vm849, %v924
      %941 = vst.msk [vmem:[#allocation2 + $0x30] sm:$0xff] %vm849, %v925
      %942 = vst.msk [vmem:[#allocation2 + $0x48] sm:$0xff] %vm849, %v926
      %943 = vst.msk [vmem:[#allocation2 + $0x50] sm:$0xff] %vm849, %v927
      %944 = vst.msk [vmem:[#allocation2 + $0x68] sm:$0xff] %vm849, %v928
      %945 = vst.msk [vmem:[#allocation2 + $0x70] sm:$0xff] %vm849, %v929
      %946 = vst.msk [vmem:[#allocation2 + $0x88] sm:$0xff] %vm849, %v930
      %947 = vst.msk [vmem:[#allocation2 + $0x90] sm:$0xff] %vm849, %v931
      %948 = vst.msk [vmem:[#allocation2 + $0xa8] sm:$0xff] %vm849, %v932
      %949 = vst.msk [vmem:[#allocation2 + $0xb0] sm:$0xff] %vm849, %v933
      %950 = vst.msk [vmem:[#allocation2 + $0xc8] sm:$0xff] %vm849, %v934
      %951 = vst.msk [vmem:[#allocation2 + $0xd0] sm:$0xff] %vm849, %v935
      %952 = vst.msk [vmem:[#allocation2 + $0xe8] sm:$0xff] %vm849, %v936
      %953 = vst.msk [vmem:[#allocation2 + $0xf0] sm:$0xff] %vm849, %v937
      %v954 = vld [vmem:[#allocation2 + $0x6] sm:$0xff]
      %v955 = vld [vmem:[#allocation2 + $0xe] sm:$0xff]
      %v956 = vld [vmem:[#allocation2 + $0x26] sm:$0xff]
      %v957 = vld [vmem:[#allocation2 + $0x2e] sm:$0xff]
      %v958 = vld [vmem:[#allocation2 + $0x46] sm:$0xff]
      %v959 = vld [vmem:[#allocation2 + $0x4e] sm:$0xff]
      %v960 = vld [vmem:[#allocation2 + $0x66] sm:$0xff]
      %v961 = vld [vmem:[#allocation2 + $0x6e] sm:$0xff]
      %v962 = vld [vmem:[#allocation2 + $0x86] sm:$0xff]
      %v963 = vld [vmem:[#allocation2 + $0x8e] sm:$0xff]
      %v964 = vld [vmem:[#allocation2 + $0xa6] sm:$0xff]
      %v965 = vld [vmem:[#allocation2 + $0xae] sm:$0xff]
      %v966 = vld [vmem:[#allocation2 + $0xc6] sm:$0xff]
      %v967 = vld [vmem:[#allocation2 + $0xce] sm:$0xff]
      %v968 = vld [vmem:[#allocation2 + $0xe6] sm:$0xff]
      %v969 = vld [vmem:[#allocation2 + $0xee] sm:$0xff]
      %v970 = vpack.c.bf16 %v955, %v954
      %v971 = vpack.c.bf16 %v957, %v956
      %v972 = vpack.c.bf16 %v959, %v958
      %v973 = vpack.c.bf16 %v961, %v960
      %v974 = vpack.c.bf16 %v963, %v962
      %v975 = vpack.c.bf16 %v965, %v964
      %v976 = vpack.c.bf16 %v967, %v966
      %v977 = vpack.c.bf16 %v969, %v968
      %v978 = vld [vmem:[%s1] sm:$0xff]
      %v979 = vld [vmem:[%s1 + $0x8] sm:$0xff]
      %v980 = vld [vmem:[%s1 + $0x10] sm:$0xff]
      %v981 = vld [vmem:[%s1 + $0x18] sm:$0xff]
      %v982 = vld [vmem:[%s1 + $0x20] sm:$0xff]
      %v983 = vld [vmem:[%s1 + $0x28] sm:$0xff]
      %v984 = vld [vmem:[#allocation2 + $0x7] sm:$0xff]
      %v985 = vld [vmem:[#allocation2 + $0xf] sm:$0xff]
      %v986 = vld [vmem:[#allocation2 + $0x27] sm:$0xff]
      %v987 = vld [vmem:[#allocation2 + $0x2f] sm:$0xff]
      %v988 = vld [vmem:[#allocation2 + $0x47] sm:$0xff]
      %v989 = vld [vmem:[#allocation2 + $0x4f] sm:$0xff]
      %v990 = vld [vmem:[#allocation2 + $0x67] sm:$0xff]
      %v991 = vld [vmem:[#allocation2 + $0x6f] sm:$0xff]
      %v992 = vld [vmem:[#allocation2 + $0x87] sm:$0xff]
      %v993 = vld [vmem:[#allocation2 + $0x8f] sm:$0xff]
      %v994 = vld [vmem:[#allocation2 + $0xa7] sm:$0xff]
      %v995 = vld [vmem:[#allocation2 + $0xaf] sm:$0xff]
      %v996 = vld [vmem:[#allocation2 + $0xc7] sm:$0xff]
      %v997 = vld [vmem:[#allocation2 + $0xcf] sm:$0xff]
      %v998 = vld [vmem:[#allocation2 + $0xe7] sm:$0xff]
      %v999 = vld [vmem:[#allocation2 + $0xef] sm:$0xff]
      %v1000 = vpack.c.bf16 %v985, %v984
      %v1001 = vpack.c.bf16 %v987, %v986
      %v1002 = vpack.c.bf16 %v989, %v988
      %v1003 = vpack.c.bf16 %v991, %v990
      %v1004 = vpack.c.bf16 %v993, %v992
      %v1005 = vpack.c.bf16 %v995, %v994
      %v1006 = vpack.c.bf16 %v997, %v996
      %v1007 = vpack.c.bf16 %v999, %v998
      %s1008 = scalar_lea.vmem %s1, 48
      %v1009 = vld [vmem:[%s1008] sm:$0xff]
      %v1010 = vld [vmem:[%s1008 + $0x8] sm:$0xff]
      %v1011 = vld [vmem:[%s1008 + $0x10] sm:$0xff]
      %v1012 = vld [vmem:[%s1008 + $0x18] sm:$0xff]
      %v1013 = vld [vmem:[%s1008 + $0x20] sm:$0xff]
      %v1014 = vld [vmem:[%s1008 + $0x28] sm:$0xff]
      %v1021 = vunpack.c.l.b16 %v1009
      %v1022 = vunpack.c.h.b16 %v1009
      %v1023 = vunpack.c.l.b16 %v1010
      %v1024 = vunpack.c.h.b16 %v1010
      %v1025 = vunpack.c.l.b16 %v1011
      %v1026 = vunpack.c.h.b16 %v1011
      %v1027 = vunpack.c.l.b16 %v1012
      %v1028 = vunpack.c.h.b16 %v1012
      %v1029 = vunpack.c.l.b16 %v1013
      %v1030 = vunpack.c.h.b16 %v1013
      %v1031 = vunpack.c.l.b16 %v1014
      %v1032 = vunpack.c.h.b16 %v1014
      %v1033 = vpack.c.b16 %v1023, %v1021
      %v1034 = vpack.c.b16 %v1024, %v1022
      %v1035 = vpack.c.b16 %v1027, %v1025
      %v1036 = vpack.c.b16 %v1028, %v1026
      %v1037 = vpack.c.b16 %v1031, %v1029
      %v1038 = vpack.c.b16 %v1032, %v1030
      %v1046 = vsel %vm849, %v1000, 0
      %v1049 = vsel %vm849, %v1001, 0
      %v1052 = vsel %vm849, %v1002, 0
      %v1055 = vsel %vm849, %v1003, 0
      %v1058 = vsel %vm849, %v1004, 0
      %v1061 = vsel %vm849, %v1005, 0
      %v1064 = vsel %vm849, %v1006, 0
      %v1067 = vsel %vm849, %v1007, 0
      %1069 = vmatpush.bf16.msra.mxu0 0
      %1070 = vmatpush.bf16.msra.mxu0 0
      %1071 = vmatpush.bf16.msra.mxu0 0
      %1072 = vmatpush.bf16.msra.mxu0 0
      %1073 = vmatpush.bf16.msra.mxu0 0
      %1074 = vmatpush.bf16.msra.mxu0 %v1037
      %1075 = vmatpush.bf16.msra.mxu0 %v1035
      %1076 = vmatpush.bf16.msra.mxu0 %v1033
      %1077 = vmatmul.bf16.gmra.mxu0 %v1046
      %v1078 = vpop.f32.mrf.mxu0
      %v1079 = vadd.f32 0.0, %v1078
      %v1080 = vpop.f32.mrf.mxu0
      %v1081 = vadd.f32 0.0, %v1080
      %1082 = vmatmul.bf16.gmra.mxu0 %v1049
      %v1083 = vpop.f32.mrf.mxu0
      %v1084 = vadd.f32 0.0, %v1083
      %v1085 = vpop.f32.mrf.mxu0
      %v1086 = vadd.f32 0.0, %v1085
      %1087 = vmatmul.bf16.gmra.mxu0 %v1052
      %v1088 = vpop.f32.mrf.mxu0
      %v1089 = vadd.f32 0.0, %v1088
      %v1090 = vpop.f32.mrf.mxu0
      %v1091 = vadd.f32 0.0, %v1090
      %1092 = vmatmul.bf16.gmra.mxu0 %v1055
      %v1093 = vpop.f32.mrf.mxu0
      %v1094 = vadd.f32 0.0, %v1093
      %v1095 = vpop.f32.mrf.mxu0
      %v1096 = vadd.f32 0.0, %v1095
      %1097 = vmatmul.bf16.gmra.mxu0 %v1058
      %v1098 = vpop.f32.mrf.mxu0
      %v1099 = vadd.f32 0.0, %v1098
      %v1100 = vpop.f32.mrf.mxu0
      %v1101 = vadd.f32 0.0, %v1100
      %1102 = vmatmul.bf16.gmra.mxu0 %v1061
      %v1103 = vpop.f32.mrf.mxu0
      %v1104 = vadd.f32 0.0, %v1103
      %v1105 = vpop.f32.mrf.mxu0
      %v1106 = vadd.f32 0.0, %v1105
      %1107 = vmatmul.bf16.gmra.mxu0 %v1064
      %v1108 = vpop.f32.mrf.mxu0
      %v1109 = vadd.f32 0.0, %v1108
      %v1110 = vpop.f32.mrf.mxu0
      %v1111 = vadd.f32 0.0, %v1110
      %1112 = vmatmul.bf16.gmra.mxu0 %v1067
      %v1113 = vpop.f32.mrf.mxu0
      %v1114 = vadd.f32 0.0, %v1113
      %v1115 = vpop.f32.mrf.mxu0
      %v1116 = vadd.f32 0.0, %v1115
      %1117 = vdwg.mxu0
      %1118 = vmatpush.bf16.msra.mxu0 0
      %1119 = vmatpush.bf16.msra.mxu0 0
      %1120 = vmatpush.bf16.msra.mxu0 0
      %1121 = vmatpush.bf16.msra.mxu0 0
      %1122 = vmatpush.bf16.msra.mxu0 0
      %1123 = vmatpush.bf16.msra.mxu0 %v1038
      %1124 = vmatpush.bf16.msra.mxu0 %v1036
      %1125 = vmatpush.bf16.msra.mxu0 %v1034
      %1126 = vmatmul.bf16.gmra.mxu0 %v1046
      %v1127 = vpop.f32.mrf.mxu0
      %v1128 = vadd.f32 0.0, %v1127
      %v1129 = vpop.f32.mrf.mxu0
      %v1130 = vadd.f32 0.0, %v1129
      %1131 = vmatmul.bf16.gmra.mxu0 %v1049
      %v1132 = vpop.f32.mrf.mxu0
      %v1133 = vadd.f32 0.0, %v1132
      %v1134 = vpop.f32.mrf.mxu0
      %v1135 = vadd.f32 0.0, %v1134
      %1136 = vmatmul.bf16.gmra.mxu0 %v1052
      %v1137 = vpop.f32.mrf.mxu0
      %v1138 = vadd.f32 0.0, %v1137
      %v1139 = vpop.f32.mrf.mxu0
      %v1140 = vadd.f32 0.0, %v1139
      %1141 = vmatmul.bf16.gmra.mxu0 %v1055
      %v1142 = vpop.f32.mrf.mxu0
      %v1143 = vadd.f32 0.0, %v1142
      %v1144 = vpop.f32.mrf.mxu0
      %v1145 = vadd.f32 0.0, %v1144
      %1146 = vmatmul.bf16.gmra.mxu0 %v1058
      %v1147 = vpop.f32.mrf.mxu0
      %v1148 = vadd.f32 0.0, %v1147
      %v1149 = vpop.f32.mrf.mxu0
      %v1150 = vadd.f32 0.0, %v1149
      %1151 = vmatmul.bf16.gmra.mxu0 %v1061
      %v1152 = vpop.f32.mrf.mxu0
      %v1153 = vadd.f32 0.0, %v1152
      %v1154 = vpop.f32.mrf.mxu0
      %v1155 = vadd.f32 0.0, %v1154
      %1156 = vmatmul.bf16.gmra.mxu0 %v1064
      %v1157 = vpop.f32.mrf.mxu0
      %v1158 = vadd.f32 0.0, %v1157
      %v1159 = vpop.f32.mrf.mxu0
      %v1160 = vadd.f32 0.0, %v1159
      %1161 = vmatmul.bf16.gmra.mxu0 %v1067
      %v1162 = vpop.f32.mrf.mxu0
      %v1163 = vadd.f32 0.0, %v1162
      %v1164 = vpop.f32.mrf.mxu0
      %v1165 = vadd.f32 0.0, %v1164
      %1166 = vdwg.mxu0
      %v1173 = vunpack.c.l.b16 %v978
      %v1174 = vunpack.c.h.b16 %v978
      %v1175 = vunpack.c.l.b16 %v979
      %v1176 = vunpack.c.h.b16 %v979
      %v1177 = vunpack.c.l.b16 %v980
      %v1178 = vunpack.c.h.b16 %v980
      %v1179 = vunpack.c.l.b16 %v981
      %v1180 = vunpack.c.h.b16 %v981
      %v1181 = vunpack.c.l.b16 %v982
      %v1182 = vunpack.c.h.b16 %v982
      %v1183 = vunpack.c.l.b16 %v983
      %v1184 = vunpack.c.h.b16 %v983
      %v1185 = vpack.c.b16 %v1175, %v1173
      %v1186 = vpack.c.b16 %v1176, %v1174
      %v1187 = vpack.c.b16 %v1179, %v1177
      %v1188 = vpack.c.b16 %v1180, %v1178
      %v1189 = vpack.c.b16 %v1183, %v1181
      %v1190 = vpack.c.b16 %v1184, %v1182
      %v1198 = vsel %vm849, %v970, 0
      %v1201 = vsel %vm849, %v971, 0
      %v1204 = vsel %vm849, %v972, 0
      %v1207 = vsel %vm849, %v973, 0
      %v1210 = vsel %vm849, %v974, 0
      %v1213 = vsel %vm849, %v975, 0
      %v1216 = vsel %vm849, %v976, 0
      %v1219 = vsel %vm849, %v977, 0
      %1221 = vmatpush.bf16.msra.mxu0 0
      %1222 = vmatpush.bf16.msra.mxu0 0
      %1223 = vmatpush.bf16.msra.mxu0 0
      %1224 = vmatpush.bf16.msra.mxu0 0
      %1225 = vmatpush.bf16.msra.mxu0 0
      %1226 = vmatpush.bf16.msra.mxu0 %v1189
      %1227 = vmatpush.bf16.msra.mxu0 %v1187
      %1228 = vmatpush.bf16.msra.mxu0 %v1185
      %1229 = vmatmul.bf16.gmra.mxu0 %v1198
      %v1230 = vpop.f32.mrf.mxu0
      %v1231 = vadd.f32 %v1079, %v1230
      %v1232 = vpop.f32.mrf.mxu0
      %v1233 = vadd.f32 %v1081, %v1232
      %1234 = vmatmul.bf16.gmra.mxu0 %v1201
      %v1235 = vpop.f32.mrf.mxu0
      %v1236 = vadd.f32 %v1084, %v1235
      %v1237 = vpop.f32.mrf.mxu0
      %v1238 = vadd.f32 %v1086, %v1237
      %1239 = vmatmul.bf16.gmra.mxu0 %v1204
      %v1240 = vpop.f32.mrf.mxu0
      %v1241 = vadd.f32 %v1089, %v1240
      %v1242 = vpop.f32.mrf.mxu0
      %v1243 = vadd.f32 %v1091, %v1242
      %1244 = vmatmul.bf16.gmra.mxu0 %v1207
      %v1245 = vpop.f32.mrf.mxu0
      %v1246 = vadd.f32 %v1094, %v1245
      %v1247 = vpop.f32.mrf.mxu0
      %v1248 = vadd.f32 %v1096, %v1247
      %1249 = vmatmul.bf16.gmra.mxu0 %v1210
      %v1250 = vpop.f32.mrf.mxu0
      %v1251 = vadd.f32 %v1099, %v1250
      %v1252 = vpop.f32.mrf.mxu0
      %v1253 = vadd.f32 %v1101, %v1252
      %1254 = vmatmul.bf16.gmra.mxu0 %v1213
      %v1255 = vpop.f32.mrf.mxu0
      %v1256 = vadd.f32 %v1104, %v1255
      %v1257 = vpop.f32.mrf.mxu0
      %v1258 = vadd.f32 %v1106, %v1257
      %1259 = vmatmul.bf16.gmra.mxu0 %v1216
      %v1260 = vpop.f32.mrf.mxu0
      %v1261 = vadd.f32 %v1109, %v1260
      %v1262 = vpop.f32.mrf.mxu0
      %v1263 = vadd.f32 %v1111, %v1262
      %1264 = vmatmul.bf16.gmra.mxu0 %v1219
      %v1265 = vpop.f32.mrf.mxu0
      %v1266 = vadd.f32 %v1114, %v1265
      %v1267 = vpop.f32.mrf.mxu0
      %v1268 = vadd.f32 %v1116, %v1267
      %1269 = vdwg.mxu0
      %1270 = vmatpush.bf16.msra.mxu0 0
      %1271 = vmatpush.bf16.msra.mxu0 0
      %1272 = vmatpush.bf16.msra.mxu0 0
      %1273 = vmatpush.bf16.msra.mxu0 0
      %1274 = vmatpush.bf16.msra.mxu0 0
      %1275 = vmatpush.bf16.msra.mxu0 %v1190
      %1276 = vmatpush.bf16.msra.mxu0 %v1188
      %1277 = vmatpush.bf16.msra.mxu0 %v1186
      %1278 = vmatmul.bf16.gmra.mxu0 %v1198
      %v1279 = vpop.f32.mrf.mxu0
      %v1280 = vadd.f32 %v1128, %v1279
      %v1281 = vpop.f32.mrf.mxu0
      %v1282 = vadd.f32 %v1130, %v1281
      %1283 = vmatmul.bf16.gmra.mxu0 %v1201
      %v1284 = vpop.f32.mrf.mxu0
      %v1285 = vadd.f32 %v1133, %v1284
      %v1286 = vpop.f32.mrf.mxu0
      %v1287 = vadd.f32 %v1135, %v1286
      %1288 = vmatmul.bf16.gmra.mxu0 %v1204
      %v1289 = vpop.f32.mrf.mxu0
      %v1290 = vadd.f32 %v1138, %v1289
      %v1291 = vpop.f32.mrf.mxu0
      %v1292 = vadd.f32 %v1140, %v1291
      %1293 = vmatmul.bf16.gmra.mxu0 %v1207
      %v1294 = vpop.f32.mrf.mxu0
      %v1295 = vadd.f32 %v1143, %v1294
      %v1296 = vpop.f32.mrf.mxu0
      %v1297 = vadd.f32 %v1145, %v1296
      %1298 = vmatmul.bf16.gmra.mxu0 %v1210
      %v1299 = vpop.f32.mrf.mxu0
      %v1300 = vadd.f32 %v1148, %v1299
      %v1301 = vpop.f32.mrf.mxu0
      %v1302 = vadd.f32 %v1150, %v1301
      %1303 = vmatmul.bf16.gmra.mxu0 %v1213
      %v1304 = vpop.f32.mrf.mxu0
      %v1305 = vadd.f32 %v1153, %v1304
      %v1306 = vpop.f32.mrf.mxu0
      %v1307 = vadd.f32 %v1155, %v1306
      %1308 = vmatmul.bf16.gmra.mxu0 %v1216
      %v1309 = vpop.f32.mrf.mxu0
      %v1310 = vadd.f32 %v1158, %v1309
      %v1311 = vpop.f32.mrf.mxu0
      %v1312 = vadd.f32 %v1160, %v1311
      %1313 = vmatmul.bf16.gmra.mxu0 %v1219
      %v1314 = vpop.f32.mrf.mxu0
      %v1315 = vadd.f32 %v1163, %v1314
      %v1316 = vpop.f32.mrf.mxu0
      %v1317 = vadd.f32 %v1165, %v1316
      %1318 = vdwg.mxu0
      %v1319 = vld [vmem:[#allocation2 + $0x8] sm:$0xff]
      %v1320 = vld [vmem:[#allocation2 + $0x10] sm:$0xff]
      %v1321 = vld [vmem:[#allocation2 + $0x28] sm:$0xff]
      %v1322 = vld [vmem:[#allocation2 + $0x30] sm:$0xff]
      %v1323 = vld [vmem:[#allocation2 + $0x48] sm:$0xff]
      %v1324 = vld [vmem:[#allocation2 + $0x50] sm:$0xff]
      %v1325 = vld [vmem:[#allocation2 + $0x68] sm:$0xff]
      %v1326 = vld [vmem:[#allocation2 + $0x70] sm:$0xff]
      %v1327 = vld [vmem:[#allocation2 + $0x88] sm:$0xff]
      %v1328 = vld [vmem:[#allocation2 + $0x90] sm:$0xff]
      %v1329 = vld [vmem:[#allocation2 + $0xa8] sm:$0xff]
      %v1330 = vld [vmem:[#allocation2 + $0xb0] sm:$0xff]
      %v1331 = vld [vmem:[#allocation2 + $0xc8] sm:$0xff]
      %v1332 = vld [vmem:[#allocation2 + $0xd0] sm:$0xff]
      %v1333 = vld [vmem:[#allocation2 + $0xe8] sm:$0xff]
      %v1334 = vld [vmem:[#allocation2 + $0xf0] sm:$0xff]
      %v1335 = vpack.c.bf16 %v1320, %v1319
      %v1336 = vpack.c.bf16 %v1322, %v1321
      %v1337 = vpack.c.bf16 %v1324, %v1323
      %v1338 = vpack.c.bf16 %v1326, %v1325
      %v1339 = vpack.c.bf16 %v1328, %v1327
      %v1340 = vpack.c.bf16 %v1330, %v1329
      %v1341 = vpack.c.bf16 %v1332, %v1331
      %v1342 = vpack.c.bf16 %v1334, %v1333
      %s1343 = scalar_lea.vmem %s1, 96
      %v1344 = vld [vmem:[%s1343] sm:$0xff]
      %v1345 = vld [vmem:[%s1343 + $0x8] sm:$0xff]
      %v1346 = vld [vmem:[%s1343 + $0x10] sm:$0xff]
      %v1347 = vld [vmem:[%s1343 + $0x18] sm:$0xff]
      %v1348 = vld [vmem:[%s1343 + $0x20] sm:$0xff]
      %v1349 = vld [vmem:[%s1343 + $0x28] sm:$0xff]
      %v1356 = vunpack.c.l.b16 %v1344
      %v1357 = vunpack.c.h.b16 %v1344
      %v1358 = vunpack.c.l.b16 %v1345
      %v1359 = vunpack.c.h.b16 %v1345
      %v1360 = vunpack.c.l.b16 %v1346
      %v1361 = vunpack.c.h.b16 %v1346
      %v1362 = vunpack.c.l.b16 %v1347
      %v1363 = vunpack.c.h.b16 %v1347
      %v1364 = vunpack.c.l.b16 %v1348
      %v1365 = vunpack.c.h.b16 %v1348
      %v1366 = vunpack.c.l.b16 %v1349
      %v1367 = vunpack.c.h.b16 %v1349
      %v1368 = vpack.c.b16 %v1358, %v1356
      %v1369 = vpack.c.b16 %v1359, %v1357
      %v1370 = vpack.c.b16 %v1362, %v1360
      %v1371 = vpack.c.b16 %v1363, %v1361
      %v1372 = vpack.c.b16 %v1366, %v1364
      %v1373 = vpack.c.b16 %v1367, %v1365
      %v1381 = vsel %vm849, %v1335, 0
      %v1384 = vsel %vm849, %v1336, 0
      %v1387 = vsel %vm849, %v1337, 0
      %v1390 = vsel %vm849, %v1338, 0
      %v1393 = vsel %vm849, %v1339, 0
      %v1396 = vsel %vm849, %v1340, 0
      %v1399 = vsel %vm849, %v1341, 0
      %v1402 = vsel %vm849, %v1342, 0
      %1404 = vmatpush.bf16.msra.mxu0 0
      %1405 = vmatpush.bf16.msra.mxu0 0
      %1406 = vmatpush.bf16.msra.mxu0 0
      %1407 = vmatpush.bf16.msra.mxu0 0
      %1408 = vmatpush.bf16.msra.mxu0 0
      %1409 = vmatpush.bf16.msra.mxu0 %v1372
      %1410 = vmatpush.bf16.msra.mxu0 %v1370
      %1411 = vmatpush.bf16.msra.mxu0 %v1368
      %1412 = vmatmul.bf16.gmra.mxu0 %v1381
      %v1413 = vpop.f32.mrf.mxu0
      %v1414 = vadd.f32 0.0, %v1413
      %v1415 = vpop.f32.mrf.mxu0
      %v1416 = vadd.f32 0.0, %v1415
      %1417 = vmatmul.bf16.gmra.mxu0 %v1384
      %v1418 = vpop.f32.mrf.mxu0
      %v1419 = vadd.f32 0.0, %v1418
      %v1420 = vpop.f32.mrf.mxu0
      %v1421 = vadd.f32 0.0, %v1420
      %1422 = vmatmul.bf16.gmra.mxu0 %v1387
      %v1423 = vpop.f32.mrf.mxu0
      %v1424 = vadd.f32 0.0, %v1423
      %v1425 = vpop.f32.mrf.mxu0
      %v1426 = vadd.f32 0.0, %v1425
      %1427 = vmatmul.bf16.gmra.mxu0 %v1390
      %v1428 = vpop.f32.mrf.mxu0
      %v1429 = vadd.f32 0.0, %v1428
      %v1430 = vpop.f32.mrf.mxu0
      %v1431 = vadd.f32 0.0, %v1430
      %1432 = vmatmul.bf16.gmra.mxu0 %v1393
      %v1433 = vpop.f32.mrf.mxu0
      %v1434 = vadd.f32 0.0, %v1433
      %v1435 = vpop.f32.mrf.mxu0
      %v1436 = vadd.f32 0.0, %v1435
      %1437 = vmatmul.bf16.gmra.mxu0 %v1396
      %v1438 = vpop.f32.mrf.mxu0
      %v1439 = vadd.f32 0.0, %v1438
      %v1440 = vpop.f32.mrf.mxu0
      %v1441 = vadd.f32 0.0, %v1440
      %1442 = vmatmul.bf16.gmra.mxu0 %v1399
      %v1443 = vpop.f32.mrf.mxu0
      %v1444 = vadd.f32 0.0, %v1443
      %v1445 = vpop.f32.mrf.mxu0
      %v1446 = vadd.f32 0.0, %v1445
      %1447 = vmatmul.bf16.gmra.mxu0 %v1402
      %v1448 = vpop.f32.mrf.mxu0
      %v1449 = vadd.f32 0.0, %v1448
      %v1450 = vpop.f32.mrf.mxu0
      %v1451 = vadd.f32 0.0, %v1450
      %1452 = vdwg.mxu0
      %1453 = vmatpush.bf16.msra.mxu0 0
      %1454 = vmatpush.bf16.msra.mxu0 0
      %1455 = vmatpush.bf16.msra.mxu0 0
      %1456 = vmatpush.bf16.msra.mxu0 0
      %1457 = vmatpush.bf16.msra.mxu0 0
      %1458 = vmatpush.bf16.msra.mxu0 %v1373
      %1459 = vmatpush.bf16.msra.mxu0 %v1371
      %1460 = vmatpush.bf16.msra.mxu0 %v1369
      %1461 = vmatmul.bf16.gmra.mxu0 %v1381
      %v1462 = vpop.f32.mrf.mxu0
      %v1463 = vadd.f32 0.0, %v1462
      %v1464 = vpop.f32.mrf.mxu0
      %v1465 = vadd.f32 0.0, %v1464
      %1466 = vmatmul.bf16.gmra.mxu0 %v1384
      %v1467 = vpop.f32.mrf.mxu0
      %v1468 = vadd.f32 0.0, %v1467
      %v1469 = vpop.f32.mrf.mxu0
      %v1470 = vadd.f32 0.0, %v1469
      %1471 = vmatmul.bf16.gmra.mxu0 %v1387
      %v1472 = vpop.f32.mrf.mxu0
      %v1473 = vadd.f32 0.0, %v1472
      %v1474 = vpop.f32.mrf.mxu0
      %v1475 = vadd.f32 0.0, %v1474
      %1476 = vmatmul.bf16.gmra.mxu0 %v1390
      %v1477 = vpop.f32.mrf.mxu0
      %v1478 = vadd.f32 0.0, %v1477
      %v1479 = vpop.f32.mrf.mxu0
      %v1480 = vadd.f32 0.0, %v1479
      %1481 = vmatmul.bf16.gmra.mxu0 %v1393
      %v1482 = vpop.f32.mrf.mxu0
      %v1483 = vadd.f32 0.0, %v1482
      %v1484 = vpop.f32.mrf.mxu0
      %v1485 = vadd.f32 0.0, %v1484
      %1486 = vmatmul.bf16.gmra.mxu0 %v1396
      %v1487 = vpop.f32.mrf.mxu0
      %v1488 = vadd.f32 0.0, %v1487
      %v1489 = vpop.f32.mrf.mxu0
      %v1490 = vadd.f32 0.0, %v1489
      %1491 = vmatmul.bf16.gmra.mxu0 %v1399
      %v1492 = vpop.f32.mrf.mxu0
      %v1493 = vadd.f32 0.0, %v1492
      %v1494 = vpop.f32.mrf.mxu0
      %v1495 = vadd.f32 0.0, %v1494
      %1496 = vmatmul.bf16.gmra.mxu0 %v1402
      %v1497 = vpop.f32.mrf.mxu0
      %v1498 = vadd.f32 0.0, %v1497
      %v1499 = vpop.f32.mrf.mxu0
      %v1500 = vadd.f32 0.0, %v1499
      %1501 = vdwg.mxu0
      %v1502 = vadd.f32 %v1231, %v1414
      %v1503 = vadd.f32 %v1280, %v1463
      %v1504 = vadd.f32 %v1233, %v1416
      %v1505 = vadd.f32 %v1282, %v1465
      %v1506 = vadd.f32 %v1236, %v1419
      %v1507 = vadd.f32 %v1285, %v1468
      %v1508 = vadd.f32 %v1238, %v1421
      %v1509 = vadd.f32 %v1287, %v1470
      %v1510 = vadd.f32 %v1241, %v1424
      %v1511 = vadd.f32 %v1290, %v1473
      %v1512 = vadd.f32 %v1243, %v1426
      %v1513 = vadd.f32 %v1292, %v1475
      %v1514 = vadd.f32 %v1246, %v1429
      %v1515 = vadd.f32 %v1295, %v1478
      %v1516 = vadd.f32 %v1248, %v1431
      %v1517 = vadd.f32 %v1297, %v1480
      %v1518 = vadd.f32 %v1251, %v1434
      %v1519 = vadd.f32 %v1300, %v1483
      %v1520 = vadd.f32 %v1253, %v1436
      %v1521 = vadd.f32 %v1302, %v1485
      %v1522 = vadd.f32 %v1256, %v1439
      %v1523 = vadd.f32 %v1305, %v1488
      %v1524 = vadd.f32 %v1258, %v1441
      %v1525 = vadd.f32 %v1307, %v1490
      %v1526 = vadd.f32 %v1261, %v1444
      %v1527 = vadd.f32 %v1310, %v1493
      %v1528 = vadd.f32 %v1263, %v1446
      %v1529 = vadd.f32 %v1312, %v1495
      %v1530 = vadd.f32 %v1266, %v1449
      %v1531 = vadd.f32 %v1315, %v1498
      %v1532 = vadd.f32 %v1268, %v1451
      %v1533 = vadd.f32 %v1317, %v1500
      %v1534 = vld [vmem:[#allocation2 + $0x9] sm:$0xff]
      %v1535 = vld [vmem:[#allocation2 + $0x11] sm:$0xff]
      %v1536 = vld [vmem:[#allocation2 + $0x29] sm:$0xff]
      %v1537 = vld [vmem:[#allocation2 + $0x31] sm:$0xff]
      %v1538 = vld [vmem:[#allocation2 + $0x49] sm:$0xff]
      %v1539 = vld [vmem:[#allocation2 + $0x51] sm:$0xff]
      %v1540 = vld [vmem:[#allocation2 + $0x69] sm:$0xff]
      %v1541 = vld [vmem:[#allocation2 + $0x71] sm:$0xff]
      %v1542 = vld [vmem:[#allocation2 + $0x89] sm:$0xff]
      %v1543 = vld [vmem:[#allocation2 + $0x91] sm:$0xff]
      %v1544 = vld [vmem:[#allocation2 + $0xa9] sm:$0xff]
      %v1545 = vld [vmem:[#allocation2 + $0xb1] sm:$0xff]
      %v1546 = vld [vmem:[#allocation2 + $0xc9] sm:$0xff]
      %v1547 = vld [vmem:[#allocation2 + $0xd1] sm:$0xff]
      %v1548 = vld [vmem:[#allocation2 + $0xe9] sm:$0xff]
      %v1549 = vld [vmem:[#allocation2 + $0xf1] sm:$0xff]
      %v1550 = vpack.c.bf16 %v1535, %v1534
      %v1551 = vpack.c.bf16 %v1537, %v1536
      %v1552 = vpack.c.bf16 %v1539, %v1538
      %v1553 = vpack.c.bf16 %v1541, %v1540
      %v1554 = vpack.c.bf16 %v1543, %v1542
      %v1555 = vpack.c.bf16 %v1545, %v1544
      %v1556 = vpack.c.bf16 %v1547, %v1546
      %v1557 = vpack.c.bf16 %v1549, %v1548
      %s1558 = scalar_lea.vmem %s1, 144
      %v1559 = vld [vmem:[%s1558] sm:$0xff]
      %v1560 = vld [vmem:[%s1558 + $0x8] sm:$0xff]
      %v1561 = vld [vmem:[%s1558 + $0x10] sm:$0xff]
      %v1562 = vld [vmem:[%s1558 + $0x18] sm:$0xff]
      %v1563 = vld [vmem:[%s1558 + $0x20] sm:$0xff]
      %v1564 = vld [vmem:[%s1558 + $0x28] sm:$0xff]
      %v1571 = vunpack.c.l.b16 %v1559
      %v1572 = vunpack.c.h.b16 %v1559
      %v1573 = vunpack.c.l.b16 %v1560
      %v1574 = vunpack.c.h.b16 %v1560
      %v1575 = vunpack.c.l.b16 %v1561
      %v1576 = vunpack.c.h.b16 %v1561
      %v1577 = vunpack.c.l.b16 %v1562
      %v1578 = vunpack.c.h.b16 %v1562
      %v1579 = vunpack.c.l.b16 %v1563
      %v1580 = vunpack.c.h.b16 %v1563
      %v1581 = vunpack.c.l.b16 %v1564
      %v1582 = vunpack.c.h.b16 %v1564
      %v1583 = vpack.c.b16 %v1573, %v1571
      %v1584 = vpack.c.b16 %v1574, %v1572
      %v1585 = vpack.c.b16 %v1577, %v1575
      %v1586 = vpack.c.b16 %v1578, %v1576
      %v1587 = vpack.c.b16 %v1581, %v1579
      %v1588 = vpack.c.b16 %v1582, %v1580
      %v1596 = vsel %vm849, %v1550, 0
      %v1599 = vsel %vm849, %v1551, 0
      %v1602 = vsel %vm849, %v1552, 0
      %v1605 = vsel %vm849, %v1553, 0
      %v1608 = vsel %vm849, %v1554, 0
      %v1611 = vsel %vm849, %v1555, 0
      %v1614 = vsel %vm849, %v1556, 0
      %v1617 = vsel %vm849, %v1557, 0
      %1619 = vmatpush.bf16.msra.mxu0 0
      %1620 = vmatpush.bf16.msra.mxu0 0
      %1621 = vmatpush.bf16.msra.mxu0 0
      %1622 = vmatpush.bf16.msra.mxu0 0
      %1623 = vmatpush.bf16.msra.mxu0 0
      %1624 = vmatpush.bf16.msra.mxu0 %v1587
      %1625 = vmatpush.bf16.msra.mxu0 %v1585
      %1626 = vmatpush.bf16.msra.mxu0 %v1583
      %1627 = vmatmul.bf16.gmra.mxu0 %v1596
      %v1628 = vpop.f32.mrf.mxu0
      %v1629 = vadd.f32 0.0, %v1628
      %v1630 = vpop.f32.mrf.mxu0
      %v1631 = vadd.f32 0.0, %v1630
      %1632 = vmatmul.bf16.gmra.mxu0 %v1599
      %v1633 = vpop.f32.mrf.mxu0
      %v1634 = vadd.f32 0.0, %v1633
      %v1635 = vpop.f32.mrf.mxu0
      %v1636 = vadd.f32 0.0, %v1635
      %1637 = vmatmul.bf16.gmra.mxu0 %v1602
      %v1638 = vpop.f32.mrf.mxu0
      %v1639 = vadd.f32 0.0, %v1638
      %v1640 = vpop.f32.mrf.mxu0
      %v1641 = vadd.f32 0.0, %v1640
      %1642 = vmatmul.bf16.gmra.mxu0 %v1605
      %v1643 = vpop.f32.mrf.mxu0
      %v1644 = vadd.f32 0.0, %v1643
      %v1645 = vpop.f32.mrf.mxu0
      %v1646 = vadd.f32 0.0, %v1645
      %1647 = vmatmul.bf16.gmra.mxu0 %v1608
      %v1648 = vpop.f32.mrf.mxu0
      %v1649 = vadd.f32 0.0, %v1648
      %v1650 = vpop.f32.mrf.mxu0
      %v1651 = vadd.f32 0.0, %v1650
      %1652 = vmatmul.bf16.gmra.mxu0 %v1611
      %v1653 = vpop.f32.mrf.mxu0
      %v1654 = vadd.f32 0.0, %v1653
      %v1655 = vpop.f32.mrf.mxu0
      %v1656 = vadd.f32 0.0, %v1655
      %1657 = vmatmul.bf16.gmra.mxu0 %v1614
      %v1658 = vpop.f32.mrf.mxu0
      %v1659 = vadd.f32 0.0, %v1658
      %v1660 = vpop.f32.mrf.mxu0
      %v1661 = vadd.f32 0.0, %v1660
      %1662 = vmatmul.bf16.gmra.mxu0 %v1617
      %v1663 = vpop.f32.mrf.mxu0
      %v1664 = vadd.f32 0.0, %v1663
      %v1665 = vpop.f32.mrf.mxu0
      %v1666 = vadd.f32 0.0, %v1665
      %1667 = vdwg.mxu0
      %1668 = vmatpush.bf16.msra.mxu0 0
      %1669 = vmatpush.bf16.msra.mxu0 0
      %1670 = vmatpush.bf16.msra.mxu0 0
      %1671 = vmatpush.bf16.msra.mxu0 0
      %1672 = vmatpush.bf16.msra.mxu0 0
      %1673 = vmatpush.bf16.msra.mxu0 %v1588
      %1674 = vmatpush.bf16.msra.mxu0 %v1586
      %1675 = vmatpush.bf16.msra.mxu0 %v1584
      %1676 = vmatmul.bf16.gmra.mxu0 %v1596
      %v1677 = vpop.f32.mrf.mxu0
      %v1678 = vadd.f32 0.0, %v1677
      %v1679 = vpop.f32.mrf.mxu0
      %v1680 = vadd.f32 0.0, %v1679
      %1681 = vmatmul.bf16.gmra.mxu0 %v1599
      %v1682 = vpop.f32.mrf.mxu0
      %v1683 = vadd.f32 0.0, %v1682
      %v1684 = vpop.f32.mrf.mxu0
      %v1685 = vadd.f32 0.0, %v1684
      %1686 = vmatmul.bf16.gmra.mxu0 %v1602
      %v1687 = vpop.f32.mrf.mxu0
      %v1688 = vadd.f32 0.0, %v1687
      %v1689 = vpop.f32.mrf.mxu0
      %v1690 = vadd.f32 0.0, %v1689
      %1691 = vmatmul.bf16.gmra.mxu0 %v1605
      %v1692 = vpop.f32.mrf.mxu0
      %v1693 = vadd.f32 0.0, %v1692
      %v1694 = vpop.f32.mrf.mxu0
      %v1695 = vadd.f32 0.0, %v1694
      %1696 = vmatmul.bf16.gmra.mxu0 %v1608
      %v1697 = vpop.f32.mrf.mxu0
      %v1698 = vadd.f32 0.0, %v1697
      %v1699 = vpop.f32.mrf.mxu0
      %v1700 = vadd.f32 0.0, %v1699
      %1701 = vmatmul.bf16.gmra.mxu0 %v1611
      %v1702 = vpop.f32.mrf.mxu0
      %v1703 = vadd.f32 0.0, %v1702
      %v1704 = vpop.f32.mrf.mxu0
      %v1705 = vadd.f32 0.0, %v1704
      %1706 = vmatmul.bf16.gmra.mxu0 %v1614
      %v1707 = vpop.f32.mrf.mxu0
      %v1708 = vadd.f32 0.0, %v1707
      %v1709 = vpop.f32.mrf.mxu0
      %v1710 = vadd.f32 0.0, %v1709
      %1711 = vmatmul.bf16.gmra.mxu0 %v1617
      %v1712 = vpop.f32.mrf.mxu0
      %v1713 = vadd.f32 0.0, %v1712
      %v1714 = vpop.f32.mrf.mxu0
      %v1715 = vadd.f32 0.0, %v1714
      %1716 = vdwg.mxu0
      %v1717 = vadd.f32 %v1502, %v1629
      %v1718 = vadd.f32 %v1503, %v1678
      %v1719 = vadd.f32 %v1504, %v1631
      %v1720 = vadd.f32 %v1505, %v1680
      %v1721 = vadd.f32 %v1506, %v1634
      %v1722 = vadd.f32 %v1507, %v1683
      %v1723 = vadd.f32 %v1508, %v1636
      %v1724 = vadd.f32 %v1509, %v1685
      %v1725 = vadd.f32 %v1510, %v1639
      %v1726 = vadd.f32 %v1511, %v1688
      %v1727 = vadd.f32 %v1512, %v1641
      %v1728 = vadd.f32 %v1513, %v1690
      %v1729 = vadd.f32 %v1514, %v1644
      %v1730 = vadd.f32 %v1515, %v1693
      %v1731 = vadd.f32 %v1516, %v1646
      %v1732 = vadd.f32 %v1517, %v1695
      %v1733 = vadd.f32 %v1518, %v1649
      %v1734 = vadd.f32 %v1519, %v1698
      %v1735 = vadd.f32 %v1520, %v1651
      %v1736 = vadd.f32 %v1521, %v1700
      %v1737 = vadd.f32 %v1522, %v1654
      %v1738 = vadd.f32 %v1523, %v1703
      %v1739 = vadd.f32 %v1524, %v1656
      %v1740 = vadd.f32 %v1525, %v1705
      %v1741 = vadd.f32 %v1526, %v1659
      %v1742 = vadd.f32 %v1527, %v1708
      %v1743 = vadd.f32 %v1528, %v1661
      %v1744 = vadd.f32 %v1529, %v1710
      %v1745 = vadd.f32 %v1530, %v1664
      %v1746 = vadd.f32 %v1531, %v1713
      %v1747 = vadd.f32 %v1532, %v1666
      %v1748 = vadd.f32 %v1533, %v1715
      %v1749 = vld [vmem:[#allocation2 + $0xa] sm:$0xff]
      %v1750 = vld [vmem:[#allocation2 + $0x12] sm:$0xff]
      %v1751 = vld [vmem:[#allocation2 + $0x2a] sm:$0xff]
      %v1752 = vld [vmem:[#allocation2 + $0x32] sm:$0xff]
      %v1753 = vld [vmem:[#allocation2 + $0x4a] sm:$0xff]
      %v1754 = vld [vmem:[#allocation2 + $0x52] sm:$0xff]
      %v1755 = vld [vmem:[#allocation2 + $0x6a] sm:$0xff]
      %v1756 = vld [vmem:[#allocation2 + $0x72] sm:$0xff]
      %v1757 = vld [vmem:[#allocation2 + $0x8a] sm:$0xff]
      %v1758 = vld [vmem:[#allocation2 + $0x92] sm:$0xff]
      %v1759 = vld [vmem:[#allocation2 + $0xaa] sm:$0xff]
      %v1760 = vld [vmem:[#allocation2 + $0xb2] sm:$0xff]
      %v1761 = vld [vmem:[#allocation2 + $0xca] sm:$0xff]
      %v1762 = vld [vmem:[#allocation2 + $0xd2] sm:$0xff]
      %v1763 = vld [vmem:[#allocation2 + $0xea] sm:$0xff]
      %v1764 = vld [vmem:[#allocation2 + $0xf2] sm:$0xff]
      %v1765 = vpack.c.bf16 %v1750, %v1749
      %v1766 = vpack.c.bf16 %v1752, %v1751
      %v1767 = vpack.c.bf16 %v1754, %v1753
      %v1768 = vpack.c.bf16 %v1756, %v1755
      %v1769 = vpack.c.bf16 %v1758, %v1757
      %v1770 = vpack.c.bf16 %v1760, %v1759
      %v1771 = vpack.c.bf16 %v1762, %v1761
      %v1772 = vpack.c.bf16 %v1764, %v1763
      %s1773 = scalar_lea.vmem %s1, 192
      %v1774 = vld [vmem:[%s1773] sm:$0xff]
      %v1775 = vld [vmem:[%s1773 + $0x8] sm:$0xff]
      %v1776 = vld [vmem:[%s1773 + $0x10] sm:$0xff]
      %v1777 = vld [vmem:[%s1773 + $0x18] sm:$0xff]
      %v1778 = vld [vmem:[%s1773 + $0x20] sm:$0xff]
      %v1779 = vld [vmem:[%s1773 + $0x28] sm:$0xff]
      %v1786 = vunpack.c.l.b16 %v1774
      %v1787 = vunpack.c.h.b16 %v1774
      %v1788 = vunpack.c.l.b16 %v1775
      %v1789 = vunpack.c.h.b16 %v1775
      %v1790 = vunpack.c.l.b16 %v1776
      %v1791 = vunpack.c.h.b16 %v1776
      %v1792 = vunpack.c.l.b16 %v1777
      %v1793 = vunpack.c.h.b16 %v1777
      %v1794 = vunpack.c.l.b16 %v1778
      %v1795 = vunpack.c.h.b16 %v1778
      %v1796 = vunpack.c.l.b16 %v1779
      %v1797 = vunpack.c.h.b16 %v1779
      %v1798 = vpack.c.b16 %v1788, %v1786
      %v1799 = vpack.c.b16 %v1789, %v1787
      %v1800 = vpack.c.b16 %v1792, %v1790
      %v1801 = vpack.c.b16 %v1793, %v1791
      %v1802 = vpack.c.b16 %v1796, %v1794
      %v1803 = vpack.c.b16 %v1797, %v1795
      %v1811 = vsel %vm849, %v1765, 0
      %v1814 = vsel %vm849, %v1766, 0
      %v1817 = vsel %vm849, %v1767, 0
      %v1820 = vsel %vm849, %v1768, 0
      %v1823 = vsel %vm849, %v1769, 0
      %v1826 = vsel %vm849, %v1770, 0
      %v1829 = vsel %vm849, %v1771, 0
      %v1832 = vsel %vm849, %v1772, 0
      %1834 = vmatpush.bf16.msra.mxu0 0
      %1835 = vmatpush.bf16.msra.mxu0 0
      %1836 = vmatpush.bf16.msra.mxu0 0
      %1837 = vmatpush.bf16.msra.mxu0 0
      %1838 = vmatpush.bf16.msra.mxu0 0
      %1839 = vmatpush.bf16.msra.mxu0 %v1802
      %1840 = vmatpush.bf16.msra.mxu0 %v1800
      %1841 = vmatpush.bf16.msra.mxu0 %v1798
      %1842 = vmatmul.bf16.gmra.mxu0 %v1811
      %v1843 = vpop.f32.mrf.mxu0
      %v1844 = vadd.f32 0.0, %v1843
      %v1845 = vpop.f32.mrf.mxu0
      %v1846 = vadd.f32 0.0, %v1845
      %1847 = vmatmul.bf16.gmra.mxu0 %v1814
      %v1848 = vpop.f32.mrf.mxu0
      %v1849 = vadd.f32 0.0, %v1848
      %v1850 = vpop.f32.mrf.mxu0
      %v1851 = vadd.f32 0.0, %v1850
      %1852 = vmatmul.bf16.gmra.mxu0 %v1817
      %v1853 = vpop.f32.mrf.mxu0
      %v1854 = vadd.f32 0.0, %v1853
      %v1855 = vpop.f32.mrf.mxu0
      %v1856 = vadd.f32 0.0, %v1855
      %1857 = vmatmul.bf16.gmra.mxu0 %v1820
      %v1858 = vpop.f32.mrf.mxu0
      %v1859 = vadd.f32 0.0, %v1858
      %v1860 = vpop.f32.mrf.mxu0
      %v1861 = vadd.f32 0.0, %v1860
      %1862 = vmatmul.bf16.gmra.mxu0 %v1823
      %v1863 = vpop.f32.mrf.mxu0
      %v1864 = vadd.f32 0.0, %v1863
      %v1865 = vpop.f32.mrf.mxu0
      %v1866 = vadd.f32 0.0, %v1865
      %1867 = vmatmul.bf16.gmra.mxu0 %v1826
      %v1868 = vpop.f32.mrf.mxu0
      %v1869 = vadd.f32 0.0, %v1868
      %v1870 = vpop.f32.mrf.mxu0
      %v1871 = vadd.f32 0.0, %v1870
      %1872 = vmatmul.bf16.gmra.mxu0 %v1829
      %v1873 = vpop.f32.mrf.mxu0
      %v1874 = vadd.f32 0.0, %v1873
      %v1875 = vpop.f32.mrf.mxu0
      %v1876 = vadd.f32 0.0, %v1875
      %1877 = vmatmul.bf16.gmra.mxu0 %v1832
      %v1878 = vpop.f32.mrf.mxu0
      %v1879 = vadd.f32 0.0, %v1878
      %v1880 = vpop.f32.mrf.mxu0
      %v1881 = vadd.f32 0.0, %v1880
      %1882 = vdwg.mxu0
      %1883 = vmatpush.bf16.msra.mxu0 0
      %1884 = vmatpush.bf16.msra.mxu0 0
      %1885 = vmatpush.bf16.msra.mxu0 0
      %1886 = vmatpush.bf16.msra.mxu0 0
      %1887 = vmatpush.bf16.msra.mxu0 0
      %1888 = vmatpush.bf16.msra.mxu0 %v1803
      %1889 = vmatpush.bf16.msra.mxu0 %v1801
      %1890 = vmatpush.bf16.msra.mxu0 %v1799
      %1891 = vmatmul.bf16.gmra.mxu0 %v1811
      %v1892 = vpop.f32.mrf.mxu0
      %v1893 = vadd.f32 0.0, %v1892
      %v1894 = vpop.f32.mrf.mxu0
      %v1895 = vadd.f32 0.0, %v1894
      %1896 = vmatmul.bf16.gmra.mxu0 %v1814
      %v1897 = vpop.f32.mrf.mxu0
      %v1898 = vadd.f32 0.0, %v1897
      %v1899 = vpop.f32.mrf.mxu0
      %v1900 = vadd.f32 0.0, %v1899
      %1901 = vmatmul.bf16.gmra.mxu0 %v1817
      %v1902 = vpop.f32.mrf.mxu0
      %v1903 = vadd.f32 0.0, %v1902
      %v1904 = vpop.f32.mrf.mxu0
      %v1905 = vadd.f32 0.0, %v1904
      %1906 = vmatmul.bf16.gmra.mxu0 %v1820
      %v1907 = vpop.f32.mrf.mxu0
      %v1908 = vadd.f32 0.0, %v1907
      %v1909 = vpop.f32.mrf.mxu0
      %v1910 = vadd.f32 0.0, %v1909
      %1911 = vmatmul.bf16.gmra.mxu0 %v1823
      %v1912 = vpop.f32.mrf.mxu0
      %v1913 = vadd.f32 0.0, %v1912
      %v1914 = vpop.f32.mrf.mxu0
      %v1915 = vadd.f32 0.0, %v1914
      %1916 = vmatmul.bf16.gmra.mxu0 %v1826
      %v1917 = vpop.f32.mrf.mxu0
      %v1918 = vadd.f32 0.0, %v1917
      %v1919 = vpop.f32.mrf.mxu0
      %v1920 = vadd.f32 0.0, %v1919
      %1921 = vmatmul.bf16.gmra.mxu0 %v1829
      %v1922 = vpop.f32.mrf.mxu0
      %v1923 = vadd.f32 0.0, %v1922
      %v1924 = vpop.f32.mrf.mxu0
      %v1925 = vadd.f32 0.0, %v1924
      %1926 = vmatmul.bf16.gmra.mxu0 %v1832
      %v1927 = vpop.f32.mrf.mxu0
      %v1928 = vadd.f32 0.0, %v1927
      %v1929 = vpop.f32.mrf.mxu0
      %v1930 = vadd.f32 0.0, %v1929
      %1931 = vdwg.mxu0
      %v1932 = vadd.f32 %v1717, %v1844
      %v1933 = vadd.f32 %v1718, %v1893
      %v1934 = vadd.f32 %v1719, %v1846
      %v1935 = vadd.f32 %v1720, %v1895
      %v1936 = vadd.f32 %v1721, %v1849
      %v1937 = vadd.f32 %v1722, %v1898
      %v1938 = vadd.f32 %v1723, %v1851
      %v1939 = vadd.f32 %v1724, %v1900
      %v1940 = vadd.f32 %v1725, %v1854
      %v1941 = vadd.f32 %v1726, %v1903
      %v1942 = vadd.f32 %v1727, %v1856
      %v1943 = vadd.f32 %v1728, %v1905
      %v1944 = vadd.f32 %v1729, %v1859
      %v1945 = vadd.f32 %v1730, %v1908
      %v1946 = vadd.f32 %v1731, %v1861
      %v1947 = vadd.f32 %v1732, %v1910
      %v1948 = vadd.f32 %v1733, %v1864
      %v1949 = vadd.f32 %v1734, %v1913
      %v1950 = vadd.f32 %v1735, %v1866
      %v1951 = vadd.f32 %v1736, %v1915
      %v1952 = vadd.f32 %v1737, %v1869
      %v1953 = vadd.f32 %v1738, %v1918
      %v1954 = vadd.f32 %v1739, %v1871
      %v1955 = vadd.f32 %v1740, %v1920
      %v1956 = vadd.f32 %v1741, %v1874
      %v1957 = vadd.f32 %v1742, %v1923
      %v1958 = vadd.f32 %v1743, %v1876
      %v1959 = vadd.f32 %v1744, %v1925
      %v1960 = vadd.f32 %v1745, %v1879
      %v1961 = vadd.f32 %v1746, %v1928
      %v1962 = vadd.f32 %v1747, %v1881
      %v1963 = vadd.f32 %v1748, %v1930
      %v1964 = vld [vmem:[%s2] sm:$0x3]
      %v1966 = vperm.slane %v1964, 0
      %v1967 = vperm.slane %v1964, 1
      %v1970 = vmul.f32 %v1932, %v1966
      %v1971 = vmul.f32 %v1933, %v1967
      %v1972 = vmul.f32 %v1934, %v1966
      %v1973 = vmul.f32 %v1935, %v1967
      %v1974 = vmul.f32 %v1936, %v1966
      %v1975 = vmul.f32 %v1937, %v1967
      %v1976 = vmul.f32 %v1938, %v1966
      %v1977 = vmul.f32 %v1939, %v1967
      %v1978 = vmul.f32 %v1940, %v1966
      %v1979 = vmul.f32 %v1941, %v1967
      %v1980 = vmul.f32 %v1942, %v1966
      %v1981 = vmul.f32 %v1943, %v1967
      %v1982 = vmul.f32 %v1944, %v1966
      %v1983 = vmul.f32 %v1945, %v1967
      %v1984 = vmul.f32 %v1946, %v1966
      %v1985 = vmul.f32 %v1947, %v1967
      %v1986 = vmul.f32 %v1948, %v1966
      %v1987 = vmul.f32 %v1949, %v1967
      %v1988 = vmul.f32 %v1950, %v1966
      %v1989 = vmul.f32 %v1951, %v1967
      %v1990 = vmul.f32 %v1952, %v1966
      %v1991 = vmul.f32 %v1953, %v1967
      %v1992 = vmul.f32 %v1954, %v1966
      %v1993 = vmul.f32 %v1955, %v1967
      %v1994 = vmul.f32 %v1956, %v1966
      %v1995 = vmul.f32 %v1957, %v1967
      %v1996 = vmul.f32 %v1958, %v1966
      %v1997 = vmul.f32 %v1959, %v1967
      %v1998 = vmul.f32 %v1960, %v1966
      %v1999 = vmul.f32 %v1961, %v1967
      %v2000 = vmul.f32 %v1962, %v1966
      %v2001 = vmul.f32 %v1963, %v1967
      %v2002 = vld [vmem:[%s3] sm:$0x3]
      %v2004 = vperm.slane %v2002, 0
      %v2005 = vperm.slane %v2002, 1
      %v2008 = vadd.f32 %v1970, %v2004
      %v2009 = vadd.f32 %v1971, %v2005
      %v2010 = vadd.f32 %v1972, %v2004
      %v2011 = vadd.f32 %v1973, %v2005
      %v2012 = vadd.f32 %v1974, %v2004
      %v2013 = vadd.f32 %v1975, %v2005
      %v2014 = vadd.f32 %v1976, %v2004
      %v2015 = vadd.f32 %v1977, %v2005
      %v2016 = vadd.f32 %v1978, %v2004
      %v2017 = vadd.f32 %v1979, %v2005
      %v2018 = vadd.f32 %v1980, %v2004
      %v2019 = vadd.f32 %v1981, %v2005
      %v2020 = vadd.f32 %v1982, %v2004
      %v2021 = vadd.f32 %v1983, %v2005
      %v2022 = vadd.f32 %v1984, %v2004
      %v2023 = vadd.f32 %v1985, %v2005
      %v2024 = vadd.f32 %v1986, %v2004
      %v2025 = vadd.f32 %v1987, %v2005
      %v2026 = vadd.f32 %v1988, %v2004
      %v2027 = vadd.f32 %v1989, %v2005
      %v2028 = vadd.f32 %v1990, %v2004
      %v2029 = vadd.f32 %v1991, %v2005
      %v2030 = vadd.f32 %v1992, %v2004
      %v2031 = vadd.f32 %v1993, %v2005
      %v2032 = vadd.f32 %v1994, %v2004
      %v2033 = vadd.f32 %v1995, %v2005
      %v2034 = vadd.f32 %v1996, %v2004
      %v2035 = vadd.f32 %v1997, %v2005
      %v2036 = vadd.f32 %v1998, %v2004
      %v2037 = vadd.f32 %v1999, %v2005
      %v2038 = vadd.f32 %v2000, %v2004
      %v2039 = vadd.f32 %v2001, %v2005
      %v2040 = vmax.f32 %v2008, 0.0
      %v2041 = vmax.f32 %v2009, 0.0
      %v2042 = vmax.f32 %v2010, 0.0
      %v2043 = vmax.f32 %v2011, 0.0
      %v2044 = vmax.f32 %v2012, 0.0
      %v2045 = vmax.f32 %v2013, 0.0
      %v2046 = vmax.f32 %v2014, 0.0
      %v2047 = vmax.f32 %v2015, 0.0
      %v2048 = vmax.f32 %v2016, 0.0
      %v2049 = vmax.f32 %v2017, 0.0
      %v2050 = vmax.f32 %v2018, 0.0
      %v2051 = vmax.f32 %v2019, 0.0
      %v2052 = vmax.f32 %v2020, 0.0
      %v2053 = vmax.f32 %v2021, 0.0
      %v2054 = vmax.f32 %v2022, 0.0
      %v2055 = vmax.f32 %v2023, 0.0
      %v2056 = vmax.f32 %v2024, 0.0
      %v2057 = vmax.f32 %v2025, 0.0
      %v2058 = vmax.f32 %v2026, 0.0
      %v2059 = vmax.f32 %v2027, 0.0
      %v2060 = vmax.f32 %v2028, 0.0
      %v2061 = vmax.f32 %v2029, 0.0
      %v2062 = vmax.f32 %v2030, 0.0
      %v2063 = vmax.f32 %v2031, 0.0
      %v2064 = vmax.f32 %v2032, 0.0
      %v2065 = vmax.f32 %v2033, 0.0
      %v2066 = vmax.f32 %v2034, 0.0
      %v2067 = vmax.f32 %v2035, 0.0
      %v2068 = vmax.f32 %v2036, 0.0
      %v2069 = vmax.f32 %v2037, 0.0
      %v2070 = vmax.f32 %v2038, 0.0
      %v2071 = vmax.f32 %v2039, 0.0
      %v2072 = vmax.f32 %v2040, %v2041
      %v2073 = vmax.f32 %v2042, %v2043
      %v2074 = vmax.f32 %v2044, %v2045
      %v2075 = vmax.f32 %v2046, %v2047
      %v2076 = vmax.f32 %v2048, %v2049
      %v2077 = vmax.f32 %v2050, %v2051
      %v2078 = vmax.f32 %v2052, %v2053
      %v2079 = vmax.f32 %v2054, %v2055
      %v2080 = vmax.f32 %v2056, %v2057
      %v2081 = vmax.f32 %v2058, %v2059
      %v2082 = vmax.f32 %v2060, %v2061
      %v2083 = vmax.f32 %v2062, %v2063
      %v2084 = vmax.f32 %v2064, %v2065
      %v2085 = vmax.f32 %v2066, %v2067
      %v2086 = vmax.f32 %v2068, %v2069
      %v2087 = vmax.f32 %v2070, %v2071
      %v2088 = vpack.c.bf16 %v2073, %v2072
      %v2089 = vpack.c.bf16 %v2075, %v2074
      %v2090 = vpack.c.bf16 %v2077, %v2076
      %v2091 = vpack.c.bf16 %v2079, %v2078
      %v2092 = vpack.c.bf16 %v2081, %v2080
      %v2093 = vpack.c.bf16 %v2083, %v2082
      %v2094 = vpack.c.bf16 %v2085, %v2084
      %v2095 = vpack.c.bf16 %v2087, %v2086
      %v2096 = vld [vmem:[%s4] sm:$0xf]
      %v2097 = vld [vmem:[%s4 + $0x4] sm:$0xf]
      %v2098 = vld [vmem:[%s4 + $0x8] sm:$0xf]
      %v2099 = vld [vmem:[%s4 + $0xc] sm:$0xf]
      %v2104 = vunpack.c.l.b16 %v2096
      %v2105 = vunpack.c.l.b16 %v2097
      %v2106 = vunpack.c.l.b16 %v2098
      %v2107 = vunpack.c.l.b16 %v2099
      %v2108 = vpack.c.b16 %v2105, %v2104
      %v2109 = vpack.c.b16 %v2107, %v2106
      %2112 = vmatpush.bf16.msra.mxu0 %v2095
      %2113 = vmatpush.bf16.msra.mxu0 %v2094
      %2114 = vmatpush.bf16.msra.mxu0 %v2093
      %2115 = vmatpush.bf16.msra.mxu0 %v2092
      %2116 = vmatpush.bf16.msra.mxu0 %v2091
      %2117 = vmatpush.bf16.msra.mxu0 %v2090
      %2118 = vmatpush.bf16.msra.mxu0 %v2089
      %2119 = vmatpush.bf16.msra.mxu0 %v2088
      %2120 = vmatmul.bf16.gmra.mxu0 %v2108
      %v2121 = vpop.f32.mrf.mxu0
      %v2122 = vadd.f32 0.0, %v2121
      %v2123 = vpop.f32.mrf.mxu0
      %v2124 = vadd.f32 0.0, %v2123
      %2125 = vmatmul.bf16.gmra.mxu0 %v2109
      %v2126 = vpop.f32.mrf.mxu0
      %v2127 = vadd.f32 0.0, %v2126
      %v2128 = vpop.f32.mrf.mxu0
      %v2129 = vadd.f32 0.0, %v2128
      %2130 = vdwg.mxu0
      %s2131 = scalar_lea.vmem %s4, 16
      %v2132 = vld [vmem:[%s2131] sm:$0xf]
      %v2133 = vld [vmem:[%s2131 + $0x4] sm:$0xf]
      %v2134 = vld [vmem:[%s2131 + $0x8] sm:$0xf]
      %v2135 = vld [vmem:[%s2131 + $0xc] sm:$0xf]
      %v2140 = vunpack.c.l.b16 %v2132
      %v2141 = vunpack.c.l.b16 %v2133
      %v2142 = vunpack.c.l.b16 %v2134
      %v2143 = vunpack.c.l.b16 %v2135
      %v2144 = vpack.c.b16 %v2141, %v2140
      %v2145 = vpack.c.b16 %v2143, %v2142
      %2148 = vmatpush.bf16.msra.mxu0 %v2095
      %2149 = vmatpush.bf16.msra.mxu0 %v2094
      %2150 = vmatpush.bf16.msra.mxu0 %v2093
      %2151 = vmatpush.bf16.msra.mxu0 %v2092
      %2152 = vmatpush.bf16.msra.mxu0 %v2091
      %2153 = vmatpush.bf16.msra.mxu0 %v2090
      %2154 = vmatpush.bf16.msra.mxu0 %v2089
      %2155 = vmatpush.bf16.msra.mxu0 %v2088
      %2156 = vmatmul.bf16.gmra.mxu0 %v2144
      %v2157 = vpop.f32.mrf.mxu0
      %v2158 = vadd.f32 0.0, %v2157
      %v2159 = vpop.f32.mrf.mxu0
      %v2160 = vadd.f32 0.0, %v2159
      %2161 = vmatmul.bf16.gmra.mxu0 %v2145
      %v2162 = vpop.f32.mrf.mxu0
      %v2163 = vadd.f32 0.0, %v2162
      %v2164 = vpop.f32.mrf.mxu0
      %v2165 = vadd.f32 0.0, %v2164
      %2166 = vdwg.mxu0
      %v2167 = vmax.f32 %v2122, %v2158
      %v2168 = vmax.f32 %v2124, %v2160
      %v2169 = vmax.f32 %v2127, %v2163
      %v2170 = vmax.f32 %v2129, %v2165
      %s2171 = scalar_lea.vmem %s4, 32
      %v2172 = vld [vmem:[%s2171] sm:$0xf]
      %v2173 = vld [vmem:[%s2171 + $0x4] sm:$0xf]
      %v2174 = vld [vmem:[%s2171 + $0x8] sm:$0xf]
      %v2175 = vld [vmem:[%s2171 + $0xc] sm:$0xf]
      %v2180 = vunpack.c.l.b16 %v2172
      %v2181 = vunpack.c.l.b16 %v2173
      %v2182 = vunpack.c.l.b16 %v2174
      %v2183 = vunpack.c.l.b16 %v2175
      %v2184 = vpack.c.b16 %v2181, %v2180
      %v2185 = vpack.c.b16 %v2183, %v2182
      %2188 = vmatpush.bf16.msra.mxu0 %v2095
      %2189 = vmatpush.bf16.msra.mxu0 %v2094
      %2190 = vmatpush.bf16.msra.mxu0 %v2093
      %2191 = vmatpush.bf16.msra.mxu0 %v2092
      %2192 = vmatpush.bf16.msra.mxu0 %v2091
      %2193 = vmatpush.bf16.msra.mxu0 %v2090
      %2194 = vmatpush.bf16.msra.mxu0 %v2089
      %2195 = vmatpush.bf16.msra.mxu0 %v2088
      %2196 = vmatmul.bf16.gmra.mxu0 %v2184
      %v2197 = vpop.f32.mrf.mxu0
      %v2198 = vadd.f32 0.0, %v2197
      %v2199 = vpop.f32.mrf.mxu0
      %v2200 = vadd.f32 0.0, %v2199
      %2201 = vmatmul.bf16.gmra.mxu0 %v2185
      %v2202 = vpop.f32.mrf.mxu0
      %v2203 = vadd.f32 0.0, %v2202
      %v2204 = vpop.f32.mrf.mxu0
      %v2205 = vadd.f32 0.0, %v2204
      %2206 = vdwg.mxu0
      %v2207 = vmax.f32 %v2167, %v2198
      %v2208 = vmax.f32 %v2168, %v2200
      %v2209 = vmax.f32 %v2169, %v2203
      %v2210 = vmax.f32 %v2170, %v2205
      %s2211 = scalar_lea.vmem %s4, 48
      %v2212 = vld [vmem:[%s2211] sm:$0xf]
      %v2213 = vld [vmem:[%s2211 + $0x4] sm:$0xf]
      %v2214 = vld [vmem:[%s2211 + $0x8] sm:$0xf]
      %v2215 = vld [vmem:[%s2211 + $0xc] sm:$0xf]
      %v2220 = vunpack.c.l.b16 %v2212
      %v2221 = vunpack.c.l.b16 %v2213
      %v2222 = vunpack.c.l.b16 %v2214
      %v2223 = vunpack.c.l.b16 %v2215
      %v2224 = vpack.c.b16 %v2221, %v2220
      %v2225 = vpack.c.b16 %v2223, %v2222
      %2228 = vmatpush.bf16.msra.mxu0 %v2095
      %2229 = vmatpush.bf16.msra.mxu0 %v2094
      %2230 = vmatpush.bf16.msra.mxu0 %v2093
      %2231 = vmatpush.bf16.msra.mxu0 %v2092
      %2232 = vmatpush.bf16.msra.mxu0 %v2091
      %2233 = vmatpush.bf16.msra.mxu0 %v2090
      %2234 = vmatpush.bf16.msra.mxu0 %v2089
      %2235 = vmatpush.bf16.msra.mxu0 %v2088
      %2236 = vmatmul.bf16.gmra.mxu0 %v2224
      %v2237 = vpop.f32.mrf.mxu0
      %v2238 = vadd.f32 0.0, %v2237
      %v2239 = vpop.f32.mrf.mxu0
      %v2240 = vadd.f32 0.0, %v2239
      %2241 = vmatmul.bf16.gmra.mxu0 %v2225
      %v2242 = vpop.f32.mrf.mxu0
      %v2243 = vadd.f32 0.0, %v2242
      %v2244 = vpop.f32.mrf.mxu0
      %v2245 = vadd.f32 0.0, %v2244
      %2246 = vdwg.mxu0
      %v2247 = vmax.f32 %v2207, %v2238
      %v2248 = vmax.f32 %v2208, %v2240
      %v2249 = vmax.f32 %v2209, %v2243
      %v2250 = vmax.f32 %v2210, %v2245
      %2251 = vst [vmem:[#allocation3 + $0x8] sm:$0xff] %v2247
      %s2252 = scalar_lea.vmem [#allocation3], 24
      %2253 = vst [vmem:[%s2252 + $0x8] sm:$0xff] %v2248
      %s2254 = scalar_lea.vmem [#allocation3], 48
      %2255 = vst [vmem:[%s2254 + $0x8] sm:$0xff] %v2249
      %s2256 = scalar_lea.vmem [#allocation3], 72
      %2257 = vst [vmem:[%s2256 + $0x8] sm:$0xff] %v2250
      %v2258 = vld [vmem:[#allocation3 + $0x6] sm:$0xff]
      %v2259 = vld [vmem:[#allocation3 + $0x1e] sm:$0xff]
      %v2260 = vld [vmem:[#allocation3 + $0x36] sm:$0xff]
      %v2261 = vld [vmem:[#allocation3 + $0x4e] sm:$0xff]
      %v2262 = vpack.c.bf16 %v2259, %v2258
      %v2263 = vpack.c.bf16 %v2261, %v2260
      %v2264 = vld [vmem:[%s5] sm:$0xff]
      %v2265 = vld [vmem:[%s5 + $0x8] sm:$0xff]
      %v2266 = vld [vmem:[%s5 + $0x10] sm:$0xff]
      %v2267 = vld [vmem:[%s5 + $0x18] sm:$0xff]
      %v2268 = vld [vmem:[%s5 + $0x20] sm:$0xff]
      %v2269 = vld [vmem:[%s5 + $0x28] sm:$0xff]
      %v2270 = vld [vmem:[%s5 + $0x30] sm:$0xff]
      %v2271 = vld [vmem:[%s5 + $0x38] sm:$0xff]
      %v2272 = vld [vmem:[%s5 + $0x40] sm:$0xff]
      %v2273 = vld [vmem:[%s5 + $0x48] sm:$0xff]
      %v2274 = vld [vmem:[%s5 + $0x50] sm:$0xff]
      %v2275 = vld [vmem:[%s5 + $0x58] sm:$0xff]
      %v2276 = vld [vmem:[%s5 + $0x60] sm:$0xff]
      %v2277 = vld [vmem:[%s5 + $0x68] sm:$0xff]
      %v2278 = vld [vmem:[%s5 + $0x70] sm:$0xff]
      %v2279 = vld [vmem:[%s5 + $0x78] sm:$0xff]
      %v2280 = vld [vmem:[#allocation3 + $0x7] sm:$0xff]
      %v2281 = vld [vmem:[#allocation3 + $0x1f] sm:$0xff]
      %v2282 = vld [vmem:[#allocation3 + $0x37] sm:$0xff]
      %v2283 = vld [vmem:[#allocation3 + $0x4f] sm:$0xff]
      %v2284 = vpack.c.bf16 %v2281, %v2280
      %v2285 = vpack.c.bf16 %v2283, %v2282
      %s2286 = scalar_lea.vmem %s5, 128
      %v2287 = vld [vmem:[%s2286] sm:$0xff]
      %v2288 = vld [vmem:[%s2286 + $0x8] sm:$0xff]
      %v2289 = vld [vmem:[%s2286 + $0x10] sm:$0xff]
      %v2290 = vld [vmem:[%s2286 + $0x18] sm:$0xff]
      %v2291 = vld [vmem:[%s2286 + $0x20] sm:$0xff]
      %v2292 = vld [vmem:[%s2286 + $0x28] sm:$0xff]
      %v2293 = vld [vmem:[%s2286 + $0x30] sm:$0xff]
      %v2294 = vld [vmem:[%s2286 + $0x38] sm:$0xff]
      %v2295 = vld [vmem:[%s2286 + $0x40] sm:$0xff]
      %v2296 = vld [vmem:[%s2286 + $0x48] sm:$0xff]
      %v2297 = vld [vmem:[%s2286 + $0x50] sm:$0xff]
      %v2298 = vld [vmem:[%s2286 + $0x58] sm:$0xff]
      %v2299 = vld [vmem:[%s2286 + $0x60] sm:$0xff]
      %v2300 = vld [vmem:[%s2286 + $0x68] sm:$0xff]
      %v2301 = vld [vmem:[%s2286 + $0x70] sm:$0xff]
      %v2302 = vld [vmem:[%s2286 + $0x78] sm:$0xff]
      %v2319 = vunpack.c.l.b16 %v2287
      %v2320 = vunpack.c.h.b16 %v2287
      %v2321 = vunpack.c.l.b16 %v2288
      %v2322 = vunpack.c.h.b16 %v2288
      %v2323 = vunpack.c.l.b16 %v2289
      %v2324 = vunpack.c.h.b16 %v2289
      %v2325 = vunpack.c.l.b16 %v2290
      %v2326 = vunpack.c.h.b16 %v2290
      %v2327 = vunpack.c.l.b16 %v2291
      %v2328 = vunpack.c.h.b16 %v2291
      %v2329 = vunpack.c.l.b16 %v2292
      %v2330 = vunpack.c.h.b16 %v2292
      %v2331 = vunpack.c.l.b16 %v2293
      %v2332 = vunpack.c.h.b16 %v2293
      %v2333 = vunpack.c.l.b16 %v2294
      %v2334 = vunpack.c.h.b16 %v2294
      %v2335 = vunpack.c.l.b16 %v2295
      %v2336 = vunpack.c.h.b16 %v2295
      %v2337 = vunpack.c.l.b16 %v2296
      %v2338 = vunpack.c.h.b16 %v2296
      %v2339 = vunpack.c.l.b16 %v2297
      %v2340 = vunpack.c.h.b16 %v2297
      %v2341 = vunpack.c.l.b16 %v2298
      %v2342 = vunpack.c.h.b16 %v2298
      %v2343 = vunpack.c.l.b16 %v2299
      %v2344 = vunpack.c.h.b16 %v2299
      %v2345 = vunpack.c.l.b16 %v2300
      %v2346 = vunpack.c.h.b16 %v2300
      %v2347 = vunpack.c.l.b16 %v2301
      %v2348 = vunpack.c.h.b16 %v2301
      %v2349 = vunpack.c.l.b16 %v2302
      %v2350 = vunpack.c.h.b16 %v2302
      %v2351 = vpack.c.b16 %v2321, %v2319
      %v2352 = vpack.c.b16 %v2322, %v2320
      %v2353 = vpack.c.b16 %v2325, %v2323
      %v2354 = vpack.c.b16 %v2326, %v2324
      %v2355 = vpack.c.b16 %v2329, %v2327
      %v2356 = vpack.c.b16 %v2330, %v2328
      %v2357 = vpack.c.b16 %v2333, %v2331
      %v2358 = vpack.c.b16 %v2334, %v2332
      %v2359 = vpack.c.b16 %v2337, %v2335
      %v2360 = vpack.c.b16 %v2338, %v2336
      %v2361 = vpack.c.b16 %v2341, %v2339
      %v2362 = vpack.c.b16 %v2342, %v2340
      %v2363 = vpack.c.b16 %v2345, %v2343
      %v2364 = vpack.c.b16 %v2346, %v2344
      %v2365 = vpack.c.b16 %v2349, %v2347
      %v2366 = vpack.c.b16 %v2350, %v2348
      %2383 = vmatpush.bf16.msra.mxu0 %v2365
      %2384 = vmatpush.bf16.msra.mxu0 %v2363
      %2385 = vmatpush.bf16.msra.mxu0 %v2361
      %2386 = vmatpush.bf16.msra.mxu0 %v2359
      %2387 = vmatpush.bf16.msra.mxu0 %v2357
      %2388 = vmatpush.bf16.msra.mxu0 %v2355
      %2389 = vmatpush.bf16.msra.mxu0 %v2353
      %2390 = vmatpush.bf16.msra.mxu0 %v2351
      %2391 = vmatmul.bf16.gmra.mxu0 %v2284
      %v2392 = vpop.f32.mrf.mxu0
      %v2393 = vadd.f32 0.0, %v2392
      %v2394 = vpop.f32.mrf.mxu0
      %v2395 = vadd.f32 0.0, %v2394
      %2396 = vmatmul.bf16.gmra.mxu0 %v2285
      %v2397 = vpop.f32.mrf.mxu0
      %v2398 = vadd.f32 0.0, %v2397
      %v2399 = vpop.f32.mrf.mxu0
      %v2400 = vadd.f32 0.0, %v2399
      %2401 = vdwg.mxu0
      %2402 = vmatpush.bf16.msra.mxu0 %v2366
      %2403 = vmatpush.bf16.msra.mxu0 %v2364
      %2404 = vmatpush.bf16.msra.mxu0 %v2362
      %2405 = vmatpush.bf16.msra.mxu0 %v2360
      %2406 = vmatpush.bf16.msra.mxu0 %v2358
      %2407 = vmatpush.bf16.msra.mxu0 %v2356
      %2408 = vmatpush.bf16.msra.mxu0 %v2354
      %2409 = vmatpush.bf16.msra.mxu0 %v2352
      %2410 = vmatmul.bf16.gmra.mxu0 %v2284
      %v2411 = vpop.f32.mrf.mxu0
      %v2412 = vadd.f32 0.0, %v2411
      %v2413 = vpop.f32.mrf.mxu0
      %v2414 = vadd.f32 0.0, %v2413
      %2415 = vmatmul.bf16.gmra.mxu0 %v2285
      %v2416 = vpop.f32.mrf.mxu0
      %v2417 = vadd.f32 0.0, %v2416
      %v2418 = vpop.f32.mrf.mxu0
      %v2419 = vadd.f32 0.0, %v2418
      %2420 = vdwg.mxu0
      %v2437 = vunpack.c.l.b16 %v2264
      %v2438 = vunpack.c.h.b16 %v2264
      %v2439 = vunpack.c.l.b16 %v2265
      %v2440 = vunpack.c.h.b16 %v2265
      %v2441 = vunpack.c.l.b16 %v2266
      %v2442 = vunpack.c.h.b16 %v2266
      %v2443 = vunpack.c.l.b16 %v2267
      %v2444 = vunpack.c.h.b16 %v2267
      %v2445 = vunpack.c.l.b16 %v2268
      %v2446 = vunpack.c.h.b16 %v2268
      %v2447 = vunpack.c.l.b16 %v2269
      %v2448 = vunpack.c.h.b16 %v2269
      %v2449 = vunpack.c.l.b16 %v2270
      %v2450 = vunpack.c.h.b16 %v2270
      %v2451 = vunpack.c.l.b16 %v2271
      %v2452 = vunpack.c.h.b16 %v2271
      %v2453 = vunpack.c.l.b16 %v2272
      %v2454 = vunpack.c.h.b16 %v2272
      %v2455 = vunpack.c.l.b16 %v2273
      %v2456 = vunpack.c.h.b16 %v2273
      %v2457 = vunpack.c.l.b16 %v2274
      %v2458 = vunpack.c.h.b16 %v2274
      %v2459 = vunpack.c.l.b16 %v2275
      %v2460 = vunpack.c.h.b16 %v2275
      %v2461 = vunpack.c.l.b16 %v2276
      %v2462 = vunpack.c.h.b16 %v2276
      %v2463 = vunpack.c.l.b16 %v2277
      %v2464 = vunpack.c.h.b16 %v2277
      %v2465 = vunpack.c.l.b16 %v2278
      %v2466 = vunpack.c.h.b16 %v2278
      %v2467 = vunpack.c.l.b16 %v2279
      %v2468 = vunpack.c.h.b16 %v2279
      %v2469 = vpack.c.b16 %v2439, %v2437
      %v2470 = vpack.c.b16 %v2440, %v2438
      %v2471 = vpack.c.b16 %v2443, %v2441
      %v2472 = vpack.c.b16 %v2444, %v2442
      %v2473 = vpack.c.b16 %v2447, %v2445
      %v2474 = vpack.c.b16 %v2448, %v2446
      %v2475 = vpack.c.b16 %v2451, %v2449
      %v2476 = vpack.c.b16 %v2452, %v2450
      %v2477 = vpack.c.b16 %v2455, %v2453
      %v2478 = vpack.c.b16 %v2456, %v2454
      %v2479 = vpack.c.b16 %v2459, %v2457
      %v2480 = vpack.c.b16 %v2460, %v2458
      %v2481 = vpack.c.b16 %v2463, %v2461
      %v2482 = vpack.c.b16 %v2464, %v2462
      %v2483 = vpack.c.b16 %v2467, %v2465
      %v2484 = vpack.c.b16 %v2468, %v2466
      %2501 = vmatpush.bf16.msra.mxu0 %v2483
      %2502 = vmatpush.bf16.msra.mxu0 %v2481
      %2503 = vmatpush.bf16.msra.mxu0 %v2479
      %2504 = vmatpush.bf16.msra.mxu0 %v2477
      %2505 = vmatpush.bf16.msra.mxu0 %v2475
      %2506 = vmatpush.bf16.msra.mxu0 %v2473
      %2507 = vmatpush.bf16.msra.mxu0 %v2471
      %2508 = vmatpush.bf16.msra.mxu0 %v2469
      %2509 = vmatmul.bf16.gmra.mxu0 %v2262
      %v2510 = vpop.f32.mrf.mxu0
      %v2511 = vadd.f32 %v2393, %v2510
      %v2512 = vpop.f32.mrf.mxu0
      %v2513 = vadd.f32 %v2395, %v2512
      %2514 = vmatmul.bf16.gmra.mxu0 %v2263
      %v2515 = vpop.f32.mrf.mxu0
      %v2516 = vadd.f32 %v2398, %v2515
      %v2517 = vpop.f32.mrf.mxu0
      %v2518 = vadd.f32 %v2400, %v2517
      %2519 = vdwg.mxu0
      %2520 = vmatpush.bf16.msra.mxu0 %v2484
      %2521 = vmatpush.bf16.msra.mxu0 %v2482
      %2522 = vmatpush.bf16.msra.mxu0 %v2480
      %2523 = vmatpush.bf16.msra.mxu0 %v2478
      %2524 = vmatpush.bf16.msra.mxu0 %v2476
      %2525 = vmatpush.bf16.msra.mxu0 %v2474
      %2526 = vmatpush.bf16.msra.mxu0 %v2472
      %2527 = vmatpush.bf16.msra.mxu0 %v2470
      %2528 = vmatmul.bf16.gmra.mxu0 %v2262
      %v2529 = vpop.f32.mrf.mxu0
      %v2530 = vadd.f32 %v2412, %v2529
      %v2531 = vpop.f32.mrf.mxu0
      %v2532 = vadd.f32 %v2414, %v2531
      %2533 = vmatmul.bf16.gmra.mxu0 %v2263
      %v2534 = vpop.f32.mrf.mxu0
      %v2535 = vadd.f32 %v2417, %v2534
      %v2536 = vpop.f32.mrf.mxu0
      %v2537 = vadd.f32 %v2419, %v2536
      %2538 = vdwg.mxu0
      %v2539 = vld [vmem:[#allocation3 + $0x8] sm:$0xff]
      %v2540 = vld [vmem:[#allocation3 + $0x20] sm:$0xff]
      %v2541 = vld [vmem:[#allocation3 + $0x38] sm:$0xff]
      %v2542 = vld [vmem:[#allocation3 + $0x50] sm:$0xff]
      %v2543 = vpack.c.bf16 %v2540, %v2539
      %v2544 = vpack.c.bf16 %v2542, %v2541
      %s2545 = scalar_lea.vmem %s5, 256
      %v2546 = vld [vmem:[%s2545] sm:$0xff]
      %v2547 = vld [vmem:[%s2545 + $0x8] sm:$0xff]
      %v2548 = vld [vmem:[%s2545 + $0x10] sm:$0xff]
      %v2549 = vld [vmem:[%s2545 + $0x18] sm:$0xff]
      %v2550 = vld [vmem:[%s2545 + $0x20] sm:$0xff]
      %v2551 = vld [vmem:[%s2545 + $0x28] sm:$0xff]
      %v2552 = vld [vmem:[%s2545 + $0x30] sm:$0xff]
      %v2553 = vld [vmem:[%s2545 + $0x38] sm:$0xff]
      %v2554 = vld [vmem:[%s2545 + $0x40] sm:$0xff]
      %v2555 = vld [vmem:[%s2545 + $0x48] sm:$0xff]
      %v2556 = vld [vmem:[%s2545 + $0x50] sm:$0xff]
      %v2557 = vld [vmem:[%s2545 + $0x58] sm:$0xff]
      %v2558 = vld [vmem:[%s2545 + $0x60] sm:$0xff]
      %v2559 = vld [vmem:[%s2545 + $0x68] sm:$0xff]
      %v2560 = vld [vmem:[%s2545 + $0x70] sm:$0xff]
      %v2561 = vld [vmem:[%s2545 + $0x78] sm:$0xff]
      %v2578 = vunpack.c.l.b16 %v2546
      %v2579 = vunpack.c.h.b16 %v2546
      %v2580 = vunpack.c.l.b16 %v2547
      %v2581 = vunpack.c.h.b16 %v2547
      %v2582 = vunpack.c.l.b16 %v2548
      %v2583 = vunpack.c.h.b16 %v2548
      %v2584 = vunpack.c.l.b16 %v2549
      %v2585 = vunpack.c.h.b16 %v2549
      %v2586 = vunpack.c.l.b16 %v2550
      %v2587 = vunpack.c.h.b16 %v2550
      %v2588 = vunpack.c.l.b16 %v2551
      %v2589 = vunpack.c.h.b16 %v2551
      %v2590 = vunpack.c.l.b16 %v2552
      %v2591 = vunpack.c.h.b16 %v2552
      %v2592 = vunpack.c.l.b16 %v2553
      %v2593 = vunpack.c.h.b16 %v2553
      %v2594 = vunpack.c.l.b16 %v2554
      %v2595 = vunpack.c.h.b16 %v2554
      %v2596 = vunpack.c.l.b16 %v2555
      %v2597 = vunpack.c.h.b16 %v2555
      %v2598 = vunpack.c.l.b16 %v2556
      %v2599 = vunpack.c.h.b16 %v2556
      %v2600 = vunpack.c.l.b16 %v2557
      %v2601 = vunpack.c.h.b16 %v2557
      %v2602 = vunpack.c.l.b16 %v2558
      %v2603 = vunpack.c.h.b16 %v2558
      %v2604 = vunpack.c.l.b16 %v2559
      %v2605 = vunpack.c.h.b16 %v2559
      %v2606 = vunpack.c.l.b16 %v2560
      %v2607 = vunpack.c.h.b16 %v2560
      %v2608 = vunpack.c.l.b16 %v2561
      %v2609 = vunpack.c.h.b16 %v2561
      %v2610 = vpack.c.b16 %v2580, %v2578
      %v2611 = vpack.c.b16 %v2581, %v2579
      %v2612 = vpack.c.b16 %v2584, %v2582
      %v2613 = vpack.c.b16 %v2585, %v2583
      %v2614 = vpack.c.b16 %v2588, %v2586
      %v2615 = vpack.c.b16 %v2589, %v2587
      %v2616 = vpack.c.b16 %v2592, %v2590
      %v2617 = vpack.c.b16 %v2593, %v2591
      %v2618 = vpack.c.b16 %v2596, %v2594
      %v2619 = vpack.c.b16 %v2597, %v2595
      %v2620 = vpack.c.b16 %v2600, %v2598
      %v2621 = vpack.c.b16 %v2601, %v2599
      %v2622 = vpack.c.b16 %v2604, %v2602
      %v2623 = vpack.c.b16 %v2605, %v2603
      %v2624 = vpack.c.b16 %v2608, %v2606
      %v2625 = vpack.c.b16 %v2609, %v2607
      %2642 = vmatpush.bf16.msra.mxu0 %v2624
      %2643 = vmatpush.bf16.msra.mxu0 %v2622
      %2644 = vmatpush.bf16.msra.mxu0 %v2620
      %2645 = vmatpush.bf16.msra.mxu0 %v2618
      %2646 = vmatpush.bf16.msra.mxu0 %v2616
      %2647 = vmatpush.bf16.msra.mxu0 %v2614
      %2648 = vmatpush.bf16.msra.mxu0 %v2612
      %2649 = vmatpush.bf16.msra.mxu0 %v2610
      %2650 = vmatmul.bf16.gmra.mxu0 %v2543
      %v2651 = vpop.f32.mrf.mxu0
      %v2652 = vadd.f32 0.0, %v2651
      %v2653 = vpop.f32.mrf.mxu0
      %v2654 = vadd.f32 0.0, %v2653
      %2655 = vmatmul.bf16.gmra.mxu0 %v2544
      %v2656 = vpop.f32.mrf.mxu0
      %v2657 = vadd.f32 0.0, %v2656
      %v2658 = vpop.f32.mrf.mxu0
      %v2659 = vadd.f32 0.0, %v2658
      %2660 = vdwg.mxu0
      %2661 = vmatpush.bf16.msra.mxu0 %v2625
      %2662 = vmatpush.bf16.msra.mxu0 %v2623
      %2663 = vmatpush.bf16.msra.mxu0 %v2621
      %2664 = vmatpush.bf16.msra.mxu0 %v2619
      %2665 = vmatpush.bf16.msra.mxu0 %v2617
      %2666 = vmatpush.bf16.msra.mxu0 %v2615
      %2667 = vmatpush.bf16.msra.mxu0 %v2613
      %2668 = vmatpush.bf16.msra.mxu0 %v2611
      %2669 = vmatmul.bf16.gmra.mxu0 %v2543
      %v2670 = vpop.f32.mrf.mxu0
      %v2671 = vadd.f32 0.0, %v2670
      %v2672 = vpop.f32.mrf.mxu0
      %v2673 = vadd.f32 0.0, %v2672
      %2674 = vmatmul.bf16.gmra.mxu0 %v2544
      %v2675 = vpop.f32.mrf.mxu0
      %v2676 = vadd.f32 0.0, %v2675
      %v2677 = vpop.f32.mrf.mxu0
      %v2678 = vadd.f32 0.0, %v2677
      %2679 = vdwg.mxu0
      %v2680 = vadd.f32 %v2511, %v2652
      %v2681 = vadd.f32 %v2530, %v2671
      %v2682 = vadd.f32 %v2513, %v2654
      %v2683 = vadd.f32 %v2532, %v2673
      %v2684 = vadd.f32 %v2516, %v2657
      %v2685 = vadd.f32 %v2535, %v2676
      %v2686 = vadd.f32 %v2518, %v2659
      %v2687 = vadd.f32 %v2537, %v2678
      %v2688 = vld [vmem:[#allocation3 + $0x9] sm:$0xff]
      %v2689 = vld [vmem:[#allocation3 + $0x21] sm:$0xff]
      %v2690 = vld [vmem:[#allocation3 + $0x39] sm:$0xff]
      %v2691 = vld [vmem:[#allocation3 + $0x51] sm:$0xff]
      %v2692 = vpack.c.bf16 %v2689, %v2688
      %v2693 = vpack.c.bf16 %v2691, %v2690
      %s2694 = scalar_lea.vmem %s5, 384
      %v2695 = vld [vmem:[%s2694] sm:$0xff]
      %v2696 = vld [vmem:[%s2694 + $0x8] sm:$0xff]
      %v2697 = vld [vmem:[%s2694 + $0x10] sm:$0xff]
      %v2698 = vld [vmem:[%s2694 + $0x18] sm:$0xff]
      %v2699 = vld [vmem:[%s2694 + $0x20] sm:$0xff]
      %v2700 = vld [vmem:[%s2694 + $0x28] sm:$0xff]
      %v2701 = vld [vmem:[%s2694 + $0x30] sm:$0xff]
      %v2702 = vld [vmem:[%s2694 + $0x38] sm:$0xff]
      %v2703 = vld [vmem:[%s2694 + $0x40] sm:$0xff]
      %v2704 = vld [vmem:[%s2694 + $0x48] sm:$0xff]
      %v2705 = vld [vmem:[%s2694 + $0x50] sm:$0xff]
      %v2706 = vld [vmem:[%s2694 + $0x58] sm:$0xff]
      %v2707 = vld [vmem:[%s2694 + $0x60] sm:$0xff]
      %v2708 = vld [vmem:[%s2694 + $0x68] sm:$0xff]
      %v2709 = vld [vmem:[%s2694 + $0x70] sm:$0xff]
      %v2710 = vld [vmem:[%s2694 + $0x78] sm:$0xff]
      %v2727 = vunpack.c.l.b16 %v2695
      %v2728 = vunpack.c.h.b16 %v2695
      %v2729 = vunpack.c.l.b16 %v2696
      %v2730 = vunpack.c.h.b16 %v2696
      %v2731 = vunpack.c.l.b16 %v2697
      %v2732 = vunpack.c.h.b16 %v2697
      %v2733 = vunpack.c.l.b16 %v2698
      %v2734 = vunpack.c.h.b16 %v2698
      %v2735 = vunpack.c.l.b16 %v2699
      %v2736 = vunpack.c.h.b16 %v2699
      %v2737 = vunpack.c.l.b16 %v2700
      %v2738 = vunpack.c.h.b16 %v2700
      %v2739 = vunpack.c.l.b16 %v2701
      %v2740 = vunpack.c.h.b16 %v2701
      %v2741 = vunpack.c.l.b16 %v2702
      %v2742 = vunpack.c.h.b16 %v2702
      %v2743 = vunpack.c.l.b16 %v2703
      %v2744 = vunpack.c.h.b16 %v2703
      %v2745 = vunpack.c.l.b16 %v2704
      %v2746 = vunpack.c.h.b16 %v2704
      %v2747 = vunpack.c.l.b16 %v2705
      %v2748 = vunpack.c.h.b16 %v2705
      %v2749 = vunpack.c.l.b16 %v2706
      %v2750 = vunpack.c.h.b16 %v2706
      %v2751 = vunpack.c.l.b16 %v2707
      %v2752 = vunpack.c.h.b16 %v2707
      %v2753 = vunpack.c.l.b16 %v2708
      %v2754 = vunpack.c.h.b16 %v2708
      %v2755 = vunpack.c.l.b16 %v2709
      %v2756 = vunpack.c.h.b16 %v2709
      %v2757 = vunpack.c.l.b16 %v2710
      %v2758 = vunpack.c.h.b16 %v2710
      %v2759 = vpack.c.b16 %v2729, %v2727
      %v2760 = vpack.c.b16 %v2730, %v2728
      %v2761 = vpack.c.b16 %v2733, %v2731
      %v2762 = vpack.c.b16 %v2734, %v2732
      %v2763 = vpack.c.b16 %v2737, %v2735
      %v2764 = vpack.c.b16 %v2738, %v2736
      %v2765 = vpack.c.b16 %v2741, %v2739
      %v2766 = vpack.c.b16 %v2742, %v2740
      %v2767 = vpack.c.b16 %v2745, %v2743
      %v2768 = vpack.c.b16 %v2746, %v2744
      %v2769 = vpack.c.b16 %v2749, %v2747
      %v2770 = vpack.c.b16 %v2750, %v2748
      %v2771 = vpack.c.b16 %v2753, %v2751
      %v2772 = vpack.c.b16 %v2754, %v2752
      %v2773 = vpack.c.b16 %v2757, %v2755
      %v2774 = vpack.c.b16 %v2758, %v2756
      %2791 = vmatpush.bf16.msra.mxu0 %v2773
      %2792 = vmatpush.bf16.msra.mxu0 %v2771
      %2793 = vmatpush.bf16.msra.mxu0 %v2769
      %2794 = vmatpush.bf16.msra.mxu0 %v2767
      %2795 = vmatpush.bf16.msra.mxu0 %v2765
      %2796 = vmatpush.bf16.msra.mxu0 %v2763
      %2797 = vmatpush.bf16.msra.mxu0 %v2761
      %2798 = vmatpush.bf16.msra.mxu0 %v2759
      %2799 = vmatmul.bf16.gmra.mxu0 %v2692
      %v2800 = vpop.f32.mrf.mxu0
      %v2801 = vadd.f32 0.0, %v2800
      %v2802 = vpop.f32.mrf.mxu0
      %v2803 = vadd.f32 0.0, %v2802
      %2804 = vmatmul.bf16.gmra.mxu0 %v2693
      %v2805 = vpop.f32.mrf.mxu0
      %v2806 = vadd.f32 0.0, %v2805
      %v2807 = vpop.f32.mrf.mxu0
      %v2808 = vadd.f32 0.0, %v2807
      %2809 = vdwg.mxu0
      %2810 = vmatpush.bf16.msra.mxu0 %v2774
      %2811 = vmatpush.bf16.msra.mxu0 %v2772
      %2812 = vmatpush.bf16.msra.mxu0 %v2770
      %2813 = vmatpush.bf16.msra.mxu0 %v2768
      %2814 = vmatpush.bf16.msra.mxu0 %v2766
      %2815 = vmatpush.bf16.msra.mxu0 %v2764
      %2816 = vmatpush.bf16.msra.mxu0 %v2762
      %2817 = vmatpush.bf16.msra.mxu0 %v2760
      %2818 = vmatmul.bf16.gmra.mxu0 %v2692
      %v2819 = vpop.f32.mrf.mxu0
      %v2820 = vadd.f32 0.0, %v2819
      %v2821 = vpop.f32.mrf.mxu0
      %v2822 = vadd.f32 0.0, %v2821
      %2823 = vmatmul.bf16.gmra.mxu0 %v2693
      %v2824 = vpop.f32.mrf.mxu0
      %v2825 = vadd.f32 0.0, %v2824
      %v2826 = vpop.f32.mrf.mxu0
      %v2827 = vadd.f32 0.0, %v2826
      %2828 = vdwg.mxu0
      %v2829 = vadd.f32 %v2680, %v2801
      %v2830 = vadd.f32 %v2681, %v2820
      %v2831 = vadd.f32 %v2682, %v2803
      %v2832 = vadd.f32 %v2683, %v2822
      %v2833 = vadd.f32 %v2684, %v2806
      %v2834 = vadd.f32 %v2685, %v2825
      %v2835 = vadd.f32 %v2686, %v2808
      %v2836 = vadd.f32 %v2687, %v2827
      %v2837 = vld [vmem:[#allocation3 + $0xa] sm:$0xff]
      %v2838 = vld [vmem:[#allocation3 + $0x22] sm:$0xff]
      %v2839 = vld [vmem:[#allocation3 + $0x3a] sm:$0xff]
      %v2840 = vld [vmem:[#allocation3 + $0x52] sm:$0xff]
      %v2841 = vpack.c.bf16 %v2838, %v2837
      %v2842 = vpack.c.bf16 %v2840, %v2839
      %s2843 = scalar_lea.vmem %s5, 512
      %v2844 = vld [vmem:[%s2843] sm:$0xff]
      %v2845 = vld [vmem:[%s2843 + $0x8] sm:$0xff]
      %v2846 = vld [vmem:[%s2843 + $0x10] sm:$0xff]
      %v2847 = vld [vmem:[%s2843 + $0x18] sm:$0xff]
      %v2848 = vld [vmem:[%s2843 + $0x20] sm:$0xff]
      %v2849 = vld [vmem:[%s2843 + $0x28] sm:$0xff]
      %v2850 = vld [vmem:[%s2843 + $0x30] sm:$0xff]
      %v2851 = vld [vmem:[%s2843 + $0x38] sm:$0xff]
      %v2852 = vld [vmem:[%s2843 + $0x40] sm:$0xff]
      %v2853 = vld [vmem:[%s2843 + $0x48] sm:$0xff]
      %v2854 = vld [vmem:[%s2843 + $0x50] sm:$0xff]
      %v2855 = vld [vmem:[%s2843 + $0x58] sm:$0xff]
      %v2856 = vld [vmem:[%s2843 + $0x60] sm:$0xff]
      %v2857 = vld [vmem:[%s2843 + $0x68] sm:$0xff]
      %v2858 = vld [vmem:[%s2843 + $0x70] sm:$0xff]
      %v2859 = vld [vmem:[%s2843 + $0x78] sm:$0xff]
      %v2876 = vunpack.c.l.b16 %v2844
      %v2877 = vunpack.c.h.b16 %v2844
      %v2878 = vunpack.c.l.b16 %v2845
      %v2879 = vunpack.c.h.b16 %v2845
      %v2880 = vunpack.c.l.b16 %v2846
      %v2881 = vunpack.c.h.b16 %v2846
      %v2882 = vunpack.c.l.b16 %v2847
      %v2883 = vunpack.c.h.b16 %v2847
      %v2884 = vunpack.c.l.b16 %v2848
      %v2885 = vunpack.c.h.b16 %v2848
      %v2886 = vunpack.c.l.b16 %v2849
      %v2887 = vunpack.c.h.b16 %v2849
      %v2888 = vunpack.c.l.b16 %v2850
      %v2889 = vunpack.c.h.b16 %v2850
      %v2890 = vunpack.c.l.b16 %v2851
      %v2891 = vunpack.c.h.b16 %v2851
      %v2892 = vunpack.c.l.b16 %v2852
      %v2893 = vunpack.c.h.b16 %v2852
      %v2894 = vunpack.c.l.b16 %v2853
      %v2895 = vunpack.c.h.b16 %v2853
      %v2896 = vunpack.c.l.b16 %v2854
      %v2897 = vunpack.c.h.b16 %v2854
      %v2898 = vunpack.c.l.b16 %v2855
      %v2899 = vunpack.c.h.b16 %v2855
      %v2900 = vunpack.c.l.b16 %v2856
      %v2901 = vunpack.c.h.b16 %v2856
      %v2902 = vunpack.c.l.b16 %v2857
      %v2903 = vunpack.c.h.b16 %v2857
      %v2904 = vunpack.c.l.b16 %v2858
      %v2905 = vunpack.c.h.b16 %v2858
      %v2906 = vunpack.c.l.b16 %v2859
      %v2907 = vunpack.c.h.b16 %v2859
      %v2908 = vpack.c.b16 %v2878, %v2876
      %v2909 = vpack.c.b16 %v2879, %v2877
      %v2910 = vpack.c.b16 %v2882, %v2880
      %v2911 = vpack.c.b16 %v2883, %v2881
      %v2912 = vpack.c.b16 %v2886, %v2884
      %v2913 = vpack.c.b16 %v2887, %v2885
      %v2914 = vpack.c.b16 %v2890, %v2888
      %v2915 = vpack.c.b16 %v2891, %v2889
      %v2916 = vpack.c.b16 %v2894, %v2892
      %v2917 = vpack.c.b16 %v2895, %v2893
      %v2918 = vpack.c.b16 %v2898, %v2896
      %v2919 = vpack.c.b16 %v2899, %v2897
      %v2920 = vpack.c.b16 %v2902, %v2900
      %v2921 = vpack.c.b16 %v2903, %v2901
      %v2922 = vpack.c.b16 %v2906, %v2904
      %v2923 = vpack.c.b16 %v2907, %v2905
      %2940 = vmatpush.bf16.msra.mxu0 %v2922
      %2941 = vmatpush.bf16.msra.mxu0 %v2920
      %2942 = vmatpush.bf16.msra.mxu0 %v2918
      %2943 = vmatpush.bf16.msra.mxu0 %v2916
      %2944 = vmatpush.bf16.msra.mxu0 %v2914
      %2945 = vmatpush.bf16.msra.mxu0 %v2912
      %2946 = vmatpush.bf16.msra.mxu0 %v2910
      %2947 = vmatpush.bf16.msra.mxu0 %v2908
      %2948 = vmatmul.bf16.gmra.mxu0 %v2841
      %v2949 = vpop.f32.mrf.mxu0
      %v2950 = vadd.f32 0.0, %v2949
      %v2951 = vpop.f32.mrf.mxu0
      %v2952 = vadd.f32 0.0, %v2951
      %2953 = vmatmul.bf16.gmra.mxu0 %v2842
      %v2954 = vpop.f32.mrf.mxu0
      %v2955 = vadd.f32 0.0, %v2954
      %v2956 = vpop.f32.mrf.mxu0
      %v2957 = vadd.f32 0.0, %v2956
      %2958 = vdwg.mxu0
      %2959 = vmatpush.bf16.msra.mxu0 %v2923
      %2960 = vmatpush.bf16.msra.mxu0 %v2921
      %2961 = vmatpush.bf16.msra.mxu0 %v2919
      %2962 = vmatpush.bf16.msra.mxu0 %v2917
      %2963 = vmatpush.bf16.msra.mxu0 %v2915
      %2964 = vmatpush.bf16.msra.mxu0 %v2913
      %2965 = vmatpush.bf16.msra.mxu0 %v2911
      %2966 = vmatpush.bf16.msra.mxu0 %v2909
      %2967 = vmatmul.bf16.gmra.mxu0 %v2841
      %v2968 = vpop.f32.mrf.mxu0
      %v2969 = vadd.f32 0.0, %v2968
      %v2970 = vpop.f32.mrf.mxu0
      %v2971 = vadd.f32 0.0, %v2970
      %2972 = vmatmul.bf16.gmra.mxu0 %v2842
      %v2973 = vpop.f32.mrf.mxu0
      %v2974 = vadd.f32 0.0, %v2973
      %v2975 = vpop.f32.mrf.mxu0
      %v2976 = vadd.f32 0.0, %v2975
      %2977 = vdwg.mxu0
      %v2978 = vadd.f32 %v2829, %v2950
      %v2979 = vadd.f32 %v2830, %v2969
      %v2980 = vadd.f32 %v2831, %v2952
      %v2981 = vadd.f32 %v2832, %v2971
      %v2982 = vadd.f32 %v2833, %v2955
      %v2983 = vadd.f32 %v2834, %v2974
      %v2984 = vadd.f32 %v2835, %v2957
      %v2985 = vadd.f32 %v2836, %v2976
      %v2986 = vld [vmem:[%s6] sm:$0x3]
      %v2988 = vperm.slane %v2986, 0
      %v2989 = vperm.slane %v2986, 1
      %v2992 = vmul.f32 %v2978, %v2988
      %v2993 = vmul.f32 %v2979, %v2989
      %v2994 = vmul.f32 %v2980, %v2988
      %v2995 = vmul.f32 %v2981, %v2989
      %v2996 = vmul.f32 %v2982, %v2988
      %v2997 = vmul.f32 %v2983, %v2989
      %v2998 = vmul.f32 %v2984, %v2988
      %v2999 = vmul.f32 %v2985, %v2989
      %v3000 = vld [vmem:[%s7] sm:$0x3]
      %v3002 = vperm.slane %v3000, 0
      %v3003 = vperm.slane %v3000, 1
      %v3006 = vadd.f32 %v2992, %v3002
      %v3007 = vadd.f32 %v2993, %v3003
      %v3008 = vadd.f32 %v2994, %v3002
      %v3009 = vadd.f32 %v2995, %v3003
      %v3010 = vadd.f32 %v2996, %v3002
      %v3011 = vadd.f32 %v2997, %v3003
      %v3012 = vadd.f32 %v2998, %v3002
      %v3013 = vadd.f32 %v2999, %v3003
      %v3014 = vmax.f32 %v3006, 0.0
      %v3015 = vmax.f32 %v3007, 0.0
      %v3016 = vmax.f32 %v3008, 0.0
      %v3017 = vmax.f32 %v3009, 0.0
      %v3018 = vmax.f32 %v3010, 0.0
      %v3019 = vmax.f32 %v3011, 0.0
      %v3020 = vmax.f32 %v3012, 0.0
      %v3021 = vmax.f32 %v3013, 0.0
      %3026 = vrot.lane.b32.xlu0 %v3014, 64
      %v3027 = vpop.permute.xlu0 %3026
      %3028 = vrot.lane.b32.xlu0 %v3016, 64
      %v3029 = vpop.permute.xlu0 %3028
      %3030 = vrot.lane.b32.xlu0 %v3018, 64
      %v3031 = vpop.permute.xlu0 %3030
      %3032 = vrot.lane.b32.xlu0 %v3020, 64
      %v3033 = vpop.permute.xlu0 %3032
      %v3038 = vmax.f32 %v3014, %v3027
      %v3039 = vmax.f32 %v3016, %v3029
      %v3040 = vmax.f32 %v3018, %v3031
      %v3041 = vmax.f32 %v3020, %v3033
      %3046 = vrot.lane.b32.xlu0 %v3015, 64
      %v3047 = vpop.permute.xlu0 %3046
      %3048 = vrot.lane.b32.xlu0 %v3017, 64
      %v3049 = vpop.permute.xlu0 %3048
      %3050 = vrot.lane.b32.xlu0 %v3019, 64
      %v3051 = vpop.permute.xlu0 %3050
      %3052 = vrot.lane.b32.xlu0 %v3021, 64
      %v3053 = vpop.permute.xlu0 %3052
      %v3058 = vmax.f32 %v3015, %v3047
      %v3059 = vmax.f32 %v3017, %v3049
      %v3060 = vmax.f32 %v3019, %v3051
      %v3061 = vmax.f32 %v3021, %v3053
      %v3062 = vmax.f32 %v3038, %v3058
      %v3063 = vmax.f32 %v3039, %v3059
      %v3064 = vmax.f32 %v3040, %v3060
      %v3065 = vmax.f32 %v3041, %v3061
      %v3066 = vpack.c.bf16 %v3063, %v3062
      %v3067 = vpack.c.bf16 %v3065, %v3064
      %v3068 = vld [vmem:[%s8] sm:$0x1]
      %vm3069 = vcmask 261120
      %v3071 = vsel %vm3069, %v3068, 0
      %3073 = vmatpush.bf16.msra.mxu0 0
      %3074 = vmatpush.bf16.msra.mxu0 0
      %3075 = vmatpush.bf16.msra.mxu0 0
      %3076 = vmatpush.bf16.msra.mxu0 0
      %3077 = vmatpush.bf16.msra.mxu0 0
      %3078 = vmatpush.bf16.msra.mxu0 0
      %3079 = vmatpush.bf16.msra.mxu0 %v3067
      %3080 = vmatpush.bf16.msra.mxu0 %v3066
      %3081 = vmatmul.bf16.gmra.mxu0 %v3071
      %v3082 = vpop.f32.mrf.mxu0
      %v3083 = vadd.f32 0.0, %v3082
      %v3084 = vpop.f32.mrf.mxu0
      %3085 = vdwg.mxu0
      %s3086 = scalar_lea.vmem %s8, 1
      %v3087 = vld [vmem:[%s3086] sm:$0x1]
      %v3089 = vsel %vm3069, %v3087, 0
      %3091 = vmatpush.bf16.msra.mxu0 0
      %3092 = vmatpush.bf16.msra.mxu0 0
      %3093 = vmatpush.bf16.msra.mxu0 0
      %3094 = vmatpush.bf16.msra.mxu0 0
      %3095 = vmatpush.bf16.msra.mxu0 0
      %3096 = vmatpush.bf16.msra.mxu0 0
      %3097 = vmatpush.bf16.msra.mxu0 %v3067
      %3098 = vmatpush.bf16.msra.mxu0 %v3066
      %3099 = vmatmul.bf16.gmra.mxu0 %v3089
      %v3100 = vpop.f32.mrf.mxu0
      %v3101 = vadd.f32 0.0, %v3100
      %v3102 = vpop.f32.mrf.mxu0
      %3103 = vdwg.mxu0
      %v3104 = vmax.f32 %v3083, %v3101
      %s3105 = scalar_lea.vmem %s8, 2
      %v3106 = vld [vmem:[%s3105] sm:$0x1]
      %v3108 = vsel %vm3069, %v3106, 0
      %3110 = vmatpush.bf16.msra.mxu0 0
      %3111 = vmatpush.bf16.msra.mxu0 0
      %3112 = vmatpush.bf16.msra.mxu0 0
      %3113 = vmatpush.bf16.msra.mxu0 0
      %3114 = vmatpush.bf16.msra.mxu0 0
      %3115 = vmatpush.bf16.msra.mxu0 0
      %3116 = vmatpush.bf16.msra.mxu0 %v3067
      %3117 = vmatpush.bf16.msra.mxu0 %v3066
      %3118 = vmatmul.bf16.gmra.mxu0 %v3108
      %v3119 = vpop.f32.mrf.mxu0
      %v3120 = vadd.f32 0.0, %v3119
      %v3121 = vpop.f32.mrf.mxu0
      %3122 = vdwg.mxu0
      %v3123 = vmax.f32 %v3104, %v3120
      %s3124 = scalar_lea.vmem %s8, 3
      %v3125 = vld [vmem:[%s3124] sm:$0x1]
      %v3127 = vsel %vm3069, %v3125, 0
      %3129 = vmatpush.bf16.msra.mxu0 0
      %3130 = vmatpush.bf16.msra.mxu0 0
      %3131 = vmatpush.bf16.msra.mxu0 0
      %3132 = vmatpush.bf16.msra.mxu0 0
      %3133 = vmatpush.bf16.msra.mxu0 0
      %3134 = vmatpush.bf16.msra.mxu0 0
      %3135 = vmatpush.bf16.msra.mxu0 %v3067
      %3136 = vmatpush.bf16.msra.mxu0 %v3066
      %3137 = vmatmul.bf16.gmra.mxu0 %v3127
      %v3138 = vpop.f32.mrf.mxu0
      %v3139 = vadd.f32 0.0, %v3138
      %v3140 = vpop.f32.mrf.mxu0
      %3141 = vdwg.mxu0
      %v3142 = vmax.f32 %v3123, %v3139
      %s3143 = scalar_lea.vmem %s8, 4
      %v3144 = vld [vmem:[%s3143] sm:$0x1]
      %v3146 = vsel %vm3069, %v3144, 0
      %3148 = vmatpush.bf16.msra.mxu0 0
      %3149 = vmatpush.bf16.msra.mxu0 0
      %3150 = vmatpush.bf16.msra.mxu0 0
      %3151 = vmatpush.bf16.msra.mxu0 0
      %3152 = vmatpush.bf16.msra.mxu0 0
      %3153 = vmatpush.bf16.msra.mxu0 0
      %3154 = vmatpush.bf16.msra.mxu0 %v3067
      %3155 = vmatpush.bf16.msra.mxu0 %v3066
      %3156 = vmatmul.bf16.gmra.mxu0 %v3146
      %v3157 = vpop.f32.mrf.mxu0
      %v3158 = vadd.f32 0.0, %v3157
      %v3159 = vpop.f32.mrf.mxu0
      %3160 = vdwg.mxu0
      %v3161 = vmax.f32 %v3142, %v3158
      %s3162 = scalar_lea.vmem %s8, 5
      %v3163 = vld [vmem:[%s3162] sm:$0x1]
      %v3165 = vsel %vm3069, %v3163, 0
      %3167 = vmatpush.bf16.msra.mxu0 0
      %3168 = vmatpush.bf16.msra.mxu0 0
      %3169 = vmatpush.bf16.msra.mxu0 0
      %3170 = vmatpush.bf16.msra.mxu0 0
      %3171 = vmatpush.bf16.msra.mxu0 0
      %3172 = vmatpush.bf16.msra.mxu0 0
      %3173 = vmatpush.bf16.msra.mxu0 %v3067
      %3174 = vmatpush.bf16.msra.mxu0 %v3066
      %3175 = vmatmul.bf16.gmra.mxu0 %v3165
      %v3176 = vpop.f32.mrf.mxu0
      %v3177 = vadd.f32 0.0, %v3176
      %v3178 = vpop.f32.mrf.mxu0
      %3179 = vdwg.mxu0
      %v3180 = vmax.f32 %v3161, %v3177
      %s3181 = scalar_lea.vmem %s8, 6
      %v3182 = vld [vmem:[%s3181] sm:$0x1]
      %v3184 = vsel %vm3069, %v3182, 0
      %3186 = vmatpush.bf16.msra.mxu0 0
      %3187 = vmatpush.bf16.msra.mxu0 0
      %3188 = vmatpush.bf16.msra.mxu0 0
      %3189 = vmatpush.bf16.msra.mxu0 0
      %3190 = vmatpush.bf16.msra.mxu0 0
      %3191 = vmatpush.bf16.msra.mxu0 0
      %3192 = vmatpush.bf16.msra.mxu0 %v3067
      %3193 = vmatpush.bf16.msra.mxu0 %v3066
      %3194 = vmatmul.bf16.gmra.mxu0 %v3184
      %v3195 = vpop.f32.mrf.mxu0
      %v3196 = vadd.f32 0.0, %v3195
      %v3197 = vpop.f32.mrf.mxu0
      %3198 = vdwg.mxu0
      %v3199 = vmax.f32 %v3180, %v3196
      %s3200 = scalar_lea.vmem %s8, 7
      %v3201 = vld [vmem:[%s3200] sm:$0x1]
      %v3203 = vsel %vm3069, %v3201, 0
      %3205 = vmatpush.bf16.msra.mxu0 0
      %3206 = vmatpush.bf16.msra.mxu0 0
      %3207 = vmatpush.bf16.msra.mxu0 0
      %3208 = vmatpush.bf16.msra.mxu0 0
      %3209 = vmatpush.bf16.msra.mxu0 0
      %3210 = vmatpush.bf16.msra.mxu0 0
      %3211 = vmatpush.bf16.msra.mxu0 %v3067
      %3212 = vmatpush.bf16.msra.mxu0 %v3066
      %3213 = vmatmul.bf16.gmra.mxu0 %v3203
      %v3214 = vpop.f32.mrf.mxu0
      %v3215 = vadd.f32 0.0, %v3214
      %v3216 = vpop.f32.mrf.mxu0
      %3217 = vdwg.mxu0
      %v3218 = vmax.f32 %v3199, %v3215
      %vm3219 = vcmask 517120
      %3220 = vst.msk [vmem:[#allocation4 + $0x18] sm:$0x3] %vm3219, %v3218
      %s3221 = scalar_lea.vmem %s8, 8
      %v3222 = vld [vmem:[%s3221] sm:$0x1]
      %v3224 = vsel %vm3069, %v3222, 0
      %3226 = vmatpush.bf16.msra.mxu0 0
      %3227 = vmatpush.bf16.msra.mxu0 0
      %3228 = vmatpush.bf16.msra.mxu0 0
      %3229 = vmatpush.bf16.msra.mxu0 0
      %3230 = vmatpush.bf16.msra.mxu0 0
      %3231 = vmatpush.bf16.msra.mxu0 0
      %3232 = vmatpush.bf16.msra.mxu0 %v3067
      %3233 = vmatpush.bf16.msra.mxu0 %v3066
      %3234 = vmatmul.bf16.gmra.mxu0 %v3224
      %v3235 = vpop.f32.mrf.mxu0
      %v3236 = vadd.f32 0.0, %v3235
      %v3237 = vpop.f32.mrf.mxu0
      %3238 = vdwg.mxu0
      %s3239 = scalar_lea.vmem %s8, 9
      %v3240 = vld [vmem:[%s3239] sm:$0x1]
      %v3242 = vsel %vm3069, %v3240, 0
      %3244 = vmatpush.bf16.msra.mxu0 0
      %3245 = vmatpush.bf16.msra.mxu0 0
      %3246 = vmatpush.bf16.msra.mxu0 0
      %3247 = vmatpush.bf16.msra.mxu0 0
      %3248 = vmatpush.bf16.msra.mxu0 0
      %3249 = vmatpush.bf16.msra.mxu0 0
      %3250 = vmatpush.bf16.msra.mxu0 %v3067
      %3251 = vmatpush.bf16.msra.mxu0 %v3066
      %3252 = vmatmul.bf16.gmra.mxu0 %v3242
      %v3253 = vpop.f32.mrf.mxu0
      %v3254 = vadd.f32 0.0, %v3253
      %v3255 = vpop.f32.mrf.mxu0
      %3256 = vdwg.mxu0
      %v3257 = vmax.f32 %v3236, %v3254
      %s3258 = scalar_lea.vmem %s8, 10
      %v3259 = vld [vmem:[%s3258] sm:$0x1]
      %v3261 = vsel %vm3069, %v3259, 0
      %3263 = vmatpush.bf16.msra.mxu0 0
      %3264 = vmatpush.bf16.msra.mxu0 0
      %3265 = vmatpush.bf16.msra.mxu0 0
      %3266 = vmatpush.bf16.msra.mxu0 0
      %3267 = vmatpush.bf16.msra.mxu0 0
      %3268 = vmatpush.bf16.msra.mxu0 0
      %3269 = vmatpush.bf16.msra.mxu0 %v3067
      %3270 = vmatpush.bf16.msra.mxu0 %v3066
      %3271 = vmatmul.bf16.gmra.mxu0 %v3261
      %v3272 = vpop.f32.mrf.mxu0
      %v3273 = vadd.f32 0.0, %v3272
      %v3274 = vpop.f32.mrf.mxu0
      %3275 = vdwg.mxu0
      %v3276 = vmax.f32 %v3257, %v3273
      %s3277 = scalar_lea.vmem %s8, 11
      %v3278 = vld [vmem:[%s3277] sm:$0x1]
      %v3280 = vsel %vm3069, %v3278, 0
      %3282 = vmatpush.bf16.msra.mxu0 0
      %3283 = vmatpush.bf16.msra.mxu0 0
      %3284 = vmatpush.bf16.msra.mxu0 0
      %3285 = vmatpush.bf16.msra.mxu0 0
      %3286 = vmatpush.bf16.msra.mxu0 0
      %3287 = vmatpush.bf16.msra.mxu0 0
      %3288 = vmatpush.bf16.msra.mxu0 %v3067
      %3289 = vmatpush.bf16.msra.mxu0 %v3066
      %3290 = vmatmul.bf16.gmra.mxu0 %v3280
      %v3291 = vpop.f32.mrf.mxu0
      %v3292 = vadd.f32 0.0, %v3291
      %v3293 = vpop.f32.mrf.mxu0
      %3294 = vdwg.mxu0
      %v3295 = vmax.f32 %v3276, %v3292
      %s3296 = scalar_lea.vmem %s8, 12
      %v3297 = vld [vmem:[%s3296] sm:$0x1]
      %v3299 = vsel %vm3069, %v3297, 0
      %3301 = vmatpush.bf16.msra.mxu0 0
      %3302 = vmatpush.bf16.msra.mxu0 0
      %3303 = vmatpush.bf16.msra.mxu0 0
      %3304 = vmatpush.bf16.msra.mxu0 0
      %3305 = vmatpush.bf16.msra.mxu0 0
      %3306 = vmatpush.bf16.msra.mxu0 0
      %3307 = vmatpush.bf16.msra.mxu0 %v3067
      %3308 = vmatpush.bf16.msra.mxu0 %v3066
      %3309 = vmatmul.bf16.gmra.mxu0 %v3299
      %v3310 = vpop.f32.mrf.mxu0
      %v3311 = vadd.f32 0.0, %v3310
      %v3312 = vpop.f32.mrf.mxu0
      %3313 = vdwg.mxu0
      %v3314 = vmax.f32 %v3295, %v3311
      %s3315 = scalar_lea.vmem %s8, 13
      %v3316 = vld [vmem:[%s3315] sm:$0x1]
      %v3318 = vsel %vm3069, %v3316, 0
      %3320 = vmatpush.bf16.msra.mxu0 0
      %3321 = vmatpush.bf16.msra.mxu0 0
      %3322 = vmatpush.bf16.msra.mxu0 0
      %3323 = vmatpush.bf16.msra.mxu0 0
      %3324 = vmatpush.bf16.msra.mxu0 0
      %3325 = vmatpush.bf16.msra.mxu0 0
      %3326 = vmatpush.bf16.msra.mxu0 %v3067
      %3327 = vmatpush.bf16.msra.mxu0 %v3066
      %3328 = vmatmul.bf16.gmra.mxu0 %v3318
      %v3329 = vpop.f32.mrf.mxu0
      %v3330 = vadd.f32 0.0, %v3329
      %v3331 = vpop.f32.mrf.mxu0
      %3332 = vdwg.mxu0
      %v3333 = vmax.f32 %v3314, %v3330
      %s3334 = scalar_lea.vmem %s8, 14
      %v3335 = vld [vmem:[%s3334] sm:$0x1]
      %v3337 = vsel %vm3069, %v3335, 0
      %3339 = vmatpush.bf16.msra.mxu0 0
      %3340 = vmatpush.bf16.msra.mxu0 0
      %3341 = vmatpush.bf16.msra.mxu0 0
      %3342 = vmatpush.bf16.msra.mxu0 0
      %3343 = vmatpush.bf16.msra.mxu0 0
      %3344 = vmatpush.bf16.msra.mxu0 0
      %3345 = vmatpush.bf16.msra.mxu0 %v3067
      %3346 = vmatpush.bf16.msra.mxu0 %v3066
      %3347 = vmatmul.bf16.gmra.mxu0 %v3337
      %v3348 = vpop.f32.mrf.mxu0
      %v3349 = vadd.f32 0.0, %v3348
      %v3350 = vpop.f32.mrf.mxu0
      %3351 = vdwg.mxu0
      %v3352 = vmax.f32 %v3333, %v3349
      %s3353 = scalar_lea.vmem %s8, 15
      %v3354 = vld [vmem:[%s3353] sm:$0x1]
      %v3356 = vsel %vm3069, %v3354, 0
      %3358 = vmatpush.bf16.msra.mxu0 0
      %3359 = vmatpush.bf16.msra.mxu0 0
      %3360 = vmatpush.bf16.msra.mxu0 0
      %3361 = vmatpush.bf16.msra.mxu0 0
      %3362 = vmatpush.bf16.msra.mxu0 0
      %3363 = vmatpush.bf16.msra.mxu0 0
      %3364 = vmatpush.bf16.msra.mxu0 %v3067
      %3365 = vmatpush.bf16.msra.mxu0 %v3066
      %3366 = vmatmul.bf16.gmra.mxu0 %v3356
      %v3367 = vpop.f32.mrf.mxu0
      %v3368 = vadd.f32 0.0, %v3367
      %v3369 = vpop.f32.mrf.mxu0
      %3370 = vdwg.mxu0
      %v3371 = vmax.f32 %v3352, %v3368
      %3372 = vst.msk [vmem:[#allocation4 + $0x28] sm:$0x3] %vm3219, %v3371
      %v3373 = vld [vmem:[#allocation4 + $0x7] sm:$0xff]
      %v3374 = vld [vmem:[#allocation4 + $0xf] sm:$0xff]
      %v3375 = vld [vmem:[#allocation4 + $0x17] sm:$0x3]
      %v3376 = vpack.c.bf16 %v3374, %v3373
      %v3377 = vpack.c.bf16 %v3375, %v3375
      %v3378 = vld [vmem:[%s9] sm:$0xf]
      %v3379 = vld [vmem:[%s9 + $0x4] sm:$0xf]
      %v3380 = vld [vmem:[%s9 + $0x8] sm:$0xf]
      %v3381 = vld [vmem:[%s9 + $0xc] sm:$0xf]
      %v3382 = vld [vmem:[%s9 + $0x10] sm:$0xf]
      %v3383 = vld [vmem:[%s9 + $0x14] sm:$0xf]
      %v3384 = vld [vmem:[%s9 + $0x18] sm:$0xf]
      %v3385 = vld [vmem:[%s9 + $0x1c] sm:$0xf]
      %v3386 = vld [vmem:[#allocation4 + $0x8] sm:$0xff]
      %v3387 = vld [vmem:[#allocation4 + $0x10] sm:$0xff]
      %v3388 = vld [vmem:[#allocation4 + $0x18] sm:$0x3]
      %v3389 = vpack.c.bf16 %v3387, %v3386
      %v3390 = vpack.c.bf16 %v3388, %v3388
      %s3391 = scalar_lea.vmem %s9, 32
      %v3392 = vld [vmem:[%s3391] sm:$0xf]
      %v3393 = vld [vmem:[%s3391 + $0x4] sm:$0xf]
      %v3394 = vld [vmem:[%s3391 + $0x8] sm:$0xf]
      %v3395 = vld [vmem:[%s3391 + $0xc] sm:$0xf]
      %v3396 = vld [vmem:[%s3391 + $0x10] sm:$0xf]
      %v3397 = vld [vmem:[%s3391 + $0x14] sm:$0xf]
      %v3398 = vld [vmem:[%s3391 + $0x18] sm:$0xf]
      %v3399 = vld [vmem:[%s3391 + $0x1c] sm:$0xf]
      %v3408 = vunpack.c.l.b16 %v3392
      %v3409 = vunpack.c.l.b16 %v3393
      %v3410 = vunpack.c.l.b16 %v3394
      %v3411 = vunpack.c.l.b16 %v3395
      %v3412 = vunpack.c.l.b16 %v3396
      %v3413 = vunpack.c.l.b16 %v3397
      %v3414 = vunpack.c.l.b16 %v3398
      %v3415 = vunpack.c.l.b16 %v3399
      %v3416 = vpack.c.b16 %v3409, %v3408
      %v3417 = vpack.c.b16 %v3411, %v3410
      %v3418 = vpack.c.b16 %v3413, %v3412
      %v3419 = vpack.c.b16 %v3415, %v3414
      %v3425 = vsel %vm895, %v3389, 0
      %v3428 = vsel %vm895, %v3390, 0
      %3430 = vmatpush.bf16.msra.mxu0 0
      %3431 = vmatpush.bf16.msra.mxu0 0
      %3432 = vmatpush.bf16.msra.mxu0 0
      %3433 = vmatpush.bf16.msra.mxu0 0
      %3434 = vmatpush.bf16.msra.mxu0 %v3419
      %3435 = vmatpush.bf16.msra.mxu0 %v3418
      %3436 = vmatpush.bf16.msra.mxu0 %v3417
      %3437 = vmatpush.bf16.msra.mxu0 %v3416
      %3438 = vmatmul.bf16.gmra.mxu0 %v3425
      %v3439 = vpop.f32.mrf.mxu0
      %v3440 = vadd.f32 0.0, %v3439
      %v3441 = vpop.f32.mrf.mxu0
      %3442 = vmatmul.bf16.gmra.mxu0 %v3428
      %v3443 = vpop.f32.mrf.mxu0
      %v3444 = vadd.f32 0.0, %v3443
      %v3445 = vpop.f32.mrf.mxu0
      %3446 = vdwg.mxu0
      %v3455 = vunpack.c.l.b16 %v3378
      %v3456 = vunpack.c.l.b16 %v3379
      %v3457 = vunpack.c.l.b16 %v3380
      %v3458 = vunpack.c.l.b16 %v3381
      %v3459 = vunpack.c.l.b16 %v3382
      %v3460 = vunpack.c.l.b16 %v3383
      %v3461 = vunpack.c.l.b16 %v3384
      %v3462 = vunpack.c.l.b16 %v3385
      %v3463 = vpack.c.b16 %v3456, %v3455
      %v3464 = vpack.c.b16 %v3458, %v3457
      %v3465 = vpack.c.b16 %v3460, %v3459
      %v3466 = vpack.c.b16 %v3462, %v3461
      %v3472 = vsel %vm895, %v3376, 0
      %v3475 = vsel %vm895, %v3377, 0
      %3477 = vmatpush.bf16.msra.mxu0 0
      %3478 = vmatpush.bf16.msra.mxu0 0
      %3479 = vmatpush.bf16.msra.mxu0 0
      %3480 = vmatpush.bf16.msra.mxu0 0
      %3481 = vmatpush.bf16.msra.mxu0 %v3466
      %3482 = vmatpush.bf16.msra.mxu0 %v3465
      %3483 = vmatpush.bf16.msra.mxu0 %v3464
      %3484 = vmatpush.bf16.msra.mxu0 %v3463
      %3485 = vmatmul.bf16.gmra.mxu0 %v3472
      %v3486 = vpop.f32.mrf.mxu0
      %v3487 = vadd.f32 %v3440, %v3486
      %v3488 = vpop.f32.mrf.mxu0
      %3489 = vmatmul.bf16.gmra.mxu0 %v3475
      %v3490 = vpop.f32.mrf.mxu0
      %v3491 = vadd.f32 %v3444, %v3490
      %v3492 = vpop.f32.mrf.mxu0
      %3493 = vdwg.mxu0
      %v3494 = vld [vmem:[#allocation4 + $0x9] sm:$0xff]
      %v3495 = vld [vmem:[#allocation4 + $0x11] sm:$0xff]
      %v3496 = vld [vmem:[#allocation4 + $0x19] sm:$0x3]
      %v3497 = vpack.c.bf16 %v3495, %v3494
      %v3498 = vpack.c.bf16 %v3496, %v3496
      %s3499 = scalar_lea.vmem %s9, 64
      %v3500 = vld [vmem:[%s3499] sm:$0xf]
      %v3501 = vld [vmem:[%s3499 + $0x4] sm:$0xf]
      %v3502 = vld [vmem:[%s3499 + $0x8] sm:$0xf]
      %v3503 = vld [vmem:[%s3499 + $0xc] sm:$0xf]
      %v3504 = vld [vmem:[%s3499 + $0x10] sm:$0xf]
      %v3505 = vld [vmem:[%s3499 + $0x14] sm:$0xf]
      %v3506 = vld [vmem:[%s3499 + $0x18] sm:$0xf]
      %v3507 = vld [vmem:[%s3499 + $0x1c] sm:$0xf]
      %v3516 = vunpack.c.l.b16 %v3500
      %v3517 = vunpack.c.l.b16 %v3501
      %v3518 = vunpack.c.l.b16 %v3502
      %v3519 = vunpack.c.l.b16 %v3503
      %v3520 = vunpack.c.l.b16 %v3504
      %v3521 = vunpack.c.l.b16 %v3505
      %v3522 = vunpack.c.l.b16 %v3506
      %v3523 = vunpack.c.l.b16 %v3507
      %v3524 = vpack.c.b16 %v3517, %v3516
      %v3525 = vpack.c.b16 %v3519, %v3518
      %v3526 = vpack.c.b16 %v3521, %v3520
      %v3527 = vpack.c.b16 %v3523, %v3522
      %v3533 = vsel %vm895, %v3497, 0
      %v3536 = vsel %vm895, %v3498, 0
      %3538 = vmatpush.bf16.msra.mxu0 0
      %3539 = vmatpush.bf16.msra.mxu0 0
      %3540 = vmatpush.bf16.msra.mxu0 0
      %3541 = vmatpush.bf16.msra.mxu0 0
      %3542 = vmatpush.bf16.msra.mxu0 %v3527
      %3543 = vmatpush.bf16.msra.mxu0 %v3526
      %3544 = vmatpush.bf16.msra.mxu0 %v3525
      %3545 = vmatpush.bf16.msra.mxu0 %v3524
      %3546 = vmatmul.bf16.gmra.mxu0 %v3533
      %v3547 = vpop.f32.mrf.mxu0
      %v3548 = vadd.f32 0.0, %v3547
      %v3549 = vpop.f32.mrf.mxu0
      %3550 = vmatmul.bf16.gmra.mxu0 %v3536
      %v3551 = vpop.f32.mrf.mxu0
      %v3552 = vadd.f32 0.0, %v3551
      %v3553 = vpop.f32.mrf.mxu0
      %3554 = vdwg.mxu0
      %v3555 = vadd.f32 %v3487, %v3548
      %v3556 = vadd.f32 %v3491, %v3552
      %v3557 = vld [vmem:[#allocation4 + $0x17] sm:$0xff]
      %v3558 = vld [vmem:[#allocation4 + $0x1f] sm:$0xff]
      %v3559 = vld [vmem:[#allocation4 + $0x27] sm:$0x3]
      %v3560 = vpack.c.bf16 %v3558, %v3557
      %v3561 = vpack.c.bf16 %v3559, %v3559
      %s3562 = scalar_lea.vmem %s9, 96
      %v3563 = vld [vmem:[%s3562] sm:$0xf]
      %v3564 = vld [vmem:[%s3562 + $0x4] sm:$0xf]
      %v3565 = vld [vmem:[%s3562 + $0x8] sm:$0xf]
      %v3566 = vld [vmem:[%s3562 + $0xc] sm:$0xf]
      %v3567 = vld [vmem:[%s3562 + $0x10] sm:$0xf]
      %v3568 = vld [vmem:[%s3562 + $0x14] sm:$0xf]
      %v3569 = vld [vmem:[%s3562 + $0x18] sm:$0xf]
      %v3570 = vld [vmem:[%s3562 + $0x1c] sm:$0xf]
      %v3579 = vunpack.c.l.b16 %v3563
      %v3580 = vunpack.c.l.b16 %v3564
      %v3581 = vunpack.c.l.b16 %v3565
      %v3582 = vunpack.c.l.b16 %v3566
      %v3583 = vunpack.c.l.b16 %v3567
      %v3584 = vunpack.c.l.b16 %v3568
      %v3585 = vunpack.c.l.b16 %v3569
      %v3586 = vunpack.c.l.b16 %v3570
      %v3587 = vpack.c.b16 %v3580, %v3579
      %v3588 = vpack.c.b16 %v3582, %v3581
      %v3589 = vpack.c.b16 %v3584, %v3583
      %v3590 = vpack.c.b16 %v3586, %v3585
      %v3596 = vsel %vm895, %v3560, 0
      %v3599 = vsel %vm895, %v3561, 0
      %3601 = vmatpush.bf16.msra.mxu0 0
      %3602 = vmatpush.bf16.msra.mxu0 0
      %3603 = vmatpush.bf16.msra.mxu0 0
      %3604 = vmatpush.bf16.msra.mxu0 0
      %3605 = vmatpush.bf16.msra.mxu0 %v3590
      %3606 = vmatpush.bf16.msra.mxu0 %v3589
      %3607 = vmatpush.bf16.msra.mxu0 %v3588
      %3608 = vmatpush.bf16.msra.mxu0 %v3587
      %3609 = vmatmul.bf16.gmra.mxu0 %v3596
      %v3610 = vpop.f32.mrf.mxu0
      %v3611 = vadd.f32 0.0, %v3610
      %v3612 = vpop.f32.mrf.mxu0
      %3613 = vmatmul.bf16.gmra.mxu0 %v3599
      %v3614 = vpop.f32.mrf.mxu0
      %v3615 = vadd.f32 0.0, %v3614
      %v3616 = vpop.f32.mrf.mxu0
      %3617 = vdwg.mxu0
      %v3618 = vadd.f32 %v3555, %v3611
      %v3619 = vadd.f32 %v3556, %v3615
      %v3620 = vld [vmem:[#allocation4 + $0x18] sm:$0xff]
      %v3621 = vld [vmem:[#allocation4 + $0x20] sm:$0xff]
      %v3622 = vld [vmem:[#allocation4 + $0x28] sm:$0x3]
      %v3623 = vpack.c.bf16 %v3621, %v3620
      %v3624 = vpack.c.bf16 %v3622, %v3622
      %s3625 = scalar_lea.vmem %s9, 128
      %v3626 = vld [vmem:[%s3625] sm:$0xf]
      %v3627 = vld [vmem:[%s3625 + $0x4] sm:$0xf]
      %v3628 = vld [vmem:[%s3625 + $0x8] sm:$0xf]
      %v3629 = vld [vmem:[%s3625 + $0xc] sm:$0xf]
      %v3630 = vld [vmem:[%s3625 + $0x10] sm:$0xf]
      %v3631 = vld [vmem:[%s3625 + $0x14] sm:$0xf]
      %v3632 = vld [vmem:[%s3625 + $0x18] sm:$0xf]
      %v3633 = vld [vmem:[%s3625 + $0x1c] sm:$0xf]
      %v3642 = vunpack.c.l.b16 %v3626
      %v3643 = vunpack.c.l.b16 %v3627
      %v3644 = vunpack.c.l.b16 %v3628
      %v3645 = vunpack.c.l.b16 %v3629
      %v3646 = vunpack.c.l.b16 %v3630
      %v3647 = vunpack.c.l.b16 %v3631
      %v3648 = vunpack.c.l.b16 %v3632
      %v3649 = vunpack.c.l.b16 %v3633
      %v3650 = vpack.c.b16 %v3643, %v3642
      %v3651 = vpack.c.b16 %v3645, %v3644
      %v3652 = vpack.c.b16 %v3647, %v3646
      %v3653 = vpack.c.b16 %v3649, %v3648
      %v3659 = vsel %vm895, %v3623, 0
      %v3662 = vsel %vm895, %v3624, 0
      %3664 = vmatpush.bf16.msra.mxu0 0
      %3665 = vmatpush.bf16.msra.mxu0 0
      %3666 = vmatpush.bf16.msra.mxu0 0
      %3667 = vmatpush.bf16.msra.mxu0 0
      %3668 = vmatpush.bf16.msra.mxu0 %v3653
      %3669 = vmatpush.bf16.msra.mxu0 %v3652
      %3670 = vmatpush.bf16.msra.mxu0 %v3651
      %3671 = vmatpush.bf16.msra.mxu0 %v3650
      %3672 = vmatmul.bf16.gmra.mxu0 %v3659
      %v3673 = vpop.f32.mrf.mxu0
      %v3674 = vadd.f32 0.0, %v3673
      %v3675 = vpop.f32.mrf.mxu0
      %3676 = vmatmul.bf16.gmra.mxu0 %v3662
      %v3677 = vpop.f32.mrf.mxu0
      %v3678 = vadd.f32 0.0, %v3677
      %v3679 = vpop.f32.mrf.mxu0
      %3680 = vdwg.mxu0
      %v3681 = vadd.f32 %v3618, %v3674
      %v3682 = vadd.f32 %v3619, %v3678
      %v3683 = vld [vmem:[#allocation4 + $0x19] sm:$0xff]
      %v3684 = vld [vmem:[#allocation4 + $0x21] sm:$0xff]
      %v3685 = vld [vmem:[#allocation4 + $0x29] sm:$0x3]
      %v3686 = vpack.c.bf16 %v3684, %v3683
      %v3687 = vpack.c.bf16 %v3685, %v3685
      %s3688 = scalar_lea.vmem %s9, 160
      %v3689 = vld [vmem:[%s3688] sm:$0xf]
      %v3690 = vld [vmem:[%s3688 + $0x4] sm:$0xf]
      %v3691 = vld [vmem:[%s3688 + $0x8] sm:$0xf]
      %v3692 = vld [vmem:[%s3688 + $0xc] sm:$0xf]
      %v3693 = vld [vmem:[%s3688 + $0x10] sm:$0xf]
      %v3694 = vld [vmem:[%s3688 + $0x14] sm:$0xf]
      %v3695 = vld [vmem:[%s3688 + $0x18] sm:$0xf]
      %v3696 = vld [vmem:[%s3688 + $0x1c] sm:$0xf]
      %v3705 = vunpack.c.l.b16 %v3689
      %v3706 = vunpack.c.l.b16 %v3690
      %v3707 = vunpack.c.l.b16 %v3691
      %v3708 = vunpack.c.l.b16 %v3692
      %v3709 = vunpack.c.l.b16 %v3693
      %v3710 = vunpack.c.l.b16 %v3694
      %v3711 = vunpack.c.l.b16 %v3695
      %v3712 = vunpack.c.l.b16 %v3696
      %v3713 = vpack.c.b16 %v3706, %v3705
      %v3714 = vpack.c.b16 %v3708, %v3707
      %v3715 = vpack.c.b16 %v3710, %v3709
      %v3716 = vpack.c.b16 %v3712, %v3711
      %v3722 = vsel %vm895, %v3686, 0
      %v3725 = vsel %vm895, %v3687, 0
      %3727 = vmatpush.bf16.msra.mxu0 0
      %3728 = vmatpush.bf16.msra.mxu0 0
      %3729 = vmatpush.bf16.msra.mxu0 0
      %3730 = vmatpush.bf16.msra.mxu0 0
      %3731 = vmatpush.bf16.msra.mxu0 %v3716
      %3732 = vmatpush.bf16.msra.mxu0 %v3715
      %3733 = vmatpush.bf16.msra.mxu0 %v3714
      %3734 = vmatpush.bf16.msra.mxu0 %v3713
      %3735 = vmatmul.bf16.gmra.mxu0 %v3722
      %v3736 = vpop.f32.mrf.mxu0
      %v3737 = vadd.f32 0.0, %v3736
      %v3738 = vpop.f32.mrf.mxu0
      %3739 = vmatmul.bf16.gmra.mxu0 %v3725
      %v3740 = vpop.f32.mrf.mxu0
      %v3741 = vadd.f32 0.0, %v3740
      %v3742 = vpop.f32.mrf.mxu0
      %3743 = vdwg.mxu0
      %v3744 = vadd.f32 %v3681, %v3737
      %v3745 = vadd.f32 %v3682, %v3741
      %v3746 = vld [vmem:[#allocation4 + $0x27] sm:$0xff]
      %v3747 = vld [vmem:[#allocation4 + $0x2f] sm:$0xff]
      %v3748 = vld [vmem:[#allocation4 + $0x37] sm:$0x3]
      %v3749 = vpack.c.bf16 %v3747, %v3746
      %v3750 = vpack.c.bf16 %v3748, %v3748
      %s3751 = scalar_lea.vmem %s9, 192
      %v3752 = vld [vmem:[%s3751] sm:$0xf]
      %v3753 = vld [vmem:[%s3751 + $0x4] sm:$0xf]
      %v3754 = vld [vmem:[%s3751 + $0x8] sm:$0xf]
      %v3755 = vld [vmem:[%s3751 + $0xc] sm:$0xf]
      %v3756 = vld [vmem:[%s3751 + $0x10] sm:$0xf]
      %v3757 = vld [vmem:[%s3751 + $0x14] sm:$0xf]
      %v3758 = vld [vmem:[%s3751 + $0x18] sm:$0xf]
      %v3759 = vld [vmem:[%s3751 + $0x1c] sm:$0xf]
      %v3768 = vunpack.c.l.b16 %v3752
      %v3769 = vunpack.c.l.b16 %v3753
      %v3770 = vunpack.c.l.b16 %v3754
      %v3771 = vunpack.c.l.b16 %v3755
      %v3772 = vunpack.c.l.b16 %v3756
      %v3773 = vunpack.c.l.b16 %v3757
      %v3774 = vunpack.c.l.b16 %v3758
      %v3775 = vunpack.c.l.b16 %v3759
      %v3776 = vpack.c.b16 %v3769, %v3768
      %v3777 = vpack.c.b16 %v3771, %v3770
      %v3778 = vpack.c.b16 %v3773, %v3772
      %v3779 = vpack.c.b16 %v3775, %v3774
      %v3785 = vsel %vm895, %v3749, 0
      %v3788 = vsel %vm895, %v3750, 0
      %3790 = vmatpush.bf16.msra.mxu0 0
      %3791 = vmatpush.bf16.msra.mxu0 0
      %3792 = vmatpush.bf16.msra.mxu0 0
      %3793 = vmatpush.bf16.msra.mxu0 0
      %3794 = vmatpush.bf16.msra.mxu0 %v3779
      %3795 = vmatpush.bf16.msra.mxu0 %v3778
      %3796 = vmatpush.bf16.msra.mxu0 %v3777
      %3797 = vmatpush.bf16.msra.mxu0 %v3776
      %3798 = vmatmul.bf16.gmra.mxu0 %v3785
      %v3799 = vpop.f32.mrf.mxu0
      %v3800 = vadd.f32 0.0, %v3799
      %v3801 = vpop.f32.mrf.mxu0
      %3802 = vmatmul.bf16.gmra.mxu0 %v3788
      %v3803 = vpop.f32.mrf.mxu0
      %v3804 = vadd.f32 0.0, %v3803
      %v3805 = vpop.f32.mrf.mxu0
      %3806 = vdwg.mxu0
      %v3807 = vadd.f32 %v3744, %v3800
      %v3808 = vadd.f32 %v3745, %v3804
      %v3809 = vld [vmem:[#allocation4 + $0x28] sm:$0xff]
      %v3810 = vld [vmem:[#allocation4 + $0x30] sm:$0xff]
      %v3811 = vld [vmem:[#allocation4 + $0x38] sm:$0x3]
      %v3812 = vpack.c.bf16 %v3810, %v3809
      %v3813 = vpack.c.bf16 %v3811, %v3811
      %s3814 = scalar_lea.vmem %s9, 224
      %v3815 = vld [vmem:[%s3814] sm:$0xf]
      %v3816 = vld [vmem:[%s3814 + $0x4] sm:$0xf]
      %v3817 = vld [vmem:[%s3814 + $0x8] sm:$0xf]
      %v3818 = vld [vmem:[%s3814 + $0xc] sm:$0xf]
      %v3819 = vld [vmem:[%s3814 + $0x10] sm:$0xf]
      %v3820 = vld [vmem:[%s3814 + $0x14] sm:$0xf]
      %v3821 = vld [vmem:[%s3814 + $0x18] sm:$0xf]
      %v3822 = vld [vmem:[%s3814 + $0x1c] sm:$0xf]
      %v3831 = vunpack.c.l.b16 %v3815
      %v3832 = vunpack.c.l.b16 %v3816
      %v3833 = vunpack.c.l.b16 %v3817
      %v3834 = vunpack.c.l.b16 %v3818
      %v3835 = vunpack.c.l.b16 %v3819
      %v3836 = vunpack.c.l.b16 %v3820
      %v3837 = vunpack.c.l.b16 %v3821
      %v3838 = vunpack.c.l.b16 %v3822
      %v3839 = vpack.c.b16 %v3832, %v3831
      %v3840 = vpack.c.b16 %v3834, %v3833
      %v3841 = vpack.c.b16 %v3836, %v3835
      %v3842 = vpack.c.b16 %v3838, %v3837
      %v3848 = vsel %vm895, %v3812, 0
      %v3851 = vsel %vm895, %v3813, 0
      %3853 = vmatpush.bf16.msra.mxu0 0
      %3854 = vmatpush.bf16.msra.mxu0 0
      %3855 = vmatpush.bf16.msra.mxu0 0
      %3856 = vmatpush.bf16.msra.mxu0 0
      %3857 = vmatpush.bf16.msra.mxu0 %v3842
      %3858 = vmatpush.bf16.msra.mxu0 %v3841
      %3859 = vmatpush.bf16.msra.mxu0 %v3840
      %3860 = vmatpush.bf16.msra.mxu0 %v3839
      %3861 = vmatmul.bf16.gmra.mxu0 %v3848
      %v3862 = vpop.f32.mrf.mxu0
      %v3863 = vadd.f32 0.0, %v3862
      %v3864 = vpop.f32.mrf.mxu0
      %3865 = vmatmul.bf16.gmra.mxu0 %v3851
      %v3866 = vpop.f32.mrf.mxu0
      %v3867 = vadd.f32 0.0, %v3866
      %v3868 = vpop.f32.mrf.mxu0
      %3869 = vdwg.mxu0
      %v3870 = vadd.f32 %v3807, %v3863
      %v3871 = vadd.f32 %v3808, %v3867
      %v3872 = vld [vmem:[#allocation4 + $0x29] sm:$0xff]
      %v3873 = vld [vmem:[#allocation4 + $0x31] sm:$0xff]
      %v3874 = vld [vmem:[#allocation4 + $0x39] sm:$0x3]
      %v3875 = vpack.c.bf16 %v3873, %v3872
      %v3876 = vpack.c.bf16 %v3874, %v3874
      %s3877 = scalar_lea.vmem %s9, 256
      %v3878 = vld [vmem:[%s3877] sm:$0xf]
      %v3879 = vld [vmem:[%s3877 + $0x4] sm:$0xf]
      %v3880 = vld [vmem:[%s3877 + $0x8] sm:$0xf]
      %v3881 = vld [vmem:[%s3877 + $0xc] sm:$0xf]
      %v3882 = vld [vmem:[%s3877 + $0x10] sm:$0xf]
      %v3883 = vld [vmem:[%s3877 + $0x14] sm:$0xf]
      %v3884 = vld [vmem:[%s3877 + $0x18] sm:$0xf]
      %v3885 = vld [vmem:[%s3877 + $0x1c] sm:$0xf]
      %v3894 = vunpack.c.l.b16 %v3878
      %v3895 = vunpack.c.l.b16 %v3879
      %v3896 = vunpack.c.l.b16 %v3880
      %v3897 = vunpack.c.l.b16 %v3881
      %v3898 = vunpack.c.l.b16 %v3882
      %v3899 = vunpack.c.l.b16 %v3883
      %v3900 = vunpack.c.l.b16 %v3884
      %v3901 = vunpack.c.l.b16 %v3885
      %v3902 = vpack.c.b16 %v3895, %v3894
      %v3903 = vpack.c.b16 %v3897, %v3896
      %v3904 = vpack.c.b16 %v3899, %v3898
      %v3905 = vpack.c.b16 %v3901, %v3900
      %v3911 = vsel %vm895, %v3875, 0
      %v3914 = vsel %vm895, %v3876, 0
      %3916 = vmatpush.bf16.msra.mxu0 0
      %3917 = vmatpush.bf16.msra.mxu0 0
      %3918 = vmatpush.bf16.msra.mxu0 0
      %3919 = vmatpush.bf16.msra.mxu0 0
      %3920 = vmatpush.bf16.msra.mxu0 %v3905
      %3921 = vmatpush.bf16.msra.mxu0 %v3904
      %3922 = vmatpush.bf16.msra.mxu0 %v3903
      %3923 = vmatpush.bf16.msra.mxu0 %v3902
      %3924 = vmatmul.bf16.gmra.mxu0 %v3911
      %v3925 = vpop.f32.mrf.mxu0
      %v3926 = vadd.f32 0.0, %v3925
      %v3927 = vpop.f32.mrf.mxu0
      %3928 = vmatmul.bf16.gmra.mxu0 %v3914
      %v3929 = vpop.f32.mrf.mxu0
      %v3930 = vadd.f32 0.0, %v3929
      %v3931 = vpop.f32.mrf.mxu0
      %3932 = vdwg.mxu0
      %v3933 = vadd.f32 %v3870, %v3926
      %v3934 = vadd.f32 %v3871, %v3930
      %v3935 = vld [vmem:[%s10] sm:$0x1]
      %v3937 = vperm.slane %v3935, 0
      %v3939 = vmul.f32 %v3933, %v3937
      %v3940 = vmul.f32 %v3934, %v3937
      %v3941 = vld [vmem:[%s11] sm:$0x1]
      %v3943 = vperm.slane %v3941, 0
      %v3945 = vadd.f32 %v3939, %v3943
      %v3946 = vadd.f32 %v3940, %v3943
      %v3947 = vmax.f32 %v3945, 0.0
      %v3948 = vmax.f32 %v3946, 0.0
      %3949 = vst [vmem:[#allocation5 + $0x18] sm:$0x3] %v3947
      %3950 = vst [vmem:[#allocation5 + $0x28] sm:$0x3] %v3948
      %v3951 = vld [vmem:[#allocation5 + $0x7] sm:$0xff]
      %v3952 = vld [vmem:[#allocation5 + $0xf] sm:$0xff]
      %v3953 = vld [vmem:[#allocation5 + $0x17] sm:$0x3]
      %v3954 = vpack.c.bf16 %v3952, %v3951
      %v3955 = vpack.c.bf16 %v3953, %v3953
      %v3956 = vld [vmem:[%s12] sm:$0xf]
      %v3957 = vld [vmem:[%s12 + $0x4] sm:$0xf]
      %v3958 = vld [vmem:[%s12 + $0x8] sm:$0xf]
      %v3959 = vld [vmem:[%s12 + $0xc] sm:$0xf]
      %v3960 = vld [vmem:[%s12 + $0x10] sm:$0xf]
      %v3961 = vld [vmem:[%s12 + $0x14] sm:$0xf]
      %v3962 = vld [vmem:[%s12 + $0x18] sm:$0xf]
      %v3963 = vld [vmem:[%s12 + $0x1c] sm:$0xf]
      %v3964 = vld [vmem:[%s12 + $0x20] sm:$0xf]
      %v3965 = vld [vmem:[%s12 + $0x24] sm:$0xf]
      %v3966 = vld [vmem:[%s12 + $0x28] sm:$0xf]
      %v3967 = vld [vmem:[%s12 + $0x2c] sm:$0xf]
      %v3968 = vld [vmem:[%s12 + $0x30] sm:$0xf]
      %v3969 = vld [vmem:[%s12 + $0x34] sm:$0xf]
      %v3970 = vld [vmem:[%s12 + $0x38] sm:$0xf]
      %v3971 = vld [vmem:[%s12 + $0x3c] sm:$0xf]
      %v3972 = vld [vmem:[#allocation5 + $0x8] sm:$0xff]
      %v3973 = vld [vmem:[#allocation5 + $0x10] sm:$0xff]
      %v3974 = vld [vmem:[#allocation5 + $0x18] sm:$0x3]
      %v3975 = vpack.c.bf16 %v3973, %v3972
      %v3976 = vpack.c.bf16 %v3974, %v3974
      %s3977 = scalar_lea.vmem %s12, 64
      %v3978 = vld [vmem:[%s3977] sm:$0xf]
      %v3979 = vld [vmem:[%s3977 + $0x4] sm:$0xf]
      %v3980 = vld [vmem:[%s3977 + $0x8] sm:$0xf]
      %v3981 = vld [vmem:[%s3977 + $0xc] sm:$0xf]
      %v3982 = vld [vmem:[%s3977 + $0x10] sm:$0xf]
      %v3983 = vld [vmem:[%s3977 + $0x14] sm:$0xf]
      %v3984 = vld [vmem:[%s3977 + $0x18] sm:$0xf]
      %v3985 = vld [vmem:[%s3977 + $0x1c] sm:$0xf]
      %v3986 = vld [vmem:[%s3977 + $0x20] sm:$0xf]
      %v3987 = vld [vmem:[%s3977 + $0x24] sm:$0xf]
      %v3988 = vld [vmem:[%s3977 + $0x28] sm:$0xf]
      %v3989 = vld [vmem:[%s3977 + $0x2c] sm:$0xf]
      %v3990 = vld [vmem:[%s3977 + $0x30] sm:$0xf]
      %v3991 = vld [vmem:[%s3977 + $0x34] sm:$0xf]
      %v3992 = vld [vmem:[%s3977 + $0x38] sm:$0xf]
      %v3993 = vld [vmem:[%s3977 + $0x3c] sm:$0xf]
      %v4010 = vunpack.c.l.b16 %v3978
      %v4011 = vunpack.c.l.b16 %v3979
      %v4012 = vunpack.c.l.b16 %v3980
      %v4013 = vunpack.c.l.b16 %v3981
      %v4014 = vunpack.c.l.b16 %v3982
      %v4015 = vunpack.c.l.b16 %v3983
      %v4016 = vunpack.c.l.b16 %v3984
      %v4017 = vunpack.c.l.b16 %v3985
      %v4018 = vunpack.c.l.b16 %v3986
      %v4019 = vunpack.c.l.b16 %v3987
      %v4020 = vunpack.c.l.b16 %v3988
      %v4021 = vunpack.c.l.b16 %v3989
      %v4022 = vunpack.c.l.b16 %v3990
      %v4023 = vunpack.c.l.b16 %v3991
      %v4024 = vunpack.c.l.b16 %v3992
      %v4025 = vunpack.c.l.b16 %v3993
      %v4026 = vpack.c.b16 %v4011, %v4010
      %v4027 = vpack.c.b16 %v4013, %v4012
      %v4028 = vpack.c.b16 %v4015, %v4014
      %v4029 = vpack.c.b16 %v4017, %v4016
      %v4030 = vpack.c.b16 %v4019, %v4018
      %v4031 = vpack.c.b16 %v4021, %v4020
      %v4032 = vpack.c.b16 %v4023, %v4022
      %v4033 = vpack.c.b16 %v4025, %v4024
      %4042 = vmatpush.bf16.msra.mxu0 %v4033
      %4043 = vmatpush.bf16.msra.mxu0 %v4032
      %4044 = vmatpush.bf16.msra.mxu0 %v4031
      %4045 = vmatpush.bf16.msra.mxu0 %v4030
      %4046 = vmatpush.bf16.msra.mxu0 %v4029
      %4047 = vmatpush.bf16.msra.mxu0 %v4028
      %4048 = vmatpush.bf16.msra.mxu0 %v4027
      %4049 = vmatpush.bf16.msra.mxu0 %v4026
      %4050 = vmatmul.bf16.gmra.mxu0 %v3975
      %v4051 = vpop.f32.mrf.mxu0
      %v4052 = vadd.f32 0.0, %v4051
      %v4053 = vpop.f32.mrf.mxu0
      %4054 = vmatmul.bf16.gmra.mxu0 %v3976
      %v4055 = vpop.f32.mrf.mxu0
      %v4056 = vadd.f32 0.0, %v4055
      %v4057 = vpop.f32.mrf.mxu0
      %4058 = vdwg.mxu0
      %v4075 = vunpack.c.l.b16 %v3956
      %v4076 = vunpack.c.l.b16 %v3957
      %v4077 = vunpack.c.l.b16 %v3958
      %v4078 = vunpack.c.l.b16 %v3959
      %v4079 = vunpack.c.l.b16 %v3960
      %v4080 = vunpack.c.l.b16 %v3961
      %v4081 = vunpack.c.l.b16 %v3962
      %v4082 = vunpack.c.l.b16 %v3963
      %v4083 = vunpack.c.l.b16 %v3964
      %v4084 = vunpack.c.l.b16 %v3965
      %v4085 = vunpack.c.l.b16 %v3966
      %v4086 = vunpack.c.l.b16 %v3967
      %v4087 = vunpack.c.l.b16 %v3968
      %v4088 = vunpack.c.l.b16 %v3969
      %v4089 = vunpack.c.l.b16 %v3970
      %v4090 = vunpack.c.l.b16 %v3971
      %v4091 = vpack.c.b16 %v4076, %v4075
      %v4092 = vpack.c.b16 %v4078, %v4077
      %v4093 = vpack.c.b16 %v4080, %v4079
      %v4094 = vpack.c.b16 %v4082, %v4081
      %v4095 = vpack.c.b16 %v4084, %v4083
      %v4096 = vpack.c.b16 %v4086, %v4085
      %v4097 = vpack.c.b16 %v4088, %v4087
      %v4098 = vpack.c.b16 %v4090, %v4089
      %4107 = vmatpush.bf16.msra.mxu0 %v4098
      %4108 = vmatpush.bf16.msra.mxu0 %v4097
      %4109 = vmatpush.bf16.msra.mxu0 %v4096
      %4110 = vmatpush.bf16.msra.mxu0 %v4095
      %4111 = vmatpush.bf16.msra.mxu0 %v4094
      %4112 = vmatpush.bf16.msra.mxu0 %v4093
      %4113 = vmatpush.bf16.msra.mxu0 %v4092
      %4114 = vmatpush.bf16.msra.mxu0 %v4091
      %4115 = vmatmul.bf16.gmra.mxu0 %v3954
      %v4116 = vpop.f32.mrf.mxu0
      %v4117 = vadd.f32 %v4052, %v4116
      %v4118 = vpop.f32.mrf.mxu0
      %4119 = vmatmul.bf16.gmra.mxu0 %v3955
      %v4120 = vpop.f32.mrf.mxu0
      %v4121 = vadd.f32 %v4056, %v4120
      %v4122 = vpop.f32.mrf.mxu0
      %4123 = vdwg.mxu0
      %v4124 = vld [vmem:[#allocation5 + $0x9] sm:$0xff]
      %v4125 = vld [vmem:[#allocation5 + $0x11] sm:$0xff]
      %v4126 = vld [vmem:[#allocation5 + $0x19] sm:$0x3]
      %v4127 = vpack.c.bf16 %v4125, %v4124
      %v4128 = vpack.c.bf16 %v4126, %v4126
      %s4129 = scalar_lea.vmem %s12, 128
      %v4130 = vld [vmem:[%s4129] sm:$0xf]
      %v4131 = vld [vmem:[%s4129 + $0x4] sm:$0xf]
      %v4132 = vld [vmem:[%s4129 + $0x8] sm:$0xf]
      %v4133 = vld [vmem:[%s4129 + $0xc] sm:$0xf]
      %v4134 = vld [vmem:[%s4129 + $0x10] sm:$0xf]
      %v4135 = vld [vmem:[%s4129 + $0x14] sm:$0xf]
      %v4136 = vld [vmem:[%s4129 + $0x18] sm:$0xf]
      %v4137 = vld [vmem:[%s4129 + $0x1c] sm:$0xf]
      %v4138 = vld [vmem:[%s4129 + $0x20] sm:$0xf]
      %v4139 = vld [vmem:[%s4129 + $0x24] sm:$0xf]
      %v4140 = vld [vmem:[%s4129 + $0x28] sm:$0xf]
      %v4141 = vld [vmem:[%s4129 + $0x2c] sm:$0xf]
      %v4142 = vld [vmem:[%s4129 + $0x30] sm:$0xf]
      %v4143 = vld [vmem:[%s4129 + $0x34] sm:$0xf]
      %v4144 = vld [vmem:[%s4129 + $0x38] sm:$0xf]
      %v4145 = vld [vmem:[%s4129 + $0x3c] sm:$0xf]
      %v4162 = vunpack.c.l.b16 %v4130
      %v4163 = vunpack.c.l.b16 %v4131
      %v4164 = vunpack.c.l.b16 %v4132
      %v4165 = vunpack.c.l.b16 %v4133
      %v4166 = vunpack.c.l.b16 %v4134
      %v4167 = vunpack.c.l.b16 %v4135
      %v4168 = vunpack.c.l.b16 %v4136
      %v4169 = vunpack.c.l.b16 %v4137
      %v4170 = vunpack.c.l.b16 %v4138
      %v4171 = vunpack.c.l.b16 %v4139
      %v4172 = vunpack.c.l.b16 %v4140
      %v4173 = vunpack.c.l.b16 %v4141
      %v4174 = vunpack.c.l.b16 %v4142
      %v4175 = vunpack.c.l.b16 %v4143
      %v4176 = vunpack.c.l.b16 %v4144
      %v4177 = vunpack.c.l.b16 %v4145
      %v4178 = vpack.c.b16 %v4163, %v4162
      %v4179 = vpack.c.b16 %v4165, %v4164
      %v4180 = vpack.c.b16 %v4167, %v4166
      %v4181 = vpack.c.b16 %v4169, %v4168
      %v4182 = vpack.c.b16 %v4171, %v4170
      %v4183 = vpack.c.b16 %v4173, %v4172
      %v4184 = vpack.c.b16 %v4175, %v4174
      %v4185 = vpack.c.b16 %v4177, %v4176
      %4194 = vmatpush.bf16.msra.mxu0 %v4185
      %4195 = vmatpush.bf16.msra.mxu0 %v4184
      %4196 = vmatpush.bf16.msra.mxu0 %v4183
      %4197 = vmatpush.bf16.msra.mxu0 %v4182
      %4198 = vmatpush.bf16.msra.mxu0 %v4181
      %4199 = vmatpush.bf16.msra.mxu0 %v4180
      %4200 = vmatpush.bf16.msra.mxu0 %v4179
      %4201 = vmatpush.bf16.msra.mxu0 %v4178
      %4202 = vmatmul.bf16.gmra.mxu0 %v4127
      %v4203 = vpop.f32.mrf.mxu0
      %v4204 = vadd.f32 0.0, %v4203
      %v4205 = vpop.f32.mrf.mxu0
      %4206 = vmatmul.bf16.gmra.mxu0 %v4128
      %v4207 = vpop.f32.mrf.mxu0
      %v4208 = vadd.f32 0.0, %v4207
      %v4209 = vpop.f32.mrf.mxu0
      %4210 = vdwg.mxu0
      %v4211 = vadd.f32 %v4117, %v4204
      %v4212 = vadd.f32 %v4121, %v4208
      %v4213 = vld [vmem:[#allocation5 + $0x17] sm:$0xff]
      %v4214 = vld [vmem:[#allocation5 + $0x1f] sm:$0xff]
      %v4215 = vld [vmem:[#allocation5 + $0x27] sm:$0x3]
      %v4216 = vpack.c.bf16 %v4214, %v4213
      %v4217 = vpack.c.bf16 %v4215, %v4215
      %s4218 = scalar_lea.vmem %s12, 192
      %v4219 = vld [vmem:[%s4218] sm:$0xf]
      %v4220 = vld [vmem:[%s4218 + $0x4] sm:$0xf]
      %v4221 = vld [vmem:[%s4218 + $0x8] sm:$0xf]
      %v4222 = vld [vmem:[%s4218 + $0xc] sm:$0xf]
      %v4223 = vld [vmem:[%s4218 + $0x10] sm:$0xf]
      %v4224 = vld [vmem:[%s4218 + $0x14] sm:$0xf]
      %v4225 = vld [vmem:[%s4218 + $0x18] sm:$0xf]
      %v4226 = vld [vmem:[%s4218 + $0x1c] sm:$0xf]
      %v4227 = vld [vmem:[%s4218 + $0x20] sm:$0xf]
      %v4228 = vld [vmem:[%s4218 + $0x24] sm:$0xf]
      %v4229 = vld [vmem:[%s4218 + $0x28] sm:$0xf]
      %v4230 = vld [vmem:[%s4218 + $0x2c] sm:$0xf]
      %v4231 = vld [vmem:[%s4218 + $0x30] sm:$0xf]
      %v4232 = vld [vmem:[%s4218 + $0x34] sm:$0xf]
      %v4233 = vld [vmem:[%s4218 + $0x38] sm:$0xf]
      %v4234 = vld [vmem:[%s4218 + $0x3c] sm:$0xf]
      %v4251 = vunpack.c.l.b16 %v4219
      %v4252 = vunpack.c.l.b16 %v4220
      %v4253 = vunpack.c.l.b16 %v4221
      %v4254 = vunpack.c.l.b16 %v4222
      %v4255 = vunpack.c.l.b16 %v4223
      %v4256 = vunpack.c.l.b16 %v4224
      %v4257 = vunpack.c.l.b16 %v4225
      %v4258 = vunpack.c.l.b16 %v4226
      %v4259 = vunpack.c.l.b16 %v4227
      %v4260 = vunpack.c.l.b16 %v4228
      %v4261 = vunpack.c.l.b16 %v4229
      %v4262 = vunpack.c.l.b16 %v4230
      %v4263 = vunpack.c.l.b16 %v4231
      %v4264 = vunpack.c.l.b16 %v4232
      %v4265 = vunpack.c.l.b16 %v4233
      %v4266 = vunpack.c.l.b16 %v4234
      %v4267 = vpack.c.b16 %v4252, %v4251
      %v4268 = vpack.c.b16 %v4254, %v4253
      %v4269 = vpack.c.b16 %v4256, %v4255
      %v4270 = vpack.c.b16 %v4258, %v4257
      %v4271 = vpack.c.b16 %v4260, %v4259
      %v4272 = vpack.c.b16 %v4262, %v4261
      %v4273 = vpack.c.b16 %v4264, %v4263
      %v4274 = vpack.c.b16 %v4266, %v4265
      %4283 = vmatpush.bf16.msra.mxu0 %v4274
      %4284 = vmatpush.bf16.msra.mxu0 %v4273
      %4285 = vmatpush.bf16.msra.mxu0 %v4272
      %4286 = vmatpush.bf16.msra.mxu0 %v4271
      %4287 = vmatpush.bf16.msra.mxu0 %v4270
      %4288 = vmatpush.bf16.msra.mxu0 %v4269
      %4289 = vmatpush.bf16.msra.mxu0 %v4268
      %4290 = vmatpush.bf16.msra.mxu0 %v4267
      %4291 = vmatmul.bf16.gmra.mxu0 %v4216
      %v4292 = vpop.f32.mrf.mxu0
      %v4293 = vadd.f32 0.0, %v4292
      %v4294 = vpop.f32.mrf.mxu0
      %4295 = vmatmul.bf16.gmra.mxu0 %v4217
      %v4296 = vpop.f32.mrf.mxu0
      %v4297 = vadd.f32 0.0, %v4296
      %v4298 = vpop.f32.mrf.mxu0
      %4299 = vdwg.mxu0
      %v4300 = vadd.f32 %v4211, %v4293
      %v4301 = vadd.f32 %v4212, %v4297
      %v4302 = vld [vmem:[#allocation5 + $0x18] sm:$0xff]
      %v4303 = vld [vmem:[#allocation5 + $0x20] sm:$0xff]
      %v4304 = vld [vmem:[#allocation5 + $0x28] sm:$0x3]
      %v4305 = vpack.c.bf16 %v4303, %v4302
      %v4306 = vpack.c.bf16 %v4304, %v4304
      %s4307 = scalar_lea.vmem %s12, 256
      %v4308 = vld [vmem:[%s4307] sm:$0xf]
      %v4309 = vld [vmem:[%s4307 + $0x4] sm:$0xf]
      %v4310 = vld [vmem:[%s4307 + $0x8] sm:$0xf]
      %v4311 = vld [vmem:[%s4307 + $0xc] sm:$0xf]
      %v4312 = vld [vmem:[%s4307 + $0x10] sm:$0xf]
      %v4313 = vld [vmem:[%s4307 + $0x14] sm:$0xf]
      %v4314 = vld [vmem:[%s4307 + $0x18] sm:$0xf]
      %v4315 = vld [vmem:[%s4307 + $0x1c] sm:$0xf]
      %v4316 = vld [vmem:[%s4307 + $0x20] sm:$0xf]
      %v4317 = vld [vmem:[%s4307 + $0x24] sm:$0xf]
      %v4318 = vld [vmem:[%s4307 + $0x28] sm:$0xf]
      %v4319 = vld [vmem:[%s4307 + $0x2c] sm:$0xf]
      %v4320 = vld [vmem:[%s4307 + $0x30] sm:$0xf]
      %v4321 = vld [vmem:[%s4307 + $0x34] sm:$0xf]
      %v4322 = vld [vmem:[%s4307 + $0x38] sm:$0xf]
      %v4323 = vld [vmem:[%s4307 + $0x3c] sm:$0xf]
      %v4340 = vunpack.c.l.b16 %v4308
      %v4341 = vunpack.c.l.b16 %v4309
      %v4342 = vunpack.c.l.b16 %v4310
      %v4343 = vunpack.c.l.b16 %v4311
      %v4344 = vunpack.c.l.b16 %v4312
      %v4345 = vunpack.c.l.b16 %v4313
      %v4346 = vunpack.c.l.b16 %v4314
      %v4347 = vunpack.c.l.b16 %v4315
      %v4348 = vunpack.c.l.b16 %v4316
      %v4349 = vunpack.c.l.b16 %v4317
      %v4350 = vunpack.c.l.b16 %v4318
      %v4351 = vunpack.c.l.b16 %v4319
      %v4352 = vunpack.c.l.b16 %v4320
      %v4353 = vunpack.c.l.b16 %v4321
      %v4354 = vunpack.c.l.b16 %v4322
      %v4355 = vunpack.c.l.b16 %v4323
      %v4356 = vpack.c.b16 %v4341, %v4340
      %v4357 = vpack.c.b16 %v4343, %v4342
      %v4358 = vpack.c.b16 %v4345, %v4344
      %v4359 = vpack.c.b16 %v4347, %v4346
      %v4360 = vpack.c.b16 %v4349, %v4348
      %v4361 = vpack.c.b16 %v4351, %v4350
      %v4362 = vpack.c.b16 %v4353, %v4352
      %v4363 = vpack.c.b16 %v4355, %v4354
      %4372 = vmatpush.bf16.msra.mxu0 %v4363
      %4373 = vmatpush.bf16.msra.mxu0 %v4362
      %4374 = vmatpush.bf16.msra.mxu0 %v4361
      %4375 = vmatpush.bf16.msra.mxu0 %v4360
      %4376 = vmatpush.bf16.msra.mxu0 %v4359
      %4377 = vmatpush.bf16.msra.mxu0 %v4358
      %4378 = vmatpush.bf16.msra.mxu0 %v4357
      %4379 = vmatpush.bf16.msra.mxu0 %v4356
      %4380 = vmatmul.bf16.gmra.mxu0 %v4305
      %v4381 = vpop.f32.mrf.mxu0
      %v4382 = vadd.f32 0.0, %v4381
      %v4383 = vpop.f32.mrf.mxu0
      %4384 = vmatmul.bf16.gmra.mxu0 %v4306
      %v4385 = vpop.f32.mrf.mxu0
      %v4386 = vadd.f32 0.0, %v4385
      %v4387 = vpop.f32.mrf.mxu0
      %4388 = vdwg.mxu0
      %v4389 = vadd.f32 %v4300, %v4382
      %v4390 = vadd.f32 %v4301, %v4386
      %v4391 = vld [vmem:[#allocation5 + $0x19] sm:$0xff]
      %v4392 = vld [vmem:[#allocation5 + $0x21] sm:$0xff]
      %v4393 = vld [vmem:[#allocation5 + $0x29] sm:$0x3]
      %v4394 = vpack.c.bf16 %v4392, %v4391
      %v4395 = vpack.c.bf16 %v4393, %v4393
      %s4396 = scalar_lea.vmem %s12, 320
      %v4397 = vld [vmem:[%s4396] sm:$0xf]
      %v4398 = vld [vmem:[%s4396 + $0x4] sm:$0xf]
      %v4399 = vld [vmem:[%s4396 + $0x8] sm:$0xf]
      %v4400 = vld [vmem:[%s4396 + $0xc] sm:$0xf]
      %v4401 = vld [vmem:[%s4396 + $0x10] sm:$0xf]
      %v4402 = vld [vmem:[%s4396 + $0x14] sm:$0xf]
      %v4403 = vld [vmem:[%s4396 + $0x18] sm:$0xf]
      %v4404 = vld [vmem:[%s4396 + $0x1c] sm:$0xf]
      %v4405 = vld [vmem:[%s4396 + $0x20] sm:$0xf]
      %v4406 = vld [vmem:[%s4396 + $0x24] sm:$0xf]
      %v4407 = vld [vmem:[%s4396 + $0x28] sm:$0xf]
      %v4408 = vld [vmem:[%s4396 + $0x2c] sm:$0xf]
      %v4409 = vld [vmem:[%s4396 + $0x30] sm:$0xf]
      %v4410 = vld [vmem:[%s4396 + $0x34] sm:$0xf]
      %v4411 = vld [vmem:[%s4396 + $0x38] sm:$0xf]
      %v4412 = vld [vmem:[%s4396 + $0x3c] sm:$0xf]
      %v4429 = vunpack.c.l.b16 %v4397
      %v4430 = vunpack.c.l.b16 %v4398
      %v4431 = vunpack.c.l.b16 %v4399
      %v4432 = vunpack.c.l.b16 %v4400
      %v4433 = vunpack.c.l.b16 %v4401
      %v4434 = vunpack.c.l.b16 %v4402
      %v4435 = vunpack.c.l.b16 %v4403
      %v4436 = vunpack.c.l.b16 %v4404
      %v4437 = vunpack.c.l.b16 %v4405
      %v4438 = vunpack.c.l.b16 %v4406
      %v4439 = vunpack.c.l.b16 %v4407
      %v4440 = vunpack.c.l.b16 %v4408
      %v4441 = vunpack.c.l.b16 %v4409
      %v4442 = vunpack.c.l.b16 %v4410
      %v4443 = vunpack.c.l.b16 %v4411
      %v4444 = vunpack.c.l.b16 %v4412
      %v4445 = vpack.c.b16 %v4430, %v4429
      %v4446 = vpack.c.b16 %v4432, %v4431
      %v4447 = vpack.c.b16 %v4434, %v4433
      %v4448 = vpack.c.b16 %v4436, %v4435
      %v4449 = vpack.c.b16 %v4438, %v4437
      %v4450 = vpack.c.b16 %v4440, %v4439
      %v4451 = vpack.c.b16 %v4442, %v4441
      %v4452 = vpack.c.b16 %v4444, %v4443
      %4461 = vmatpush.bf16.msra.mxu0 %v4452
      %4462 = vmatpush.bf16.msra.mxu0 %v4451
      %4463 = vmatpush.bf16.msra.mxu0 %v4450
      %4464 = vmatpush.bf16.msra.mxu0 %v4449
      %4465 = vmatpush.bf16.msra.mxu0 %v4448
      %4466 = vmatpush.bf16.msra.mxu0 %v4447
      %4467 = vmatpush.bf16.msra.mxu0 %v4446
      %4468 = vmatpush.bf16.msra.mxu0 %v4445
      %4469 = vmatmul.bf16.gmra.mxu0 %v4394
      %v4470 = vpop.f32.mrf.mxu0
      %v4471 = vadd.f32 0.0, %v4470
      %v4472 = vpop.f32.mrf.mxu0
      %4473 = vmatmul.bf16.gmra.mxu0 %v4395
      %v4474 = vpop.f32.mrf.mxu0
      %v4475 = vadd.f32 0.0, %v4474
      %v4476 = vpop.f32.mrf.mxu0
      %4477 = vdwg.mxu0
      %v4478 = vadd.f32 %v4389, %v4471
      %v4479 = vadd.f32 %v4390, %v4475
      %v4480 = vld [vmem:[#allocation5 + $0x27] sm:$0xff]
      %v4481 = vld [vmem:[#allocation5 + $0x2f] sm:$0xff]
      %v4482 = vld [vmem:[#allocation5 + $0x37] sm:$0x3]
      %v4483 = vpack.c.bf16 %v4481, %v4480
      %v4484 = vpack.c.bf16 %v4482, %v4482
      %s4485 = scalar_lea.vmem %s12, 384
      %v4486 = vld [vmem:[%s4485] sm:$0xf]
      %v4487 = vld [vmem:[%s4485 + $0x4] sm:$0xf]
      %v4488 = vld [vmem:[%s4485 + $0x8] sm:$0xf]
      %v4489 = vld [vmem:[%s4485 + $0xc] sm:$0xf]
      %v4490 = vld [vmem:[%s4485 + $0x10] sm:$0xf]
      %v4491 = vld [vmem:[%s4485 + $0x14] sm:$0xf]
      %v4492 = vld [vmem:[%s4485 + $0x18] sm:$0xf]
      %v4493 = vld [vmem:[%s4485 + $0x1c] sm:$0xf]
      %v4494 = vld [vmem:[%s4485 + $0x20] sm:$0xf]
      %v4495 = vld [vmem:[%s4485 + $0x24] sm:$0xf]
      %v4496 = vld [vmem:[%s4485 + $0x28] sm:$0xf]
      %v4497 = vld [vmem:[%s4485 + $0x2c] sm:$0xf]
      %v4498 = vld [vmem:[%s4485 + $0x30] sm:$0xf]
      %v4499 = vld [vmem:[%s4485 + $0x34] sm:$0xf]
      %v4500 = vld [vmem:[%s4485 + $0x38] sm:$0xf]
      %v4501 = vld [vmem:[%s4485 + $0x3c] sm:$0xf]
      %v4518 = vunpack.c.l.b16 %v4486
      %v4519 = vunpack.c.l.b16 %v4487
      %v4520 = vunpack.c.l.b16 %v4488
      %v4521 = vunpack.c.l.b16 %v4489
      %v4522 = vunpack.c.l.b16 %v4490
      %v4523 = vunpack.c.l.b16 %v4491
      %v4524 = vunpack.c.l.b16 %v4492
      %v4525 = vunpack.c.l.b16 %v4493
      %v4526 = vunpack.c.l.b16 %v4494
      %v4527 = vunpack.c.l.b16 %v4495
      %v4528 = vunpack.c.l.b16 %v4496
      %v4529 = vunpack.c.l.b16 %v4497
      %v4530 = vunpack.c.l.b16 %v4498
      %v4531 = vunpack.c.l.b16 %v4499
      %v4532 = vunpack.c.l.b16 %v4500
      %v4533 = vunpack.c.l.b16 %v4501
      %v4534 = vpack.c.b16 %v4519, %v4518
      %v4535 = vpack.c.b16 %v4521, %v4520
      %v4536 = vpack.c.b16 %v4523, %v4522
      %v4537 = vpack.c.b16 %v4525, %v4524
      %v4538 = vpack.c.b16 %v4527, %v4526
      %v4539 = vpack.c.b16 %v4529, %v4528
      %v4540 = vpack.c.b16 %v4531, %v4530
      %v4541 = vpack.c.b16 %v4533, %v4532
      %4550 = vmatpush.bf16.msra.mxu0 %v4541
      %4551 = vmatpush.bf16.msra.mxu0 %v4540
      %4552 = vmatpush.bf16.msra.mxu0 %v4539
      %4553 = vmatpush.bf16.msra.mxu0 %v4538
      %4554 = vmatpush.bf16.msra.mxu0 %v4537
      %4555 = vmatpush.bf16.msra.mxu0 %v4536
      %4556 = vmatpush.bf16.msra.mxu0 %v4535
      %4557 = vmatpush.bf16.msra.mxu0 %v4534
      %4558 = vmatmul.bf16.gmra.mxu0 %v4483
      %v4559 = vpop.f32.mrf.mxu0
      %v4560 = vadd.f32 0.0, %v4559
      %v4561 = vpop.f32.mrf.mxu0
      %4562 = vmatmul.bf16.gmra.mxu0 %v4484
      %v4563 = vpop.f32.mrf.mxu0
      %v4564 = vadd.f32 0.0, %v4563
      %v4565 = vpop.f32.mrf.mxu0
      %4566 = vdwg.mxu0
      %v4567 = vadd.f32 %v4478, %v4560
      %v4568 = vadd.f32 %v4479, %v4564
      %v4569 = vld [vmem:[#allocation5 + $0x28] sm:$0xff]
      %v4570 = vld [vmem:[#allocation5 + $0x30] sm:$0xff]
      %v4571 = vld [vmem:[#allocation5 + $0x38] sm:$0x3]
      %v4572 = vpack.c.bf16 %v4570, %v4569
      %v4573 = vpack.c.bf16 %v4571, %v4571
      %s4574 = scalar_lea.vmem %s12, 448
      %v4575 = vld [vmem:[%s4574] sm:$0xf]
      %v4576 = vld [vmem:[%s4574 + $0x4] sm:$0xf]
      %v4577 = vld [vmem:[%s4574 + $0x8] sm:$0xf]
      %v4578 = vld [vmem:[%s4574 + $0xc] sm:$0xf]
      %v4579 = vld [vmem:[%s4574 + $0x10] sm:$0xf]
      %v4580 = vld [vmem:[%s4574 + $0x14] sm:$0xf]
      %v4581 = vld [vmem:[%s4574 + $0x18] sm:$0xf]
      %v4582 = vld [vmem:[%s4574 + $0x1c] sm:$0xf]
      %v4583 = vld [vmem:[%s4574 + $0x20] sm:$0xf]
      %v4584 = vld [vmem:[%s4574 + $0x24] sm:$0xf]
      %v4585 = vld [vmem:[%s4574 + $0x28] sm:$0xf]
      %v4586 = vld [vmem:[%s4574 + $0x2c] sm:$0xf]
      %v4587 = vld [vmem:[%s4574 + $0x30] sm:$0xf]
      %v4588 = vld [vmem:[%s4574 + $0x34] sm:$0xf]
      %v4589 = vld [vmem:[%s4574 + $0x38] sm:$0xf]
      %v4590 = vld [vmem:[%s4574 + $0x3c] sm:$0xf]
      %v4607 = vunpack.c.l.b16 %v4575
      %v4608 = vunpack.c.l.b16 %v4576
      %v4609 = vunpack.c.l.b16 %v4577
      %v4610 = vunpack.c.l.b16 %v4578
      %v4611 = vunpack.c.l.b16 %v4579
      %v4612 = vunpack.c.l.b16 %v4580
      %v4613 = vunpack.c.l.b16 %v4581
      %v4614 = vunpack.c.l.b16 %v4582
      %v4615 = vunpack.c.l.b16 %v4583
      %v4616 = vunpack.c.l.b16 %v4584
      %v4617 = vunpack.c.l.b16 %v4585
      %v4618 = vunpack.c.l.b16 %v4586
      %v4619 = vunpack.c.l.b16 %v4587
      %v4620 = vunpack.c.l.b16 %v4588
      %v4621 = vunpack.c.l.b16 %v4589
      %v4622 = vunpack.c.l.b16 %v4590
      %v4623 = vpack.c.b16 %v4608, %v4607
      %v4624 = vpack.c.b16 %v4610, %v4609
      %v4625 = vpack.c.b16 %v4612, %v4611
      %v4626 = vpack.c.b16 %v4614, %v4613
      %v4627 = vpack.c.b16 %v4616, %v4615
      %v4628 = vpack.c.b16 %v4618, %v4617
      %v4629 = vpack.c.b16 %v4620, %v4619
      %v4630 = vpack.c.b16 %v4622, %v4621
      %4639 = vmatpush.bf16.msra.mxu0 %v4630
      %4640 = vmatpush.bf16.msra.mxu0 %v4629
      %4641 = vmatpush.bf16.msra.mxu0 %v4628
      %4642 = vmatpush.bf16.msra.mxu0 %v4627
      %4643 = vmatpush.bf16.msra.mxu0 %v4626
      %4644 = vmatpush.bf16.msra.mxu0 %v4625
      %4645 = vmatpush.bf16.msra.mxu0 %v4624
      %4646 = vmatpush.bf16.msra.mxu0 %v4623
      %4647 = vmatmul.bf16.gmra.mxu0 %v4572
      %v4648 = vpop.f32.mrf.mxu0
      %v4649 = vadd.f32 0.0, %v4648
      %v4650 = vpop.f32.mrf.mxu0
      %4651 = vmatmul.bf16.gmra.mxu0 %v4573
      %v4652 = vpop.f32.mrf.mxu0
      %v4653 = vadd.f32 0.0, %v4652
      %v4654 = vpop.f32.mrf.mxu0
      %4655 = vdwg.mxu0
      %v4656 = vadd.f32 %v4567, %v4649
      %v4657 = vadd.f32 %v4568, %v4653
      %v4658 = vld [vmem:[#allocation5 + $0x29] sm:$0xff]
      %v4659 = vld [vmem:[#allocation5 + $0x31] sm:$0xff]
      %v4660 = vld [vmem:[#allocation5 + $0x39] sm:$0x3]
      %v4661 = vpack.c.bf16 %v4659, %v4658
      %v4662 = vpack.c.bf16 %v4660, %v4660
      %s4663 = scalar_lea.vmem %s12, 512
      %v4664 = vld [vmem:[%s4663] sm:$0xf]
      %v4665 = vld [vmem:[%s4663 + $0x4] sm:$0xf]
      %v4666 = vld [vmem:[%s4663 + $0x8] sm:$0xf]
      %v4667 = vld [vmem:[%s4663 + $0xc] sm:$0xf]
      %v4668 = vld [vmem:[%s4663 + $0x10] sm:$0xf]
      %v4669 = vld [vmem:[%s4663 + $0x14] sm:$0xf]
      %v4670 = vld [vmem:[%s4663 + $0x18] sm:$0xf]
      %v4671 = vld [vmem:[%s4663 + $0x1c] sm:$0xf]
      %v4672 = vld [vmem:[%s4663 + $0x20] sm:$0xf]
      %v4673 = vld [vmem:[%s4663 + $0x24] sm:$0xf]
      %v4674 = vld [vmem:[%s4663 + $0x28] sm:$0xf]
      %v4675 = vld [vmem:[%s4663 + $0x2c] sm:$0xf]
      %v4676 = vld [vmem:[%s4663 + $0x30] sm:$0xf]
      %v4677 = vld [vmem:[%s4663 + $0x34] sm:$0xf]
      %v4678 = vld [vmem:[%s4663 + $0x38] sm:$0xf]
      %v4679 = vld [vmem:[%s4663 + $0x3c] sm:$0xf]
      %v4696 = vunpack.c.l.b16 %v4664
      %v4697 = vunpack.c.l.b16 %v4665
      %v4698 = vunpack.c.l.b16 %v4666
      %v4699 = vunpack.c.l.b16 %v4667
      %v4700 = vunpack.c.l.b16 %v4668
      %v4701 = vunpack.c.l.b16 %v4669
      %v4702 = vunpack.c.l.b16 %v4670
      %v4703 = vunpack.c.l.b16 %v4671
      %v4704 = vunpack.c.l.b16 %v4672
      %v4705 = vunpack.c.l.b16 %v4673
      %v4706 = vunpack.c.l.b16 %v4674
      %v4707 = vunpack.c.l.b16 %v4675
      %v4708 = vunpack.c.l.b16 %v4676
      %v4709 = vunpack.c.l.b16 %v4677
      %v4710 = vunpack.c.l.b16 %v4678
      %v4711 = vunpack.c.l.b16 %v4679
      %v4712 = vpack.c.b16 %v4697, %v4696
      %v4713 = vpack.c.b16 %v4699, %v4698
      %v4714 = vpack.c.b16 %v4701, %v4700
      %v4715 = vpack.c.b16 %v4703, %v4702
      %v4716 = vpack.c.b16 %v4705, %v4704
      %v4717 = vpack.c.b16 %v4707, %v4706
      %v4718 = vpack.c.b16 %v4709, %v4708
      %v4719 = vpack.c.b16 %v4711, %v4710
      %4728 = vmatpush.bf16.msra.mxu0 %v4719
      %4729 = vmatpush.bf16.msra.mxu0 %v4718
      %4730 = vmatpush.bf16.msra.mxu0 %v4717
      %4731 = vmatpush.bf16.msra.mxu0 %v4716
      %4732 = vmatpush.bf16.msra.mxu0 %v4715
      %4733 = vmatpush.bf16.msra.mxu0 %v4714
      %4734 = vmatpush.bf16.msra.mxu0 %v4713
      %4735 = vmatpush.bf16.msra.mxu0 %v4712
      %4736 = vmatmul.bf16.gmra.mxu0 %v4661
      %v4737 = vpop.f32.mrf.mxu0
      %v4738 = vadd.f32 0.0, %v4737
      %v4739 = vpop.f32.mrf.mxu0
      %4740 = vmatmul.bf16.gmra.mxu0 %v4662
      %v4741 = vpop.f32.mrf.mxu0
      %v4742 = vadd.f32 0.0, %v4741
      %v4743 = vpop.f32.mrf.mxu0
      %4744 = vdwg.mxu0
      %v4745 = vadd.f32 %v4656, %v4738
      %v4746 = vadd.f32 %v4657, %v4742
      %v4747 = vld [vmem:[%s13] sm:$0x1]
      %v4749 = vperm.slane %v4747, 0
      %v4751 = vmul.f32 %v4745, %v4749
      %v4752 = vmul.f32 %v4746, %v4749
      %v4753 = vld [vmem:[%s14] sm:$0x1]
      %v4755 = vperm.slane %v4753, 0
      %v4757 = vadd.f32 %v4751, %v4755
      %v4758 = vadd.f32 %v4752, %v4755
      %v4759 = vmax.f32 %v4757, 0.0
      %v4760 = vmax.f32 %v4758, 0.0
      %4761 = vst [vmem:[#allocation6 + $0x8] sm:$0x3] %v4759
      %4762 = vst [vmem:[#allocation6 + $0x10] sm:$0x3] %v4760
      %v4763 = vld [vmem:[#allocation6 + $0x8] sm:$0xff]
      %v4764 = vld [vmem:[#allocation6 + $0x10] sm:$0xff]
      %v4765 = vpack.c.bf16 %v4764, %v4763
      %v4766 = vld [vmem:[#allocation6] sm:$0xff]
      %v4767 = vpack.c.bf16 %v4763, %v4766
      %v4768 = vld [vmem:[#allocation6 + $0x10] sm:$0xff]
      %v4769 = vld [vmem:[#allocation6 + $0x18] sm:$0xff]
      %v4770 = vpack.c.bf16 %v4769, %v4768
      %v4771 = vld [vmem:[%s15] sm:$0xff]
      %v4772 = vld [vmem:[%s15 + $0x8] sm:$0xff]
      %v4773 = vld [vmem:[%s15 + $0x10] sm:$0xff]
      %v4774 = vld [vmem:[%s15 + $0x18] sm:$0xff]
      %v4775 = vld [vmem:[%s15 + $0x20] sm:$0xff]
      %v4776 = vld [vmem:[%s15 + $0x28] sm:$0xff]
      %v4777 = vld [vmem:[%s15 + $0x30] sm:$0xff]
      %v4778 = vld [vmem:[%s15 + $0x38] sm:$0xff]
      %v4779 = vld [vmem:[%s15 + $0x40] sm:$0xff]
      %v4780 = vld [vmem:[%s15 + $0x48] sm:$0xff]
      %v4781 = vld [vmem:[%s15 + $0x50] sm:$0xff]
      %v4782 = vld [vmem:[%s15 + $0x58] sm:$0xff]
      %v4783 = vld [vmem:[%s15 + $0x60] sm:$0xff]
      %v4784 = vld [vmem:[%s15 + $0x68] sm:$0xff]
      %v4785 = vld [vmem:[%s15 + $0x70] sm:$0xff]
      %v4786 = vld [vmem:[%s15 + $0x78] sm:$0xff]
      %v4803 = vunpack.c.l.b16 %v4771
      %v4804 = vunpack.c.h.b16 %v4771
      %v4805 = vunpack.c.l.b16 %v4772
      %v4806 = vunpack.c.h.b16 %v4772
      %v4807 = vunpack.c.l.b16 %v4773
      %v4808 = vunpack.c.h.b16 %v4773
      %v4809 = vunpack.c.l.b16 %v4774
      %v4810 = vunpack.c.h.b16 %v4774
      %v4811 = vunpack.c.l.b16 %v4775
      %v4812 = vunpack.c.h.b16 %v4775
      %v4813 = vunpack.c.l.b16 %v4776
      %v4814 = vunpack.c.h.b16 %v4776
      %v4815 = vunpack.c.l.b16 %v4777
      %v4816 = vunpack.c.h.b16 %v4777
      %v4817 = vunpack.c.l.b16 %v4778
      %v4818 = vunpack.c.h.b16 %v4778
      %v4819 = vunpack.c.l.b16 %v4779
      %v4820 = vunpack.c.h.b16 %v4779
      %v4821 = vunpack.c.l.b16 %v4780
      %v4822 = vunpack.c.h.b16 %v4780
      %v4823 = vunpack.c.l.b16 %v4781
      %v4824 = vunpack.c.h.b16 %v4781
      %v4825 = vunpack.c.l.b16 %v4782
      %v4826 = vunpack.c.h.b16 %v4782
      %v4827 = vunpack.c.l.b16 %v4783
      %v4828 = vunpack.c.h.b16 %v4783
      %v4829 = vunpack.c.l.b16 %v4784
      %v4830 = vunpack.c.h.b16 %v4784
      %v4831 = vunpack.c.l.b16 %v4785
      %v4832 = vunpack.c.h.b16 %v4785
      %v4833 = vunpack.c.l.b16 %v4786
      %v4834 = vunpack.c.h.b16 %v4786
      %v4835 = vpack.c.b16 %v4805, %v4803
      %v4836 = vpack.c.b16 %v4806, %v4804
      %v4837 = vpack.c.b16 %v4809, %v4807
      %v4838 = vpack.c.b16 %v4810, %v4808
      %v4839 = vpack.c.b16 %v4813, %v4811
      %v4840 = vpack.c.b16 %v4814, %v4812
      %v4841 = vpack.c.b16 %v4817, %v4815
      %v4842 = vpack.c.b16 %v4818, %v4816
      %v4843 = vpack.c.b16 %v4821, %v4819
      %v4844 = vpack.c.b16 %v4822, %v4820
      %v4845 = vpack.c.b16 %v4825, %v4823
      %v4846 = vpack.c.b16 %v4826, %v4824
      %v4847 = vpack.c.b16 %v4829, %v4827
      %v4848 = vpack.c.b16 %v4830, %v4828
      %v4849 = vpack.c.b16 %v4833, %v4831
      %v4850 = vpack.c.b16 %v4834, %v4832
      %4867 = vmatpush.bf16.msra.mxu0 %v4849
      %4868 = vmatpush.bf16.msra.mxu0 %v4847
      %4869 = vmatpush.bf16.msra.mxu0 %v4845
      %4870 = vmatpush.bf16.msra.mxu0 %v4843
      %4871 = vmatpush.bf16.msra.mxu0 %v4841
      %4872 = vmatpush.bf16.msra.mxu0 %v4839
      %4873 = vmatpush.bf16.msra.mxu0 %v4837
      %4874 = vmatpush.bf16.msra.mxu0 %v4835
      %4875 = vmatmul.bf16.gmra.mxu0 %v4765
      %v4876 = vpop.f32.mrf.mxu0
      %v4877 = vadd.f32 0.0, %v4876
      %v4878 = vpop.f32.mrf.mxu0
      %v4879 = vadd.f32 0.0, %v4878
      %4880 = vdwg.mxu0
      %4881 = vmatpush.bf16.msra.mxu0 %v4850
      %4882 = vmatpush.bf16.msra.mxu0 %v4848
      %4883 = vmatpush.bf16.msra.mxu0 %v4846
      %4884 = vmatpush.bf16.msra.mxu0 %v4844
      %4885 = vmatpush.bf16.msra.mxu0 %v4842
      %4886 = vmatpush.bf16.msra.mxu0 %v4840
      %4887 = vmatpush.bf16.msra.mxu0 %v4838
      %4888 = vmatpush.bf16.msra.mxu0 %v4836
      %4889 = vmatmul.bf16.gmra.mxu0 %v4765
      %v4890 = vpop.f32.mrf.mxu0
      %v4891 = vadd.f32 0.0, %v4890
      %v4892 = vpop.f32.mrf.mxu0
      %v4893 = vadd.f32 0.0, %v4892
      %4894 = vdwg.mxu0
      %v4895 = vld [vmem:[%s16] sm:$0xf]
      %v4896 = vld [vmem:[%s16 + $0x4] sm:$0xf]
      %v4897 = vld [vmem:[%s16 + $0x8] sm:$0xf]
      %v4898 = vld [vmem:[%s16 + $0xc] sm:$0xf]
      %v4899 = vld [vmem:[%s16 + $0x10] sm:$0xf]
      %v4900 = vld [vmem:[%s16 + $0x14] sm:$0xf]
      %v4901 = vld [vmem:[%s16 + $0x18] sm:$0xf]
      %v4902 = vld [vmem:[%s16 + $0x1c] sm:$0xf]
      %v4903 = vld [vmem:[%s16 + $0x20] sm:$0xf]
      %v4904 = vld [vmem:[%s16 + $0x24] sm:$0xf]
      %v4905 = vld [vmem:[%s16 + $0x28] sm:$0xf]
      %v4906 = vld [vmem:[%s16 + $0x2c] sm:$0xf]
      %v4907 = vld [vmem:[%s16 + $0x30] sm:$0xf]
      %v4908 = vld [vmem:[%s16 + $0x34] sm:$0xf]
      %v4909 = vld [vmem:[%s16 + $0x38] sm:$0xf]
      %v4910 = vld [vmem:[%s16 + $0x3c] sm:$0xf]
      %v4927 = vunpack.c.l.b16 %v4895
      %v4928 = vunpack.c.l.b16 %v4896
      %v4929 = vunpack.c.l.b16 %v4897
      %v4930 = vunpack.c.l.b16 %v4898
      %v4931 = vunpack.c.l.b16 %v4899
      %v4932 = vunpack.c.l.b16 %v4900
      %v4933 = vunpack.c.l.b16 %v4901
      %v4934 = vunpack.c.l.b16 %v4902
      %v4935 = vunpack.c.l.b16 %v4903
      %v4936 = vunpack.c.l.b16 %v4904
      %v4937 = vunpack.c.l.b16 %v4905
      %v4938 = vunpack.c.l.b16 %v4906
      %v4939 = vunpack.c.l.b16 %v4907
      %v4940 = vunpack.c.l.b16 %v4908
      %v4941 = vunpack.c.l.b16 %v4909
      %v4942 = vunpack.c.l.b16 %v4910
      %v4943 = vpack.c.b16 %v4928, %v4927
      %v4944 = vpack.c.b16 %v4930, %v4929
      %v4945 = vpack.c.b16 %v4932, %v4931
      %v4946 = vpack.c.b16 %v4934, %v4933
      %v4947 = vpack.c.b16 %v4936, %v4935
      %v4948 = vpack.c.b16 %v4938, %v4937
      %v4949 = vpack.c.b16 %v4940, %v4939
      %v4950 = vpack.c.b16 %v4942, %v4941
      %4959 = vmatpush.bf16.msra.mxu0 %v4950
      %4960 = vmatpush.bf16.msra.mxu0 %v4949
      %4961 = vmatpush.bf16.msra.mxu0 %v4948
      %4962 = vmatpush.bf16.msra.mxu0 %v4947
      %4963 = vmatpush.bf16.msra.mxu0 %v4946
      %4964 = vmatpush.bf16.msra.mxu0 %v4945
      %4965 = vmatpush.bf16.msra.mxu0 %v4944
      %4966 = vmatpush.bf16.msra.mxu0 %v4943
      %4967 = vmatmul.bf16.gmra.mxu0 %v4767
      %v4968 = vpop.f32.mrf.mxu0
      %v4969 = vadd.f32 0.0, %v4968
      %v4970 = vpop.f32.mrf.mxu0
      %v4971 = vadd.f32 0.0, %v4970
      %4972 = vdwg.mxu0
      %v4973 = vadd.f32 %v4877, %v4969
      %v4974 = vadd.f32 %v4879, %v4971
      %v4975 = vld [vmem:[%s17] sm:$0xf]
      %v4976 = vld [vmem:[%s17 + $0x4] sm:$0xf]
      %v4977 = vld [vmem:[%s17 + $0x8] sm:$0xf]
      %v4978 = vld [vmem:[%s17 + $0xc] sm:$0xf]
      %v4979 = vld [vmem:[%s17 + $0x10] sm:$0xf]
      %v4980 = vld [vmem:[%s17 + $0x14] sm:$0xf]
      %v4981 = vld [vmem:[%s17 + $0x18] sm:$0xf]
      %v4982 = vld [vmem:[%s17 + $0x1c] sm:$0xf]
      %v4983 = vld [vmem:[%s17 + $0x20] sm:$0xf]
      %v4984 = vld [vmem:[%s17 + $0x24] sm:$0xf]
      %v4985 = vld [vmem:[%s17 + $0x28] sm:$0xf]
      %v4986 = vld [vmem:[%s17 + $0x2c] sm:$0xf]
      %v4987 = vld [vmem:[%s17 + $0x30] sm:$0xf]
      %v4988 = vld [vmem:[%s17 + $0x34] sm:$0xf]
      %v4989 = vld [vmem:[%s17 + $0x38] sm:$0xf]
      %v4990 = vld [vmem:[%s17 + $0x3c] sm:$0xf]
      %v5007 = vunpack.c.l.b16 %v4975
      %v5008 = vunpack.c.l.b16 %v4976
      %v5009 = vunpack.c.l.b16 %v4977
      %v5010 = vunpack.c.l.b16 %v4978
      %v5011 = vunpack.c.l.b16 %v4979
      %v5012 = vunpack.c.l.b16 %v4980
      %v5013 = vunpack.c.l.b16 %v4981
      %v5014 = vunpack.c.l.b16 %v4982
      %v5015 = vunpack.c.l.b16 %v4983
      %v5016 = vunpack.c.l.b16 %v4984
      %v5017 = vunpack.c.l.b16 %v4985
      %v5018 = vunpack.c.l.b16 %v4986
      %v5019 = vunpack.c.l.b16 %v4987
      %v5020 = vunpack.c.l.b16 %v4988
      %v5021 = vunpack.c.l.b16 %v4989
      %v5022 = vunpack.c.l.b16 %v4990
      %v5023 = vpack.c.b16 %v5008, %v5007
      %v5024 = vpack.c.b16 %v5010, %v5009
      %v5025 = vpack.c.b16 %v5012, %v5011
      %v5026 = vpack.c.b16 %v5014, %v5013
      %v5027 = vpack.c.b16 %v5016, %v5015
      %v5028 = vpack.c.b16 %v5018, %v5017
      %v5029 = vpack.c.b16 %v5020, %v5019
      %v5030 = vpack.c.b16 %v5022, %v5021
      %5039 = vmatpush.bf16.msra.mxu0 %v5030
      %5040 = vmatpush.bf16.msra.mxu0 %v5029
      %5041 = vmatpush.bf16.msra.mxu0 %v5028
      %5042 = vmatpush.bf16.msra.mxu0 %v5027
      %5043 = vmatpush.bf16.msra.mxu0 %v5026
      %5044 = vmatpush.bf16.msra.mxu0 %v5025
      %5045 = vmatpush.bf16.msra.mxu0 %v5024
      %5046 = vmatpush.bf16.msra.mxu0 %v5023
      %5047 = vmatmul.bf16.gmra.mxu0 %v4770
      %v5048 = vpop.f32.mrf.mxu0
      %v5049 = vadd.f32 0.0, %v5048
      %v5050 = vpop.f32.mrf.mxu0
      %v5051 = vadd.f32 0.0, %v5050
      %5052 = vdwg.mxu0
      %v5053 = vadd.f32 %v4891, %v5049
      %v5054 = vadd.f32 %v4893, %v5051
      %v5055 = vld [vmem:[%s18] sm:$0x1]
      %v5057 = vperm.slane %v5055, 0
      %v5059 = vmul.f32 %v4973, %v5057
      %v5060 = vmul.f32 %v4974, %v5057
      %v5061 = vld [vmem:[%s19] sm:$0x1]
      %v5063 = vperm.slane %v5061, 0
      %v5065 = vadd.f32 %v5059, %v5063
      %v5066 = vadd.f32 %v5060, %v5063
      %vm5067 = vcmp.gt.f32.partialorder %v5065, 0.0
      %vm5068 = vcmp.gt.f32.partialorder %v5066, 0.0
      %v5069 = vmin.f32 %v5065, 0.0
      %v5070 = vmin.f32 %v5066, 0.0
      %v5071 = vmul.f32 %v5069, 1.442695
      %v5072 = vpow.pop %v5071
      %v5073 = vmul.f32 %v5070, 1.442695
      %v5074 = vpow.pop %v5073
      %v5075 = vsub.f32 %v5072, 1.0
      %v5076 = vsub.f32 %v5074, 1.0
      %v5077 = vsel %vm5067, %v5065, %v5075
      %v5078 = vsel %vm5068, %v5066, %v5076
      %v5079 = vmul.f32 %v5053, %v5057
      %v5080 = vmul.f32 %v5054, %v5057
      %v5081 = vadd.f32 %v5079, %v5063
      %v5082 = vadd.f32 %v5080, %v5063
      %vm5083 = vcmp.gt.f32.partialorder %v5081, 0.0
      %vm5084 = vcmp.gt.f32.partialorder %v5082, 0.0
      %v5085 = vmin.f32 %v5081, 0.0
      %v5086 = vmin.f32 %v5082, 0.0
      %v5087 = vmul.f32 %v5085, 1.442695
      %v5088 = vpow.pop %v5087
      %v5089 = vmul.f32 %v5086, 1.442695
      %v5090 = vpow.pop %v5089
      %v5091 = vsub.f32 %v5088, 1.0
      %v5092 = vsub.f32 %v5090, 1.0
      %v5093 = vsel %vm5083, %v5081, %v5091
      %v5094 = vsel %vm5084, %v5082, %v5092
      %5095 = vst [vmem:[#allocation7 + $0x8] sm:$0x3] %v5077
      %5096 = vst [vmem:[#allocation7 + $0x10] sm:$0x3] %v5093
      %5097 = vst [vmem:[#allocation7 + $0x18] sm:$0x3] %v5078
      %5098 = vst [vmem:[#allocation7 + $0x20] sm:$0x3] %v5094
      %v5099 = vld [vmem:[#allocation7 + $0x8] sm:$0xff]
      %v5100 = vld [vmem:[#allocation7 + $0x10] sm:$0xff]
      %v5101 = vld [vmem:[#allocation7 + $0x18] sm:$0xff]
      %v5102 = vld [vmem:[#allocation7 + $0x20] sm:$0xff]
      %v5103 = vpack.c.bf16 %v5100, %v5099
      %v5104 = vpack.c.bf16 %v5102, %v5101
      %v5105 = vld [vmem:[#allocation7] sm:$0xff]
      %v5106 = vpack.c.bf16 %v5099, %v5105
      %v5107 = vpack.c.bf16 %v5101, %v5100
      %v5108 = vld [vmem:[#allocation7 + $0x10] sm:$0xff]
      %v5109 = vld [vmem:[#allocation7 + $0x18] sm:$0xff]
      %v5110 = vld [vmem:[#allocation7 + $0x20] sm:$0xff]
      %v5111 = vld [vmem:[#allocation7 + $0x28] sm:$0xff]
      %v5112 = vpack.c.bf16 %v5109, %v5108
      %v5113 = vpack.c.bf16 %v5111, %v5110
      %v5114 = vld [vmem:[%s20] sm:$0xff]
      %v5115 = vld [vmem:[%s20 + $0x8] sm:$0xff]
      %v5116 = vld [vmem:[%s20 + $0x10] sm:$0xff]
      %v5117 = vld [vmem:[%s20 + $0x18] sm:$0xff]
      %v5118 = vld [vmem:[%s20 + $0x20] sm:$0xff]
      %v5119 = vld [vmem:[%s20 + $0x28] sm:$0xff]
      %v5120 = vld [vmem:[%s20 + $0x30] sm:$0xff]
      %v5121 = vld [vmem:[%s20 + $0x38] sm:$0xff]
      %v5122 = vld [vmem:[%s20 + $0x40] sm:$0xff]
      %v5123 = vld [vmem:[%s20 + $0x48] sm:$0xff]
      %v5124 = vld [vmem:[%s20 + $0x50] sm:$0xff]
      %v5125 = vld [vmem:[%s20 + $0x58] sm:$0xff]
      %v5126 = vld [vmem:[%s20 + $0x60] sm:$0xff]
      %v5127 = vld [vmem:[%s20 + $0x68] sm:$0xff]
      %v5128 = vld [vmem:[%s20 + $0x70] sm:$0xff]
      %v5129 = vld [vmem:[%s20 + $0x78] sm:$0xff]
      %v5146 = vunpack.c.l.b16 %v5114
      %v5147 = vunpack.c.h.b16 %v5114
      %v5148 = vunpack.c.l.b16 %v5115
      %v5149 = vunpack.c.h.b16 %v5115
      %v5150 = vunpack.c.l.b16 %v5116
      %v5151 = vunpack.c.h.b16 %v5116
      %v5152 = vunpack.c.l.b16 %v5117
      %v5153 = vunpack.c.h.b16 %v5117
      %v5154 = vunpack.c.l.b16 %v5118
      %v5155 = vunpack.c.h.b16 %v5118
      %v5156 = vunpack.c.l.b16 %v5119
      %v5157 = vunpack.c.h.b16 %v5119
      %v5158 = vunpack.c.l.b16 %v5120
      %v5159 = vunpack.c.h.b16 %v5120
      %v5160 = vunpack.c.l.b16 %v5121
      %v5161 = vunpack.c.h.b16 %v5121
      %v5162 = vunpack.c.l.b16 %v5122
      %v5163 = vunpack.c.h.b16 %v5122
      %v5164 = vunpack.c.l.b16 %v5123
      %v5165 = vunpack.c.h.b16 %v5123
      %v5166 = vunpack.c.l.b16 %v5124
      %v5167 = vunpack.c.h.b16 %v5124
      %v5168 = vunpack.c.l.b16 %v5125
      %v5169 = vunpack.c.h.b16 %v5125
      %v5170 = vunpack.c.l.b16 %v5126
      %v5171 = vunpack.c.h.b16 %v5126
      %v5172 = vunpack.c.l.b16 %v5127
      %v5173 = vunpack.c.h.b16 %v5127
      %v5174 = vunpack.c.l.b16 %v5128
      %v5175 = vunpack.c.h.b16 %v5128
      %v5176 = vunpack.c.l.b16 %v5129
      %v5177 = vunpack.c.h.b16 %v5129
      %v5178 = vpack.c.b16 %v5148, %v5146
      %v5179 = vpack.c.b16 %v5149, %v5147
      %v5180 = vpack.c.b16 %v5152, %v5150
      %v5181 = vpack.c.b16 %v5153, %v5151
      %v5182 = vpack.c.b16 %v5156, %v5154
      %v5183 = vpack.c.b16 %v5157, %v5155
      %v5184 = vpack.c.b16 %v5160, %v5158
      %v5185 = vpack.c.b16 %v5161, %v5159
      %v5186 = vpack.c.b16 %v5164, %v5162
      %v5187 = vpack.c.b16 %v5165, %v5163
      %v5188 = vpack.c.b16 %v5168, %v5166
      %v5189 = vpack.c.b16 %v5169, %v5167
      %v5190 = vpack.c.b16 %v5172, %v5170
      %v5191 = vpack.c.b16 %v5173, %v5171
      %v5192 = vpack.c.b16 %v5176, %v5174
      %v5193 = vpack.c.b16 %v5177, %v5175
      %5210 = vmatpush.bf16.msra.mxu0 %v5192
      %5211 = vmatpush.bf16.msra.mxu0 %v5190
      %5212 = vmatpush.bf16.msra.mxu0 %v5188
      %5213 = vmatpush.bf16.msra.mxu0 %v5186
      %5214 = vmatpush.bf16.msra.mxu0 %v5184
      %5215 = vmatpush.bf16.msra.mxu0 %v5182
      %5216 = vmatpush.bf16.msra.mxu0 %v5180
      %5217 = vmatpush.bf16.msra.mxu0 %v5178
      %5218 = vmatmul.bf16.gmra.mxu0 %v5103
      %v5219 = vpop.f32.mrf.mxu0
      %v5220 = vadd.f32 0.0, %v5219
      %v5221 = vpop.f32.mrf.mxu0
      %v5222 = vadd.f32 0.0, %v5221
      %5223 = vmatmul.bf16.gmra.mxu0 %v5104
      %v5224 = vpop.f32.mrf.mxu0
      %v5225 = vadd.f32 0.0, %v5224
      %v5226 = vpop.f32.mrf.mxu0
      %v5227 = vadd.f32 0.0, %v5226
      %5228 = vdwg.mxu0
      %5229 = vmatpush.bf16.msra.mxu0 %v5193
      %5230 = vmatpush.bf16.msra.mxu0 %v5191
      %5231 = vmatpush.bf16.msra.mxu0 %v5189
      %5232 = vmatpush.bf16.msra.mxu0 %v5187
      %5233 = vmatpush.bf16.msra.mxu0 %v5185
      %5234 = vmatpush.bf16.msra.mxu0 %v5183
      %5235 = vmatpush.bf16.msra.mxu0 %v5181
      %5236 = vmatpush.bf16.msra.mxu0 %v5179
      %5237 = vmatmul.bf16.gmra.mxu0 %v5103
      %v5238 = vpop.f32.mrf.mxu0
      %v5239 = vadd.f32 0.0, %v5238
      %v5240 = vpop.f32.mrf.mxu0
      %v5241 = vadd.f32 0.0, %v5240
      %5242 = vmatmul.bf16.gmra.mxu0 %v5104
      %v5243 = vpop.f32.mrf.mxu0
      %v5244 = vadd.f32 0.0, %v5243
      %v5245 = vpop.f32.mrf.mxu0
      %v5246 = vadd.f32 0.0, %v5245
      %5247 = vdwg.mxu0
      %v5248 = vld [vmem:[%s21] sm:$0xf]
      %v5249 = vld [vmem:[%s21 + $0x4] sm:$0xf]
      %v5250 = vld [vmem:[%s21 + $0x8] sm:$0xf]
      %v5251 = vld [vmem:[%s21 + $0xc] sm:$0xf]
      %v5252 = vld [vmem:[%s21 + $0x10] sm:$0xf]
      %v5253 = vld [vmem:[%s21 + $0x14] sm:$0xf]
      %v5254 = vld [vmem:[%s21 + $0x18] sm:$0xf]
      %v5255 = vld [vmem:[%s21 + $0x1c] sm:$0xf]
      %v5256 = vld [vmem:[%s21 + $0x20] sm:$0xf]
      %v5257 = vld [vmem:[%s21 + $0x24] sm:$0xf]
      %v5258 = vld [vmem:[%s21 + $0x28] sm:$0xf]
      %v5259 = vld [vmem:[%s21 + $0x2c] sm:$0xf]
      %v5260 = vld [vmem:[%s21 + $0x30] sm:$0xf]
      %v5261 = vld [vmem:[%s21 + $0x34] sm:$0xf]
      %v5262 = vld [vmem:[%s21 + $0x38] sm:$0xf]
      %v5263 = vld [vmem:[%s21 + $0x3c] sm:$0xf]
      %v5280 = vunpack.c.l.b16 %v5248
      %v5281 = vunpack.c.l.b16 %v5249
      %v5282 = vunpack.c.l.b16 %v5250
      %v5283 = vunpack.c.l.b16 %v5251
      %v5284 = vunpack.c.l.b16 %v5252
      %v5285 = vunpack.c.l.b16 %v5253
      %v5286 = vunpack.c.l.b16 %v5254
      %v5287 = vunpack.c.l.b16 %v5255
      %v5288 = vunpack.c.l.b16 %v5256
      %v5289 = vunpack.c.l.b16 %v5257
      %v5290 = vunpack.c.l.b16 %v5258
      %v5291 = vunpack.c.l.b16 %v5259
      %v5292 = vunpack.c.l.b16 %v5260
      %v5293 = vunpack.c.l.b16 %v5261
      %v5294 = vunpack.c.l.b16 %v5262
      %v5295 = vunpack.c.l.b16 %v5263
      %v5296 = vpack.c.b16 %v5281, %v5280
      %v5297 = vpack.c.b16 %v5283, %v5282
      %v5298 = vpack.c.b16 %v5285, %v5284
      %v5299 = vpack.c.b16 %v5287, %v5286
      %v5300 = vpack.c.b16 %v5289, %v5288
      %v5301 = vpack.c.b16 %v5291, %v5290
      %v5302 = vpack.c.b16 %v5293, %v5292
      %v5303 = vpack.c.b16 %v5295, %v5294
      %5312 = vmatpush.bf16.msra.mxu0 %v5303
      %5313 = vmatpush.bf16.msra.mxu0 %v5302
      %5314 = vmatpush.bf16.msra.mxu0 %v5301
      %5315 = vmatpush.bf16.msra.mxu0 %v5300
      %5316 = vmatpush.bf16.msra.mxu0 %v5299
      %5317 = vmatpush.bf16.msra.mxu0 %v5298
      %5318 = vmatpush.bf16.msra.mxu0 %v5297
      %5319 = vmatpush.bf16.msra.mxu0 %v5296
      %5320 = vmatmul.bf16.gmra.mxu0 %v5106
      %v5321 = vpop.f32.mrf.mxu0
      %v5322 = vadd.f32 0.0, %v5321
      %v5323 = vpop.f32.mrf.mxu0
      %v5324 = vadd.f32 0.0, %v5323
      %5325 = vmatmul.bf16.gmra.mxu0 %v5107
      %v5326 = vpop.f32.mrf.mxu0
      %v5327 = vadd.f32 0.0, %v5326
      %v5328 = vpop.f32.mrf.mxu0
      %v5329 = vadd.f32 0.0, %v5328
      %5330 = vdwg.mxu0
      %v5331 = vadd.f32 %v5220, %v5322
      %v5332 = vadd.f32 %v5222, %v5324
      %v5333 = vadd.f32 %v5225, %v5327
      %v5334 = vadd.f32 %v5227, %v5329
      %v5335 = vld [vmem:[%s22] sm:$0xf]
      %v5336 = vld [vmem:[%s22 + $0x4] sm:$0xf]
      %v5337 = vld [vmem:[%s22 + $0x8] sm:$0xf]
      %v5338 = vld [vmem:[%s22 + $0xc] sm:$0xf]
      %v5339 = vld [vmem:[%s22 + $0x10] sm:$0xf]
      %v5340 = vld [vmem:[%s22 + $0x14] sm:$0xf]
      %v5341 = vld [vmem:[%s22 + $0x18] sm:$0xf]
      %v5342 = vld [vmem:[%s22 + $0x1c] sm:$0xf]
      %v5343 = vld [vmem:[%s22 + $0x20] sm:$0xf]
      %v5344 = vld [vmem:[%s22 + $0x24] sm:$0xf]
      %v5345 = vld [vmem:[%s22 + $0x28] sm:$0xf]
      %v5346 = vld [vmem:[%s22 + $0x2c] sm:$0xf]
      %v5347 = vld [vmem:[%s22 + $0x30] sm:$0xf]
      %v5348 = vld [vmem:[%s22 + $0x34] sm:$0xf]
      %v5349 = vld [vmem:[%s22 + $0x38] sm:$0xf]
      %v5350 = vld [vmem:[%s22 + $0x3c] sm:$0xf]
      %v5367 = vunpack.c.l.b16 %v5335
      %v5368 = vunpack.c.l.b16 %v5336
      %v5369 = vunpack.c.l.b16 %v5337
      %v5370 = vunpack.c.l.b16 %v5338
      %v5371 = vunpack.c.l.b16 %v5339
      %v5372 = vunpack.c.l.b16 %v5340
      %v5373 = vunpack.c.l.b16 %v5341
      %v5374 = vunpack.c.l.b16 %v5342
      %v5375 = vunpack.c.l.b16 %v5343
      %v5376 = vunpack.c.l.b16 %v5344
      %v5377 = vunpack.c.l.b16 %v5345
      %v5378 = vunpack.c.l.b16 %v5346
      %v5379 = vunpack.c.l.b16 %v5347
      %v5380 = vunpack.c.l.b16 %v5348
      %v5381 = vunpack.c.l.b16 %v5349
      %v5382 = vunpack.c.l.b16 %v5350
      %v5383 = vpack.c.b16 %v5368, %v5367
      %v5384 = vpack.c.b16 %v5370, %v5369
      %v5385 = vpack.c.b16 %v5372, %v5371
      %v5386 = vpack.c.b16 %v5374, %v5373
      %v5387 = vpack.c.b16 %v5376, %v5375
      %v5388 = vpack.c.b16 %v5378, %v5377
      %v5389 = vpack.c.b16 %v5380, %v5379
      %v5390 = vpack.c.b16 %v5382, %v5381
      %5399 = vmatpush.bf16.msra.mxu0 %v5390
      %5400 = vmatpush.bf16.msra.mxu0 %v5389
      %5401 = vmatpush.bf16.msra.mxu0 %v5388
      %5402 = vmatpush.bf16.msra.mxu0 %v5387
      %5403 = vmatpush.bf16.msra.mxu0 %v5386
      %5404 = vmatpush.bf16.msra.mxu0 %v5385
      %5405 = vmatpush.bf16.msra.mxu0 %v5384
      %5406 = vmatpush.bf16.msra.mxu0 %v5383
      %5407 = vmatmul.bf16.gmra.mxu0 %v5112
      %v5408 = vpop.f32.mrf.mxu0
      %v5409 = vadd.f32 0.0, %v5408
      %v5410 = vpop.f32.mrf.mxu0
      %v5411 = vadd.f32 0.0, %v5410
      %5412 = vmatmul.bf16.gmra.mxu0 %v5113
      %v5413 = vpop.f32.mrf.mxu0
      %v5414 = vadd.f32 0.0, %v5413
      %v5415 = vpop.f32.mrf.mxu0
      %v5416 = vadd.f32 0.0, %v5415
      %5417 = vdwg.mxu0
      %v5418 = vadd.f32 %v5239, %v5409
      %v5419 = vadd.f32 %v5241, %v5411
      %v5420 = vadd.f32 %v5244, %v5414
      %v5421 = vadd.f32 %v5246, %v5416
      %v5422 = vld [vmem:[%s23] sm:$0x1]
      %v5424 = vperm.slane %v5422, 0
      %v5426 = vmul.f32 %v5331, %v5424
      %v5427 = vmul.f32 %v5332, %v5424
      %v5428 = vmul.f32 %v5333, %v5424
      %v5429 = vmul.f32 %v5334, %v5424
      %v5430 = vld [vmem:[%s24] sm:$0x1]
      %v5432 = vperm.slane %v5430, 0
      %v5434 = vadd.f32 %v5426, %v5432
      %v5435 = vadd.f32 %v5427, %v5432
      %v5436 = vadd.f32 %v5428, %v5432
      %v5437 = vadd.f32 %v5429, %v5432
      %vm5438 = vcmp.gt.f32.partialorder %v5434, 0.0
      %vm5439 = vcmp.gt.f32.partialorder %v5435, 0.0
      %vm5440 = vcmp.gt.f32.partialorder %v5436, 0.0
      %vm5441 = vcmp.gt.f32.partialorder %v5437, 0.0
      %v5442 = vmin.f32 %v5434, 0.0
      %v5443 = vmin.f32 %v5435, 0.0
      %v5444 = vmin.f32 %v5436, 0.0
      %v5445 = vmin.f32 %v5437, 0.0
      %v5446 = vmul.f32 %v5442, 1.442695
      %v5447 = vpow.pop %v5446
      %v5448 = vmul.f32 %v5443, 1.442695
      %v5449 = vpow.pop %v5448
      %v5450 = vmul.f32 %v5444, 1.442695
      %v5451 = vpow.pop %v5450
      %v5452 = vmul.f32 %v5445, 1.442695
      %v5453 = vpow.pop %v5452
      %v5454 = vsub.f32 %v5447, 1.0
      %v5455 = vsub.f32 %v5449, 1.0
      %v5456 = vsub.f32 %v5451, 1.0
      %v5457 = vsub.f32 %v5453, 1.0
      %v5458 = vsel %vm5438, %v5434, %v5454
      %v5459 = vsel %vm5439, %v5435, %v5455
      %v5460 = vsel %vm5440, %v5436, %v5456
      %v5461 = vsel %vm5441, %v5437, %v5457
      %v5462 = vmul.f32 %v5418, %v5424
      %v5463 = vmul.f32 %v5419, %v5424
      %v5464 = vmul.f32 %v5420, %v5424
      %v5465 = vmul.f32 %v5421, %v5424
      %v5466 = vadd.f32 %v5462, %v5432
      %v5467 = vadd.f32 %v5463, %v5432
      %v5468 = vadd.f32 %v5464, %v5432
      %v5469 = vadd.f32 %v5465, %v5432
      %vm5470 = vcmp.gt.f32.partialorder %v5466, 0.0
      %vm5471 = vcmp.gt.f32.partialorder %v5467, 0.0
      %vm5472 = vcmp.gt.f32.partialorder %v5468, 0.0
      %vm5473 = vcmp.gt.f32.partialorder %v5469, 0.0
      %v5474 = vmin.f32 %v5466, 0.0
      %v5475 = vmin.f32 %v5467, 0.0
      %v5476 = vmin.f32 %v5468, 0.0
      %v5477 = vmin.f32 %v5469, 0.0
      %v5478 = vmul.f32 %v5474, 1.442695
      %v5479 = vpow.pop %v5478
      %v5480 = vmul.f32 %v5475, 1.442695
      %v5481 = vpow.pop %v5480
      %v5482 = vmul.f32 %v5476, 1.442695
      %v5483 = vpow.pop %v5482
      %v5484 = vmul.f32 %v5477, 1.442695
      %v5485 = vpow.pop %v5484
      %v5486 = vsub.f32 %v5479, 1.0
      %v5487 = vsub.f32 %v5481, 1.0
      %v5488 = vsub.f32 %v5483, 1.0
      %v5489 = vsub.f32 %v5485, 1.0
      %v5490 = vsel %vm5470, %v5466, %v5486
      %v5491 = vsel %vm5471, %v5467, %v5487
      %v5492 = vsel %vm5472, %v5468, %v5488
      %v5493 = vsel %vm5473, %v5469, %v5489
      %v5494 = vld [vmem:[%s25] sm:$0xff]
      %v5495 = vld [vmem:[%s25 + $0x8] sm:$0xff]
      %v5496 = vld [vmem:[%s25 + $0x10] sm:$0xff]
      %v5497 = vld [vmem:[%s25 + $0x18] sm:$0xff]
      %v5498 = vld [vmem:[%s25 + $0x20] sm:$0xff]
      %v5499 = vld [vmem:[%s25 + $0x28] sm:$0xff]
      %v5500 = vld [vmem:[%s25 + $0x30] sm:$0xff]
      %v5501 = vld [vmem:[%s25 + $0x38] sm:$0xff]
      %v5502 = vld [vmem:[%s25 + $0x40] sm:$0xff]
      %v5503 = vld [vmem:[%s25 + $0x48] sm:$0xff]
      %v5504 = vld [vmem:[%s25 + $0x50] sm:$0xff]
      %v5505 = vld [vmem:[%s25 + $0x58] sm:$0xff]
      %v5506 = vld [vmem:[%s25 + $0x60] sm:$0xff]
      %v5507 = vld [vmem:[%s25 + $0x68] sm:$0xff]
      %v5508 = vld [vmem:[%s25 + $0x70] sm:$0xff]
      %v5509 = vld [vmem:[%s25 + $0x78] sm:$0xff]
      %5510 = vmatpush.msra.mxu0 %v5509
      %5511 = vmatpush.msra.mxu0 %v5508
      %5512 = vmatpush.msra.mxu0 %v5507
      %5513 = vmatpush.msra.mxu0 %v5506
      %5514 = vmatpush.msra.mxu0 %v5505
      %5515 = vmatpush.msra.mxu0 %v5504
      %5516 = vmatpush.msra.mxu0 %v5503
      %5517 = vmatpush.msra.mxu0 %v5502
      %5518 = vmatpush.msra.mxu0 %v5501
      %5519 = vmatpush.msra.mxu0 %v5500
      %5520 = vmatpush.msra.mxu0 %v5499
      %5521 = vmatpush.msra.mxu0 %v5498
      %5522 = vmatpush.msra.mxu0 %v5497
      %5523 = vmatpush.msra.mxu0 %v5496
      %5524 = vmatpush.msra.mxu0 %v5495
      %5525 = vmatpush.msra.mxu0 %v5494
      %5526 = vmatmul.f32.gmra.mxu0 %v5458
      %v5527 = vpop.f32.mrf.mxu0
      %v5528 = vadd.f32 0.0, %v5527
      %5529 = vmatmul.f32.gmra.mxu0 %v5459
      %v5530 = vpop.f32.mrf.mxu0
      %v5531 = vadd.f32 0.0, %v5530
      %5532 = vmatmul.f32.gmra.mxu0 %v5460
      %v5533 = vpop.f32.mrf.mxu0
      %v5534 = vadd.f32 0.0, %v5533
      %5535 = vmatmul.f32.gmra.mxu0 %v5461
      %v5536 = vpop.f32.mrf.mxu0
      %v5537 = vadd.f32 0.0, %v5536
      %5538 = vdwg.mxu0
      %5539 = vmatpush.msra.mxu0 %v5509
      %5540 = vmatpush.msra.mxu0 %v5508
      %5541 = vmatpush.msra.mxu0 %v5507
      %5542 = vmatpush.msra.mxu0 %v5506
      %5543 = vmatpush.msra.mxu0 %v5505
      %5544 = vmatpush.msra.mxu0 %v5504
      %5545 = vmatpush.msra.mxu0 %v5503
      %5546 = vmatpush.msra.mxu0 %v5502
      %5547 = vmatpush.msra.mxu0 %v5501
      %5548 = vmatpush.msra.mxu0 %v5500
      %5549 = vmatpush.msra.mxu0 %v5499
      %5550 = vmatpush.msra.mxu0 %v5498
      %5551 = vmatpush.msra.mxu0 %v5497
      %5552 = vmatpush.msra.mxu0 %v5496
      %5553 = vmatpush.msra.mxu0 %v5495
      %5554 = vmatpush.msra.mxu0 %v5494
      %5555 = vmatmul.f32.gmra.mxu0 %v5490
      %v5556 = vpop.f32.mrf.mxu0
      %v5557 = vadd.f32 0.0, %v5556
      %5558 = vmatmul.f32.gmra.mxu0 %v5491
      %v5559 = vpop.f32.mrf.mxu0
      %v5560 = vadd.f32 0.0, %v5559
      %5561 = vmatmul.f32.gmra.mxu0 %v5492
      %v5562 = vpop.f32.mrf.mxu0
      %v5563 = vadd.f32 0.0, %v5562
      %5564 = vmatmul.f32.gmra.mxu0 %v5493
      %v5565 = vpop.f32.mrf.mxu0
      %v5566 = vadd.f32 0.0, %v5565
      %5567 = vdwg.mxu0
      %v5568 = vld [vmem:[%s26] sm:$0xf]
      %v5569 = vld [vmem:[#allocation8] sm:$0x1]
      %v5571 = vperm.slane %v5569, 0
      %v5574 = vsel %vm3069, %v5568, 0
      %5576 = vmatpush.msra.mxu0 0.0
      %5577 = vmatpush.msra.mxu0 0.0
      %5578 = vmatpush.msra.mxu0 0.0
      %5579 = vmatpush.msra.mxu0 0.0
      %5580 = vmatpush.msra.mxu0 0.0
      %5581 = vmatpush.msra.mxu0 0.0
      %5582 = vmatpush.msra.mxu0 0.0
      %5583 = vmatpush.msra.mxu0 0.0
      %5584 = vmatpush.msra.mxu0 0.0
      %5585 = vmatpush.msra.mxu0 0.0
      %5586 = vmatpush.msra.mxu0 0.0
      %5587 = vmatpush.msra.mxu0 0.0
      %5588 = vmatpush.msra.mxu0 %v5537
      %5589 = vmatpush.msra.mxu0 %v5534
      %5590 = vmatpush.msra.mxu0 %v5531
      %5591 = vmatpush.msra.mxu0 %v5528
      %5592 = vmatmul.f32.gmra.mxu0 %v5574
      %v5593 = vpop.f32.mrf.mxu0
      %v5594 = vadd.f32 %v5571, %v5593
      %5595 = vdwg.mxu0
      %5596 = vmatpush.msra.mxu0 0.0
      %5597 = vmatpush.msra.mxu0 0.0
      %5598 = vmatpush.msra.mxu0 0.0
      %5599 = vmatpush.msra.mxu0 0.0
      %5600 = vmatpush.msra.mxu0 0.0
      %5601 = vmatpush.msra.mxu0 0.0
      %5602 = vmatpush.msra.mxu0 0.0
      %5603 = vmatpush.msra.mxu0 0.0
      %5604 = vmatpush.msra.mxu0 0.0
      %5605 = vmatpush.msra.mxu0 0.0
      %5606 = vmatpush.msra.mxu0 0.0
      %5607 = vmatpush.msra.mxu0 0.0
      %5608 = vmatpush.msra.mxu0 %v5566
      %5609 = vmatpush.msra.mxu0 %v5563
      %5610 = vmatpush.msra.mxu0 %v5560
      %5611 = vmatpush.msra.mxu0 %v5557
      %5612 = vmatmul.f32.gmra.mxu0 %v5574
      %v5613 = vpop.f32.mrf.mxu0
      %v5614 = vadd.f32 %v5571, %v5613
      %5615 = vdwg.mxu0
      %vm5616 = vcmask 3072
      %5617 = vst.msk [vmem:[%s847] sm:$0xf] %vm5616, %v5594
      %s5618 = scalar_lea.vmem %s847, 4
      %5619 = vst.msk [vmem:[%s5618] sm:$0xf] %vm5616, %v5614
      %p5620 = scmp.lt.s32.totalorder %s41, 1
      %s5621 = scalar_select %p5620, %s41, 1
      %s5622 = smul.addr %s5621, 2
      %s5623 = smul.addr %s5622, 4
      %s5624 = scalar_lea.vmem %s28, %s5623
      // Predicated region
      $region133: #{n3ded64_forward.1} parent=131 // pred_check
        %p5625 = pneg %p652
      $region134: #{n3ded64_forward.1} parent=131 // pred_check_branch
        %5627 = sbr.rel (%p5625) target = $region136
      $region135: #{n3ded64_forward.1} parent=131 // pred_region
        _
      $region136: #{n3ded64_forward.1} parent=131 // pred_fallthru
        _
    $region132: #{n3ded64_forward.1} parent=5 // pred_fallthru
      _
    %p5628 = scmp.le.s32.totalorder 2, %s36
    // Predicated region
    $region137: #{n3ded64_forward.1} parent=5 // pred_check
      %p5629 = pneg %p5628
    $region138: #{n3ded64_forward.1} parent=5 // pred_check_branch
      %5631 = sbr.rel (%p5629) target = $region140
    $region139: #{n3ded64_forward.1} parent=5 // pred_region
      %s5632 = ssub.s32 %s36, 2
      // Predicated region
      $region141: #{n3ded64_forward.1} parent=139 // pred_check
        %p5633 = pneg %p658
      $region142: #{n3ded64_forward.1} parent=139 // pred_check_branch
        %5635 = sbr.rel (%p5633) target = $region144
      $region143: #{n3ded64_forward.1} parent=139 // pred_region
        %p5636 = scmp.lt.s32.totalorder %s42, 1
        %s5637 = scalar_select %p5636, %s42, 1
        %s5638 = smul.addr %s5637, 2
        %s5639 = smul.addr %s5638, 4
        %s5640 = scalar_lea.vmem %s28, %s5639
      $region144: #{n3ded64_forward.1} parent=139 // pred_fallthru
        _
    $region140: #{n3ded64_forward.1} parent=5 // pred_fallthru
      _
  $region6: #{n3ded64_forward.1} parent=0 // loop_footer
    %s40 = sadd.s32 1, %s36
  $region7: #{n3ded64_forward.1} parent=0 // loop_footer_branch
    %35 = sbr.rel target = $region3
  $region8: #{n3ded64_forward.1} parent=0 // loop_exit
    _

</llo_original>
